<compile_context>
chip_gen: v5e
topology: v5e:2x2
jax: 0.10.0
libtpu: 0.0.40
codegen_flags: <defaults>
</compile_context>

<pallas_src>
import functools
import math
from typing import NamedTuple, Tuple

import numpy as np
import jax
import jax.numpy as jnp
from jax.experimental import pallas as pl
from jax.experimental.pallas import tpu as pltpu

_EPS = 1e-5          # nn.InstanceNorm2d eps (norm_epsilon)
_LANE = 128
_TILE_M = 256        # M tile for the un-fused fallback matmul
_K_SPLIT = 2048      # K above this gets its own ("arbitrary") reduction axis
_TILE_K = 1024
_FUSE_VMEM_BUDGET = 24 * 1024 * 1024   # per-sample fused conv+IN path budget


def _round_up(v, m):
    return ((v + m - 1) // m) * m


def _vmem_limit(nbytes):
    return int(min(64 * 1024 * 1024, max(16 * 1024 * 1024, 4 * nbytes)))


def _fits_fused(hw, k, np_, res=False, out_isz=2):
    tk = _TILE_K if k > _K_SPLIT else k
    need = (2 * hw * tk * 2          # a blocks (double-buffered, bf16)
            + 2 * tk * np_ * 2       # weight blocks
            + 2 * hw * np_ * out_isz  # output blocks
            + hw * np_ * 4           # f32 accumulator
            + 2 * np_ * 4            # bias
            + (2 * hw * np_ * 2 if res else 0))
    return need <= _FUSE_VMEM_BUDGET


# ----------------------------------------------------------------------------
# Pallas kernels
# ----------------------------------------------------------------------------
def _matmul_bias_kernel(a_ref, b_ref, bias_ref, o_ref, acc_ref, *, act):
    """(tm,tk)@(tk,Np) accumulated over the K grid axis in an f32 VMEM scratch;
    bias + activation epilogue fused on the last K step (lane-dense store)."""
    @pl.when(pl.program_id(1) == 0)
    def _init():
        acc_ref[...] = jnp.zeros_like(acc_ref)

    acc_ref[...] += jnp.dot(a_ref[...], b_ref[...],
                            preferred_element_type=jnp.float32)

    @pl.when(pl.program_id(1) == pl.num_programs(1) - 1)
    def _epilogue():
        y = acc_ref[...] + bias_ref[...]          # f32 epilogue (v5e-safe)
        if act == "relu":
            y = jnp.maximum(y, 0.0)
        elif act == "tanh":
            y = jnp.tanh(y)
        o_ref[...] = y.astype(o_ref.dtype)


def _matmul_in_kernel(a_ref, b_ref, bias_ref, o_ref, acc_ref, *, act, eps):
    """Per-sample fused conv matmul + bias + InstanceNorm(+ReLU).
    a: (HW, tk); b: (tk, Np); acc/out: (HW, Np); K accumulated on grid axis 1.
    Zero-padded output lanes stay exactly zero through the IN epilogue."""
    @pl.when(pl.program_id(1) == 0)
    def _init():
        acc_ref[...] = jnp.zeros_like(acc_ref)

    acc_ref[...] += jnp.dot(a_ref[...], b_ref[...],
                            preferred_element_type=jnp.float32)

    @pl.when(pl.program_id(1) == pl.num_programs(1) - 1)
    def _epilogue():
        y = acc_ref[...] + bias_ref[...]
        inv_n = 1.0 / y.shape[0]
        mean = jnp.sum(y, axis=0, keepdims=True) * inv_n   # E[x], E[x^2]
        var = jnp.sum(y * y, axis=0, keepdims=True) * inv_n - mean * mean
        y = (y - mean) * jax.lax.rsqrt(jnp.maximum(var, 0.0) + eps)
        if act == "relu":
            y = jnp.maximum(y, 0.0)
        o_ref[...] = y.astype(o_ref.dtype)


def _matmul_in_res_kernel(a_ref, b_ref, bias_ref, x_ref, o_ref, acc_ref, *, eps):
    """Block stage-3 tail: out = x + InstanceNorm(a @ w + b) in one kernel."""
    @pl.when(pl.program_id(1) == 0)
    def _init():
        acc_ref[...] = jnp.zeros_like(acc_ref)

    acc_ref[...] += jnp.dot(a_ref[...], b_ref[...],
                            preferred_element_type=jnp.float32)

    @pl.when(pl.program_id(1) == pl.num_programs(1) - 1)
    def _epilogue():
        t = acc_ref[...] + bias_ref[...]
        inv_n = 1.0 / t.shape[0]
        mean = jnp.sum(t, axis=0, keepdims=True) * inv_n
        var = jnp.sum(t * t, axis=0, keepdims=True) * inv_n - mean * mean
        y = x_ref[...].astype(jnp.float32) + \
            (t - mean) * jax.lax.rsqrt(jnp.maximum(var, 0.0) + eps)
        o_ref[...] = y.astype(o_ref.dtype)


def _instance_norm_kernel(x_ref, o_ref, *, eps, act):
    x = x_ref[...].astype(jnp.float32)                 # (1, H*W, C)
    inv_n = 1.0 / x.shape[1]
    mean = jnp.sum(x, axis=1, keepdims=True) * inv_n
    var = jnp.sum(x * x, axis=1, keepdims=True) * inv_n - mean * mean
    y = (x - mean) * jax.lax.rsqrt(jnp.maximum(var, 0.0) + eps)
    if act == "relu":
        y = jnp.maximum(y, 0.0)
    o_ref[...] = y.astype(o_ref.dtype)


def _in_residual_kernel(t_ref, x_ref, o_ref, *, eps):
    t = t_ref[...].astype(jnp.float32)
    inv_n = 1.0 / t.shape[1]
    mean = jnp.sum(t, axis=1, keepdims=True) * inv_n
    var = jnp.sum(t * t, axis=1, keepdims=True) * inv_n - mean * mean
    y = x_ref[...].astype(jnp.float32) + \
        (t - mean) * jax.lax.rsqrt(jnp.maximum(var, 0.0) + eps)
    o_ref[...] = y.astype(o_ref.dtype)


# ----------------------------------------------------------------------------
# Pallas wrappers
# ----------------------------------------------------------------------------
def _matmul_bias(a, w, b, act="none", out_dtype=jnp.bfloat16, tile_m=_TILE_M):
    """a: (M,K); w: (K,Np) with Np % 128 == 0; b: (1,Np) f32 -> (M,Np)."""
    M, K = a.shape
    Kw, Np = w.shape
    assert Kw == K and Np % _LANE == 0

    a = a.astype(jnp.bfloat16)
    w = w.astype(jnp.bfloat16)
    b = b.reshape(1, Np).astype(jnp.float32)

    if K > _K_SPLIT:                              # deep-K: real reduction axis
        tk = _TILE_K
        Kp = _round_up(K, tk)
        a = jnp.pad(a, ((0, 0), (0, Kp - K)))
        w = jnp.pad(w, ((0, Kp - K), (0, 0)))
    else:                                         # shallow K: single block
        tk, Kp = K, K

    tm = min(tile_m, _round_up(M, 8))
    Mp = _round_up(M, tm)
    if Mp != M:
        a = jnp.pad(a, ((0, Mp - M), (0, 0)))

    grid = (Mp // tm, Kp // tk)
    out_isz = np.dtype(out_dtype).itemsize
    vmem = _vmem_limit(2 * tm * tk * 2 + 2 * tk * Np * 2
                       + 2 * tm * Np * out_isz + tm * Np * 4 + 2 * Np * 4)

    out = pl.pallas_call(
        functools.partial(_matmul_bias_kernel, act=act),
        out_shape=jax.ShapeDtypeStruct((Mp, Np), out_dtype),
        grid_spec=pltpu.PrefetchScalarGridSpec(
            num_scalar_prefetch=0,
            grid=grid,
            in_specs=[
                pl.BlockSpec((tm, tk), lambda i, k: (i, k)),
                pl.BlockSpec((tk, Np), lambda i, k: (k, 0)),
                pl.BlockSpec((1, Np), lambda i, k: (0, 0)),
            ],
            out_specs=pl.BlockSpec((tm, Np), lambda i, k: (i, 0)),
            scratch_shapes=[pltpu.VMEM((tm, Np), jnp.float32)],
        ),
        compiler_params=pltpu.CompilerParams(
            dimension_semantics=("parallel", "arbitrary"),
            vmem_limit_bytes=vmem),
    )(a, w, b)
    return out[:M] if Mp != M else out


def _matmul_in(a, w, b, n, hw, *, act="none", residual=None, eps=_EPS,
               out_dtype=jnp.bfloat16):
    """Fused (a @ w + b) -> per-sample InstanceNorm (+ReLU, or +residual).

    a: (n*hw, K) im2col slab; w: (K, Np), Np % 128 == 0; b: (1, Np) f32;
    residual: optional (n*hw, Np).  Grid = (sample, K-step)."""
    M, K = a.shape
    Kw, Np = w.shape
    assert Kw == K and Np % _LANE == 0 and M == n * hw

    a = a.astype(jnp.bfloat16)
    w = w.astype(jnp.bfloat16)
    b = b.reshape(1, Np).astype(jnp.float32)

    if K > _K_SPLIT:
        tk = _TILE_K
        Kp = _round_up(K, tk)
        a = jnp.pad(a, ((0, 0), (0, Kp - K)))
        w = jnp.pad(w, ((0, Kp - K), (0, 0)))
    else:
        tk, Kp = K, K

    a3 = a.reshape(n, hw, Kp)
    in_specs = [
        pl.BlockSpec((None, hw, tk), lambda i, k: (i, 0, k)),
        pl.BlockSpec((tk, Np), lambda i, k: (k, 0)),
        pl.BlockSpec((1, Np), lambda i, k: (0, 0)),
    ]
    args = [a3, w, b]
    if residual is not None:
        in_specs.append(pl.BlockSpec((None, hw, Np), lambda i, k: (i, 0, 0)))
        args.append(residual.reshape(n, hw, Np).astype(jnp.bfloat16))
        kernel = functools.partial(_matmul_in_res_kernel, eps=eps)
    else:
        kernel = functools.partial(_matmul_in_kernel, act=act, eps=eps)

    out_isz = np.dtype(out_dtype).itemsize
    vmem = _vmem_limit(2 * hw * tk * 2 + 2 * tk * Np * 2 + 2 * hw * Np * out_isz
                       + hw * Np * 4 + 2 * Np * 4
                       + (2 * hw * Np * 2 if residual is not None else 0))

    out = pl.pallas_call(
        kernel,
        out_shape=jax.ShapeDtypeStruct((n, hw, Np), out_dtype),
        grid_spec=pltpu.PrefetchScalarGridSpec(
            num_scalar_prefetch=0,
            grid=(n, Kp // tk),
            in_specs=in_specs,
            out_specs=pl.BlockSpec((None, hw, Np), lambda i, k: (i, 0, 0)),
            scratch_shapes=[pltpu.VMEM((hw, Np), jnp.float32)],
        ),
        compiler_params=pltpu.CompilerParams(
            dimension_semantics=("parallel", "arbitrary"),
            vmem_limit_bytes=vmem),
    )(*args)
    return out.reshape(M, Np)


def instance_norm(x, act="none", eps=_EPS):
    # Per-(sample, channel) norm over H*W; biased var, no affine params
    # (matches nn.InstanceNorm2d defaults).  Zero-padded lanes stay exactly 0.
    N, H, W, C = x.shape
    xr = x.reshape(N, H * W, C)
    spec = pl.BlockSpec((1, H * W, C), lambda n: (n, 0, 0))
    y = pl.pallas_call(
        functools.partial(_instance_norm_kernel, eps=eps, act=act),
        out_shape=jax.ShapeDtypeStruct(xr.shape, x.dtype),
        grid_spec=pltpu.PrefetchScalarGridSpec(
            num_scalar_prefetch=0, grid=(N,), in_specs=[spec], out_specs=spec),
        compiler_params=pltpu.CompilerParams(
            dimension_semantics=("parallel",),
            vmem_limit_bytes=_vmem_limit(4 * H * W * C * x.dtype.itemsize)),
    )(xr)
    return y.reshape(N, H, W, C)


def instance_norm_residual(t, x, eps=_EPS):
    # Returns x + InstanceNorm(t)  (fallback path for very large images).
    N, H, W, C = x.shape
    spec = pl.BlockSpec((1, H * W, C), lambda n: (n, 0, 0))
    y = pl.pallas_call(
        functools.partial(_in_residual_kernel, eps=eps),
        out_shape=jax.ShapeDtypeStruct((N, H * W, C), x.dtype),
        grid_spec=pltpu.PrefetchScalarGridSpec(
            num_scalar_prefetch=0, grid=(N,), in_specs=[spec, spec],
            out_specs=spec),
        compiler_params=pltpu.CompilerParams(
            dimension_semantics=("parallel",),
            vmem_limit_bytes=_vmem_limit(6 * H * W * C * x.dtype.itemsize)),
    )(t.reshape(N, H * W, C), x.reshape(N, H * W, C))
    return y.reshape(N, H, W, C)


# ----------------------------------------------------------------------------
# Convolution glue (im2col) + fused Pallas matmuls
# ----------------------------------------------------------------------------
def _extract_patches(x, k, stride=1):
    # x: (N, Hp, Wp, C) already padded -> (N*Ho*Wo, k*k*C), tap-major K layout.
    # TODO(synk): gather the k*k taps inside the matmul kernel from a halo'd
    # VMEM tile instead of materializing the im2col slab in HBM.
    N, Hp, Wp, C = x.shape
    Ho = (Hp - k) // stride + 1
    Wo = (Wp - k) // stride + 1
    taps = []
    for dy in range(k):
        for dx in range(k):
            taps.append(
                x[:, dy:dy + Ho * stride:stride, dx:dx + Wo * stride:stride, :])
    patches = jnp.stack(taps, axis=3)                  # (N, Ho, Wo, k*k, C)
    return patches.reshape(N * Ho * Wo, k * k * C), (N, Ho, Wo)


def conv2d(x, pw, *, k, cin, stride=1, pad=0, pad_mode="constant",
           act="none", out_dtype=jnp.bfloat16):
    """Plain Conv2d + bias (+act) -> M-tiled matmul (used for the final Tanh)."""
    x = x[..., :cin]                                   # drop lane padding
    if pad > 0:
        x = jnp.pad(x, ((0, 0), (pad, pad), (pad, pad), (0, 0)), mode=pad_mode)
    patches, (N, Ho, Wo) = _extract_patches(x, k, stride)
    y = _matmul_bias(patches, pw["w"], pw["b"], act=act, out_dtype=out_dtype)
    return y.reshape(N, Ho, Wo, -1)                    # channels = padded Np


def conv2d_in(x, pw, *, k, cin, stride=1, pad=0, pad_mode="constant",
              act="relu", eps=_EPS):
    """Conv2d(+bias) + InstanceNorm(+act), fused into one Pallas call when the
    per-sample slab fits VMEM; otherwise M-tiled matmul + separate IN kernel."""
    x = x[..., :cin]
    if pad > 0:
        x = jnp.pad(x, ((0, 0), (pad, pad), (pad, pad), (0, 0)), mode=pad_mode)
    patches, (N, Ho, Wo) = _extract_patches(x, k, stride)
    Np = pw["w"].shape[1]
    if _fits_fused(Ho * Wo, patches.shape[1], Np):
        y = _matmul_in(patches, pw["w"], pw["b"], N, Ho * Wo, act=act, eps=eps)
        return y.reshape(N, Ho, Wo, Np)
    y = _matmul_bias(patches, pw["w"], pw["b"]).reshape(N, Ho, Wo, Np)
    return instance_norm(y, act=act, eps=eps)


def conv_transpose2d(x, pw, *, cin, cout, out_dtype=jnp.bfloat16):
    """ConvTranspose2d(k=3, s=2, p=1, output_padding=1) via sub-pixel phases:
    one matmul over the 2x2 taps of the un-dilated input + pixel shuffle."""
    x = x[..., :cin]
    N, H, W, _ = x.shape
    xp = jnp.pad(x, ((0, 0), (0, 1), (0, 1), (0, 0)))  # trailing zero halo
    patches, _ = _extract_patches(xp, 2, 1)            # (N*H*W, 4*cin)
    y = _matmul_bias(patches, pw["w"], pw["b"], out_dtype=out_dtype)
    y = y.reshape(N, H, W, -1)[..., :4 * cout]
    y = y.reshape(N, H, W, 2, 2, cout).transpose(0, 1, 3, 2, 4, 5)
    return y.reshape(N, 2 * H, 2 * W, cout)


# ----------------------------------------------------------------------------
# One InvertedResidualChannels block (3 fused matmul+IN kernels)
# ----------------------------------------------------------------------------
def _block_forward(x, bp, *, inp, mid, ks, eps=_EPS):
    N, H, W, C = x.shape
    M, HW, B = N * H * W, H * W, len(ks)
    xr = x[..., :inp]

    def _patches(h, k):
        p = (k - 1) // 2
        hp = jnp.pad(h, ((0, 0), (p, p), (p, p), (0, 0)), mode="reflect")
        return _extract_patches(hp, k, 1)[0]

    def fused(a, w, b, act="relu", residual=None):
        Np = w.shape[1]
        if _fits_fused(HW, a.shape[1], Np, res=residual is not None):
            return _matmul_in(a, w, b, N, HW, act=act, residual=residual,
                              eps=eps)
        y = _matmul_bias(a, w, b)
        if residual is None:
            return instance_norm(y.reshape(N, H, W, Np), act=act,
                                 eps=eps).reshape(M, Np)
        return instance_norm_residual(y.reshape(N, H, W, Np),
                                      residual.reshape(N, H, W, Np),
                                      eps=eps).reshape(M, Np)

    # stage 1: all branch entry convs (res kxk + dw 1x1) + IN + ReLU, ONE call.
    a1 = jnp.concatenate([_patches(xr, k) for k in ks]
                         + [xr.reshape(M, inp)], axis=1)
    mids = fused(a1, bp["w1"], bp["b1"]).reshape(N, H, W, -1)

    # stage 2: depthwise convs (dense block-diagonal) + IN + ReLU, ONE call.
    a2 = jnp.concatenate(
        [_patches(mids[..., (B + i) * mid:(B + i + 1) * mid], k)
         for i, k in enumerate(ks)], axis=1)
    dw_mids = fused(a2, bp["w2"], bp["b2"]).reshape(N, H, W, -1)

    # stage 3: all exit projections; the MXU accumulator IS the branch sum and
    # the `x + InstanceNorm(tmp)` tail is fused into the same kernel epilogue.
    a3 = jnp.concatenate(
        [_patches(mids[..., i * mid:(i + 1) * mid], k)
         for i, k in enumerate(ks)]
        + [dw_mids[..., i * mid:(i + 1) * mid].reshape(M, mid)
           for i in range(B)], axis=1)
    Np3 = bp["w3"].shape[1]
    x_flat = x.reshape(M, C)
    if C < Np3:
        x_flat = jnp.pad(x_flat, ((0, 0), (0, Np3 - C)))
    elif C > Np3:
        x_flat = x_flat[:, :Np3]
    out = fused(a3, bp["w3"], bp["b3"], residual=x_flat)
    return out.reshape(N, H, W, Np3)


# ----------------------------------------------------------------------------
# Parameters: synthetic per-branch weights + packing to lane-dense matrices
# ----------------------------------------------------------------------------
class Config(NamedTuple):
    input_nc: int = 3
    output_nc: int = 3
    ngf: int = 8
    channels_reduction_factor: int = 2
    kernel_sizes: Tuple[int, ...] = (3, 5)
    n_blocks: int = 3


def _make_params(key, cfg):
    keys = iter(jax.random.split(key, 4096))

    def wconv(k, cin, cout):
        std = 1.0 / math.sqrt(k * k * cin)
        return jax.random.normal(next(keys), (k, k, cin, cout), jnp.float32) * std

    def bias(cout):
        return jax.random.normal(next(keys), (cout,), jnp.float32) * 0.01

    ngf, ks = cfg.ngf, cfg.kernel_sizes
    p = {}
    p["d0_w"], p["d0_b"] = wconv(7, cfg.input_nc, ngf), bias(ngf)
    p["d1_w"], p["d1_b"] = wconv(3, ngf, ngf * 2), bias(ngf * 2)
    p["d2_w"], p["d2_b"] = wconv(3, ngf * 2, ngf * 4), bias(ngf * 4)

    inp = ngf * 4
    mid = inp // cfg.channels_reduction_factor
    blocks = []
    for _ in range(cfg.n_blocks):
        res = [dict(w1=wconv(k, inp, mid), b1=bias(mid),
                    w2=wconv(k, mid, inp), b2=bias(inp)) for k in ks]
        dw = [dict(pw1_w=wconv(1, inp, mid), pw1_b=bias(mid),
                   dw_w=jax.random.normal(next(keys), (k, k, mid), jnp.float32)
                        * (1.0 / math.sqrt(k * k)),
                   dw_b=bias(mid),
                   pw2_w=wconv(1, mid, inp), pw2_b=bias(inp)) for k in ks]
        blocks.append(dict(res=res, dw=dw))
    p["blocks"] = blocks

    p["u0_w"], p["u0_b"] = wconv(3, ngf * 4, ngf * 2), bias(ngf * 2)
    p["u1_w"], p["u1_b"] = wconv(3, ngf * 2, ngf), bias(ngf)
    p["u2_w"], p["u2_b"] = wconv(7, ngf, cfg.output_nc), bias(cfg.output_nc)
    return p


def _pack_conv(w, b):
    k, _, cin, cout = w.shape
    K = k * k * cin
    Np = _round_up(cout, _LANE)
    wp = jnp.zeros((K, Np), jnp.float32).at[:, :cout].set(w.reshape(K, cout))
    bp = jnp.zeros((1, Np), jnp.float32).at[:, :cout].set(b)
    return {"w": wp.astype(jnp.bfloat16), "b": bp}


def _dw_dense(w):
    # (k,k,C) depthwise weight -> exact dense (k*k*C, C) block-diagonal matrix.
    k, _, C = w.shape
    return (w[..., None] * jnp.eye(C, dtype=w.dtype)).reshape(k * k * C, C)


def _pack_conv_transpose(w, b):
    """Pack ConvTranspose2d(3,2,1,op=1) into a (4*cin, 4*cout) sub-pixel weight.
    K rows: 2x2 forward taps (dy,dx) of the un-dilated input; N cols: the 4
    output phases (a,b) of the 2x interleave.  Derived from y_o = 2*y_i-1+dy."""
    _, _, cin, cout = w.shape
    Np = _round_up(4 * cout, _LANE)
    W = jnp.zeros((4 * cin, Np), jnp.float32)
    bp = jnp.zeros((1, Np), jnp.float32)

    def tap(a, b_):
        return slice((2 * a + b_) * cin, (2 * a + b_ + 1) * cin)

    def ph(a, b_):
        return slice((2 * a + b_) * cout, (2 * a + b_ + 1) * cout)

    W = W.at[tap(0, 0), ph(0, 0)].set(w[1, 1])
    W = W.at[tap(0, 0), ph(0, 1)].set(w[1, 2])
    W = W.at[tap(0, 1), ph(0, 1)].set(w[1, 0])
    W = W.at[tap(0, 0), ph(1, 0)].set(w[2, 1])
    W = W.at[tap(1, 0), ph(1, 0)].set(w[0, 1])
    W = W.at[tap(0, 0), ph(1, 1)].set(w[2, 2])
    W = W.at[tap(0, 1), ph(1, 1)].set(w[2, 0])
    W = W.at[tap(1, 0), ph(1, 1)].set(w[0, 2])
    W = W.at[tap(1, 1), ph(1, 1)].set(w[0, 0])
    for a in (0, 1):
        for b2 in (0, 1):
            bp = bp.at[0, ph(a, b2)].set(b)
    return {"w": W.astype(jnp.bfloat16), "b": bp}


def _pack_block(raw, inp, mid, ks):
    B = len(ks)
    # stage 1: K = [im2col(x,k) for k in ks] ++ [x] ; N = 2*B*mid (padded).
    K1 = sum(k * k * inp for k in ks) + inp
    N1p = _round_up(2 * B * mid, _LANE)
    W1 = jnp.zeros((K1, N1p), jnp.float32)
    b1 = jnp.zeros((1, N1p), jnp.float32)
    off = 0
    for i, k in enumerate(ks):
        br = raw["res"][i]
        W1 = W1.at[off:off + k * k * inp, i * mid:(i + 1) * mid].set(
            br["w1"].reshape(k * k * inp, mid))
        b1 = b1.at[0, i * mid:(i + 1) * mid].set(br["b1"])
        off += k * k * inp
    for i in range(B):
        br = raw["dw"][i]
        c0 = (B + i) * mid
        W1 = W1.at[off:off + inp, c0:c0 + mid].set(br["pw1_w"].reshape(inp, mid))
        b1 = b1.at[0, c0:c0 + mid].set(br["pw1_b"])

    # stage 2: depthwise convs, dense-expanded, block-diagonal.
    K2 = sum(k * k * mid for k in ks)
    N2p = _round_up(B * mid, _LANE)
    W2 = jnp.zeros((K2, N2p), jnp.float32)
    b2 = jnp.zeros((1, N2p), jnp.float32)
    off = 0
    for i, k in enumerate(ks):
        br = raw["dw"][i]
        W2 = W2.at[off:off + k * k * mid, i * mid:(i + 1) * mid].set(
            _dw_dense(br["dw_w"]))
        b2 = b2.at[0, i * mid:(i + 1) * mid].set(br["dw_b"])
        off += k * k * mid

    # stage 3: exit projections stacked along K; bias = sum of branch biases.
    K3 = sum(k * k * mid for k in ks) + B * mid
    N3p = _round_up(inp, _LANE)
    W3 = jnp.zeros((K3, N3p), jnp.float32)
    b3 = jnp.zeros((1, N3p), jnp.float32)
    off = 0
    for i, k in enumerate(ks):
        br = raw["res"][i]
        W3 = W3.at[off:off + k * k * mid, :inp].set(
            br["w2"].reshape(k * k * mid, inp))
        b3 = b3.at[0, :inp].add(br["b2"])
        off += k * k * mid
    for i in range(B):
        br = raw["dw"][i]
        W3 = W3.at[off:off + mid, :inp].set(br["pw2_w"].reshape(mid, inp))
        b3 = b3.at[0, :inp].add(br["pw2_b"])
        off += mid

    return {"w1": W1.astype(jnp.bfloat16), "b1": b1,
            "w2": W2.astype(jnp.bfloat16), "b2": b2,
            "w3": W3.astype(jnp.bfloat16), "b3": b3}


def _pack_params(raw, cfg):
    inp = cfg.ngf * 4
    mid = inp // cfg.channels_reduction_factor
    return {
        "d0": _pack_conv(raw["d0_w"], raw["d0_b"]),
        "d1": _pack_conv(raw["d1_w"], raw["d1_b"]),
        "d2": _pack_conv(raw["d2_w"], raw["d2_b"]),
        "blocks": [_pack_block(blk, inp, mid, cfg.kernel_sizes)
                   for blk in raw["blocks"]],
        "u0": _pack_conv_transpose(raw["u0_w"], raw["u0_b"]),
        "u1": _pack_conv_transpose(raw["u1_w"], raw["u1_b"]),
        "u2": _pack_conv(raw["u2_w"], raw["u2_b"]),
    }


# ----------------------------------------------------------------------------
# Forward pass (matches InceptionGenerator.forward)
# ----------------------------------------------------------------------------
def inception_generator_forward(x_nchw, params, cfg):
    ngf = cfg.ngf
    x = jnp.transpose(x_nchw, (0, 2, 3, 1)).astype(jnp.bfloat16)  # NCHW -> NHWC

    # ---- down-sampling: each Conv + IN + ReLU is one fused Pallas call ----
    x = conv2d_in(x, params["d0"], k=7, cin=cfg.input_nc, pad=3,
                  pad_mode="reflect")
    x = conv2d_in(x, params["d1"], k=3, cin=ngf, stride=2, pad=1)
    x = conv2d_in(x, params["d2"], k=3, cin=ngf * 2, stride=2, pad=1)

    # ---- features: InvertedResidualChannels blocks (dropout p=0 == identity)
    inp = ngf * 4
    mid = inp // cfg.channels_reduction_factor
    for bp in params["blocks"]:
        x = _block_forward(x, bp, inp=inp, mid=mid, ks=cfg.kernel_sizes)

    # ---- up-sampling ----
    x = conv_transpose2d(x, params["u0"], cin=ngf * 4, cout=ngf * 2)
    x = instance_norm(x, act="relu")
    x = conv_transpose2d(x, params["u1"], cin=ngf * 2, cout=ngf)
    x = instance_norm(x, act="relu")
    x = conv2d(x, params["u2"], k=7, cin=ngf, pad=3, pad_mode="reflect",
               act="tanh", out_dtype=jnp.float32)     # final Tanh fused, f32
    x = x[..., :cfg.output_nc]
    return jnp.transpose(x, (0, 3, 1, 2))             # NHWC -> NCHW


# ----------------------------------------------------------------------------
if __name__ == "__main__":
    # Config consistent with the module: input_nc=3, output_nc=3, ngf=8,
    # channels=None, channels_reduction_factor=2, kernel_sizes=[3,5],
    # n_blocks=3, padding_type='reflect', norm_layer=InstanceNorm2d, nn.ReLU.
    cfg = Config(input_nc=3, output_nc=3, ngf=8, channels_reduction_factor=2,
                 kernel_sizes=(3, 5), n_blocks=3)
    key = jax.random.PRNGKey(0)
    pkey, xkey = jax.random.split(key)
    params = _pack_params(_make_params(pkey, cfg), cfg)

    x = jax.random.normal(xkey, (2, cfg.input_nc, 16, 16), jnp.float32)  # NCHW

    fwd = jax.jit(inception_generator_forward, static_argnums=2)
    y = fwd(x, params, cfg)
    jax.block_until_ready(y)

    assert y.shape == (2, cfg.output_nc, 16, 16), y.shape
    assert bool(jnp.all(jnp.isfinite(y)))
    assert bool(jnp.all(jnp.abs(y) <= 1.0 + 1e-6))    # tanh output range
    print("KERNEL_OK")
</pallas_src>

<mosaic_0001>
module attributes {stable_mosaic.version = 11 : i64} {
  func.func @_matmul_in_kernel(%arg0: i32, %arg1: i32, %arg2: memref<1x256x147xbf16, #tpu.memory_space<vmem>>, %arg3: memref<147x128xbf16, #tpu.memory_space<vmem>>, %arg4: memref<1x128xf32, #tpu.memory_space<vmem>>, %arg5: memref<1x256x128xbf16, #tpu.memory_space<vmem>>, %arg6: memref<256x128xf32, #tpu.memory_space<vmem>>) attributes {dimension_semantics = [#tpu.dimension_semantics<parallel>, #tpu.dimension_semantics<arbitrary>], iteration_bounds = array<i64: 2, 1>, scalar_prefetch = 0 : i64, scratch_operands = 1 : i64, tpu.core_type = #tpu.core_type<tc>, window_params = [{transform_indices = @transform_0, window_bounds = array<i64: 1, 256, 147>}, {transform_indices = @transform_1, window_bounds = array<i64: 147, 128>}, {pipeline_mode = #tpu.pipeline_mode<synchronous>, transform_indices = @transform_2, window_bounds = array<i64: 1, 128>}, {transform_indices = @transform_3, window_bounds = array<i64: 1, 256, 128>}]} {
    %c0_i32 = arith.constant 0 : i32
    %0 = arith.cmpi eq, %arg1, %c0_i32 : i32
    %1 = arith.extui %0 : i1 to i32
    %c0_i32_0 = arith.constant 0 : i32
    %2 = arith.cmpi ne, %1, %c0_i32_0 : i32
    scf.if %2 {
      %cst_11 = arith.constant 0.000000e+00 : f32
      %13 = vector.broadcast %cst_11 : f32 to vector<256x128xf32>
      %c0_12 = arith.constant 0 : index
      %c0_13 = arith.constant 0 : index
      %14 = vector.load %arg6[%c0_12, %c0_13] : memref<256x128xf32, #tpu.memory_space<vmem>>, vector<256x128xf32>
      tpu.vector_store %arg6[%c0_12, %c0_13], %13 {strides = array<i32>} : memref<256x128xf32, #tpu.memory_space<vmem>>, vector<256x128xf32>,
    } else {
    }
    %c0 = arith.constant 0 : index
    %c0_1 = arith.constant 0 : index
    %3 = vector.load %arg6[%c0, %c0_1] : memref<256x128xf32, #tpu.memory_space<vmem>>, vector<256x128xf32>
    %c0_2 = arith.constant 0 : index
    %c0_3 = arith.constant 0 : index
    %c0_4 = arith.constant 0 : index
    %4 = vector.load %arg2[%c0_2, %c0_3, %c0_4] : memref<1x256x147xbf16, #tpu.memory_space<vmem>>, vector<1x256x147xbf16>
    %5 = vector.shape_cast %4 : vector<1x256x147xbf16> to vector<256x147xbf16>
    %c0_5 = arith.constant 0 : index
    %c0_6 = arith.constant 0 : index
    %6 = vector.load %arg3[%c0_5, %c0_6] : memref<147x128xbf16, #tpu.memory_space<vmem>>, vector<147x128xbf16>
    %cst = arith.constant dense<0.000000e+00> : vector<256x128xf32>
    %7 = tpu.matmul %5, %6, %cst {dimension_numbers = #tpu.dot_dimension_numbers<[1], [0], [0], [1], [0, 0, 1, 1], [], []>} : vector<256x147xbf16>, vector<147x128xbf16>, vector<256x128xf32> -> vector<256x128xf32>
    %8 = arith.addf %3, %7 : vector<256x128xf32>
    %c0_7 = arith.constant 0 : index
    %c0_8 = arith.constant 0 : index
    %9 = vector.load %arg6[%c0_7, %c0_8] : memref<256x128xf32, #tpu.memory_space<vmem>>, vector<256x128xf32>
    tpu.vector_store %arg6[%c0_7, %c0_8], %8 {strides = array<i32>} : memref<256x128xf32, #tpu.memory_space<vmem>>, vector<256x128xf32>,
    %c0_i32_9 = arith.constant 0 : i32
    %10 = arith.cmpi eq, %arg1, %c0_i32_9 : i32
    %11 = arith.extui %10 : i1 to i32
    %c0_i32_10 = arith.constant 0 : i32
    %12 = arith.cmpi ne, %11, %c0_i32_10 : i32
    scf.if %12 {
      %c0_11 = arith.constant 0 : index
      %c0_12 = arith.constant 0 : index
      %13 = vector.load %arg6[%c0_11, %c0_12] : memref<256x128xf32, #tpu.memory_space<vmem>>, vector<256x128xf32>
      %c0_13 = arith.constant 0 : index
      %c0_14 = arith.constant 0 : index
      %14 = vector.load %arg4[%c0_13, %c0_14] : memref<1x128xf32, #tpu.memory_space<vmem>>, vector<1x128xf32>
      %15 = vector.broadcast %14 : vector<1x128xf32> to vector<256x128xf32>
      %16 = arith.addf %13, %15 : vector<256x128xf32>
      %cst_15 = arith.constant dense<0.000000e+00> : vector<128xf32>
      %17 = vector.multi_reduction <add>, %16, %cst_15 [0] : vector<256x128xf32> to vector<128xf32>
      %18 = vector.shape_cast %17 : vector<128xf32> to vector<1x128xf32>
      %cst_16 = arith.constant 3.906250e-03 : f32
      %19 = vector.broadcast %cst_16 : f32 to vector<1x128xf32>
      %20 = arith.mulf %18, %19 : vector<1x128xf32>
      %21 = arith.mulf %16, %16 : vector<256x128xf32>
      %cst_17 = arith.constant dense<0.000000e+00> : vector<128xf32>
      %22 = vector.multi_reduction <add>, %21, %cst_17 [0] : vector<256x128xf32> to vector<128xf32>
      %23 = vector.shape_cast %22 : vector<128xf32> to vector<1x128xf32>
      %cst_18 = arith.constant 3.906250e-03 : f32
      %24 = vector.broadcast %cst_18 : f32 to vector<1x128xf32>
      %25 = arith.mulf %23, %24 : vector<1x128xf32>
      %26 = arith.mulf %20, %20 : vector<1x128xf32>
      %27 = arith.subf %25, %26 : vector<1x128xf32>
      %28 = vector.broadcast %20 : vector<1x128xf32> to vector<256x128xf32>
      %29 = arith.subf %16, %28 : vector<256x128xf32>
      %cst_19 = arith.constant 0.000000e+00 : f32
      %30 = vector.broadcast %cst_19 : f32 to vector<1x128xf32>
      %31 = arith.maximumf %27, %30 : vector<1x128xf32>
      %cst_20 = arith.constant 9.99999974E-6 : f32
      %32 = vector.broadcast %cst_20 : f32 to vector<1x128xf32>
      %33 = arith.addf %31, %32 : vector<1x128xf32>
      %34 = math.rsqrt %33 : vector<1x128xf32>
      %35 = vector.broadcast %34 : vector<1x128xf32> to vector<256x128xf32>
      %36 = arith.mulf %29, %35 : vector<256x128xf32>
      %cst_21 = arith.constant 0.000000e+00 : f32
      %37 = vector.broadcast %cst_21 : f32 to vector<256x128xf32>
      %38 = arith.maximumf %36, %37 : vector<256x128xf32>
      %39 = arith.truncf %38 : vector<256x128xf32> to vector<256x128xbf16>
      %c0_22 = arith.constant 0 : index
      %c0_23 = arith.constant 0 : index
      %c0_24 = arith.constant 0 : index
      %40 = vector.load %arg5[%c0_22, %c0_23, %c0_24] : memref<1x256x128xbf16, #tpu.memory_space<vmem>>, vector<1x256x128xbf16>
      %41 = vector.shape_cast %40 : vector<1x256x128xbf16> to vector<256x128xbf16>
      %42 = vector.shape_cast %39 : vector<256x128xbf16> to vector<1x256x128xbf16>
      tpu.vector_store %arg5[%c0_22, %c0_23, %c0_24], %42 {strides = array<i32>} : memref<1x256x128xbf16, #tpu.memory_space<vmem>>, vector<1x256x128xbf16>,
    } else {
    }
    return
  }
  func.func @transform_0(%arg0: i32, %arg1: i32) -> (i32, i32, i32) {
    %c0_i32 = arith.constant 0 : i32
    %c0_i32_0 = arith.constant 0 : i32
    return %arg0, %c0_i32, %arg1 : i32, i32, i32
  }
  func.func @transform_1(%arg0: i32, %arg1: i32) -> (i32, i32) {
    %c0_i32 = arith.constant 0 : i32
    %c0_i32_0 = arith.constant 0 : i32
    return %arg1, %c0_i32 : i32, i32
  }
  func.func @transform_2(%arg0: i32, %arg1: i32) -> (i32, i32) {
    %c0_i32 = arith.constant 0 : i32
    %c0_i32_0 = arith.constant 0 : i32
    %c0_i32_1 = arith.constant 0 : i32
    return %c0_i32, %c0_i32_0 : i32, i32
  }
  func.func @transform_3(%arg0: i32, %arg1: i32) -> (i32, i32, i32) {
    %c0_i32 = arith.constant 0 : i32
    %c0_i32_0 = arith.constant 0 : i32
    %c0_i32_1 = arith.constant 0 : i32
    return %arg0, %c0_i32, %c0_i32_0 : i32, i32, i32
  }
}

module attributes {stable_mosaic.version = 11 : i64} {
  func.func @_matmul_in_kernel(%arg0: i32, %arg1: i32, %arg2: memref<1x64x72xbf16, #tpu.memory_space<vmem>>, %arg3: memref<72x128xbf16, #tpu.memory_space<vmem>>, %arg4: memref<1x128xf32, #tpu.memory_space<vmem>>, %arg5: memref<1x64x128xbf16, #tpu.memory_space<vmem>>, %arg6: memref<64x128xf32, #tpu.memory_space<vmem>>) attributes {dimension_semantics = [#tpu.dimension_semantics<parallel>, #tpu.dimension_semantics<arbitrary>], iteration_bounds = array<i64: 2, 1>, scalar_prefetch = 0 : i64, scratch_operands = 1 : i64, tpu.core_type = #tpu.core_type<tc>, window_params = [{transform_indices = @transform_0, window_bounds = array<i64: 1, 64, 72>}, {transform_indices = @transform_1, window_bounds = array<i64: 72, 128>}, {pipeline_mode = #tpu.pipeline_mode<synchronous>, transform_indices = @transform_2, window_bounds = array<i64: 1, 128>}, {transform_indices = @transform_3, window_bounds = array<i64: 1, 64, 128>}]} {
    %c0_i32 = arith.constant 0 : i32
    %0 = arith.cmpi eq, %arg1, %c0_i32 : i32
    %1 = arith.extui %0 : i1 to i32
    %c0_i32_0 = arith.constant 0 : i32
    %2 = arith.cmpi ne, %1, %c0_i32_0 : i32
    scf.if %2 {
      %cst_11 = arith.constant 0.000000e+00 : f32
      %13 = vector.broadcast %cst_11 : f32 to vector<64x128xf32>
      %c0_12 = arith.constant 0 : index
      %c0_13 = arith.constant 0 : index
      %14 = vector.load %arg6[%c0_12, %c0_13] : memref<64x128xf32, #tpu.memory_space<vmem>>, vector<64x128xf32>
      tpu.vector_store %arg6[%c0_12, %c0_13], %13 {strides = array<i32>} : memref<64x128xf32, #tpu.memory_space<vmem>>, vector<64x128xf32>,
    } else {
    }
    %c0 = arith.constant 0 : index
    %c0_1 = arith.constant 0 : index
    %3 = vector.load %arg6[%c0, %c0_1] : memref<64x128xf32, #tpu.memory_space<vmem>>, vector<64x128xf32>
    %c0_2 = arith.constant 0 : index
    %c0_3 = arith.constant 0 : index
    %c0_4 = arith.constant 0 : index
    %4 = vector.load %arg2[%c0_2, %c0_3, %c0_4] : memref<1x64x72xbf16, #tpu.memory_space<vmem>>, vector<1x64x72xbf16>
    %5 = vector.shape_cast %4 : vector<1x64x72xbf16> to vector<64x72xbf16>
    %c0_5 = arith.constant 0 : index
    %c0_6 = arith.constant 0 : index
    %6 = vector.load %arg3[%c0_5, %c0_6] : memref<72x128xbf16, #tpu.memory_space<vmem>>, vector<72x128xbf16>
    %cst = arith.constant dense<0.000000e+00> : vector<64x128xf32>
    %7 = tpu.matmul %5, %6, %cst {dimension_numbers = #tpu.dot_dimension_numbers<[1], [0], [0], [1], [0, 0, 1, 1], [], []>} : vector<64x72xbf16>, vector<72x128xbf16>, vector<64x128xf32> -> vector<64x128xf32>
    %8 = arith.addf %3, %7 : vector<64x128xf32>
    %c0_7 = arith.constant 0 : index
    %c0_8 = arith.constant 0 : index
    %9 = vector.load %arg6[%c0_7, %c0_8] : memref<64x128xf32, #tpu.memory_space<vmem>>, vector<64x128xf32>
    tpu.vector_store %arg6[%c0_7, %c0_8], %8 {strides = array<i32>} : memref<64x128xf32, #tpu.memory_space<vmem>>, vector<64x128xf32>,
    %c0_i32_9 = arith.constant 0 : i32
    %10 = arith.cmpi eq, %arg1, %c0_i32_9 : i32
    %11 = arith.extui %10 : i1 to i32
    %c0_i32_10 = arith.constant 0 : i32
    %12 = arith.cmpi ne, %11, %c0_i32_10 : i32
    scf.if %12 {
      %c0_11 = arith.constant 0 : index
      %c0_12 = arith.constant 0 : index
      %13 = vector.load %arg6[%c0_11, %c0_12] : memref<64x128xf32, #tpu.memory_space<vmem>>, vector<64x128xf32>
      %c0_13 = arith.constant 0 : index
      %c0_14 = arith.constant 0 : index
      %14 = vector.load %arg4[%c0_13, %c0_14] : memref<1x128xf32, #tpu.memory_space<vmem>>, vector<1x128xf32>
      %15 = vector.broadcast %14 : vector<1x128xf32> to vector<64x128xf32>
      %16 = arith.addf %13, %15 : vector<64x128xf32>
      %cst_15 = arith.constant dense<0.000000e+00> : vector<128xf32>
      %17 = vector.multi_reduction <add>, %16, %cst_15 [0] : vector<64x128xf32> to vector<128xf32>
      %18 = vector.shape_cast %17 : vector<128xf32> to vector<1x128xf32>
      %cst_16 = arith.constant 1.562500e-02 : f32
      %19 = vector.broadcast %cst_16 : f32 to vector<1x128xf32>
      %20 = arith.mulf %18, %19 : vector<1x128xf32>
      %21 = arith.mulf %16, %16 : vector<64x128xf32>
      %cst_17 = arith.constant dense<0.000000e+00> : vector<128xf32>
      %22 = vector.multi_reduction <add>, %21, %cst_17 [0] : vector<64x128xf32> to vector<128xf32>
      %23 = vector.shape_cast %22 : vector<128xf32> to vector<1x128xf32>
      %cst_18 = arith.constant 1.562500e-02 : f32
      %24 = vector.broadcast %cst_18 : f32 to vector<1x128xf32>
      %25 = arith.mulf %23, %24 : vector<1x128xf32>
      %26 = arith.mulf %20, %20 : vector<1x128xf32>
      %27 = arith.subf %25, %26 : vector<1x128xf32>
      %28 = vector.broadcast %20 : vector<1x128xf32> to vector<64x128xf32>
      %29 = arith.subf %16, %28 : vector<64x128xf32>
      %cst_19 = arith.constant 0.000000e+00 : f32
      %30 = vector.broadcast %cst_19 : f32 to vector<1x128xf32>
      %31 = arith.maximumf %27, %30 : vector<1x128xf32>
      %cst_20 = arith.constant 9.99999974E-6 : f32
      %32 = vector.broadcast %cst_20 : f32 to vector<1x128xf32>
      %33 = arith.addf %31, %32 : vector<1x128xf32>
      %34 = math.rsqrt %33 : vector<1x128xf32>
      %35 = vector.broadcast %34 : vector<1x128xf32> to vector<64x128xf32>
      %36 = arith.mulf %29, %35 : vector<64x128xf32>
      %cst_21 = arith.constant 0.000000e+00 : f32
      %37 = vector.broadcast %cst_21 : f32 to vector<64x128xf32>
      %38 = arith.maximumf %36, %37 : vector<64x128xf32>
      %39 = arith.truncf %38 : vector<64x128xf32> to vector<64x128xbf16>
      %c0_22 = arith.constant 0 : index
      %c0_23 = arith.constant 0 : index
      %c0_24 = arith.constant 0 : index
      %40 = vector.load %arg5[%c0_22, %c0_23, %c0_24] : memref<1x64x128xbf16, #tpu.memory_space<vmem>>, vector<1x64x128xbf16>
      %41 = vector.shape_cast %40 : vector<1x64x128xbf16> to vector<64x128xbf16>
      %42 = vector.shape_cast %39 : vector<64x128xbf16> to vector<1x64x128xbf16>
      tpu.vector_store %arg5[%c0_22, %c0_23, %c0_24], %42 {strides = array<i32>} : memref<1x64x128xbf16, #tpu.memory_space<vmem>>, vector<1x64x128xbf16>,
    } else {
    }
    return
  }
  func.func @transform_0(%arg0: i32, %arg1: i32) -> (i32, i32, i32) {
    %c0_i32 = arith.constant 0 : i32
    %c0_i32_0 = arith.constant 0 : i32
    return %arg0, %c0_i32, %arg1 : i32, i32, i32
  }
  func.func @transform_1(%arg0: i32, %arg1: i32) -> (i32, i32) {
    %c0_i32 = arith.constant 0 : i32
    %c0_i32_0 = arith.constant 0 : i32
    return %arg1, %c0_i32 : i32, i32
  }
  func.func @transform_2(%arg0: i32, %arg1: i32) -> (i32, i32) {
    %c0_i32 = arith.constant 0 : i32
    %c0_i32_0 = arith.constant 0 : i32
    %c0_i32_1 = arith.constant 0 : i32
    return %c0_i32, %c0_i32_0 : i32, i32
  }
  func.func @transform_3(%arg0: i32, %arg1: i32) -> (i32, i32, i32) {
    %c0_i32 = arith.constant 0 : i32
    %c0_i32_0 = arith.constant 0 : i32
    %c0_i32_1 = arith.constant 0 : i32
    return %arg0, %c0_i32, %c0_i32_0 : i32, i32, i32
  }
}

module attributes {stable_mosaic.version = 11 : i64} {
  func.func @_matmul_in_kernel(%arg0: i32, %arg1: i32, %arg2: memref<1x16x144xbf16, #tpu.memory_space<vmem>>, %arg3: memref<144x128xbf16, #tpu.memory_space<vmem>>, %arg4: memref<1x128xf32, #tpu.memory_space<vmem>>, %arg5: memref<1x16x128xbf16, #tpu.memory_space<vmem>>, %arg6: memref<16x128xf32, #tpu.memory_space<vmem>>) attributes {dimension_semantics = [#tpu.dimension_semantics<parallel>, #tpu.dimension_semantics<arbitrary>], iteration_bounds = array<i64: 2, 1>, scalar_prefetch = 0 : i64, scratch_operands = 1 : i64, tpu.core_type = #tpu.core_type<tc>, window_params = [{transform_indices = @transform_0, window_bounds = array<i64: 1, 16, 144>}, {transform_indices = @transform_1, window_bounds = array<i64: 144, 128>}, {pipeline_mode = #tpu.pipeline_mode<synchronous>, transform_indices = @transform_2, window_bounds = array<i64: 1, 128>}, {transform_indices = @transform_3, window_bounds = array<i64: 1, 16, 128>}]} {
    %c0_i32 = arith.constant 0 : i32
    %0 = arith.cmpi eq, %arg1, %c0_i32 : i32
    %1 = arith.extui %0 : i1 to i32
    %c0_i32_0 = arith.constant 0 : i32
    %2 = arith.cmpi ne, %1, %c0_i32_0 : i32
    scf.if %2 {
      %cst_11 = arith.constant 0.000000e+00 : f32
      %13 = vector.broadcast %cst_11 : f32 to vector<16x128xf32>
      %c0_12 = arith.constant 0 : index
      %c0_13 = arith.constant 0 : index
      %14 = vector.load %arg6[%c0_12, %c0_13] : memref<16x128xf32, #tpu.memory_space<vmem>>, vector<16x128xf32>
      tpu.vector_store %arg6[%c0_12, %c0_13], %13 {strides = array<i32>} : memref<16x128xf32, #tpu.memory_space<vmem>>, vector<16x128xf32>,
    } else {
    }
    %c0 = arith.constant 0 : index
    %c0_1 = arith.constant 0 : index
    %3 = vector.load %arg6[%c0, %c0_1] : memref<16x128xf32, #tpu.memory_space<vmem>>, vector<16x128xf32>
    %c0_2 = arith.constant 0 : index
    %c0_3 = arith.constant 0 : index
    %c0_4 = arith.constant 0 : index
    %4 = vector.load %arg2[%c0_2, %c0_3, %c0_4] : memref<1x16x144xbf16, #tpu.memory_space<vmem>>, vector<1x16x144xbf16>
    %5 = vector.shape_cast %4 : vector<1x16x144xbf16> to vector<16x144xbf16>
    %c0_5 = arith.constant 0 : index
    %c0_6 = arith.constant 0 : index
    %6 = vector.load %arg3[%c0_5, %c0_6] : memref<144x128xbf16, #tpu.memory_space<vmem>>, vector<144x128xbf16>
    %cst = arith.constant dense<0.000000e+00> : vector<16x128xf32>
    %7 = tpu.matmul %5, %6, %cst {dimension_numbers = #tpu.dot_dimension_numbers<[1], [0], [0], [1], [0, 0, 1, 1], [], []>} : vector<16x144xbf16>, vector<144x128xbf16>, vector<16x128xf32> -> vector<16x128xf32>
    %8 = arith.addf %3, %7 : vector<16x128xf32>
    %c0_7 = arith.constant 0 : index
    %c0_8 = arith.constant 0 : index
    %9 = vector.load %arg6[%c0_7, %c0_8] : memref<16x128xf32, #tpu.memory_space<vmem>>, vector<16x128xf32>
    tpu.vector_store %arg6[%c0_7, %c0_8], %8 {strides = array<i32>} : memref<16x128xf32, #tpu.memory_space<vmem>>, vector<16x128xf32>,
    %c0_i32_9 = arith.constant 0 : i32
    %10 = arith.cmpi eq, %arg1, %c0_i32_9 : i32
    %11 = arith.extui %10 : i1 to i32
    %c0_i32_10 = arith.constant 0 : i32
    %12 = arith.cmpi ne, %11, %c0_i32_10 : i32
    scf.if %12 {
      %c0_11 = arith.constant 0 : index
      %c0_12 = arith.constant 0 : index
      %13 = vector.load %arg6[%c0_11, %c0_12] : memref<16x128xf32, #tpu.memory_space<vmem>>, vector<16x128xf32>
      %c0_13 = arith.constant 0 : index
      %c0_14 = arith.constant 0 : index
      %14 = vector.load %arg4[%c0_13, %c0_14] : memref<1x128xf32, #tpu.memory_space<vmem>>, vector<1x128xf32>
      %15 = vector.broadcast %14 : vector<1x128xf32> to vector<16x128xf32>
      %16 = arith.addf %13, %15 : vector<16x128xf32>
      %cst_15 = arith.constant dense<0.000000e+00> : vector<128xf32>
      %17 = vector.multi_reduction <add>, %16, %cst_15 [0] : vector<16x128xf32> to vector<128xf32>
      %18 = vector.shape_cast %17 : vector<128xf32> to vector<1x128xf32>
      %cst_16 = arith.constant 6.250000e-02 : f32
      %19 = vector.broadcast %cst_16 : f32 to vector<1x128xf32>
      %20 = arith.mulf %18, %19 : vector<1x128xf32>
      %21 = arith.mulf %16, %16 : vector<16x128xf32>
      %cst_17 = arith.constant dense<0.000000e+00> : vector<128xf32>
      %22 = vector.multi_reduction <add>, %21, %cst_17 [0] : vector<16x128xf32> to vector<128xf32>
      %23 = vector.shape_cast %22 : vector<128xf32> to vector<1x128xf32>
      %cst_18 = arith.constant 6.250000e-02 : f32
      %24 = vector.broadcast %cst_18 : f32 to vector<1x128xf32>
      %25 = arith.mulf %23, %24 : vector<1x128xf32>
      %26 = arith.mulf %20, %20 : vector<1x128xf32>
      %27 = arith.subf %25, %26 : vector<1x128xf32>
      %28 = vector.broadcast %20 : vector<1x128xf32> to vector<16x128xf32>
      %29 = arith.subf %16, %28 : vector<16x128xf32>
      %cst_19 = arith.constant 0.000000e+00 : f32
      %30 = vector.broadcast %cst_19 : f32 to vector<1x128xf32>
      %31 = arith.maximumf %27, %30 : vector<1x128xf32>
      %cst_20 = arith.constant 9.99999974E-6 : f32
      %32 = vector.broadcast %cst_20 : f32 to vector<1x128xf32>
      %33 = arith.addf %31, %32 : vector<1x128xf32>
      %34 = math.rsqrt %33 : vector<1x128xf32>
      %35 = vector.broadcast %34 : vector<1x128xf32> to vector<16x128xf32>
      %36 = arith.mulf %29, %35 : vector<16x128xf32>
      %cst_21 = arith.constant 0.000000e+00 : f32
      %37 = vector.broadcast %cst_21 : f32 to vector<16x128xf32>
      %38 = arith.maximumf %36, %37 : vector<16x128xf32>
      %39 = arith.truncf %38 : vector<16x128xf32> to vector<16x128xbf16>
      %c0_22 = arith.constant 0 : index
      %c0_23 = arith.constant 0 : index
      %c0_24 = arith.constant 0 : index
      %40 = vector.load %arg5[%c0_22, %c0_23, %c0_24] : memref<1x16x128xbf16, #tpu.memory_space<vmem>>, vector<1x16x128xbf16>
      %41 = vector.shape_cast %40 : vector<1x16x128xbf16> to vector<16x128xbf16>
      %42 = vector.shape_cast %39 : vector<16x128xbf16> to vector<1x16x128xbf16>
      tpu.vector_store %arg5[%c0_22, %c0_23, %c0_24], %42 {strides = array<i32>} : memref<1x16x128xbf16, #tpu.memory_space<vmem>>, vector<1x16x128xbf16>,
    } else {
    }
    return
  }
  func.func @transform_0(%arg0: i32, %arg1: i32) -> (i32, i32, i32) {
    %c0_i32 = arith.constant 0 : i32
    %c0_i32_0 = arith.constant 0 : i32
    return %arg0, %c0_i32, %arg1 : i32, i32, i32
  }
  func.func @transform_1(%arg0: i32, %arg1: i32) -> (i32, i32) {
    %c0_i32 = arith.constant 0 : i32
    %c0_i32_0 = arith.constant 0 : i32
    return %arg1, %c0_i32 : i32, i32
  }
  func.func @transform_2(%arg0: i32, %arg1: i32) -> (i32, i32) {
    %c0_i32 = arith.constant 0 : i32
    %c0_i32_0 = arith.constant 0 : i32
    %c0_i32_1 = arith.constant 0 : i32
    return %c0_i32, %c0_i32_0 : i32, i32
  }
  func.func @transform_3(%arg0: i32, %arg1: i32) -> (i32, i32, i32) {
    %c0_i32 = arith.constant 0 : i32
    %c0_i32_0 = arith.constant 0 : i32
    %c0_i32_1 = arith.constant 0 : i32
    return %arg0, %c0_i32, %c0_i32_0 : i32, i32, i32
  }
}

module attributes {stable_mosaic.version = 11 : i64} {
  func.func @_matmul_in_kernel(%arg0: i32, %arg1: i32, %arg2: memref<1x16x1120xbf16, #tpu.memory_space<vmem>>, %arg3: memref<1120x128xbf16, #tpu.memory_space<vmem>>, %arg4: memref<1x128xf32, #tpu.memory_space<vmem>>, %arg5: memref<1x16x128xbf16, #tpu.memory_space<vmem>>, %arg6: memref<16x128xf32, #tpu.memory_space<vmem>>) attributes {dimension_semantics = [#tpu.dimension_semantics<parallel>, #tpu.dimension_semantics<arbitrary>], iteration_bounds = array<i64: 2, 1>, scalar_prefetch = 0 : i64, scratch_operands = 1 : i64, tpu.core_type = #tpu.core_type<tc>, window_params = [{transform_indices = @transform_0, window_bounds = array<i64: 1, 16, 1120>}, {transform_indices = @transform_1, window_bounds = array<i64: 1120, 128>}, {pipeline_mode = #tpu.pipeline_mode<synchronous>, transform_indices = @transform_2, window_bounds = array<i64: 1, 128>}, {transform_indices = @transform_3, window_bounds = array<i64: 1, 16, 128>}]} {
    %c0_i32 = arith.constant 0 : i32
    %0 = arith.cmpi eq, %arg1, %c0_i32 : i32
    %1 = arith.extui %0 : i1 to i32
    %c0_i32_0 = arith.constant 0 : i32
    %2 = arith.cmpi ne, %1, %c0_i32_0 : i32
    scf.if %2 {
      %cst_11 = arith.constant 0.000000e+00 : f32
      %13 = vector.broadcast %cst_11 : f32 to vector<16x128xf32>
      %c0_12 = arith.constant 0 : index
      %c0_13 = arith.constant 0 : index
      %14 = vector.load %arg6[%c0_12, %c0_13] : memref<16x128xf32, #tpu.memory_space<vmem>>, vector<16x128xf32>
      tpu.vector_store %arg6[%c0_12, %c0_13], %13 {strides = array<i32>} : memref<16x128xf32, #tpu.memory_space<vmem>>, vector<16x128xf32>,
    } else {
    }
    %c0 = arith.constant 0 : index
    %c0_1 = arith.constant 0 : index
    %3 = vector.load %arg6[%c0, %c0_1] : memref<16x128xf32, #tpu.memory_space<vmem>>, vector<16x128xf32>
    %c0_2 = arith.constant 0 : index
    %c0_3 = arith.constant 0 : index
    %c0_4 = arith.constant 0 : index
    %4 = vector.load %arg2[%c0_2, %c0_3, %c0_4] : memref<1x16x1120xbf16, #tpu.memory_space<vmem>>, vector<1x16x1120xbf16>
    %5 = vector.shape_cast %4 : vector<1x16x1120xbf16> to vector<16x1120xbf16>
    %c0_5 = arith.constant 0 : index
    %c0_6 = arith.constant 0 : index
    %6 = vector.load %arg3[%c0_5, %c0_6] : memref<1120x128xbf16, #tpu.memory_space<vmem>>, vector<1120x128xbf16>
    %cst = arith.constant dense<0.000000e+00> : vector<16x128xf32>
    %7 = tpu.matmul %5, %6, %cst {dimension_numbers = #tpu.dot_dimension_numbers<[1], [0], [0], [1], [0, 0, 1, 1], [], []>} : vector<16x1120xbf16>, vector<1120x128xbf16>, vector<16x128xf32> -> vector<16x128xf32>
    %8 = arith.addf %3, %7 : vector<16x128xf32>
    %c0_7 = arith.constant 0 : index
    %c0_8 = arith.constant 0 : index
    %9 = vector.load %arg6[%c0_7, %c0_8] : memref<16x128xf32, #tpu.memory_space<vmem>>, vector<16x128xf32>
    tpu.vector_store %arg6[%c0_7, %c0_8], %8 {strides = array<i32>} : memref<16x128xf32, #tpu.memory_space<vmem>>, vector<16x128xf32>,
    %c0_i32_9 = arith.constant 0 : i32
    %10 = arith.cmpi eq, %arg1, %c0_i32_9 : i32
    %11 = arith.extui %10 : i1 to i32
    %c0_i32_10 = arith.constant 0 : i32
    %12 = arith.cmpi ne, %11, %c0_i32_10 : i32
    scf.if %12 {
      %c0_11 = arith.constant 0 : index
      %c0_12 = arith.constant 0 : index
      %13 = vector.load %arg6[%c0_11, %c0_12] : memref<16x128xf32, #tpu.memory_space<vmem>>, vector<16x128xf32>
      %c0_13 = arith.constant 0 : index
      %c0_14 = arith.constant 0 : index
      %14 = vector.load %arg4[%c0_13, %c0_14] : memref<1x128xf32, #tpu.memory_space<vmem>>, vector<1x128xf32>
      %15 = vector.broadcast %14 : vector<1x128xf32> to vector<16x128xf32>
      %16 = arith.addf %13, %15 : vector<16x128xf32>
      %cst_15 = arith.constant dense<0.000000e+00> : vector<128xf32>
      %17 = vector.multi_reduction <add>, %16, %cst_15 [0] : vector<16x128xf32> to vector<128xf32>
      %18 = vector.shape_cast %17 : vector<128xf32> to vector<1x128xf32>
      %cst_16 = arith.constant 6.250000e-02 : f32
      %19 = vector.broadcast %cst_16 : f32 to vector<1x128xf32>
      %20 = arith.mulf %18, %19 : vector<1x128xf32>
      %21 = arith.mulf %16, %16 : vector<16x128xf32>
      %cst_17 = arith.constant dense<0.000000e+00> : vector<128xf32>
      %22 = vector.multi_reduction <add>, %21, %cst_17 [0] : vector<16x128xf32> to vector<128xf32>
      %23 = vector.shape_cast %22 : vector<128xf32> to vector<1x128xf32>
      %cst_18 = arith.constant 6.250000e-02 : f32
      %24 = vector.broadcast %cst_18 : f32 to vector<1x128xf32>
      %25 = arith.mulf %23, %24 : vector<1x128xf32>
      %26 = arith.mulf %20, %20 : vector<1x128xf32>
      %27 = arith.subf %25, %26 : vector<1x128xf32>
      %28 = vector.broadcast %20 : vector<1x128xf32> to vector<16x128xf32>
      %29 = arith.subf %16, %28 : vector<16x128xf32>
      %cst_19 = arith.constant 0.000000e+00 : f32
      %30 = vector.broadcast %cst_19 : f32 to vector<1x128xf32>
      %31 = arith.maximumf %27, %30 : vector<1x128xf32>
      %cst_20 = arith.constant 9.99999974E-6 : f32
      %32 = vector.broadcast %cst_20 : f32 to vector<1x128xf32>
      %33 = arith.addf %31, %32 : vector<1x128xf32>
      %34 = math.rsqrt %33 : vector<1x128xf32>
      %35 = vector.broadcast %34 : vector<1x128xf32> to vector<16x128xf32>
      %36 = arith.mulf %29, %35 : vector<16x128xf32>
      %cst_21 = arith.constant 0.000000e+00 : f32
      %37 = vector.broadcast %cst_21 : f32 to vector<16x128xf32>
      %38 = arith.maximumf %36, %37 : vector<16x128xf32>
      %39 = arith.truncf %38 : vector<16x128xf32> to vector<16x128xbf16>
      %c0_22 = arith.constant 0 : index
      %c0_23 = arith.constant 0 : index
      %c0_24 = arith.constant 0 : index
      %40 = vector.load %arg5[%c0_22, %c0_23, %c0_24] : memref<1x16x128xbf16, #tpu.memory_space<vmem>>, vector<1x16x128xbf16>
      %41 = vector.shape_cast %40 : vector<1x16x128xbf16> to vector<16x128xbf16>
      %42 = vector.shape_cast %39 : vector<16x128xbf16> to vector<1x16x128xbf16>
      tpu.vector_store %arg5[%c0_22, %c0_23, %c0_24], %42 {strides = array<i32>} : memref<1x16x128xbf16, #tpu.memory_space<vmem>>, vector<1x16x128xbf16>,
    } else {
    }
    return
  }
  func.func @transform_0(%arg0: i32, %arg1: i32) -> (i32, i32, i32) {
    %c0_i32 = arith.constant 0 : i32
    %c0_i32_0 = arith.constant 0 : i32
    return %arg0, %c0_i32, %arg1 : i32, i32, i32
  }
  func.func @transform_1(%arg0: i32, %arg1: i32) -> (i32, i32) {
    %c0_i32 = arith.constant 0 : i32
    %c0_i32_0 = arith.constant 0 : i32
    return %arg1, %c0_i32 : i32, i32
  }
  func.func @transform_2(%arg0: i32, %arg1: i32) -> (i32, i32) {
    %c0_i32 = arith.constant 0 : i32
    %c0_i32_0 = arith.constant 0 : i32
    %c0_i32_1 = arith.constant 0 : i32
    return %c0_i32, %c0_i32_0 : i32, i32
  }
  func.func @transform_3(%arg0: i32, %arg1: i32) -> (i32, i32, i32) {
    %c0_i32 = arith.constant 0 : i32
    %c0_i32_0 = arith.constant 0 : i32
    %c0_i32_1 = arith.constant 0 : i32
    return %arg0, %c0_i32, %c0_i32_0 : i32, i32, i32
  }
}

module attributes {stable_mosaic.version = 11 : i64} {
  func.func @_matmul_in_kernel(%arg0: i32, %arg1: i32, %arg2: memref<1x16x544xbf16, #tpu.memory_space<vmem>>, %arg3: memref<544x128xbf16, #tpu.memory_space<vmem>>, %arg4: memref<1x128xf32, #tpu.memory_space<vmem>>, %arg5: memref<1x16x128xbf16, #tpu.memory_space<vmem>>, %arg6: memref<16x128xf32, #tpu.memory_space<vmem>>) attributes {dimension_semantics = [#tpu.dimension_semantics<parallel>, #tpu.dimension_semantics<arbitrary>], iteration_bounds = array<i64: 2, 1>, scalar_prefetch = 0 : i64, scratch_operands = 1 : i64, tpu.core_type = #tpu.core_type<tc>, window_params = [{transform_indices = @transform_0, window_bounds = array<i64: 1, 16, 544>}, {transform_indices = @transform_1, window_bounds = array<i64: 544, 128>}, {pipeline_mode = #tpu.pipeline_mode<synchronous>, transform_indices = @transform_2, window_bounds = array<i64: 1, 128>}, {transform_indices = @transform_3, window_bounds = array<i64: 1, 16, 128>}]} {
    %c0_i32 = arith.constant 0 : i32
    %0 = arith.cmpi eq, %arg1, %c0_i32 : i32
    %1 = arith.extui %0 : i1 to i32
    %c0_i32_0 = arith.constant 0 : i32
    %2 = arith.cmpi ne, %1, %c0_i32_0 : i32
    scf.if %2 {
      %cst_11 = arith.constant 0.000000e+00 : f32
      %13 = vector.broadcast %cst_11 : f32 to vector<16x128xf32>
      %c0_12 = arith.constant 0 : index
      %c0_13 = arith.constant 0 : index
      %14 = vector.load %arg6[%c0_12, %c0_13] : memref<16x128xf32, #tpu.memory_space<vmem>>, vector<16x128xf32>
      tpu.vector_store %arg6[%c0_12, %c0_13], %13 {strides = array<i32>} : memref<16x128xf32, #tpu.memory_space<vmem>>, vector<16x128xf32>,
    } else {
    }
    %c0 = arith.constant 0 : index
    %c0_1 = arith.constant 0 : index
    %3 = vector.load %arg6[%c0, %c0_1] : memref<16x128xf32, #tpu.memory_space<vmem>>, vector<16x128xf32>
    %c0_2 = arith.constant 0 : index
    %c0_3 = arith.constant 0 : index
    %c0_4 = arith.constant 0 : index
    %4 = vector.load %arg2[%c0_2, %c0_3, %c0_4] : memref<1x16x544xbf16, #tpu.memory_space<vmem>>, vector<1x16x544xbf16>
    %5 = vector.shape_cast %4 : vector<1x16x544xbf16> to vector<16x544xbf16>
    %c0_5 = arith.constant 0 : index
    %c0_6 = arith.constant 0 : index
    %6 = vector.load %arg3[%c0_5, %c0_6] : memref<544x128xbf16, #tpu.memory_space<vmem>>, vector<544x128xbf16>
    %cst = arith.constant dense<0.000000e+00> : vector<16x128xf32>
    %7 = tpu.matmul %5, %6, %cst {dimension_numbers = #tpu.dot_dimension_numbers<[1], [0], [0], [1], [0, 0, 1, 1], [], []>} : vector<16x544xbf16>, vector<544x128xbf16>, vector<16x128xf32> -> vector<16x128xf32>
    %8 = arith.addf %3, %7 : vector<16x128xf32>
    %c0_7 = arith.constant 0 : index
    %c0_8 = arith.constant 0 : index
    %9 = vector.load %arg6[%c0_7, %c0_8] : memref<16x128xf32, #tpu.memory_space<vmem>>, vector<16x128xf32>
    tpu.vector_store %arg6[%c0_7, %c0_8], %8 {strides = array<i32>} : memref<16x128xf32, #tpu.memory_space<vmem>>, vector<16x128xf32>,
    %c0_i32_9 = arith.constant 0 : i32
    %10 = arith.cmpi eq, %arg1, %c0_i32_9 : i32
    %11 = arith.extui %10 : i1 to i32
    %c0_i32_10 = arith.constant 0 : i32
    %12 = arith.cmpi ne, %11, %c0_i32_10 : i32
    scf.if %12 {
      %c0_11 = arith.constant 0 : index
      %c0_12 = arith.constant 0 : index
      %13 = vector.load %arg6[%c0_11, %c0_12] : memref<16x128xf32, #tpu.memory_space<vmem>>, vector<16x128xf32>
      %c0_13 = arith.constant 0 : index
      %c0_14 = arith.constant 0 : index
      %14 = vector.load %arg4[%c0_13, %c0_14] : memref<1x128xf32, #tpu.memory_space<vmem>>, vector<1x128xf32>
      %15 = vector.broadcast %14 : vector<1x128xf32> to vector<16x128xf32>
      %16 = arith.addf %13, %15 : vector<16x128xf32>
      %cst_15 = arith.constant dense<0.000000e+00> : vector<128xf32>
      %17 = vector.multi_reduction <add>, %16, %cst_15 [0] : vector<16x128xf32> to vector<128xf32>
      %18 = vector.shape_cast %17 : vector<128xf32> to vector<1x128xf32>
      %cst_16 = arith.constant 6.250000e-02 : f32
      %19 = vector.broadcast %cst_16 : f32 to vector<1x128xf32>
      %20 = arith.mulf %18, %19 : vector<1x128xf32>
      %21 = arith.mulf %16, %16 : vector<16x128xf32>
      %cst_17 = arith.constant dense<0.000000e+00> : vector<128xf32>
      %22 = vector.multi_reduction <add>, %21, %cst_17 [0] : vector<16x128xf32> to vector<128xf32>
      %23 = vector.shape_cast %22 : vector<128xf32> to vector<1x128xf32>
      %cst_18 = arith.constant 6.250000e-02 : f32
      %24 = vector.broadcast %cst_18 : f32 to vector<1x128xf32>
      %25 = arith.mulf %23, %24 : vector<1x128xf32>
      %26 = arith.mulf %20, %20 : vector<1x128xf32>
      %27 = arith.subf %25, %26 : vector<1x128xf32>
      %28 = vector.broadcast %20 : vector<1x128xf32> to vector<16x128xf32>
      %29 = arith.subf %16, %28 : vector<16x128xf32>
      %cst_19 = arith.constant 0.000000e+00 : f32
      %30 = vector.broadcast %cst_19 : f32 to vector<1x128xf32>
      %31 = arith.maximumf %27, %30 : vector<1x128xf32>
      %cst_20 = arith.constant 9.99999974E-6 : f32
      %32 = vector.broadcast %cst_20 : f32 to vector<1x128xf32>
      %33 = arith.addf %31, %32 : vector<1x128xf32>
      %34 = math.rsqrt %33 : vector<1x128xf32>
      %35 = vector.broadcast %34 : vector<1x128xf32> to vector<16x128xf32>
      %36 = arith.mulf %29, %35 : vector<16x128xf32>
      %cst_21 = arith.constant 0.000000e+00 : f32
      %37 = vector.broadcast %cst_21 : f32 to vector<16x128xf32>
      %38 = arith.maximumf %36, %37 : vector<16x128xf32>
      %39 = arith.truncf %38 : vector<16x128xf32> to vector<16x128xbf16>
      %c0_22 = arith.constant 0 : index
      %c0_23 = arith.constant 0 : index
      %c0_24 = arith.constant 0 : index
      %40 = vector.load %arg5[%c0_22, %c0_23, %c0_24] : memref<1x16x128xbf16, #tpu.memory_space<vmem>>, vector<1x16x128xbf16>
      %41 = vector.shape_cast %40 : vector<1x16x128xbf16> to vector<16x128xbf16>
      %42 = vector.shape_cast %39 : vector<16x128xbf16> to vector<1x16x128xbf16>
      tpu.vector_store %arg5[%c0_22, %c0_23, %c0_24], %42 {strides = array<i32>} : memref<1x16x128xbf16, #tpu.memory_space<vmem>>, vector<1x16x128xbf16>,
    } else {
    }
    return
  }
  func.func @transform_0(%arg0: i32, %arg1: i32) -> (i32, i32, i32) {
    %c0_i32 = arith.constant 0 : i32
    %c0_i32_0 = arith.constant 0 : i32
    return %arg0, %c0_i32, %arg1 : i32, i32, i32
  }
  func.func @transform_1(%arg0: i32, %arg1: i32) -> (i32, i32) {
    %c0_i32 = arith.constant 0 : i32
    %c0_i32_0 = arith.constant 0 : i32
    return %arg1, %c0_i32 : i32, i32
  }
  func.func @transform_2(%arg0: i32, %arg1: i32) -> (i32, i32) {
    %c0_i32 = arith.constant 0 : i32
    %c0_i32_0 = arith.constant 0 : i32
    %c0_i32_1 = arith.constant 0 : i32
    return %c0_i32, %c0_i32_0 : i32, i32
  }
  func.func @transform_3(%arg0: i32, %arg1: i32) -> (i32, i32, i32) {
    %c0_i32 = arith.constant 0 : i32
    %c0_i32_0 = arith.constant 0 : i32
    %c0_i32_1 = arith.constant 0 : i32
    return %arg0, %c0_i32, %c0_i32_0 : i32, i32, i32
  }
}

module attributes {stable_mosaic.version = 11 : i64} {
  func.func @_matmul_in_res_kernel(%arg0: i32, %arg1: i32, %arg2: memref<1x16x576xbf16, #tpu.memory_space<vmem>>, %arg3: memref<576x128xbf16, #tpu.memory_space<vmem>>, %arg4: memref<1x128xf32, #tpu.memory_space<vmem>>, %arg5: memref<1x16x128xbf16, #tpu.memory_space<vmem>>, %arg6: memref<1x16x128xbf16, #tpu.memory_space<vmem>>, %arg7: memref<16x128xf32, #tpu.memory_space<vmem>>) attributes {dimension_semantics = [#tpu.dimension_semantics<parallel>, #tpu.dimension_semantics<arbitrary>], iteration_bounds = array<i64: 2, 1>, scalar_prefetch = 0 : i64, scratch_operands = 1 : i64, tpu.core_type = #tpu.core_type<tc>, window_params = [{transform_indices = @transform_0, window_bounds = array<i64: 1, 16, 576>}, {transform_indices = @transform_1, window_bounds = array<i64: 576, 128>}, {pipeline_mode = #tpu.pipeline_mode<synchronous>, transform_indices = @transform_2, window_bounds = array<i64: 1, 128>}, {transform_indices = @transform_3, window_bounds = array<i64: 1, 16, 128>}, {transform_indices = @transform_4, window_bounds = array<i64: 1, 16, 128>}]} {
    %c0_i32 = arith.constant 0 : i32
    %0 = arith.cmpi eq, %arg1, %c0_i32 : i32
    %1 = arith.extui %0 : i1 to i32
    %c0_i32_0 = arith.constant 0 : i32
    %2 = arith.cmpi ne, %1, %c0_i32_0 : i32
    scf.if %2 {
      %cst_11 = arith.constant 0.000000e+00 : f32
      %13 = vector.broadcast %cst_11 : f32 to vector<16x128xf32>
      %c0_12 = arith.constant 0 : index
      %c0_13 = arith.constant 0 : index
      %14 = vector.load %arg7[%c0_12, %c0_13] : memref<16x128xf32, #tpu.memory_space<vmem>>, vector<16x128xf32>
      tpu.vector_store %arg7[%c0_12, %c0_13], %13 {strides = array<i32>} : memref<16x128xf32, #tpu.memory_space<vmem>>, vector<16x128xf32>,
    } else {
    }
    %c0 = arith.constant 0 : index
    %c0_1 = arith.constant 0 : index
    %3 = vector.load %arg7[%c0, %c0_1] : memref<16x128xf32, #tpu.memory_space<vmem>>, vector<16x128xf32>
    %c0_2 = arith.constant 0 : index
    %c0_3 = arith.constant 0 : index
    %c0_4 = arith.constant 0 : index
    %4 = vector.load %arg2[%c0_2, %c0_3, %c0_4] : memref<1x16x576xbf16, #tpu.memory_space<vmem>>, vector<1x16x576xbf16>
    %5 = vector.shape_cast %4 : vector<1x16x576xbf16> to vector<16x576xbf16>
    %c0_5 = arith.constant 0 : index
    %c0_6 = arith.constant 0 : index
    %6 = vector.load %arg3[%c0_5, %c0_6] : memref<576x128xbf16, #tpu.memory_space<vmem>>, vector<576x128xbf16>
    %cst = arith.constant dense<0.000000e+00> : vector<16x128xf32>
    %7 = tpu.matmul %5, %6, %cst {dimension_numbers = #tpu.dot_dimension_numbers<[1], [0], [0], [1], [0, 0, 1, 1], [], []>} : vector<16x576xbf16>, vector<576x128xbf16>, vector<16x128xf32> -> vector<16x128xf32>
    %8 = arith.addf %3, %7 : vector<16x128xf32>
    %c0_7 = arith.constant 0 : index
    %c0_8 = arith.constant 0 : index
    %9 = vector.load %arg7[%c0_7, %c0_8] : memref<16x128xf32, #tpu.memory_space<vmem>>, vector<16x128xf32>
    tpu.vector_store %arg7[%c0_7, %c0_8], %8 {strides = array<i32>} : memref<16x128xf32, #tpu.memory_space<vmem>>, vector<16x128xf32>,
    %c0_i32_9 = arith.constant 0 : i32
    %10 = arith.cmpi eq, %arg1, %c0_i32_9 : i32
    %11 = arith.extui %10 : i1 to i32
    %c0_i32_10 = arith.constant 0 : i32
    %12 = arith.cmpi ne, %11, %c0_i32_10 : i32
    scf.if %12 {
      %c0_11 = arith.constant 0 : index
      %c0_12 = arith.constant 0 : index
      %13 = vector.load %arg7[%c0_11, %c0_12] : memref<16x128xf32, #tpu.memory_space<vmem>>, vector<16x128xf32>
      %c0_13 = arith.constant 0 : index
      %c0_14 = arith.constant 0 : index
      %14 = vector.load %arg4[%c0_13, %c0_14] : memref<1x128xf32, #tpu.memory_space<vmem>>, vector<1x128xf32>
      %15 = vector.broadcast %14 : vector<1x128xf32> to vector<16x128xf32>
      %16 = arith.addf %13, %15 : vector<16x128xf32>
      %cst_15 = arith.constant dense<0.000000e+00> : vector<128xf32>
      %17 = vector.multi_reduction <add>, %16, %cst_15 [0] : vector<16x128xf32> to vector<128xf32>
      %18 = vector.shape_cast %17 : vector<128xf32> to vector<1x128xf32>
      %cst_16 = arith.constant 6.250000e-02 : f32
      %19 = vector.broadcast %cst_16 : f32 to vector<1x128xf32>
      %20 = arith.mulf %18, %19 : vector<1x128xf32>
      %21 = arith.mulf %16, %16 : vector<16x128xf32>
      %cst_17 = arith.constant dense<0.000000e+00> : vector<128xf32>
      %22 = vector.multi_reduction <add>, %21, %cst_17 [0] : vector<16x128xf32> to vector<128xf32>
      %23 = vector.shape_cast %22 : vector<128xf32> to vector<1x128xf32>
      %cst_18 = arith.constant 6.250000e-02 : f32
      %24 = vector.broadcast %cst_18 : f32 to vector<1x128xf32>
      %25 = arith.mulf %23, %24 : vector<1x128xf32>
      %26 = arith.mulf %20, %20 : vector<1x128xf32>
      %27 = arith.subf %25, %26 : vector<1x128xf32>
      %c0_19 = arith.constant 0 : index
      %c0_20 = arith.constant 0 : index
      %c0_21 = arith.constant 0 : index
      %28 = vector.load %arg5[%c0_19, %c0_20, %c0_21] : memref<1x16x128xbf16, #tpu.memory_space<vmem>>, vector<1x16x128xbf16>
      %29 = vector.shape_cast %28 : vector<1x16x128xbf16> to vector<16x128xbf16>
      %30 = arith.extf %29 : vector<16x128xbf16> to vector<16x128xf32>
      %31 = vector.broadcast %20 : vector<1x128xf32> to vector<16x128xf32>
      %32 = arith.subf %16, %31 : vector<16x128xf32>
      %cst_22 = arith.constant 0.000000e+00 : f32
      %33 = vector.broadcast %cst_22 : f32 to vector<1x128xf32>
      %34 = arith.maximumf %27, %33 : vector<1x128xf32>
      %cst_23 = arith.constant 9.99999974E-6 : f32
      %35 = vector.broadcast %cst_23 : f32 to vector<1x128xf32>
      %36 = arith.addf %34, %35 : vector<1x128xf32>
      %37 = math.rsqrt %36 : vector<1x128xf32>
      %38 = vector.broadcast %37 : vector<1x128xf32> to vector<16x128xf32>
      %39 = arith.mulf %32, %38 : vector<16x128xf32>
      %40 = arith.addf %30, %39 : vector<16x128xf32>
      %41 = arith.truncf %40 : vector<16x128xf32> to vector<16x128xbf16>
      %c0_24 = arith.constant 0 : index
      %c0_25 = arith.constant 0 : index
      %c0_26 = arith.constant 0 : index
      %42 = vector.load %arg6[%c0_24, %c0_25, %c0_26] : memref<1x16x128xbf16, #tpu.memory_space<vmem>>, vector<1x16x128xbf16>
      %43 = vector.shape_cast %42 : vector<1x16x128xbf16> to vector<16x128xbf16>
      %44 = vector.shape_cast %41 : vector<16x128xbf16> to vector<1x16x128xbf16>
      tpu.vector_store %arg6[%c0_24, %c0_25, %c0_26], %44 {strides = array<i32>} : memref<1x16x128xbf16, #tpu.memory_space<vmem>>, vector<1x16x128xbf16>,
    } else {
    }
    return
  }
  func.func @transform_0(%arg0: i32, %arg1: i32) -> (i32, i32, i32) {
    %c0_i32 = arith.constant 0 : i32
    %c0_i32_0 = arith.constant 0 : i32
    return %arg0, %c0_i32, %arg1 : i32, i32, i32
  }
  func.func @transform_1(%arg0: i32, %arg1: i32) -> (i32, i32) {
    %c0_i32 = arith.constant 0 : i32
    %c0_i32_0 = arith.constant 0 : i32
    return %arg1, %c0_i32 : i32, i32
  }
  func.func @transform_2(%arg0: i32, %arg1: i32) -> (i32, i32) {
    %c0_i32 = arith.constant 0 : i32
    %c0_i32_0 = arith.constant 0 : i32
    %c0_i32_1 = arith.constant 0 : i32
    return %c0_i32, %c0_i32_0 : i32, i32
  }
  func.func @transform_3(%arg0: i32, %arg1: i32) -> (i32, i32, i32) {
    %c0_i32 = arith.constant 0 : i32
    %c0_i32_0 = arith.constant 0 : i32
    %c0_i32_1 = arith.constant 0 : i32
    return %arg0, %c0_i32, %c0_i32_0 : i32, i32, i32
  }
  func.func @transform_4(%arg0: i32, %arg1: i32) -> (i32, i32, i32) {
    %c0_i32 = arith.constant 0 : i32
    %c0_i32_0 = arith.constant 0 : i32
    %c0_i32_1 = arith.constant 0 : i32
    return %arg0, %c0_i32, %c0_i32_0 : i32, i32, i32
  }
}

module attributes {stable_mosaic.version = 11 : i64} {
  func.func @_matmul_bias_kernel(%arg0: i32, %arg1: i32, %arg2: memref<32x128xbf16, #tpu.memory_space<vmem>>, %arg3: memref<128x128xbf16, #tpu.memory_space<vmem>>, %arg4: memref<1x128xf32, #tpu.memory_space<vmem>>, %arg5: memref<32x128xbf16, #tpu.memory_space<vmem>>, %arg6: memref<32x128xf32, #tpu.memory_space<vmem>>) attributes {dimension_semantics = [#tpu.dimension_semantics<parallel>, #tpu.dimension_semantics<arbitrary>], iteration_bounds = array<i64: 1, 1>, scalar_prefetch = 0 : i64, scratch_operands = 1 : i64, tpu.core_type = #tpu.core_type<tc>, window_params = [{transform_indices = @transform_0, window_bounds = array<i64: 32, 128>}, {transform_indices = @transform_1, window_bounds = array<i64: 128, 128>}, {pipeline_mode = #tpu.pipeline_mode<synchronous>, transform_indices = @transform_2, window_bounds = array<i64: 1, 128>}, {transform_indices = @transform_3, window_bounds = array<i64: 32, 128>}]} {
    %c0_i32 = arith.constant 0 : i32
    %0 = arith.cmpi eq, %arg1, %c0_i32 : i32
    %1 = arith.extui %0 : i1 to i32
    %c0_i32_0 = arith.constant 0 : i32
    %2 = arith.cmpi ne, %1, %c0_i32_0 : i32
    scf.if %2 {
      %cst_10 = arith.constant 0.000000e+00 : f32
      %12 = vector.broadcast %cst_10 : f32 to vector<32x128xf32>
      %c0_11 = arith.constant 0 : index
      %c0_12 = arith.constant 0 : index
      %13 = vector.load %arg6[%c0_11, %c0_12] : memref<32x128xf32, #tpu.memory_space<vmem>>, vector<32x128xf32>
      tpu.vector_store %arg6[%c0_11, %c0_12], %12 {strides = array<i32>} : memref<32x128xf32, #tpu.memory_space<vmem>>, vector<32x128xf32>,
    } else {
    }
    %c0 = arith.constant 0 : index
    %c0_1 = arith.constant 0 : index
    %3 = vector.load %arg6[%c0, %c0_1] : memref<32x128xf32, #tpu.memory_space<vmem>>, vector<32x128xf32>
    %c0_2 = arith.constant 0 : index
    %c0_3 = arith.constant 0 : index
    %4 = vector.load %arg2[%c0_2, %c0_3] : memref<32x128xbf16, #tpu.memory_space<vmem>>, vector<32x128xbf16>
    %c0_4 = arith.constant 0 : index
    %c0_5 = arith.constant 0 : index
    %5 = vector.load %arg3[%c0_4, %c0_5] : memref<128x128xbf16, #tpu.memory_space<vmem>>, vector<128x128xbf16>
    %cst = arith.constant dense<0.000000e+00> : vector<32x128xf32>
    %6 = tpu.matmul %4, %5, %cst {dimension_numbers = #tpu.dot_dimension_numbers<[1], [0], [0], [1], [0, 0, 1, 1], [], []>} : vector<32x128xbf16>, vector<128x128xbf16>, vector<32x128xf32> -> vector<32x128xf32>
    %7 = arith.addf %3, %6 : vector<32x128xf32>
    %c0_6 = arith.constant 0 : index
    %c0_7 = arith.constant 0 : index
    %8 = vector.load %arg6[%c0_6, %c0_7] : memref<32x128xf32, #tpu.memory_space<vmem>>, vector<32x128xf32>
    tpu.vector_store %arg6[%c0_6, %c0_7], %7 {strides = array<i32>} : memref<32x128xf32, #tpu.memory_space<vmem>>, vector<32x128xf32>,
    %c0_i32_8 = arith.constant 0 : i32
    %9 = arith.cmpi eq, %arg1, %c0_i32_8 : i32
    %10 = arith.extui %9 : i1 to i32
    %c0_i32_9 = arith.constant 0 : i32
    %11 = arith.cmpi ne, %10, %c0_i32_9 : i32
    scf.if %11 {
      %c0_10 = arith.constant 0 : index
      %c0_11 = arith.constant 0 : index
      %12 = vector.load %arg6[%c0_10, %c0_11] : memref<32x128xf32, #tpu.memory_space<vmem>>, vector<32x128xf32>
      %c0_12 = arith.constant 0 : index
      %c0_13 = arith.constant 0 : index
      %13 = vector.load %arg4[%c0_12, %c0_13] : memref<1x128xf32, #tpu.memory_space<vmem>>, vector<1x128xf32>
      %14 = vector.broadcast %13 : vector<1x128xf32> to vector<32x128xf32>
      %15 = arith.addf %12, %14 : vector<32x128xf32>
      %16 = arith.truncf %15 : vector<32x128xf32> to vector<32x128xbf16>
      %c0_14 = arith.constant 0 : index
      %c0_15 = arith.constant 0 : index
      %17 = vector.load %arg5[%c0_14, %c0_15] : memref<32x128xbf16, #tpu.memory_space<vmem>>, vector<32x128xbf16>
      tpu.vector_store %arg5[%c0_14, %c0_15], %16 {strides = array<i32>} : memref<32x128xbf16, #tpu.memory_space<vmem>>, vector<32x128xbf16>,
    } else {
    }
    return
  }
  func.func @transform_0(%arg0: i32, %arg1: i32) -> (i32, i32) {
    %c0_i32 = arith.constant 0 : i32
    return %arg0, %arg1 : i32, i32
  }
  func.func @transform_1(%arg0: i32, %arg1: i32) -> (i32, i32) {
    %c0_i32 = arith.constant 0 : i32
    %c0_i32_0 = arith.constant 0 : i32
    return %arg1, %c0_i32 : i32, i32
  }
  func.func @transform_2(%arg0: i32, %arg1: i32) -> (i32, i32) {
    %c0_i32 = arith.constant 0 : i32
    %c0_i32_0 = arith.constant 0 : i32
    %c0_i32_1 = arith.constant 0 : i32
    return %c0_i32, %c0_i32_0 : i32, i32
  }
  func.func @transform_3(%arg0: i32, %arg1: i32) -> (i32, i32) {
    %c0_i32 = arith.constant 0 : i32
    %c0_i32_0 = arith.constant 0 : i32
    return %arg0, %c0_i32 : i32, i32
  }
}

module attributes {stable_mosaic.version = 11 : i64} {
  func.func @_instance_norm_kernel(%arg0: i32, %arg1: memref<1x64x16xbf16, #tpu.memory_space<vmem>>, %arg2: memref<1x64x16xbf16, #tpu.memory_space<vmem>>) attributes {dimension_semantics = [#tpu.dimension_semantics<parallel>], iteration_bounds = array<i64: 2>, scalar_prefetch = 0 : i64, scratch_operands = 0 : i64, tpu.core_type = #tpu.core_type<tc>, window_params = [{transform_indices = @transform_0, window_bounds = array<i64: 1, 64, 16>}, {transform_indices = @transform_1, window_bounds = array<i64: 1, 64, 16>}]} {
    %c0 = arith.constant 0 : index
    %c0_0 = arith.constant 0 : index
    %c0_1 = arith.constant 0 : index
    %0 = vector.load %arg1[%c0, %c0_0, %c0_1] : memref<1x64x16xbf16, #tpu.memory_space<vmem>>, vector<1x64x16xbf16>
    %1 = arith.extf %0 : vector<1x64x16xbf16> to vector<1x64x16xf32>
    %cst = arith.constant dense<0.000000e+00> : vector<1x16xf32>
    %2 = vector.multi_reduction <add>, %1, %cst [1] : vector<1x64x16xf32> to vector<1x16xf32>
    %3 = vector.shape_cast %2 : vector<1x16xf32> to vector<1x1x16xf32>
    %cst_2 = arith.constant 1.562500e-02 : f32
    %4 = vector.broadcast %cst_2 : f32 to vector<1x1x16xf32>
    %5 = arith.mulf %3, %4 : vector<1x1x16xf32>
    %6 = arith.mulf %1, %1 : vector<1x64x16xf32>
    %cst_3 = arith.constant dense<0.000000e+00> : vector<1x16xf32>
    %7 = vector.multi_reduction <add>, %6, %cst_3 [1] : vector<1x64x16xf32> to vector<1x16xf32>
    %8 = vector.shape_cast %7 : vector<1x16xf32> to vector<1x1x16xf32>
    %cst_4 = arith.constant 1.562500e-02 : f32
    %9 = vector.broadcast %cst_4 : f32 to vector<1x1x16xf32>
    %10 = arith.mulf %8, %9 : vector<1x1x16xf32>
    %11 = arith.mulf %5, %5 : vector<1x1x16xf32>
    %12 = arith.subf %10, %11 : vector<1x1x16xf32>
    %13 = vector.broadcast %5 : vector<1x1x16xf32> to vector<1x64x16xf32>
    %14 = arith.subf %1, %13 : vector<1x64x16xf32>
    %cst_5 = arith.constant 0.000000e+00 : f32
    %15 = vector.broadcast %cst_5 : f32 to vector<1x1x16xf32>
    %16 = arith.maximumf %12, %15 : vector<1x1x16xf32>
    %cst_6 = arith.constant 9.99999974E-6 : f32
    %17 = vector.broadcast %cst_6 : f32 to vector<1x1x16xf32>
    %18 = arith.addf %16, %17 : vector<1x1x16xf32>
    %19 = math.rsqrt %18 : vector<1x1x16xf32>
    %20 = vector.broadcast %19 : vector<1x1x16xf32> to vector<1x64x16xf32>
    %21 = arith.mulf %14, %20 : vector<1x64x16xf32>
    %cst_7 = arith.constant 0.000000e+00 : f32
    %22 = vector.broadcast %cst_7 : f32 to vector<1x64x16xf32>
    %23 = arith.maximumf %21, %22 : vector<1x64x16xf32>
    %24 = arith.truncf %23 : vector<1x64x16xf32> to vector<1x64x16xbf16>
    %c0_8 = arith.constant 0 : index
    %c0_9 = arith.constant 0 : index
    %c0_10 = arith.constant 0 : index
    %25 = vector.load %arg2[%c0_8, %c0_9, %c0_10] : memref<1x64x16xbf16, #tpu.memory_space<vmem>>, vector<1x64x16xbf16>
    tpu.vector_store %arg2[%c0_8, %c0_9, %c0_10], %24 {strides = array<i32>} : memref<1x64x16xbf16, #tpu.memory_space<vmem>>, vector<1x64x16xbf16>,
    return
  }
  func.func @transform_0(%arg0: i32) -> (i32, i32, i32) {
    %c0_i32 = arith.constant 0 : i32
    %c0_i32_0 = arith.constant 0 : i32
    %c0_i32_1 = arith.constant 0 : i32
    return %arg0, %c0_i32, %c0_i32_0 : i32, i32, i32
  }
  func.func @transform_1(%arg0: i32) -> (i32, i32, i32) {
    %c0_i32 = arith.constant 0 : i32
    %c0_i32_0 = arith.constant 0 : i32
    %c0_i32_1 = arith.constant 0 : i32
    return %arg0, %c0_i32, %c0_i32_0 : i32, i32, i32
  }
}

module attributes {stable_mosaic.version = 11 : i64} {
  func.func @_matmul_bias_kernel(%arg0: i32, %arg1: i32, %arg2: memref<128x64xbf16, #tpu.memory_space<vmem>>, %arg3: memref<64x128xbf16, #tpu.memory_space<vmem>>, %arg4: memref<1x128xf32, #tpu.memory_space<vmem>>, %arg5: memref<128x128xbf16, #tpu.memory_space<vmem>>, %arg6: memref<128x128xf32, #tpu.memory_space<vmem>>) attributes {dimension_semantics = [#tpu.dimension_semantics<parallel>, #tpu.dimension_semantics<arbitrary>], iteration_bounds = array<i64: 1, 1>, scalar_prefetch = 0 : i64, scratch_operands = 1 : i64, tpu.core_type = #tpu.core_type<tc>, window_params = [{transform_indices = @transform_0, window_bounds = array<i64: 128, 64>}, {transform_indices = @transform_1, window_bounds = array<i64: 64, 128>}, {pipeline_mode = #tpu.pipeline_mode<synchronous>, transform_indices = @transform_2, window_bounds = array<i64: 1, 128>}, {transform_indices = @transform_3, window_bounds = array<i64: 128, 128>}]} {
    %c0_i32 = arith.constant 0 : i32
    %0 = arith.cmpi eq, %arg1, %c0_i32 : i32
    %1 = arith.extui %0 : i1 to i32
    %c0_i32_0 = arith.constant 0 : i32
    %2 = arith.cmpi ne, %1, %c0_i32_0 : i32
    scf.if %2 {
      %cst_10 = arith.constant 0.000000e+00 : f32
      %12 = vector.broadcast %cst_10 : f32 to vector<128x128xf32>
      %c0_11 = arith.constant 0 : index
      %c0_12 = arith.constant 0 : index
      %13 = vector.load %arg6[%c0_11, %c0_12] : memref<128x128xf32, #tpu.memory_space<vmem>>, vector<128x128xf32>
      tpu.vector_store %arg6[%c0_11, %c0_12], %12 {strides = array<i32>} : memref<128x128xf32, #tpu.memory_space<vmem>>, vector<128x128xf32>,
    } else {
    }
    %c0 = arith.constant 0 : index
    %c0_1 = arith.constant 0 : index
    %3 = vector.load %arg6[%c0, %c0_1] : memref<128x128xf32, #tpu.memory_space<vmem>>, vector<128x128xf32>
    %c0_2 = arith.constant 0 : index
    %c0_3 = arith.constant 0 : index
    %4 = vector.load %arg2[%c0_2, %c0_3] : memref<128x64xbf16, #tpu.memory_space<vmem>>, vector<128x64xbf16>
    %c0_4 = arith.constant 0 : index
    %c0_5 = arith.constant 0 : index
    %5 = vector.load %arg3[%c0_4, %c0_5] : memref<64x128xbf16, #tpu.memory_space<vmem>>, vector<64x128xbf16>
    %cst = arith.constant dense<0.000000e+00> : vector<128x128xf32>
    %6 = tpu.matmul %4, %5, %cst {dimension_numbers = #tpu.dot_dimension_numbers<[1], [0], [0], [1], [0, 0, 1, 1], [], []>} : vector<128x64xbf16>, vector<64x128xbf16>, vector<128x128xf32> -> vector<128x128xf32>
    %7 = arith.addf %3, %6 : vector<128x128xf32>
    %c0_6 = arith.constant 0 : index
    %c0_7 = arith.constant 0 : index
    %8 = vector.load %arg6[%c0_6, %c0_7] : memref<128x128xf32, #tpu.memory_space<vmem>>, vector<128x128xf32>
    tpu.vector_store %arg6[%c0_6, %c0_7], %7 {strides = array<i32>} : memref<128x128xf32, #tpu.memory_space<vmem>>, vector<128x128xf32>,
    %c0_i32_8 = arith.constant 0 : i32
    %9 = arith.cmpi eq, %arg1, %c0_i32_8 : i32
    %10 = arith.extui %9 : i1 to i32
    %c0_i32_9 = arith.constant 0 : i32
    %11 = arith.cmpi ne, %10, %c0_i32_9 : i32
    scf.if %11 {
      %c0_10 = arith.constant 0 : index
      %c0_11 = arith.constant 0 : index
      %12 = vector.load %arg6[%c0_10, %c0_11] : memref<128x128xf32, #tpu.memory_space<vmem>>, vector<128x128xf32>
      %c0_12 = arith.constant 0 : index
      %c0_13 = arith.constant 0 : index
      %13 = vector.load %arg4[%c0_12, %c0_13] : memref<1x128xf32, #tpu.memory_space<vmem>>, vector<1x128xf32>
      %14 = vector.broadcast %13 : vector<1x128xf32> to vector<128x128xf32>
      %15 = arith.addf %12, %14 : vector<128x128xf32>
      %16 = arith.truncf %15 : vector<128x128xf32> to vector<128x128xbf16>
      %c0_14 = arith.constant 0 : index
      %c0_15 = arith.constant 0 : index
      %17 = vector.load %arg5[%c0_14, %c0_15] : memref<128x128xbf16, #tpu.memory_space<vmem>>, vector<128x128xbf16>
      tpu.vector_store %arg5[%c0_14, %c0_15], %16 {strides = array<i32>} : memref<128x128xbf16, #tpu.memory_space<vmem>>, vector<128x128xbf16>,
    } else {
    }
    return
  }
  func.func @transform_0(%arg0: i32, %arg1: i32) -> (i32, i32) {
    %c0_i32 = arith.constant 0 : i32
    return %arg0, %arg1 : i32, i32
  }
  func.func @transform_1(%arg0: i32, %arg1: i32) -> (i32, i32) {
    %c0_i32 = arith.constant 0 : i32
    %c0_i32_0 = arith.constant 0 : i32
    return %arg1, %c0_i32 : i32, i32
  }
  func.func @transform_2(%arg0: i32, %arg1: i32) -> (i32, i32) {
    %c0_i32 = arith.constant 0 : i32
    %c0_i32_0 = arith.constant 0 : i32
    %c0_i32_1 = arith.constant 0 : i32
    return %c0_i32, %c0_i32_0 : i32, i32
  }
  func.func @transform_3(%arg0: i32, %arg1: i32) -> (i32, i32) {
    %c0_i32 = arith.constant 0 : i32
    %c0_i32_0 = arith.constant 0 : i32
    return %arg0, %c0_i32 : i32, i32
  }
}

module attributes {stable_mosaic.version = 11 : i64} {
  func.func @_instance_norm_kernel(%arg0: i32, %arg1: memref<1x256x8xbf16, #tpu.memory_space<vmem>>, %arg2: memref<1x256x8xbf16, #tpu.memory_space<vmem>>) attributes {dimension_semantics = [#tpu.dimension_semantics<parallel>], iteration_bounds = array<i64: 2>, scalar_prefetch = 0 : i64, scratch_operands = 0 : i64, tpu.core_type = #tpu.core_type<tc>, window_params = [{transform_indices = @transform_0, window_bounds = array<i64: 1, 256, 8>}, {transform_indices = @transform_1, window_bounds = array<i64: 1, 256, 8>}]} {
    %c0 = arith.constant 0 : index
    %c0_0 = arith.constant 0 : index
    %c0_1 = arith.constant 0 : index
    %0 = vector.load %arg1[%c0, %c0_0, %c0_1] : memref<1x256x8xbf16, #tpu.memory_space<vmem>>, vector<1x256x8xbf16>
    %1 = arith.extf %0 : vector<1x256x8xbf16> to vector<1x256x8xf32>
    %cst = arith.constant dense<0.000000e+00> : vector<1x8xf32>
    %2 = vector.multi_reduction <add>, %1, %cst [1] : vector<1x256x8xf32> to vector<1x8xf32>
    %3 = vector.shape_cast %2 : vector<1x8xf32> to vector<1x1x8xf32>
    %cst_2 = arith.constant 3.906250e-03 : f32
    %4 = vector.broadcast %cst_2 : f32 to vector<1x1x8xf32>
    %5 = arith.mulf %3, %4 : vector<1x1x8xf32>
    %6 = arith.mulf %1, %1 : vector<1x256x8xf32>
    %cst_3 = arith.constant dense<0.000000e+00> : vector<1x8xf32>
    %7 = vector.multi_reduction <add>, %6, %cst_3 [1] : vector<1x256x8xf32> to vector<1x8xf32>
    %8 = vector.shape_cast %7 : vector<1x8xf32> to vector<1x1x8xf32>
    %cst_4 = arith.constant 3.906250e-03 : f32
    %9 = vector.broadcast %cst_4 : f32 to vector<1x1x8xf32>
    %10 = arith.mulf %8, %9 : vector<1x1x8xf32>
    %11 = arith.mulf %5, %5 : vector<1x1x8xf32>
    %12 = arith.subf %10, %11 : vector<1x1x8xf32>
    %13 = vector.broadcast %5 : vector<1x1x8xf32> to vector<1x256x8xf32>
    %14 = arith.subf %1, %13 : vector<1x256x8xf32>
    %cst_5 = arith.constant 0.000000e+00 : f32
    %15 = vector.broadcast %cst_5 : f32 to vector<1x1x8xf32>
    %16 = arith.maximumf %12, %15 : vector<1x1x8xf32>
    %cst_6 = arith.constant 9.99999974E-6 : f32
    %17 = vector.broadcast %cst_6 : f32 to vector<1x1x8xf32>
    %18 = arith.addf %16, %17 : vector<1x1x8xf32>
    %19 = math.rsqrt %18 : vector<1x1x8xf32>
    %20 = vector.broadcast %19 : vector<1x1x8xf32> to vector<1x256x8xf32>
    %21 = arith.mulf %14, %20 : vector<1x256x8xf32>
    %cst_7 = arith.constant 0.000000e+00 : f32
    %22 = vector.broadcast %cst_7 : f32 to vector<1x256x8xf32>
    %23 = arith.maximumf %21, %22 : vector<1x256x8xf32>
    %24 = arith.truncf %23 : vector<1x256x8xf32> to vector<1x256x8xbf16>
    %c0_8 = arith.constant 0 : index
    %c0_9 = arith.constant 0 : index
    %c0_10 = arith.constant 0 : index
    %25 = vector.load %arg2[%c0_8, %c0_9, %c0_10] : memref<1x256x8xbf16, #tpu.memory_space<vmem>>, vector<1x256x8xbf16>
    tpu.vector_store %arg2[%c0_8, %c0_9, %c0_10], %24 {strides = array<i32>} : memref<1x256x8xbf16, #tpu.memory_space<vmem>>, vector<1x256x8xbf16>,
    return
  }
  func.func @transform_0(%arg0: i32) -> (i32, i32, i32) {
    %c0_i32 = arith.constant 0 : i32
    %c0_i32_0 = arith.constant 0 : i32
    %c0_i32_1 = arith.constant 0 : i32
    return %arg0, %c0_i32, %c0_i32_0 : i32, i32, i32
  }
  func.func @transform_1(%arg0: i32) -> (i32, i32, i32) {
    %c0_i32 = arith.constant 0 : i32
    %c0_i32_0 = arith.constant 0 : i32
    %c0_i32_1 = arith.constant 0 : i32
    return %arg0, %c0_i32, %c0_i32_0 : i32, i32, i32
  }
}

module attributes {stable_mosaic.version = 11 : i64} {
  func.func @_matmul_bias_kernel(%arg0: i32, %arg1: i32, %arg2: memref<256x392xbf16, #tpu.memory_space<vmem>>, %arg3: memref<392x128xbf16, #tpu.memory_space<vmem>>, %arg4: memref<1x128xf32, #tpu.memory_space<vmem>>, %arg5: memref<256x128xf32, #tpu.memory_space<vmem>>, %arg6: memref<256x128xf32, #tpu.memory_space<vmem>>) attributes {dimension_semantics = [#tpu.dimension_semantics<parallel>, #tpu.dimension_semantics<arbitrary>], iteration_bounds = array<i64: 2, 1>, scalar_prefetch = 0 : i64, scratch_operands = 1 : i64, tpu.core_type = #tpu.core_type<tc>, window_params = [{transform_indices = @transform_0, window_bounds = array<i64: 256, 392>}, {transform_indices = @transform_1, window_bounds = array<i64: 392, 128>}, {pipeline_mode = #tpu.pipeline_mode<synchronous>, transform_indices = @transform_2, window_bounds = array<i64: 1, 128>}, {transform_indices = @transform_3, window_bounds = array<i64: 256, 128>}]} {
    %c0_i32 = arith.constant 0 : i32
    %0 = arith.cmpi eq, %arg1, %c0_i32 : i32
    %1 = arith.extui %0 : i1 to i32
    %c0_i32_0 = arith.constant 0 : i32
    %2 = arith.cmpi ne, %1, %c0_i32_0 : i32
    scf.if %2 {
      %cst_10 = arith.constant 0.000000e+00 : f32
      %12 = vector.broadcast %cst_10 : f32 to vector<256x128xf32>
      %c0_11 = arith.constant 0 : index
      %c0_12 = arith.constant 0 : index
      %13 = vector.load %arg6[%c0_11, %c0_12] : memref<256x128xf32, #tpu.memory_space<vmem>>, vector<256x128xf32>
      tpu.vector_store %arg6[%c0_11, %c0_12], %12 {strides = array<i32>} : memref<256x128xf32, #tpu.memory_space<vmem>>, vector<256x128xf32>,
    } else {
    }
    %c0 = arith.constant 0 : index
    %c0_1 = arith.constant 0 : index
    %3 = vector.load %arg6[%c0, %c0_1] : memref<256x128xf32, #tpu.memory_space<vmem>>, vector<256x128xf32>
    %c0_2 = arith.constant 0 : index
    %c0_3 = arith.constant 0 : index
    %4 = vector.load %arg2[%c0_2, %c0_3] : memref<256x392xbf16, #tpu.memory_space<vmem>>, vector<256x392xbf16>
    %c0_4 = arith.constant 0 : index
    %c0_5 = arith.constant 0 : index
    %5 = vector.load %arg3[%c0_4, %c0_5] : memref<392x128xbf16, #tpu.memory_space<vmem>>, vector<392x128xbf16>
    %cst = arith.constant dense<0.000000e+00> : vector<256x128xf32>
    %6 = tpu.matmul %4, %5, %cst {dimension_numbers = #tpu.dot_dimension_numbers<[1], [0], [0], [1], [0, 0, 1, 1], [], []>} : vector<256x392xbf16>, vector<392x128xbf16>, vector<256x128xf32> -> vector<256x128xf32>
    %7 = arith.addf %3, %6 : vector<256x128xf32>
    %c0_6 = arith.constant 0 : index
    %c0_7 = arith.constant 0 : index
    %8 = vector.load %arg6[%c0_6, %c0_7] : memref<256x128xf32, #tpu.memory_space<vmem>>, vector<256x128xf32>
    tpu.vector_store %arg6[%c0_6, %c0_7], %7 {strides = array<i32>} : memref<256x128xf32, #tpu.memory_space<vmem>>, vector<256x128xf32>,
    %c0_i32_8 = arith.constant 0 : i32
    %9 = arith.cmpi eq, %arg1, %c0_i32_8 : i32
    %10 = arith.extui %9 : i1 to i32
    %c0_i32_9 = arith.constant 0 : i32
    %11 = arith.cmpi ne, %10, %c0_i32_9 : i32
    scf.if %11 {
      %c0_10 = arith.constant 0 : index
      %c0_11 = arith.constant 0 : index
      %12 = vector.load %arg6[%c0_10, %c0_11] : memref<256x128xf32, #tpu.memory_space<vmem>>, vector<256x128xf32>
      %c0_12 = arith.constant 0 : index
      %c0_13 = arith.constant 0 : index
      %13 = vector.load %arg4[%c0_12, %c0_13] : memref<1x128xf32, #tpu.memory_space<vmem>>, vector<1x128xf32>
      %14 = vector.broadcast %13 : vector<1x128xf32> to vector<256x128xf32>
      %15 = arith.addf %12, %14 : vector<256x128xf32>
      %16 = math.tanh %15 : vector<256x128xf32>
      %c0_14 = arith.constant 0 : index
      %c0_15 = arith.constant 0 : index
      %17 = vector.load %arg5[%c0_14, %c0_15] : memref<256x128xf32, #tpu.memory_space<vmem>>, vector<256x128xf32>
      tpu.vector_store %arg5[%c0_14, %c0_15], %16 {strides = array<i32>} : memref<256x128xf32, #tpu.memory_space<vmem>>, vector<256x128xf32>,
    } else {
    }
    return
  }
  func.func @transform_0(%arg0: i32, %arg1: i32) -> (i32, i32) {
    %c0_i32 = arith.constant 0 : i32
    return %arg0, %arg1 : i32, i32
  }
  func.func @transform_1(%arg0: i32, %arg1: i32) -> (i32, i32) {
    %c0_i32 = arith.constant 0 : i32
    %c0_i32_0 = arith.constant 0 : i32
    return %arg1, %c0_i32 : i32, i32
  }
  func.func @transform_2(%arg0: i32, %arg1: i32) -> (i32, i32) {
    %c0_i32 = arith.constant 0 : i32
    %c0_i32_0 = arith.constant 0 : i32
    %c0_i32_1 = arith.constant 0 : i32
    return %c0_i32, %c0_i32_0 : i32, i32
  }
  func.func @transform_3(%arg0: i32, %arg1: i32) -> (i32, i32) {
    %c0_i32 = arith.constant 0 : i32
    %c0_i32_0 = arith.constant 0 : i32
    return %arg0, %c0_i32 : i32, i32
  }
}

</mosaic_0001>

<llo_original>
// kernel: inception_generator_forward.17
$region0: #{inception_generator_forward.17}
  #allocation0 [shape = 'u32[]', space=smem, size = 0x4, offset = 0x4, fixed_abs, tag = 'smem constant byte address 0x4 - core index']
  #allocation1 [shape = 'u32[72,128]{1,0:T(1,128)}', space=vmem, size = 0x9000, scoped, tag = 'internal scratch']
  #allocation2 [shape = 'f32[256,128]{1,0:T(8,128)}', space=vmem, size = 0x20000, scoped, tag = 'scratch operand']
  %s0 = inlined_call_operand.vmem [shape: bf16[2,256,147], index: 0, kind: input, shape index: {}]
  %s1 = inlined_call_operand.vmem [shape: bf16[147,128], index: 1, kind: input, shape index: {}]
  %s2 = inlined_call_operand.vmem [shape: f32[1,128], index: 2, kind: input, shape index: {}]
  %s3 = inlined_call_operand.vmem [shape: bf16[2,256,128], index: 3, kind: output, shape index: {}]
  %s4 = sld [smem:[#allocation0]]
  $region53: #{inception_generator_forward.17} parent=0
    _
  %s6 = ssub.s32 1, %s4
  %s7 = scalar_select 0, %s6, %s4
  loop: start=0, step=1, limit=4
  $region2: #{inception_generator_forward.17} parent=0 // loop_pre_header
    _
  $region3: #{inception_generator_forward.17} parent=0 // loop_header
    %s9 = sphi 0, %s13
    %p10 = scmp.ge.s32.totalorder %s9, 4
    %s16 = sphi 0, %s28
    %s17 = sphi 0, %s24
    %s18 = sphi 0, %s16
    %s19 = sphi 0, %s17
    %s20 = sphi 0, %s18
    %s21 = sphi 0, %s19
    %s33 = sphi 0, %s35
    %s36 = sphi 0, %s33
    %s37 = sphi 0, %s36
    %s53 = sphi 0, %s37
    %s59 = sphi 0, %s61
    %s62 = sphi 0, %s59
    %s63 = sphi 0, %s62
    %s79 = sphi 0, %s63
    %s83 = sphi 0, %s83
    %s85 = sphi 0, %s83
    %s86 = sphi 0, %s85
    %s100 = sphi 0, %s86
    %s106 = sphi 0, %s108
    %s109 = sphi 0, %s106
    %s110 = sphi 0, %s109
    %s126 = sphi 0, %s110
  $region4: #{inception_generator_forward.17} parent=0 // loop_header_branch
    %12 = sbr.rel (%p10) target = $region8
  $region5: #{inception_generator_forward.17} parent=0 // loop_body
    %s14 = ssub.s32 %s9, 1
    %s15 = ssub.s32 %s9, 2
    %s22 = sadd.s32 1, %s17
    %p23 = scmp.ge.s32.totalorder %s22, 1
    %s24 = scalar_select %p23, 0, %s22
    %s25 = sadd.s32 1, %s16
    %s26 = scalar_select %p23, %s25, %s16
    %p27 = scmp.ge.s32.totalorder %s26, 2
    %s28 = scalar_select %p27, 0, %s26
    %s29 = ssub.s32 %s16, %s28
    %s30 = ssub.s32 %s17, %s24
    %s31 = sor.u32 %s29, %s30
    %p32 = scmp.eq.s32.totalorder %s31, 0
    %s34 = sadd.s32 %s33, 1
    %s35 = scalar_select %p32, %s33, %s34
    %p38 = pneg %p32
    %p39 = scmp.eq.s32.totalorder %s9, 1
    %p40 = por %p38, %p39
    %p41 = scmp.ne.s32.totalorder %s33, %s36
    %p42 = scmp.eq.s32.totalorder %s9, 0
    %p43 = por %p41, %p42
    %p44 = scmp.ne.s32.totalorder %s33, %s36
    %p45 = scmp.eq.s32.totalorder %s14, 1
    %p46 = por %p44, %p45
    %p47 = scmp.ne.s32.totalorder %s36, %s37
    %p48 = scmp.eq.s32.totalorder %s14, 0
    %p49 = por %p47, %p48
    %p50 = scmp.ne.s32.totalorder %s36, %s37
    %p51 = scmp.eq.s32.totalorder %s15, 1
    %p52 = por %p50, %p51
    %p54 = scmp.ne.s32.totalorder %s37, %s53
    %p55 = scmp.eq.s32.totalorder %s15, 0
    %p56 = por %p54, %p55
    %s57 = ssub.s32 %s17, %s24
    %p58 = scmp.eq.s32.totalorder %s57, 0
    %s60 = sadd.s32 %s59, 1
    %s61 = scalar_select %p58, %s59, %s60
    %p64 = pneg %p58
    %p65 = scmp.eq.s32.totalorder %s9, 1
    %p66 = por %p64, %p65
    %p67 = scmp.ne.s32.totalorder %s59, %s62
    %p68 = scmp.eq.s32.totalorder %s9, 0
    %p69 = por %p67, %p68
    %p70 = scmp.ne.s32.totalorder %s59, %s62
    %p71 = scmp.eq.s32.totalorder %s14, 1
    %p72 = por %p70, %p71
    %p73 = scmp.ne.s32.totalorder %s62, %s63
    %p74 = scmp.eq.s32.totalorder %s14, 0
    %p75 = por %p73, %p74
    %p76 = scmp.ne.s32.totalorder %s62, %s63
    %p77 = scmp.eq.s32.totalorder %s15, 1
    %p78 = por %p76, %p77
    %p80 = scmp.ne.s32.totalorder %s63, %s79
    %p81 = scmp.eq.s32.totalorder %s15, 0
    %p82 = por %p80, %p81
    %s84 = sadd.s32 %s83, 1
    %p87 = scmp.eq.s32.totalorder %s9, 1
    %p88 = scmp.ne.s32.totalorder %s83, %s85
    %p89 = scmp.eq.s32.totalorder %s9, 0
    %p90 = por %p88, %p89
    %p91 = scmp.ne.s32.totalorder %s83, %s85
    %p92 = scmp.eq.s32.totalorder %s14, 1
    %p93 = por %p91, %p92
    %p94 = scmp.ne.s32.totalorder %s85, %s86
    %p95 = scmp.eq.s32.totalorder %s14, 0
    %p96 = por %p94, %p95
    %p97 = scmp.ne.s32.totalorder %s85, %s86
    %p98 = scmp.eq.s32.totalorder %s15, 1
    %p99 = por %p97, %p98
    %p101 = scmp.ne.s32.totalorder %s86, %s100
    %p102 = scmp.eq.s32.totalorder %s15, 0
    %p103 = por %p101, %p102
    %s104 = ssub.s32 %s16, %s28
    %p105 = scmp.eq.s32.totalorder %s104, 0
    %s107 = sadd.s32 %s106, 1
    %s108 = scalar_select %p105, %s106, %s107
    %p111 = pneg %p105
    %p112 = scmp.eq.s32.totalorder %s9, 1
    %p113 = por %p111, %p112
    %p114 = scmp.ne.s32.totalorder %s106, %s109
    %p115 = scmp.eq.s32.totalorder %s9, 0
    %p116 = por %p114, %p115
    %p117 = scmp.ne.s32.totalorder %s106, %s109
    %p118 = scmp.eq.s32.totalorder %s14, 1
    %p119 = por %p117, %p118
    %p120 = scmp.ne.s32.totalorder %s109, %s110
    %p121 = scmp.eq.s32.totalorder %s14, 0
    %p122 = por %p120, %p121
    %p123 = scmp.ne.s32.totalorder %s109, %s110
    %p124 = scmp.eq.s32.totalorder %s15, 1
    %p125 = por %p123, %p124
    %p127 = scmp.ne.s32.totalorder %s110, %s126
    %p128 = scmp.eq.s32.totalorder %s15, 0
    %p129 = por %p127, %p128
    %p130 = scmp.le.s32.totalorder 1, %s9
    %p131 = scmp.lt.s32.totalorder %s9, 3
    %p132 = pnand %p130, %p131
    %p133 = pneg %p132
    // Predicated region
    $region9: #{inception_generator_forward.17} parent=5 // pred_check
      _
    $region10: #{inception_generator_forward.17} parent=5 // pred_check_branch
      %135 = sbr.rel (%p132) target = $region12
    $region11: #{inception_generator_forward.17} parent=5 // pred_region
      %s136 = ssub.s32 %s9, 1
      // Predicated region
      $region13: #{inception_generator_forward.17} parent=11 // pred_check
        %p137 = pneg %p75
      $region14: #{inception_generator_forward.17} parent=11 // pred_check_branch
        %139 = sbr.rel (%p137) target = $region16
      $region15: #{inception_generator_forward.17} parent=11 // pred_region
        %s140 = smul.u32 19, %s19
        %p141 = scmp.lt.s32.totalorder %s140, 18
        %s142 = scalar_select %p141, %s140, 18
        %s143 = smul.addr %s142, 4
        %s144 = scalar_lea.vmem %s1, %s143
        %s145 = smul.u32 19, %s19
      $region16: #{inception_generator_forward.17} parent=11 // pred_fallthru
        _
      // Predicated region
      $region17: #{inception_generator_forward.17} parent=11 // pred_check
        %p146 = pneg %p96
      $region18: #{inception_generator_forward.17} parent=11 // pred_check_branch
        %148 = sbr.rel (%p146) target = $region20
      $region19: #{inception_generator_forward.17} parent=11 // pred_region
        _
      $region20: #{inception_generator_forward.17} parent=11 // pred_fallthru
        _
    $region12: #{inception_generator_forward.17} parent=5 // pred_fallthru
      _
    %p149 = scmp.lt.s32.totalorder %s9, 2
    // Predicated region
    $region21: #{inception_generator_forward.17} parent=5 // pred_check
      %p150 = pneg %p149
    $region22: #{inception_generator_forward.17} parent=5 // pred_check_branch
      %152 = sbr.rel (%p150) target = $region24
    $region23: #{inception_generator_forward.17} parent=5 // pred_region
      // Predicated region
      $region25: #{inception_generator_forward.17} parent=23 // pred_check
        %p153 = pneg %p43
      $region26: #{inception_generator_forward.17} parent=23 // pred_check_branch
        %155 = sbr.rel (%p153) target = $region28
      $region27: #{inception_generator_forward.17} parent=23 // pred_region
        %s156 = smul.u32 2, %s17
        %p157 = scmp.lt.s32.totalorder %s16, 1
        %s158 = scalar_select %p157, %s16, 1
        %p159 = scmp.lt.s32.totalorder %s156, 1
        %s160 = scalar_select %p159, %s156, 1
        %s161 = smul.addr %s158, 64
        %s162 = sadd.s32 %s160, %s161
        %s163 = smul.addr %s162, 4
        %s164 = scalar_lea.vmem %s0, %s163
        %s165 = smul.u32 2, %s17
      $region28: #{inception_generator_forward.17} parent=23 // pred_fallthru
        _
    $region24: #{inception_generator_forward.17} parent=5 // pred_fallthru
      _
    %p166 = scmp.le.s32.totalorder 1, %s9
    %p167 = scmp.lt.s32.totalorder %s9, 3
    %p168 = pnand %p166, %p167
    %p169 = pneg %p168
    // Predicated region
    $region29: #{inception_generator_forward.17} parent=5 // pred_check
      _
    $region30: #{inception_generator_forward.17} parent=5 // pred_check_branch
      %171 = sbr.rel (%p168) target = $region32
    $region31: #{inception_generator_forward.17} parent=5 // pred_region
      %s172 = ssub.s32 %s9, 1
      %s173 = smul.u32 2, %s19
      %p174 = scmp.lt.s32.totalorder %s18, 1
      %s175 = scalar_select %p174, %s18, 1
      %p176 = scmp.lt.s32.totalorder %s173, 1
      %s177 = scalar_select %p176, %s173, 1
      %s178 = smul.addr %s175, 64
      %s179 = sadd.s32 %s177, %s178
      %s180 = smul.addr %s179, 4
      %s181 = scalar_lea.vmem %s0, %s180
      %p182 = pneg %p49
      %p183 = pneg %p46
      %s184 = smul.u32 19, %s19
      %p185 = scmp.lt.s32.totalorder %s184, 18
      %s186 = scalar_select %p185, %s184, 18
      %s187 = smul.addr %s186, 4
      %s188 = scalar_lea.vmem %s1, %s187
      %p189 = pneg %p75
      %p190 = pneg %p72
      %p191 = pneg %p96
      %p192 = pneg %p93
      %p193 = pneg %p122
      %p194 = pneg %p119
      %p195 = scmp.lt.s32.totalorder %s18, 1
      %s196 = scalar_select %p195, %s18, 1
      %s197 = smul.addr %s196, 32
      %s198 = smul.addr %s197, 4
      %s199 = scalar_lea.vmem %s3, %s198
      %s200 = smul.u32 2, %s19
      %p201 = scmp.lt.s32.totalorder %s18, 1
      %s202 = scalar_select %p201, %s18, 1
      %p203 = scmp.lt.s32.totalorder %s200, 1
      %s204 = scalar_select %p203, %s200, 1
      %s205 = smul.addr %s202, 64
      %s206 = sadd.s32 %s204, %s205
      %s207 = smul.addr %s206, 4
      %s208 = scalar_lea.vmem %s0, %s207
      %s209 = smul.u32 2, %s19
      %s210 = smul.u32 19, %s19
      %p211 = scmp.lt.s32.totalorder %s210, 18
      %s212 = scalar_select %p211, %s210, 18
      %s213 = smul.addr %s212, 4
      %s214 = scalar_lea.vmem %s1, %s213
      %s215 = smul.u32 19, %s19
      %p216 = scmp.lt.s32.totalorder %s18, 1
      %s217 = scalar_select %p216, %s18, 1
      %s218 = smul.addr %s217, 32
      %s219 = smul.addr %s218, 4
      %s220 = scalar_lea.vmem %s3, %s219
      %p222 = scmp.eq.s32.totalorder %s19, 0
      // Predicated region
      $region33: #{inception_generator_forward.17} parent=31 // pred_check
        %p223 = pneg %p222
      $region34: #{inception_generator_forward.17} parent=31 // pred_check_branch
        %225 = sbr.rel (%p223) target = $region36
      $region35: #{inception_generator_forward.17} parent=31 // pred_region
        %226 = vst [vmem:[#allocation2] sm:$0xff] 0.0
        %227 = vst [vmem:[#allocation2 + $0x8] sm:$0xff] 0.0
        %228 = vst [vmem:[#allocation2 + $0x10] sm:$0xff] 0.0
        %229 = vst [vmem:[#allocation2 + $0x18] sm:$0xff] 0.0
        %230 = vst [vmem:[#allocation2 + $0x20] sm:$0xff] 0.0
        %231 = vst [vmem:[#allocation2 + $0x28] sm:$0xff] 0.0
        %232 = vst [vmem:[#allocation2 + $0x30] sm:$0xff] 0.0
        %233 = vst [vmem:[#allocation2 + $0x38] sm:$0xff] 0.0
        %234 = vst [vmem:[#allocation2 + $0x40] sm:$0xff] 0.0
        %235 = vst [vmem:[#allocation2 + $0x48] sm:$0xff] 0.0
        %236 = vst [vmem:[#allocation2 + $0x50] sm:$0xff] 0.0
        %237 = vst [vmem:[#allocation2 + $0x58] sm:$0xff] 0.0
        %238 = vst [vmem:[#allocation2 + $0x60] sm:$0xff] 0.0
        %239 = vst [vmem:[#allocation2 + $0x68] sm:$0xff] 0.0
        %240 = vst [vmem:[#allocation2 + $0x70] sm:$0xff] 0.0
        %241 = vst [vmem:[#allocation2 + $0x78] sm:$0xff] 0.0
        %242 = vst [vmem:[#allocation2 + $0x80] sm:$0xff] 0.0
        %243 = vst [vmem:[#allocation2 + $0x88] sm:$0xff] 0.0
        %244 = vst [vmem:[#allocation2 + $0x90] sm:$0xff] 0.0
        %245 = vst [vmem:[#allocation2 + $0x98] sm:$0xff] 0.0
        %246 = vst [vmem:[#allocation2 + $0xa0] sm:$0xff] 0.0
        %247 = vst [vmem:[#allocation2 + $0xa8] sm:$0xff] 0.0
        %248 = vst [vmem:[#allocation2 + $0xb0] sm:$0xff] 0.0
        %249 = vst [vmem:[#allocation2 + $0xb8] sm:$0xff] 0.0
        %250 = vst [vmem:[#allocation2 + $0xc0] sm:$0xff] 0.0
        %251 = vst [vmem:[#allocation2 + $0xc8] sm:$0xff] 0.0
        %252 = vst [vmem:[#allocation2 + $0xd0] sm:$0xff] 0.0
        %253 = vst [vmem:[#allocation2 + $0xd8] sm:$0xff] 0.0
        %254 = vst [vmem:[#allocation2 + $0xe0] sm:$0xff] 0.0
        %255 = vst [vmem:[#allocation2 + $0xe8] sm:$0xff] 0.0
        %256 = vst [vmem:[#allocation2 + $0xf0] sm:$0xff] 0.0
        %257 = vst [vmem:[#allocation2 + $0xf8] sm:$0xff] 0.0
      $region36: #{inception_generator_forward.17} parent=31 // pred_fallthru
        _
      %v258 = vld [vmem:[#allocation2] sm:$0xff]
      %v259 = vld [vmem:[#allocation2 + $0x8] sm:$0xff]
      %v260 = vld [vmem:[#allocation2 + $0x10] sm:$0xff]
      %v261 = vld [vmem:[#allocation2 + $0x18] sm:$0xff]
      %v262 = vld [vmem:[#allocation2 + $0x20] sm:$0xff]
      %v263 = vld [vmem:[#allocation2 + $0x28] sm:$0xff]
      %v264 = vld [vmem:[#allocation2 + $0x30] sm:$0xff]
      %v265 = vld [vmem:[#allocation2 + $0x38] sm:$0xff]
      %v266 = vld [vmem:[#allocation2 + $0x40] sm:$0xff]
      %v267 = vld [vmem:[#allocation2 + $0x48] sm:$0xff]
      %v268 = vld [vmem:[#allocation2 + $0x50] sm:$0xff]
      %v269 = vld [vmem:[#allocation2 + $0x58] sm:$0xff]
      %v270 = vld [vmem:[#allocation2 + $0x60] sm:$0xff]
      %v271 = vld [vmem:[#allocation2 + $0x68] sm:$0xff]
      %v272 = vld [vmem:[#allocation2 + $0x70] sm:$0xff]
      %v273 = vld [vmem:[#allocation2 + $0x78] sm:$0xff]
      %v274 = vld [vmem:[#allocation2 + $0x80] sm:$0xff]
      %v275 = vld [vmem:[#allocation2 + $0x88] sm:$0xff]
      %v276 = vld [vmem:[#allocation2 + $0x90] sm:$0xff]
      %v277 = vld [vmem:[#allocation2 + $0x98] sm:$0xff]
      %v278 = vld [vmem:[#allocation2 + $0xa0] sm:$0xff]
      %v279 = vld [vmem:[#allocation2 + $0xa8] sm:$0xff]
      %v280 = vld [vmem:[#allocation2 + $0xb0] sm:$0xff]
      %v281 = vld [vmem:[#allocation2 + $0xb8] sm:$0xff]
      %v282 = vld [vmem:[#allocation2 + $0xc0] sm:$0xff]
      %v283 = vld [vmem:[#allocation2 + $0xc8] sm:$0xff]
      %v284 = vld [vmem:[#allocation2 + $0xd0] sm:$0xff]
      %v285 = vld [vmem:[#allocation2 + $0xd8] sm:$0xff]
      %v286 = vld [vmem:[#allocation2 + $0xe0] sm:$0xff]
      %v287 = vld [vmem:[#allocation2 + $0xe8] sm:$0xff]
      %v288 = vld [vmem:[#allocation2 + $0xf0] sm:$0xff]
      %v289 = vld [vmem:[#allocation2 + $0xf8] sm:$0xff]
      %v290 = vld [vmem:[%s208] sm:$0xff]
      %v291 = vld [vmem:[%s208 + $0x8] sm:$0xff]
      %v292 = vld [vmem:[%s208 + $0x10] sm:$0xff]
      %v293 = vld [vmem:[%s208 + $0x18] sm:$0xff]
      %v294 = vld [vmem:[%s208 + $0x20] sm:$0xff]
      %v295 = vld [vmem:[%s208 + $0x28] sm:$0xff]
      %v296 = vld [vmem:[%s208 + $0x30] sm:$0xff]
      %v297 = vld [vmem:[%s208 + $0x38] sm:$0xff]
      %v298 = vld [vmem:[%s208 + $0x40] sm:$0xff]
      %v299 = vld [vmem:[%s208 + $0x48] sm:$0xff]
      %v300 = vld [vmem:[%s208 + $0x50] sm:$0xff]
      %v301 = vld [vmem:[%s208 + $0x58] sm:$0xff]
      %v302 = vld [vmem:[%s208 + $0x60] sm:$0xff]
      %v303 = vld [vmem:[%s208 + $0x68] sm:$0xff]
      %v304 = vld [vmem:[%s208 + $0x70] sm:$0xff]
      %v305 = vld [vmem:[%s208 + $0x78] sm:$0xff]
      %v306 = vld [vmem:[%s208 + $0x80] sm:$0xff]
      %v307 = vld [vmem:[%s208 + $0x88] sm:$0xff]
      %v308 = vld [vmem:[%s208 + $0x90] sm:$0xff]
      %v309 = vld [vmem:[%s208 + $0x98] sm:$0xff]
      %v310 = vld [vmem:[%s208 + $0xa0] sm:$0xff]
      %v311 = vld [vmem:[%s208 + $0xa8] sm:$0xff]
      %v312 = vld [vmem:[%s208 + $0xb0] sm:$0xff]
      %v313 = vld [vmem:[%s208 + $0xb8] sm:$0xff]
      %v314 = vld [vmem:[%s208 + $0xc0] sm:$0xff]
      %v315 = vld [vmem:[%s208 + $0xc8] sm:$0xff]
      %v316 = vld [vmem:[%s208 + $0xd0] sm:$0xff]
      %v317 = vld [vmem:[%s208 + $0xd8] sm:$0xff]
      %v318 = vld [vmem:[%s208 + $0xe0] sm:$0xff]
      %v319 = vld [vmem:[%s208 + $0xe8] sm:$0xff]
      %v320 = vld [vmem:[%s208 + $0xf0] sm:$0xff]
      %v321 = vld [vmem:[%s208 + $0xf8] sm:$0xff]
      %v322 = vld [vmem:[%s214] sm:$0xf]
      %v323 = vld [vmem:[%s214 + $0x4] sm:$0xf]
      %v324 = vld [vmem:[%s214 + $0x8] sm:$0xf]
      %v325 = vld [vmem:[%s214 + $0xc] sm:$0xf]
      %v326 = vld [vmem:[%s214 + $0x10] sm:$0xf]
      %v327 = vld [vmem:[%s214 + $0x14] sm:$0xf]
      %v328 = vld [vmem:[%s214 + $0x18] sm:$0xf]
      %v329 = vld [vmem:[%s214 + $0x1c] sm:$0xf]
      %v330 = vld [vmem:[%s214 + $0x20] sm:$0xf]
      %v331 = vld [vmem:[%s214 + $0x24] sm:$0xf]
      %v332 = vld [vmem:[%s214 + $0x28] sm:$0xf]
      %v333 = vld [vmem:[%s214 + $0x2c] sm:$0xf]
      %v334 = vld [vmem:[%s214 + $0x30] sm:$0xf]
      %v335 = vld [vmem:[%s214 + $0x34] sm:$0xf]
      %v336 = vld [vmem:[%s214 + $0x38] sm:$0xf]
      %v337 = vld [vmem:[%s214 + $0x3c] sm:$0xf]
      %v338 = vld [vmem:[%s214 + $0x40] sm:$0xf]
      %v339 = vld [vmem:[%s214 + $0x44] sm:$0xf]
      %v340 = vld [vmem:[%s214 + $0x48] sm:$0x3]
      %v373 = vunpack.c.l.b16 %v290
      %v374 = vunpack.c.h.b16 %v290
      %v375 = vunpack.c.l.b16 %v291
      %v376 = vunpack.c.h.b16 %v291
      %v377 = vunpack.c.l.b16 %v292
      %v378 = vunpack.c.h.b16 %v292
      %v379 = vunpack.c.l.b16 %v293
      %v380 = vunpack.c.h.b16 %v293
      %v381 = vunpack.c.l.b16 %v294
      %v382 = vunpack.c.h.b16 %v294
      %v383 = vunpack.c.l.b16 %v295
      %v384 = vunpack.c.h.b16 %v295
      %v385 = vunpack.c.l.b16 %v296
      %v386 = vunpack.c.h.b16 %v296
      %v387 = vunpack.c.l.b16 %v297
      %v388 = vunpack.c.h.b16 %v297
      %v389 = vunpack.c.l.b16 %v298
      %v390 = vunpack.c.h.b16 %v298
      %v391 = vunpack.c.l.b16 %v299
      %v392 = vunpack.c.h.b16 %v299
      %v393 = vunpack.c.l.b16 %v300
      %v394 = vunpack.c.h.b16 %v300
      %v395 = vunpack.c.l.b16 %v301
      %v396 = vunpack.c.h.b16 %v301
      %v397 = vunpack.c.l.b16 %v302
      %v398 = vunpack.c.h.b16 %v302
      %v399 = vunpack.c.l.b16 %v303
      %v400 = vunpack.c.h.b16 %v303
      %v401 = vunpack.c.l.b16 %v304
      %v402 = vunpack.c.h.b16 %v304
      %v403 = vunpack.c.l.b16 %v305
      %v404 = vunpack.c.h.b16 %v305
      %v405 = vunpack.c.l.b16 %v306
      %v406 = vunpack.c.h.b16 %v306
      %v407 = vunpack.c.l.b16 %v307
      %v408 = vunpack.c.h.b16 %v307
      %v409 = vunpack.c.l.b16 %v308
      %v410 = vunpack.c.h.b16 %v308
      %v411 = vunpack.c.l.b16 %v309
      %v412 = vunpack.c.h.b16 %v309
      %v413 = vunpack.c.l.b16 %v310
      %v414 = vunpack.c.h.b16 %v310
      %v415 = vunpack.c.l.b16 %v311
      %v416 = vunpack.c.h.b16 %v311
      %v417 = vunpack.c.l.b16 %v312
      %v418 = vunpack.c.h.b16 %v312
      %v419 = vunpack.c.l.b16 %v313
      %v420 = vunpack.c.h.b16 %v313
      %v421 = vunpack.c.l.b16 %v314
      %v422 = vunpack.c.h.b16 %v314
      %v423 = vunpack.c.l.b16 %v315
      %v424 = vunpack.c.h.b16 %v315
      %v425 = vunpack.c.l.b16 %v316
      %v426 = vunpack.c.h.b16 %v316
      %v427 = vunpack.c.l.b16 %v317
      %v428 = vunpack.c.h.b16 %v317
      %v429 = vunpack.c.l.b16 %v318
      %v430 = vunpack.c.h.b16 %v318
      %v431 = vunpack.c.l.b16 %v319
      %v432 = vunpack.c.h.b16 %v319
      %v433 = vunpack.c.l.b16 %v320
      %v434 = vunpack.c.h.b16 %v320
      %v435 = vunpack.c.l.b16 %v321
      %v436 = vunpack.c.h.b16 %v321
      %v437 = vpack.c.b16 %v375, %v373
      %v438 = vpack.c.b16 %v376, %v374
      %v439 = vpack.c.b16 %v379, %v377
      %v440 = vpack.c.b16 %v380, %v378
      %v441 = vpack.c.b16 %v383, %v381
      %v442 = vpack.c.b16 %v384, %v382
      %v443 = vpack.c.b16 %v387, %v385
      %v444 = vpack.c.b16 %v388, %v386
      %v445 = vpack.c.b16 %v391, %v389
      %v446 = vpack.c.b16 %v392, %v390
      %v447 = vpack.c.b16 %v395, %v393
      %v448 = vpack.c.b16 %v396, %v394
      %v449 = vpack.c.b16 %v399, %v397
      %v450 = vpack.c.b16 %v400, %v398
      %v451 = vpack.c.b16 %v403, %v401
      %v452 = vpack.c.b16 %v404, %v402
      %v453 = vpack.c.b16 %v407, %v405
      %v454 = vpack.c.b16 %v408, %v406
      %v455 = vpack.c.b16 %v411, %v409
      %v456 = vpack.c.b16 %v412, %v410
      %v457 = vpack.c.b16 %v415, %v413
      %v458 = vpack.c.b16 %v416, %v414
      %v459 = vpack.c.b16 %v419, %v417
      %v460 = vpack.c.b16 %v420, %v418
      %v461 = vpack.c.b16 %v423, %v421
      %v462 = vpack.c.b16 %v424, %v422
      %v463 = vpack.c.b16 %v427, %v425
      %v464 = vpack.c.b16 %v428, %v426
      %v465 = vpack.c.b16 %v431, %v429
      %v466 = vpack.c.b16 %v432, %v430
      %v467 = vpack.c.b16 %v435, %v433
      %v468 = vpack.c.b16 %v436, %v434
      %v504 = vunpack.c.l.b16 %v322
      %v505 = vunpack.c.l.b16 %v323
      %v506 = vunpack.c.l.b16 %v324
      %v507 = vunpack.c.l.b16 %v325
      %v508 = vunpack.c.l.b16 %v326
      %v509 = vunpack.c.l.b16 %v327
      %v510 = vunpack.c.l.b16 %v328
      %v511 = vunpack.c.l.b16 %v329
      %v512 = vunpack.c.l.b16 %v330
      %v513 = vunpack.c.l.b16 %v331
      %v514 = vunpack.c.l.b16 %v332
      %v515 = vunpack.c.l.b16 %v333
      %v516 = vunpack.c.l.b16 %v334
      %v517 = vunpack.c.l.b16 %v335
      %v518 = vunpack.c.l.b16 %v336
      %v519 = vunpack.c.l.b16 %v337
      %v520 = vunpack.c.l.b16 %v338
      %v521 = vunpack.c.l.b16 %v339
      %v522 = vunpack.c.l.b16 %v340
      %v523 = vpack.c.b16 %v505, %v504
      %v524 = vpack.c.b16 %v507, %v506
      %v525 = vpack.c.b16 %v509, %v508
      %v526 = vpack.c.b16 %v511, %v510
      %v527 = vpack.c.b16 %v513, %v512
      %v528 = vpack.c.b16 %v515, %v514
      %v529 = vpack.c.b16 %v517, %v516
      %v530 = vpack.c.b16 %v519, %v518
      %v531 = vpack.c.b16 %v521, %v520
      %v532 = vpack.c.b16 %v522, %v522
      %vm542 = vcmask 154624
      %v544 = vsel %vm542, %v438, 0
      %v547 = vsel %vm542, %v440, 0
      %v550 = vsel %vm542, %v442, 0
      %v553 = vsel %vm542, %v444, 0
      %v556 = vsel %vm542, %v446, 0
      %v559 = vsel %vm542, %v448, 0
      %v562 = vsel %vm542, %v450, 0
      %v565 = vsel %vm542, %v452, 0
      %v568 = vsel %vm542, %v454, 0
      %v571 = vsel %vm542, %v456, 0
      %v574 = vsel %vm542, %v458, 0
      %v577 = vsel %vm542, %v460, 0
      %v580 = vsel %vm542, %v462, 0
      %v583 = vsel %vm542, %v464, 0
      %v586 = vsel %vm542, %v466, 0
      %v589 = vsel %vm542, %v468, 0
      %vm591 = vcmask 1040384
      %vm592 = vcmask 1041408
      %v593 = vsel %vm591, 4294967295, 65535
      %v594 = vsel %vm592, %v593, 0
      %v596 = vand.u32 %v532, %v594
      %598 = vmatpush.bf16.msra.mxu0 %v530
      %599 = vmatpush.bf16.msra.mxu0 %v529
      %600 = vmatpush.bf16.msra.mxu0 %v528
      %601 = vmatpush.bf16.msra.mxu0 %v527
      %602 = vmatpush.bf16.msra.mxu0 %v526
      %603 = vmatpush.bf16.msra.mxu0 %v525
      %604 = vmatpush.bf16.msra.mxu0 %v524
      %605 = vmatpush.bf16.msra.mxu0 %v523
      %606 = vmatmul.bf16.gmra.mxu0 %v437
      %v607 = vpop.f32.mrf.mxu0
      %v608 = vadd.f32 0.0, %v607
      %v609 = vpop.f32.mrf.mxu0
      %v610 = vadd.f32 0.0, %v609
      %611 = vmatmul.bf16.gmra.mxu0 %v439
      %v612 = vpop.f32.mrf.mxu0
      %v613 = vadd.f32 0.0, %v612
      %v614 = vpop.f32.mrf.mxu0
      %v615 = vadd.f32 0.0, %v614
      %616 = vmatmul.bf16.gmra.mxu0 %v441
      %v617 = vpop.f32.mrf.mxu0
      %v618 = vadd.f32 0.0, %v617
      %v619 = vpop.f32.mrf.mxu0
      %v620 = vadd.f32 0.0, %v619
      %621 = vmatmul.bf16.gmra.mxu0 %v443
      %v622 = vpop.f32.mrf.mxu0
      %v623 = vadd.f32 0.0, %v622
      %v624 = vpop.f32.mrf.mxu0
      %v625 = vadd.f32 0.0, %v624
      %626 = vmatmul.bf16.gmra.mxu0 %v445
      %v627 = vpop.f32.mrf.mxu0
      %v628 = vadd.f32 0.0, %v627
      %v629 = vpop.f32.mrf.mxu0
      %v630 = vadd.f32 0.0, %v629
      %631 = vmatmul.bf16.gmra.mxu0 %v447
      %v632 = vpop.f32.mrf.mxu0
      %v633 = vadd.f32 0.0, %v632
      %v634 = vpop.f32.mrf.mxu0
      %v635 = vadd.f32 0.0, %v634
      %636 = vmatmul.bf16.gmra.mxu0 %v449
      %v637 = vpop.f32.mrf.mxu0
      %v638 = vadd.f32 0.0, %v637
      %v639 = vpop.f32.mrf.mxu0
      %v640 = vadd.f32 0.0, %v639
      %641 = vmatmul.bf16.gmra.mxu0 %v451
      %v642 = vpop.f32.mrf.mxu0
      %v643 = vadd.f32 0.0, %v642
      %v644 = vpop.f32.mrf.mxu0
      %v645 = vadd.f32 0.0, %v644
      %646 = vmatmul.bf16.gmra.mxu0 %v453
      %v647 = vpop.f32.mrf.mxu0
      %v648 = vadd.f32 0.0, %v647
      %v649 = vpop.f32.mrf.mxu0
      %v650 = vadd.f32 0.0, %v649
      %651 = vmatmul.bf16.gmra.mxu0 %v455
      %v652 = vpop.f32.mrf.mxu0
      %v653 = vadd.f32 0.0, %v652
      %v654 = vpop.f32.mrf.mxu0
      %v655 = vadd.f32 0.0, %v654
      %656 = vmatmul.bf16.gmra.mxu0 %v457
      %v657 = vpop.f32.mrf.mxu0
      %v658 = vadd.f32 0.0, %v657
      %v659 = vpop.f32.mrf.mxu0
      %v660 = vadd.f32 0.0, %v659
      %661 = vmatmul.bf16.gmra.mxu0 %v459
      %v662 = vpop.f32.mrf.mxu0
      %v663 = vadd.f32 0.0, %v662
      %v664 = vpop.f32.mrf.mxu0
      %v665 = vadd.f32 0.0, %v664
      %666 = vmatmul.bf16.gmra.mxu0 %v461
      %v667 = vpop.f32.mrf.mxu0
      %v668 = vadd.f32 0.0, %v667
      %v669 = vpop.f32.mrf.mxu0
      %v670 = vadd.f32 0.0, %v669
      %671 = vmatmul.bf16.gmra.mxu0 %v463
      %v672 = vpop.f32.mrf.mxu0
      %v673 = vadd.f32 0.0, %v672
      %v674 = vpop.f32.mrf.mxu0
      %v675 = vadd.f32 0.0, %v674
      %676 = vmatmul.bf16.gmra.mxu0 %v465
      %v677 = vpop.f32.mrf.mxu0
      %v678 = vadd.f32 0.0, %v677
      %v679 = vpop.f32.mrf.mxu0
      %v680 = vadd.f32 0.0, %v679
      %681 = vmatmul.bf16.gmra.mxu0 %v467
      %v682 = vpop.f32.mrf.mxu0
      %v683 = vadd.f32 0.0, %v682
      %v684 = vpop.f32.mrf.mxu0
      %v685 = vadd.f32 0.0, %v684
      %686 = vdwg.mxu0
      %687 = vmatpush.bf16.msra.mxu0 0
      %688 = vmatpush.bf16.msra.mxu0 0
      %689 = vmatpush.bf16.msra.mxu0 0
      %690 = vmatpush.bf16.msra.mxu0 0
      %691 = vmatpush.bf16.msra.mxu0 0
      %692 = vmatpush.bf16.msra.mxu0 0
      %693 = vmatpush.bf16.msra.mxu0 %v596
      %694 = vmatpush.bf16.msra.mxu0 %v531
      %695 = vmatmul.bf16.gmra.mxu0 %v544
      %v696 = vpop.f32.mrf.mxu0
      %v697 = vadd.f32 %v608, %v696
      %v698 = vpop.f32.mrf.mxu0
      %v699 = vadd.f32 %v610, %v698
      %700 = vmatmul.bf16.gmra.mxu0 %v547
      %v701 = vpop.f32.mrf.mxu0
      %v702 = vadd.f32 %v613, %v701
      %v703 = vpop.f32.mrf.mxu0
      %v704 = vadd.f32 %v615, %v703
      %705 = vmatmul.bf16.gmra.mxu0 %v550
      %v706 = vpop.f32.mrf.mxu0
      %v707 = vadd.f32 %v618, %v706
      %v708 = vpop.f32.mrf.mxu0
      %v709 = vadd.f32 %v620, %v708
      %710 = vmatmul.bf16.gmra.mxu0 %v553
      %v711 = vpop.f32.mrf.mxu0
      %v712 = vadd.f32 %v623, %v711
      %v713 = vpop.f32.mrf.mxu0
      %v714 = vadd.f32 %v625, %v713
      %715 = vmatmul.bf16.gmra.mxu0 %v556
      %v716 = vpop.f32.mrf.mxu0
      %v717 = vadd.f32 %v628, %v716
      %v718 = vpop.f32.mrf.mxu0
      %v719 = vadd.f32 %v630, %v718
      %720 = vmatmul.bf16.gmra.mxu0 %v559
      %v721 = vpop.f32.mrf.mxu0
      %v722 = vadd.f32 %v633, %v721
      %v723 = vpop.f32.mrf.mxu0
      %v724 = vadd.f32 %v635, %v723
      %725 = vmatmul.bf16.gmra.mxu0 %v562
      %v726 = vpop.f32.mrf.mxu0
      %v727 = vadd.f32 %v638, %v726
      %v728 = vpop.f32.mrf.mxu0
      %v729 = vadd.f32 %v640, %v728
      %730 = vmatmul.bf16.gmra.mxu0 %v565
      %v731 = vpop.f32.mrf.mxu0
      %v732 = vadd.f32 %v643, %v731
      %v733 = vpop.f32.mrf.mxu0
      %v734 = vadd.f32 %v645, %v733
      %735 = vmatmul.bf16.gmra.mxu0 %v568
      %v736 = vpop.f32.mrf.mxu0
      %v737 = vadd.f32 %v648, %v736
      %v738 = vpop.f32.mrf.mxu0
      %v739 = vadd.f32 %v650, %v738
      %740 = vmatmul.bf16.gmra.mxu0 %v571
      %v741 = vpop.f32.mrf.mxu0
      %v742 = vadd.f32 %v653, %v741
      %v743 = vpop.f32.mrf.mxu0
      %v744 = vadd.f32 %v655, %v743
      %745 = vmatmul.bf16.gmra.mxu0 %v574
      %v746 = vpop.f32.mrf.mxu0
      %v747 = vadd.f32 %v658, %v746
      %v748 = vpop.f32.mrf.mxu0
      %v749 = vadd.f32 %v660, %v748
      %750 = vmatmul.bf16.gmra.mxu0 %v577
      %v751 = vpop.f32.mrf.mxu0
      %v752 = vadd.f32 %v663, %v751
      %v753 = vpop.f32.mrf.mxu0
      %v754 = vadd.f32 %v665, %v753
      %755 = vmatmul.bf16.gmra.mxu0 %v580
      %v756 = vpop.f32.mrf.mxu0
      %v757 = vadd.f32 %v668, %v756
      %v758 = vpop.f32.mrf.mxu0
      %v759 = vadd.f32 %v670, %v758
      %760 = vmatmul.bf16.gmra.mxu0 %v583
      %v761 = vpop.f32.mrf.mxu0
      %v762 = vadd.f32 %v673, %v761
      %v763 = vpop.f32.mrf.mxu0
      %v764 = vadd.f32 %v675, %v763
      %765 = vmatmul.bf16.gmra.mxu0 %v586
      %v766 = vpop.f32.mrf.mxu0
      %v767 = vadd.f32 %v678, %v766
      %v768 = vpop.f32.mrf.mxu0
      %v769 = vadd.f32 %v680, %v768
      %770 = vmatmul.bf16.gmra.mxu0 %v589
      %v771 = vpop.f32.mrf.mxu0
      %v772 = vadd.f32 %v683, %v771
      %v773 = vpop.f32.mrf.mxu0
      %v774 = vadd.f32 %v685, %v773
      %775 = vdwg.mxu0
      %v776 = vadd.f32 %v258, %v697
      %v777 = vadd.f32 %v259, %v699
      %v778 = vadd.f32 %v260, %v702
      %v779 = vadd.f32 %v261, %v704
      %v780 = vadd.f32 %v262, %v707
      %v781 = vadd.f32 %v263, %v709
      %v782 = vadd.f32 %v264, %v712
      %v783 = vadd.f32 %v265, %v714
      %v784 = vadd.f32 %v266, %v717
      %v785 = vadd.f32 %v267, %v719
      %v786 = vadd.f32 %v268, %v722
      %v787 = vadd.f32 %v269, %v724
      %v788 = vadd.f32 %v270, %v727
      %v789 = vadd.f32 %v271, %v729
      %v790 = vadd.f32 %v272, %v732
      %v791 = vadd.f32 %v273, %v734
      %v792 = vadd.f32 %v274, %v737
      %v793 = vadd.f32 %v275, %v739
      %v794 = vadd.f32 %v276, %v742
      %v795 = vadd.f32 %v277, %v744
      %v796 = vadd.f32 %v278, %v747
      %v797 = vadd.f32 %v279, %v749
      %v798 = vadd.f32 %v280, %v752
      %v799 = vadd.f32 %v281, %v754
      %v800 = vadd.f32 %v282, %v757
      %v801 = vadd.f32 %v283, %v759
      %v802 = vadd.f32 %v284, %v762
      %v803 = vadd.f32 %v285, %v764
      %v804 = vadd.f32 %v286, %v767
      %v805 = vadd.f32 %v287, %v769
      %v806 = vadd.f32 %v288, %v772
      %v807 = vadd.f32 %v289, %v774
      %808 = vst [vmem:[#allocation2] sm:$0xff] %v776
      %809 = vst [vmem:[#allocation2 + $0x8] sm:$0xff] %v777
      %810 = vst [vmem:[#allocation2 + $0x10] sm:$0xff] %v778
      %811 = vst [vmem:[#allocation2 + $0x18] sm:$0xff] %v779
      %812 = vst [vmem:[#allocation2 + $0x20] sm:$0xff] %v780
      %813 = vst [vmem:[#allocation2 + $0x28] sm:$0xff] %v781
      %814 = vst [vmem:[#allocation2 + $0x30] sm:$0xff] %v782
      %815 = vst [vmem:[#allocation2 + $0x38] sm:$0xff] %v783
      %816 = vst [vmem:[#allocation2 + $0x40] sm:$0xff] %v784
      %817 = vst [vmem:[#allocation2 + $0x48] sm:$0xff] %v785
      %818 = vst [vmem:[#allocation2 + $0x50] sm:$0xff] %v786
      %819 = vst [vmem:[#allocation2 + $0x58] sm:$0xff] %v787
      %820 = vst [vmem:[#allocation2 + $0x60] sm:$0xff] %v788
      %821 = vst [vmem:[#allocation2 + $0x68] sm:$0xff] %v789
      %822 = vst [vmem:[#allocation2 + $0x70] sm:$0xff] %v790
      %823 = vst [vmem:[#allocation2 + $0x78] sm:$0xff] %v791
      %824 = vst [vmem:[#allocation2 + $0x80] sm:$0xff] %v792
      %825 = vst [vmem:[#allocation2 + $0x88] sm:$0xff] %v793
      %826 = vst [vmem:[#allocation2 + $0x90] sm:$0xff] %v794
      %827 = vst [vmem:[#allocation2 + $0x98] sm:$0xff] %v795
      %828 = vst [vmem:[#allocation2 + $0xa0] sm:$0xff] %v796
      %829 = vst [vmem:[#allocation2 + $0xa8] sm:$0xff] %v797
      %830 = vst [vmem:[#allocation2 + $0xb0] sm:$0xff] %v798
      %831 = vst [vmem:[#allocation2 + $0xb8] sm:$0xff] %v799
      %832 = vst [vmem:[#allocation2 + $0xc0] sm:$0xff] %v800
      %833 = vst [vmem:[#allocation2 + $0xc8] sm:$0xff] %v801
      %834 = vst [vmem:[#allocation2 + $0xd0] sm:$0xff] %v802
      %835 = vst [vmem:[#allocation2 + $0xd8] sm:$0xff] %v803
      %836 = vst [vmem:[#allocation2 + $0xe0] sm:$0xff] %v804
      %837 = vst [vmem:[#allocation2 + $0xe8] sm:$0xff] %v805
      %838 = vst [vmem:[#allocation2 + $0xf0] sm:$0xff] %v806
      %839 = vst [vmem:[#allocation2 + $0xf8] sm:$0xff] %v807
      // Predicated region
      $region37: #{inception_generator_forward.17} parent=31 // pred_check
        %p840 = pneg %p222
      $region38: #{inception_generator_forward.17} parent=31 // pred_check_branch
        %842 = sbr.rel (%p840) target = $region40
      $region39: #{inception_generator_forward.17} parent=31 // pred_region
        %v843 = vld [vmem:[#allocation2] sm:$0xff]
        %v844 = vld [vmem:[#allocation2 + $0x8] sm:$0xff]
        %v845 = vld [vmem:[#allocation2 + $0x10] sm:$0xff]
        %v846 = vld [vmem:[#allocation2 + $0x18] sm:$0xff]
        %v847 = vld [vmem:[#allocation2 + $0x20] sm:$0xff]
        %v848 = vld [vmem:[#allocation2 + $0x28] sm:$0xff]
        %v849 = vld [vmem:[#allocation2 + $0x30] sm:$0xff]
        %v850 = vld [vmem:[#allocation2 + $0x38] sm:$0xff]
        %v851 = vld [vmem:[#allocation2 + $0x40] sm:$0xff]
        %v852 = vld [vmem:[#allocation2 + $0x48] sm:$0xff]
        %v853 = vld [vmem:[#allocation2 + $0x50] sm:$0xff]
        %v854 = vld [vmem:[#allocation2 + $0x58] sm:$0xff]
        %v855 = vld [vmem:[#allocation2 + $0x60] sm:$0xff]
        %v856 = vld [vmem:[#allocation2 + $0x68] sm:$0xff]
        %v857 = vld [vmem:[#allocation2 + $0x70] sm:$0xff]
        %v858 = vld [vmem:[#allocation2 + $0x78] sm:$0xff]
        %v859 = vld [vmem:[#allocation2 + $0x80] sm:$0xff]
        %v860 = vld [vmem:[#allocation2 + $0x88] sm:$0xff]
        %v861 = vld [vmem:[#allocation2 + $0x90] sm:$0xff]
        %v862 = vld [vmem:[#allocation2 + $0x98] sm:$0xff]
        %v863 = vld [vmem:[#allocation2 + $0xa0] sm:$0xff]
        %v864 = vld [vmem:[#allocation2 + $0xa8] sm:$0xff]
        %v865 = vld [vmem:[#allocation2 + $0xb0] sm:$0xff]
        %v866 = vld [vmem:[#allocation2 + $0xb8] sm:$0xff]
        %v867 = vld [vmem:[#allocation2 + $0xc0] sm:$0xff]
        %v868 = vld [vmem:[#allocation2 + $0xc8] sm:$0xff]
        %v869 = vld [vmem:[#allocation2 + $0xd0] sm:$0xff]
        %v870 = vld [vmem:[#allocation2 + $0xd8] sm:$0xff]
        %v871 = vld [vmem:[#allocation2 + $0xe0] sm:$0xff]
        %v872 = vld [vmem:[#allocation2 + $0xe8] sm:$0xff]
        %v873 = vld [vmem:[#allocation2 + $0xf0] sm:$0xff]
        %v874 = vld [vmem:[#allocation2 + $0xf8] sm:$0xff]
        %v875 = vld [vmem:[%s2] sm:$0x1]
        %v877 = vperm.slane %v875, 0
        %v879 = vadd.f32 %v843, %v877
        %v880 = vadd.f32 %v844, %v877
        %v881 = vadd.f32 %v845, %v877
        %v882 = vadd.f32 %v846, %v877
        %v883 = vadd.f32 %v847, %v877
        %v884 = vadd.f32 %v848, %v877
        %v885 = vadd.f32 %v849, %v877
        %v886 = vadd.f32 %v850, %v877
        %v887 = vadd.f32 %v851, %v877
        %v888 = vadd.f32 %v852, %v877
        %v889 = vadd.f32 %v853, %v877
        %v890 = vadd.f32 %v854, %v877
        %v891 = vadd.f32 %v855, %v877
        %v892 = vadd.f32 %v856, %v877
        %v893 = vadd.f32 %v857, %v877
        %v894 = vadd.f32 %v858, %v877
        %v895 = vadd.f32 %v859, %v877
        %v896 = vadd.f32 %v860, %v877
        %v897 = vadd.f32 %v861, %v877
        %v898 = vadd.f32 %v862, %v877
        %v899 = vadd.f32 %v863, %v877
        %v900 = vadd.f32 %v864, %v877
        %v901 = vadd.f32 %v865, %v877
        %v902 = vadd.f32 %v866, %v877
        %v903 = vadd.f32 %v867, %v877
        %v904 = vadd.f32 %v868, %v877
        %v905 = vadd.f32 %v869, %v877
        %v906 = vadd.f32 %v870, %v877
        %v907 = vadd.f32 %v871, %v877
        %v908 = vadd.f32 %v872, %v877
        %v909 = vadd.f32 %v873, %v877
        %v910 = vadd.f32 %v874, %v877
        %v911 = vadd.f32 %v879, %v880
        %v912 = vadd.f32 %v911, %v881
        %v913 = vadd.f32 %v912, %v882
        %v914 = vadd.f32 %v913, %v883
        %v915 = vadd.f32 %v914, %v884
        %v916 = vadd.f32 %v915, %v885
        %v917 = vadd.f32 %v916, %v886
        %v918 = vadd.f32 %v917, %v887
        %v919 = vadd.f32 %v918, %v888
        %v920 = vadd.f32 %v919, %v889
        %v921 = vadd.f32 %v920, %v890
        %v922 = vadd.f32 %v921, %v891
        %v923 = vadd.f32 %v922, %v892
        %v924 = vadd.f32 %v923, %v893
        %v925 = vadd.f32 %v924, %v894
        %v926 = vadd.f32 %v925, %v895
        %v927 = vadd.f32 %v926, %v896
        %v928 = vadd.f32 %v927, %v897
        %v929 = vadd.f32 %v928, %v898
        %v930 = vadd.f32 %v929, %v899
        %v931 = vadd.f32 %v930, %v900
        %v932 = vadd.f32 %v931, %v901
        %v933 = vadd.f32 %v932, %v902
        %v934 = vadd.f32 %v933, %v903
        %v935 = vadd.f32 %v934, %v904
        %v936 = vadd.f32 %v935, %v905
        %v937 = vadd.f32 %v936, %v906
        %v938 = vadd.f32 %v937, %v907
        %v939 = vadd.f32 %v938, %v908
        %v940 = vadd.f32 %v939, %v909
        %v941 = vadd.f32 %v940, %v910
        %v942 = vrot.slane %v941, 4
        %v943 = vadd.f32 %v941, %v942
        %v944 = vrot.slane %v943, 2
        %v945 = vadd.f32 %v943, %v944
        %v946 = vrot.slane %v945, 1
        %v947 = vadd.f32 %v945, %v946
        %v948 = vmul.f32 %v947, 0.00390625
        %v949 = vmul.f32 %v879, %v879
        %v950 = vmul.f32 %v880, %v880
        %v951 = vmul.f32 %v881, %v881
        %v952 = vmul.f32 %v882, %v882
        %v953 = vmul.f32 %v883, %v883
        %v954 = vmul.f32 %v884, %v884
        %v955 = vmul.f32 %v885, %v885
        %v956 = vmul.f32 %v886, %v886
        %v957 = vmul.f32 %v887, %v887
        %v958 = vmul.f32 %v888, %v888
        %v959 = vmul.f32 %v889, %v889
        %v960 = vmul.f32 %v890, %v890
        %v961 = vmul.f32 %v891, %v891
        %v962 = vmul.f32 %v892, %v892
        %v963 = vmul.f32 %v893, %v893
        %v964 = vmul.f32 %v894, %v894
        %v965 = vmul.f32 %v895, %v895
        %v966 = vmul.f32 %v896, %v896
        %v967 = vmul.f32 %v897, %v897
        %v968 = vmul.f32 %v898, %v898
        %v969 = vmul.f32 %v899, %v899
        %v970 = vmul.f32 %v900, %v900
        %v971 = vmul.f32 %v901, %v901
        %v972 = vmul.f32 %v902, %v902
        %v973 = vmul.f32 %v903, %v903
        %v974 = vmul.f32 %v904, %v904
        %v975 = vmul.f32 %v905, %v905
        %v976 = vmul.f32 %v906, %v906
        %v977 = vmul.f32 %v907, %v907
        %v978 = vmul.f32 %v908, %v908
        %v979 = vmul.f32 %v909, %v909
        %v980 = vmul.f32 %v910, %v910
        %v981 = vadd.f32 %v949, %v950
        %v982 = vadd.f32 %v981, %v951
        %v983 = vadd.f32 %v982, %v952
        %v984 = vadd.f32 %v983, %v953
        %v985 = vadd.f32 %v984, %v954
        %v986 = vadd.f32 %v985, %v955
        %v987 = vadd.f32 %v986, %v956
        %v988 = vadd.f32 %v987, %v957
        %v989 = vadd.f32 %v988, %v958
        %v990 = vadd.f32 %v989, %v959
        %v991 = vadd.f32 %v990, %v960
        %v992 = vadd.f32 %v991, %v961
        %v993 = vadd.f32 %v992, %v962
        %v994 = vadd.f32 %v993, %v963
        %v995 = vadd.f32 %v994, %v964
        %v996 = vadd.f32 %v995, %v965
        %v997 = vadd.f32 %v996, %v966
        %v998 = vadd.f32 %v997, %v967
        %v999 = vadd.f32 %v998, %v968
        %v1000 = vadd.f32 %v999, %v969
        %v1001 = vadd.f32 %v1000, %v970
        %v1002 = vadd.f32 %v1001, %v971
        %v1003 = vadd.f32 %v1002, %v972
        %v1004 = vadd.f32 %v1003, %v973
        %v1005 = vadd.f32 %v1004, %v974
        %v1006 = vadd.f32 %v1005, %v975
        %v1007 = vadd.f32 %v1006, %v976
        %v1008 = vadd.f32 %v1007, %v977
        %v1009 = vadd.f32 %v1008, %v978
        %v1010 = vadd.f32 %v1009, %v979
        %v1011 = vadd.f32 %v1010, %v980
        %v1012 = vrot.slane %v1011, 4
        %v1013 = vadd.f32 %v1011, %v1012
        %v1014 = vrot.slane %v1013, 2
        %v1015 = vadd.f32 %v1013, %v1014
        %v1016 = vrot.slane %v1015, 1
        %v1017 = vadd.f32 %v1015, %v1016
        %v1018 = vmul.f32 %v1017, 0.00390625
        %v1019 = vmul.f32 %v948, %v948
        %v1020 = vsub.f32 %v1018, %v1019
        %v1021 = vsub.f32 %v879, %v948
        %v1022 = vsub.f32 %v880, %v948
        %v1023 = vsub.f32 %v881, %v948
        %v1024 = vsub.f32 %v882, %v948
        %v1025 = vsub.f32 %v883, %v948
        %v1026 = vsub.f32 %v884, %v948
        %v1027 = vsub.f32 %v885, %v948
        %v1028 = vsub.f32 %v886, %v948
        %v1029 = vsub.f32 %v887, %v948
        %v1030 = vsub.f32 %v888, %v948
        %v1031 = vsub.f32 %v889, %v948
        %v1032 = vsub.f32 %v890, %v948
        %v1033 = vsub.f32 %v891, %v948
        %v1034 = vsub.f32 %v892, %v948
        %v1035 = vsub.f32 %v893, %v948
        %v1036 = vsub.f32 %v894, %v948
        %v1037 = vsub.f32 %v895, %v948
        %v1038 = vsub.f32 %v896, %v948
        %v1039 = vsub.f32 %v897, %v948
        %v1040 = vsub.f32 %v898, %v948
        %v1041 = vsub.f32 %v899, %v948
        %v1042 = vsub.f32 %v900, %v948
        %v1043 = vsub.f32 %v901, %v948
        %v1044 = vsub.f32 %v902, %v948
        %v1045 = vsub.f32 %v903, %v948
        %v1046 = vsub.f32 %v904, %v948
        %v1047 = vsub.f32 %v905, %v948
        %v1048 = vsub.f32 %v906, %v948
        %v1049 = vsub.f32 %v907, %v948
        %v1050 = vsub.f32 %v908, %v948
        %v1051 = vsub.f32 %v909, %v948
        %v1052 = vsub.f32 %v910, %v948
        %v1053 = vmax.f32 %v1020, 0.0
        %v1054 = vadd.f32 %v1053, 1e-05
        %v1055 = vrsqrt.pop %v1054
        %v1056 = vmul.f32 %v1055, %v1054
        %v1057 = vmul.f32 %v1056, %v1055
        %v1058 = vmul.f32 0.5, %v1057
        %v1059 = vsub.f32 1.5, %v1058
        %v1060 = vmul.f32 %v1055, %v1059
        %vm1061 = vweird.f32 %v1054
        %vm1062 = vweird.f32 %v1055
        %vm1063 = vmor %vm1061, %vm1062
        %v1064 = vsel %vm1063, %v1055, %v1060
        %v1065 = vmul.f32 %v1021, %v1064
        %v1066 = vmul.f32 %v1022, %v1064
        %v1067 = vmul.f32 %v1023, %v1064
        %v1068 = vmul.f32 %v1024, %v1064
        %v1069 = vmul.f32 %v1025, %v1064
        %v1070 = vmul.f32 %v1026, %v1064
        %v1071 = vmul.f32 %v1027, %v1064
        %v1072 = vmul.f32 %v1028, %v1064
        %v1073 = vmul.f32 %v1029, %v1064
        %v1074 = vmul.f32 %v1030, %v1064
        %v1075 = vmul.f32 %v1031, %v1064
        %v1076 = vmul.f32 %v1032, %v1064
        %v1077 = vmul.f32 %v1033, %v1064
        %v1078 = vmul.f32 %v1034, %v1064
        %v1079 = vmul.f32 %v1035, %v1064
        %v1080 = vmul.f32 %v1036, %v1064
        %v1081 = vmul.f32 %v1037, %v1064
        %v1082 = vmul.f32 %v1038, %v1064
        %v1083 = vmul.f32 %v1039, %v1064
        %v1084 = vmul.f32 %v1040, %v1064
        %v1085 = vmul.f32 %v1041, %v1064
        %v1086 = vmul.f32 %v1042, %v1064
        %v1087 = vmul.f32 %v1043, %v1064
        %v1088 = vmul.f32 %v1044, %v1064
        %v1089 = vmul.f32 %v1045, %v1064
        %v1090 = vmul.f32 %v1046, %v1064
        %v1091 = vmul.f32 %v1047, %v1064
        %v1092 = vmul.f32 %v1048, %v1064
        %v1093 = vmul.f32 %v1049, %v1064
        %v1094 = vmul.f32 %v1050, %v1064
        %v1095 = vmul.f32 %v1051, %v1064
        %v1096 = vmul.f32 %v1052, %v1064
        %v1097 = vmax.f32 %v1065, 0.0
        %v1098 = vmax.f32 %v1066, 0.0
        %v1099 = vmax.f32 %v1067, 0.0
        %v1100 = vmax.f32 %v1068, 0.0
        %v1101 = vmax.f32 %v1069, 0.0
        %v1102 = vmax.f32 %v1070, 0.0
        %v1103 = vmax.f32 %v1071, 0.0
        %v1104 = vmax.f32 %v1072, 0.0
        %v1105 = vmax.f32 %v1073, 0.0
        %v1106 = vmax.f32 %v1074, 0.0
        %v1107 = vmax.f32 %v1075, 0.0
        %v1108 = vmax.f32 %v1076, 0.0
        %v1109 = vmax.f32 %v1077, 0.0
        %v1110 = vmax.f32 %v1078, 0.0
        %v1111 = vmax.f32 %v1079, 0.0
        %v1112 = vmax.f32 %v1080, 0.0
        %v1113 = vmax.f32 %v1081, 0.0
        %v1114 = vmax.f32 %v1082, 0.0
        %v1115 = vmax.f32 %v1083, 0.0
        %v1116 = vmax.f32 %v1084, 0.0
        %v1117 = vmax.f32 %v1085, 0.0
        %v1118 = vmax.f32 %v1086, 0.0
        %v1119 = vmax.f32 %v1087, 0.0
        %v1120 = vmax.f32 %v1088, 0.0
        %v1121 = vmax.f32 %v1089, 0.0
        %v1122 = vmax.f32 %v1090, 0.0
        %v1123 = vmax.f32 %v1091, 0.0
        %v1124 = vmax.f32 %v1092, 0.0
        %v1125 = vmax.f32 %v1093, 0.0
        %v1126 = vmax.f32 %v1094, 0.0
        %v1127 = vmax.f32 %v1095, 0.0
        %v1128 = vmax.f32 %v1096, 0.0
        %v1129 = vpack.c.bf16 %v1097, %v1097
        %v1130 = vpack.c.bf16 %v1098, %v1098
        %v1131 = vpack.c.bf16 %v1099, %v1099
        %v1132 = vpack.c.bf16 %v1100, %v1100
        %v1133 = vpack.c.bf16 %v1101, %v1101
        %v1134 = vpack.c.bf16 %v1102, %v1102
        %v1135 = vpack.c.bf16 %v1103, %v1103
        %v1136 = vpack.c.bf16 %v1104, %v1104
        %v1137 = vpack.c.bf16 %v1105, %v1105
        %v1138 = vpack.c.bf16 %v1106, %v1106
        %v1139 = vpack.c.bf16 %v1107, %v1107
        %v1140 = vpack.c.bf16 %v1108, %v1108
        %v1141 = vpack.c.bf16 %v1109, %v1109
        %v1142 = vpack.c.bf16 %v1110, %v1110
        %v1143 = vpack.c.bf16 %v1111, %v1111
        %v1144 = vpack.c.bf16 %v1112, %v1112
        %v1145 = vpack.c.bf16 %v1113, %v1113
        %v1146 = vpack.c.bf16 %v1114, %v1114
        %v1147 = vpack.c.bf16 %v1115, %v1115
        %v1148 = vpack.c.bf16 %v1116, %v1116
        %v1149 = vpack.c.bf16 %v1117, %v1117
        %v1150 = vpack.c.bf16 %v1118, %v1118
        %v1151 = vpack.c.bf16 %v1119, %v1119
        %v1152 = vpack.c.bf16 %v1120, %v1120
        %v1153 = vpack.c.bf16 %v1121, %v1121
        %v1154 = vpack.c.bf16 %v1122, %v1122
        %v1155 = vpack.c.bf16 %v1123, %v1123
        %v1156 = vpack.c.bf16 %v1124, %v1124
        %v1157 = vpack.c.bf16 %v1125, %v1125
        %v1158 = vpack.c.bf16 %v1126, %v1126
        %v1159 = vpack.c.bf16 %v1127, %v1127
        %v1160 = vpack.c.bf16 %v1128, %v1128
        %1161 = vst [vmem:[%s220] sm:$0xf] %v1129
        %1162 = vst [vmem:[%s220 + $0x4] sm:$0xf] %v1130
        %1163 = vst [vmem:[%s220 + $0x8] sm:$0xf] %v1131
        %1164 = vst [vmem:[%s220 + $0xc] sm:$0xf] %v1132
        %1165 = vst [vmem:[%s220 + $0x10] sm:$0xf] %v1133
        %1166 = vst [vmem:[%s220 + $0x14] sm:$0xf] %v1134
        %1167 = vst [vmem:[%s220 + $0x18] sm:$0xf] %v1135
        %1168 = vst [vmem:[%s220 + $0x1c] sm:$0xf] %v1136
        %1169 = vst [vmem:[%s220 + $0x20] sm:$0xf] %v1137
        %1170 = vst [vmem:[%s220 + $0x24] sm:$0xf] %v1138
        %1171 = vst [vmem:[%s220 + $0x28] sm:$0xf] %v1139
        %1172 = vst [vmem:[%s220 + $0x2c] sm:$0xf] %v1140
        %1173 = vst [vmem:[%s220 + $0x30] sm:$0xf] %v1141
        %1174 = vst [vmem:[%s220 + $0x34] sm:$0xf] %v1142
        %1175 = vst [vmem:[%s220 + $0x38] sm:$0xf] %v1143
        %1176 = vst [vmem:[%s220 + $0x3c] sm:$0xf] %v1144
        %1177 = vst [vmem:[%s220 + $0x40] sm:$0xf] %v1145
        %1178 = vst [vmem:[%s220 + $0x44] sm:$0xf] %v1146
        %1179 = vst [vmem:[%s220 + $0x48] sm:$0xf] %v1147
        %1180 = vst [vmem:[%s220 + $0x4c] sm:$0xf] %v1148
        %1181 = vst [vmem:[%s220 + $0x50] sm:$0xf] %v1149
        %1182 = vst [vmem:[%s220 + $0x54] sm:$0xf] %v1150
        %1183 = vst [vmem:[%s220 + $0x58] sm:$0xf] %v1151
        %1184 = vst [vmem:[%s220 + $0x5c] sm:$0xf] %v1152
        %1185 = vst [vmem:[%s220 + $0x60] sm:$0xf] %v1153
        %1186 = vst [vmem:[%s220 + $0x64] sm:$0xf] %v1154
        %1187 = vst [vmem:[%s220 + $0x68] sm:$0xf] %v1155
        %1188 = vst [vmem:[%s220 + $0x6c] sm:$0xf] %v1156
        %1189 = vst [vmem:[%s220 + $0x70] sm:$0xf] %v1157
        %1190 = vst [vmem:[%s220 + $0x74] sm:$0xf] %v1158
        %1191 = vst [vmem:[%s220 + $0x78] sm:$0xf] %v1159
        %1192 = vst [vmem:[%s220 + $0x7c] sm:$0xf] %v1160
      $region40: #{inception_generator_forward.17} parent=31 // pred_fallthru
        _
      %p1193 = scmp.lt.s32.totalorder %s18, 1
      %s1194 = scalar_select %p1193, %s18, 1
      %s1195 = smul.addr %s1194, 32
      %s1196 = smul.addr %s1195, 4
      %s1197 = scalar_lea.vmem %s3, %s1196
      // Predicated region
      $region41: #{inception_generator_forward.17} parent=31 // pred_check
        %p1198 = pneg %p119
      $region42: #{inception_generator_forward.17} parent=31 // pred_check_branch
        %1200 = sbr.rel (%p1198) target = $region44
      $region43: #{inception_generator_forward.17} parent=31 // pred_region
        _
      $region44: #{inception_generator_forward.17} parent=31 // pred_fallthru
        _
    $region32: #{inception_generator_forward.17} parent=5 // pred_fallthru
      _
    %p1201 = scmp.le.s32.totalorder 2, %s9
    // Predicated region
    $region45: #{inception_generator_forward.17} parent=5 // pred_check
      %p1202 = pneg %p1201
    $region46: #{inception_generator_forward.17} parent=5 // pred_check_branch
      %1204 = sbr.rel (%p1202) target = $region48
    $region47: #{inception_generator_forward.17} parent=5 // pred_region
      %s1205 = ssub.s32 %s9, 2
      // Predicated region
      $region49: #{inception_generator_forward.17} parent=47 // pred_check
        %p1206 = pneg %p125
      $region50: #{inception_generator_forward.17} parent=47 // pred_check_branch
        %1208 = sbr.rel (%p1206) target = $region52
      $region51: #{inception_generator_forward.17} parent=47 // pred_region
        %p1209 = scmp.lt.s32.totalorder %s20, 1
        %s1210 = scalar_select %p1209, %s20, 1
        %s1211 = smul.addr %s1210, 32
        %s1212 = smul.addr %s1211, 4
        %s1213 = scalar_lea.vmem %s3, %s1212
      $region52: #{inception_generator_forward.17} parent=47 // pred_fallthru
        _
    $region48: #{inception_generator_forward.17} parent=5 // pred_fallthru
      _
  $region6: #{inception_generator_forward.17} parent=0 // loop_footer
    %s13 = sadd.s32 1, %s9
  $region7: #{inception_generator_forward.17} parent=0 // loop_footer_branch
    %8 = sbr.rel target = $region3
  $region8: #{inception_generator_forward.17} parent=0 // loop_exit
    _

// kernel: inception_generator_forward.18
$region0: #{inception_generator_forward.18}
  #allocation0 [shape = 'u32[]', space=smem, size = 0x4, offset = 0x4, fixed_abs, tag = 'smem constant byte address 0x4 - core index']
  #allocation1 [shape = 'u32[72,128]{1,0:T(1,128)}', space=vmem, size = 0x9000, scoped, tag = 'internal scratch']
  #allocation2 [shape = 'f32[64,128]{1,0:T(8,128)}', space=vmem, size = 0x8000, scoped, tag = 'scratch operand']
  %s0 = inlined_call_operand.vmem [shape: bf16[2,64,72], index: 0, kind: input, shape index: {}]
  %s1 = inlined_call_operand.vmem [shape: bf16[72,128], index: 1, kind: input, shape index: {}]
  %s2 = inlined_call_operand.vmem [shape: f32[1,128], index: 2, kind: input, shape index: {}]
  %s3 = inlined_call_operand.vmem [shape: bf16[2,64,128], index: 3, kind: output, shape index: {}]
  %s4 = sld [smem:[#allocation0]]
  $region53: #{inception_generator_forward.18} parent=0
    _
  %s6 = ssub.s32 1, %s4
  %s7 = scalar_select 0, %s6, %s4
  loop: start=0, step=1, limit=4
  $region2: #{inception_generator_forward.18} parent=0 // loop_pre_header
    _
  $region3: #{inception_generator_forward.18} parent=0 // loop_header
    %s9 = sphi 0, %s13
    %p10 = scmp.ge.s32.totalorder %s9, 4
    %s16 = sphi 0, %s28
    %s17 = sphi 0, %s24
    %s18 = sphi 0, %s16
    %s19 = sphi 0, %s17
    %s20 = sphi 0, %s18
    %s21 = sphi 0, %s19
    %s33 = sphi 0, %s35
    %s36 = sphi 0, %s33
    %s37 = sphi 0, %s36
    %s53 = sphi 0, %s37
    %s59 = sphi 0, %s61
    %s62 = sphi 0, %s59
    %s63 = sphi 0, %s62
    %s79 = sphi 0, %s63
    %s83 = sphi 0, %s83
    %s85 = sphi 0, %s83
    %s86 = sphi 0, %s85
    %s100 = sphi 0, %s86
    %s106 = sphi 0, %s108
    %s109 = sphi 0, %s106
    %s110 = sphi 0, %s109
    %s126 = sphi 0, %s110
  $region4: #{inception_generator_forward.18} parent=0 // loop_header_branch
    %12 = sbr.rel (%p10) target = $region8
  $region5: #{inception_generator_forward.18} parent=0 // loop_body
    %s14 = ssub.s32 %s9, 1
    %s15 = ssub.s32 %s9, 2
    %s22 = sadd.s32 1, %s17
    %p23 = scmp.ge.s32.totalorder %s22, 1
    %s24 = scalar_select %p23, 0, %s22
    %s25 = sadd.s32 1, %s16
    %s26 = scalar_select %p23, %s25, %s16
    %p27 = scmp.ge.s32.totalorder %s26, 2
    %s28 = scalar_select %p27, 0, %s26
    %s29 = ssub.s32 %s16, %s28
    %s30 = ssub.s32 %s17, %s24
    %s31 = sor.u32 %s29, %s30
    %p32 = scmp.eq.s32.totalorder %s31, 0
    %s34 = sadd.s32 %s33, 1
    %s35 = scalar_select %p32, %s33, %s34
    %p38 = pneg %p32
    %p39 = scmp.eq.s32.totalorder %s9, 1
    %p40 = por %p38, %p39
    %p41 = scmp.ne.s32.totalorder %s33, %s36
    %p42 = scmp.eq.s32.totalorder %s9, 0
    %p43 = por %p41, %p42
    %p44 = scmp.ne.s32.totalorder %s33, %s36
    %p45 = scmp.eq.s32.totalorder %s14, 1
    %p46 = por %p44, %p45
    %p47 = scmp.ne.s32.totalorder %s36, %s37
    %p48 = scmp.eq.s32.totalorder %s14, 0
    %p49 = por %p47, %p48
    %p50 = scmp.ne.s32.totalorder %s36, %s37
    %p51 = scmp.eq.s32.totalorder %s15, 1
    %p52 = por %p50, %p51
    %p54 = scmp.ne.s32.totalorder %s37, %s53
    %p55 = scmp.eq.s32.totalorder %s15, 0
    %p56 = por %p54, %p55
    %s57 = ssub.s32 %s17, %s24
    %p58 = scmp.eq.s32.totalorder %s57, 0
    %s60 = sadd.s32 %s59, 1
    %s61 = scalar_select %p58, %s59, %s60
    %p64 = pneg %p58
    %p65 = scmp.eq.s32.totalorder %s9, 1
    %p66 = por %p64, %p65
    %p67 = scmp.ne.s32.totalorder %s59, %s62
    %p68 = scmp.eq.s32.totalorder %s9, 0
    %p69 = por %p67, %p68
    %p70 = scmp.ne.s32.totalorder %s59, %s62
    %p71 = scmp.eq.s32.totalorder %s14, 1
    %p72 = por %p70, %p71
    %p73 = scmp.ne.s32.totalorder %s62, %s63
    %p74 = scmp.eq.s32.totalorder %s14, 0
    %p75 = por %p73, %p74
    %p76 = scmp.ne.s32.totalorder %s62, %s63
    %p77 = scmp.eq.s32.totalorder %s15, 1
    %p78 = por %p76, %p77
    %p80 = scmp.ne.s32.totalorder %s63, %s79
    %p81 = scmp.eq.s32.totalorder %s15, 0
    %p82 = por %p80, %p81
    %s84 = sadd.s32 %s83, 1
    %p87 = scmp.eq.s32.totalorder %s9, 1
    %p88 = scmp.ne.s32.totalorder %s83, %s85
    %p89 = scmp.eq.s32.totalorder %s9, 0
    %p90 = por %p88, %p89
    %p91 = scmp.ne.s32.totalorder %s83, %s85
    %p92 = scmp.eq.s32.totalorder %s14, 1
    %p93 = por %p91, %p92
    %p94 = scmp.ne.s32.totalorder %s85, %s86
    %p95 = scmp.eq.s32.totalorder %s14, 0
    %p96 = por %p94, %p95
    %p97 = scmp.ne.s32.totalorder %s85, %s86
    %p98 = scmp.eq.s32.totalorder %s15, 1
    %p99 = por %p97, %p98
    %p101 = scmp.ne.s32.totalorder %s86, %s100
    %p102 = scmp.eq.s32.totalorder %s15, 0
    %p103 = por %p101, %p102
    %s104 = ssub.s32 %s16, %s28
    %p105 = scmp.eq.s32.totalorder %s104, 0
    %s107 = sadd.s32 %s106, 1
    %s108 = scalar_select %p105, %s106, %s107
    %p111 = pneg %p105
    %p112 = scmp.eq.s32.totalorder %s9, 1
    %p113 = por %p111, %p112
    %p114 = scmp.ne.s32.totalorder %s106, %s109
    %p115 = scmp.eq.s32.totalorder %s9, 0
    %p116 = por %p114, %p115
    %p117 = scmp.ne.s32.totalorder %s106, %s109
    %p118 = scmp.eq.s32.totalorder %s14, 1
    %p119 = por %p117, %p118
    %p120 = scmp.ne.s32.totalorder %s109, %s110
    %p121 = scmp.eq.s32.totalorder %s14, 0
    %p122 = por %p120, %p121
    %p123 = scmp.ne.s32.totalorder %s109, %s110
    %p124 = scmp.eq.s32.totalorder %s15, 1
    %p125 = por %p123, %p124
    %p127 = scmp.ne.s32.totalorder %s110, %s126
    %p128 = scmp.eq.s32.totalorder %s15, 0
    %p129 = por %p127, %p128
    %p130 = scmp.le.s32.totalorder 1, %s9
    %p131 = scmp.lt.s32.totalorder %s9, 3
    %p132 = pnand %p130, %p131
    %p133 = pneg %p132
    // Predicated region
    $region9: #{inception_generator_forward.18} parent=5 // pred_check
      _
    $region10: #{inception_generator_forward.18} parent=5 // pred_check_branch
      %135 = sbr.rel (%p132) target = $region12
    $region11: #{inception_generator_forward.18} parent=5 // pred_region
      %s136 = ssub.s32 %s9, 1
      // Predicated region
      $region13: #{inception_generator_forward.18} parent=11 // pred_check
        %p137 = pneg %p75
      $region14: #{inception_generator_forward.18} parent=11 // pred_check_branch
        %139 = sbr.rel (%p137) target = $region16
      $region15: #{inception_generator_forward.18} parent=11 // pred_region
        %s140 = smul.u32 9, %s19
        %p141 = scmp.lt.s32.totalorder %s140, 8
        %s142 = scalar_select %p141, %s140, 8
        %s143 = smul.addr %s142, 4
        %s144 = scalar_lea.vmem %s1, %s143
        %s145 = smul.u32 9, %s19
      $region16: #{inception_generator_forward.18} parent=11 // pred_fallthru
        _
      // Predicated region
      $region17: #{inception_generator_forward.18} parent=11 // pred_check
        %p146 = pneg %p96
      $region18: #{inception_generator_forward.18} parent=11 // pred_check_branch
        %148 = sbr.rel (%p146) target = $region20
      $region19: #{inception_generator_forward.18} parent=11 // pred_region
        _
      $region20: #{inception_generator_forward.18} parent=11 // pred_fallthru
        _
    $region12: #{inception_generator_forward.18} parent=5 // pred_fallthru
      _
    %p149 = scmp.lt.s32.totalorder %s9, 2
    // Predicated region
    $region21: #{inception_generator_forward.18} parent=5 // pred_check
      %p150 = pneg %p149
    $region22: #{inception_generator_forward.18} parent=5 // pred_check_branch
      %152 = sbr.rel (%p150) target = $region24
    $region23: #{inception_generator_forward.18} parent=5 // pred_region
      // Predicated region
      $region25: #{inception_generator_forward.18} parent=23 // pred_check
        %p153 = pneg %p43
      $region26: #{inception_generator_forward.18} parent=23 // pred_check_branch
        %155 = sbr.rel (%p153) target = $region28
      $region27: #{inception_generator_forward.18} parent=23 // pred_region
        %p156 = scmp.lt.s32.totalorder %s16, 1
        %s157 = scalar_select %p156, %s16, 1
        %p158 = scmp.lt.s32.totalorder %s17, 0
        %s159 = scalar_select %p158, %s17, 0
        %s160 = smul.addr %s157, 8
        %s161 = sadd.s32 %s159, %s160
        %s162 = smul.addr %s161, 4
        %s163 = scalar_lea.vmem %s0, %s162
      $region28: #{inception_generator_forward.18} parent=23 // pred_fallthru
        _
    $region24: #{inception_generator_forward.18} parent=5 // pred_fallthru
      _
    %p164 = scmp.le.s32.totalorder 1, %s9
    %p165 = scmp.lt.s32.totalorder %s9, 3
    %p166 = pnand %p164, %p165
    %p167 = pneg %p166
    // Predicated region
    $region29: #{inception_generator_forward.18} parent=5 // pred_check
      _
    $region30: #{inception_generator_forward.18} parent=5 // pred_check_branch
      %169 = sbr.rel (%p166) target = $region32
    $region31: #{inception_generator_forward.18} parent=5 // pred_region
      %s170 = ssub.s32 %s9, 1
      %p171 = scmp.lt.s32.totalorder %s18, 1
      %s172 = scalar_select %p171, %s18, 1
      %p173 = scmp.lt.s32.totalorder %s19, 0
      %s174 = scalar_select %p173, %s19, 0
      %s175 = smul.addr %s172, 8
      %s176 = sadd.s32 %s174, %s175
      %s177 = smul.addr %s176, 4
      %s178 = scalar_lea.vmem %s0, %s177
      %p179 = pneg %p49
      %p180 = pneg %p46
      %s181 = smul.u32 9, %s19
      %p182 = scmp.lt.s32.totalorder %s181, 8
      %s183 = scalar_select %p182, %s181, 8
      %s184 = smul.addr %s183, 4
      %s185 = scalar_lea.vmem %s1, %s184
      %p186 = pneg %p75
      %p187 = pneg %p72
      %p188 = pneg %p96
      %p189 = pneg %p93
      %p190 = pneg %p122
      %p191 = pneg %p119
      %p192 = scmp.lt.s32.totalorder %s18, 1
      %s193 = scalar_select %p192, %s18, 1
      %s194 = smul.addr %s193, 8
      %s195 = smul.addr %s194, 4
      %s196 = scalar_lea.vmem %s3, %s195
      %p197 = scmp.lt.s32.totalorder %s18, 1
      %s198 = scalar_select %p197, %s18, 1
      %p199 = scmp.lt.s32.totalorder %s19, 0
      %s200 = scalar_select %p199, %s19, 0
      %s201 = smul.addr %s198, 8
      %s202 = sadd.s32 %s200, %s201
      %s203 = smul.addr %s202, 4
      %s204 = scalar_lea.vmem %s0, %s203
      %s205 = smul.u32 9, %s19
      %p206 = scmp.lt.s32.totalorder %s205, 8
      %s207 = scalar_select %p206, %s205, 8
      %s208 = smul.addr %s207, 4
      %s209 = scalar_lea.vmem %s1, %s208
      %s210 = smul.u32 9, %s19
      %p211 = scmp.lt.s32.totalorder %s18, 1
      %s212 = scalar_select %p211, %s18, 1
      %s213 = smul.addr %s212, 8
      %s214 = smul.addr %s213, 4
      %s215 = scalar_lea.vmem %s3, %s214
      %p217 = scmp.eq.s32.totalorder %s19, 0
      // Predicated region
      $region33: #{inception_generator_forward.18} parent=31 // pred_check
        %p218 = pneg %p217
      $region34: #{inception_generator_forward.18} parent=31 // pred_check_branch
        %220 = sbr.rel (%p218) target = $region36
      $region35: #{inception_generator_forward.18} parent=31 // pred_region
        %221 = vst [vmem:[#allocation2] sm:$0xff] 0.0
        %222 = vst [vmem:[#allocation2 + $0x8] sm:$0xff] 0.0
        %223 = vst [vmem:[#allocation2 + $0x10] sm:$0xff] 0.0
        %224 = vst [vmem:[#allocation2 + $0x18] sm:$0xff] 0.0
        %225 = vst [vmem:[#allocation2 + $0x20] sm:$0xff] 0.0
        %226 = vst [vmem:[#allocation2 + $0x28] sm:$0xff] 0.0
        %227 = vst [vmem:[#allocation2 + $0x30] sm:$0xff] 0.0
        %228 = vst [vmem:[#allocation2 + $0x38] sm:$0xff] 0.0
      $region36: #{inception_generator_forward.18} parent=31 // pred_fallthru
        _
      %v229 = vld [vmem:[#allocation2] sm:$0xff]
      %v230 = vld [vmem:[#allocation2 + $0x8] sm:$0xff]
      %v231 = vld [vmem:[#allocation2 + $0x10] sm:$0xff]
      %v232 = vld [vmem:[#allocation2 + $0x18] sm:$0xff]
      %v233 = vld [vmem:[#allocation2 + $0x20] sm:$0xff]
      %v234 = vld [vmem:[#allocation2 + $0x28] sm:$0xff]
      %v235 = vld [vmem:[#allocation2 + $0x30] sm:$0xff]
      %v236 = vld [vmem:[#allocation2 + $0x38] sm:$0xff]
      %v237 = vld [vmem:[%s204] sm:$0xf]
      %v238 = vld [vmem:[%s204 + $0x4] sm:$0xf]
      %v239 = vld [vmem:[%s204 + $0x8] sm:$0xf]
      %v240 = vld [vmem:[%s204 + $0xc] sm:$0xf]
      %v241 = vld [vmem:[%s204 + $0x10] sm:$0xf]
      %v242 = vld [vmem:[%s204 + $0x14] sm:$0xf]
      %v243 = vld [vmem:[%s204 + $0x18] sm:$0xf]
      %v244 = vld [vmem:[%s204 + $0x1c] sm:$0xf]
      %v245 = vld [vmem:[%s209] sm:$0xf]
      %v246 = vld [vmem:[%s209 + $0x4] sm:$0xf]
      %v247 = vld [vmem:[%s209 + $0x8] sm:$0xf]
      %v248 = vld [vmem:[%s209 + $0xc] sm:$0xf]
      %v249 = vld [vmem:[%s209 + $0x10] sm:$0xf]
      %v250 = vld [vmem:[%s209 + $0x14] sm:$0xf]
      %v251 = vld [vmem:[%s209 + $0x18] sm:$0xf]
      %v252 = vld [vmem:[%s209 + $0x1c] sm:$0xf]
      %v253 = vld [vmem:[%s209 + $0x20] sm:$0xf]
      %v262 = vunpack.c.l.b16 %v237
      %v263 = vunpack.c.l.b16 %v238
      %v264 = vunpack.c.l.b16 %v239
      %v265 = vunpack.c.l.b16 %v240
      %v266 = vunpack.c.l.b16 %v241
      %v267 = vunpack.c.l.b16 %v242
      %v268 = vunpack.c.l.b16 %v243
      %v269 = vunpack.c.l.b16 %v244
      %v270 = vpack.c.b16 %v263, %v262
      %v271 = vpack.c.b16 %v265, %v264
      %v272 = vpack.c.b16 %v267, %v266
      %v273 = vpack.c.b16 %v269, %v268
      %v283 = vunpack.c.l.b16 %v245
      %v284 = vunpack.c.l.b16 %v246
      %v285 = vunpack.c.l.b16 %v247
      %v286 = vunpack.c.l.b16 %v248
      %v287 = vunpack.c.l.b16 %v249
      %v288 = vunpack.c.l.b16 %v250
      %v289 = vunpack.c.l.b16 %v251
      %v290 = vunpack.c.l.b16 %v252
      %v291 = vunpack.c.l.b16 %v253
      %v292 = vpack.c.b16 %v284, %v283
      %v293 = vpack.c.b16 %v286, %v285
      %v294 = vpack.c.b16 %v288, %v287
      %v295 = vpack.c.b16 %v290, %v289
      %v296 = vpack.c.b16 %v291, %v291
      %vm301 = vcmask 588800
      %v303 = vsel %vm301, %v270, 0
      %v306 = vsel %vm301, %v271, 0
      %v309 = vsel %vm301, %v272, 0
      %v312 = vsel %vm301, %v273, 0
      %vm314 = vcmask 1043456
      %v316 = vsel %vm314, %v296, 0
      %318 = vmatpush.bf16.msra.mxu0 0
      %319 = vmatpush.bf16.msra.mxu0 0
      %320 = vmatpush.bf16.msra.mxu0 0
      %321 = vmatpush.bf16.msra.mxu0 %v316
      %322 = vmatpush.bf16.msra.mxu0 %v295
      %323 = vmatpush.bf16.msra.mxu0 %v294
      %324 = vmatpush.bf16.msra.mxu0 %v293
      %325 = vmatpush.bf16.msra.mxu0 %v292
      %326 = vmatmul.bf16.gmra.mxu0 %v303
      %v327 = vpop.f32.mrf.mxu0
      %v328 = vadd.f32 0.0, %v327
      %v329 = vpop.f32.mrf.mxu0
      %v330 = vadd.f32 0.0, %v329
      %331 = vmatmul.bf16.gmra.mxu0 %v306
      %v332 = vpop.f32.mrf.mxu0
      %v333 = vadd.f32 0.0, %v332
      %v334 = vpop.f32.mrf.mxu0
      %v335 = vadd.f32 0.0, %v334
      %336 = vmatmul.bf16.gmra.mxu0 %v309
      %v337 = vpop.f32.mrf.mxu0
      %v338 = vadd.f32 0.0, %v337
      %v339 = vpop.f32.mrf.mxu0
      %v340 = vadd.f32 0.0, %v339
      %341 = vmatmul.bf16.gmra.mxu0 %v312
      %v342 = vpop.f32.mrf.mxu0
      %v343 = vadd.f32 0.0, %v342
      %v344 = vpop.f32.mrf.mxu0
      %v345 = vadd.f32 0.0, %v344
      %346 = vdwg.mxu0
      %v347 = vadd.f32 %v229, %v328
      %v348 = vadd.f32 %v230, %v330
      %v349 = vadd.f32 %v231, %v333
      %v350 = vadd.f32 %v232, %v335
      %v351 = vadd.f32 %v233, %v338
      %v352 = vadd.f32 %v234, %v340
      %v353 = vadd.f32 %v235, %v343
      %v354 = vadd.f32 %v236, %v345
      %355 = vst [vmem:[#allocation2] sm:$0xff] %v347
      %356 = vst [vmem:[#allocation2 + $0x8] sm:$0xff] %v348
      %357 = vst [vmem:[#allocation2 + $0x10] sm:$0xff] %v349
      %358 = vst [vmem:[#allocation2 + $0x18] sm:$0xff] %v350
      %359 = vst [vmem:[#allocation2 + $0x20] sm:$0xff] %v351
      %360 = vst [vmem:[#allocation2 + $0x28] sm:$0xff] %v352
      %361 = vst [vmem:[#allocation2 + $0x30] sm:$0xff] %v353
      %362 = vst [vmem:[#allocation2 + $0x38] sm:$0xff] %v354
      // Predicated region
      $region37: #{inception_generator_forward.18} parent=31 // pred_check
        %p363 = pneg %p217
      $region38: #{inception_generator_forward.18} parent=31 // pred_check_branch
        %365 = sbr.rel (%p363) target = $region40
      $region39: #{inception_generator_forward.18} parent=31 // pred_region
        %v366 = vld [vmem:[#allocation2] sm:$0xff]
        %v367 = vld [vmem:[#allocation2 + $0x8] sm:$0xff]
        %v368 = vld [vmem:[#allocation2 + $0x10] sm:$0xff]
        %v369 = vld [vmem:[#allocation2 + $0x18] sm:$0xff]
        %v370 = vld [vmem:[#allocation2 + $0x20] sm:$0xff]
        %v371 = vld [vmem:[#allocation2 + $0x28] sm:$0xff]
        %v372 = vld [vmem:[#allocation2 + $0x30] sm:$0xff]
        %v373 = vld [vmem:[#allocation2 + $0x38] sm:$0xff]
        %v374 = vld [vmem:[%s2] sm:$0x1]
        %v376 = vperm.slane %v374, 0
        %v378 = vadd.f32 %v366, %v376
        %v379 = vadd.f32 %v367, %v376
        %v380 = vadd.f32 %v368, %v376
        %v381 = vadd.f32 %v369, %v376
        %v382 = vadd.f32 %v370, %v376
        %v383 = vadd.f32 %v371, %v376
        %v384 = vadd.f32 %v372, %v376
        %v385 = vadd.f32 %v373, %v376
        %v386 = vadd.f32 %v378, %v379
        %v387 = vadd.f32 %v386, %v380
        %v388 = vadd.f32 %v387, %v381
        %v389 = vadd.f32 %v388, %v382
        %v390 = vadd.f32 %v389, %v383
        %v391 = vadd.f32 %v390, %v384
        %v392 = vadd.f32 %v391, %v385
        %v393 = vrot.slane %v392, 4
        %v394 = vadd.f32 %v392, %v393
        %v395 = vrot.slane %v394, 2
        %v396 = vadd.f32 %v394, %v395
        %v397 = vrot.slane %v396, 1
        %v398 = vadd.f32 %v396, %v397
        %v399 = vmul.f32 %v398, 0.015625
        %v400 = vmul.f32 %v378, %v378
        %v401 = vmul.f32 %v379, %v379
        %v402 = vmul.f32 %v380, %v380
        %v403 = vmul.f32 %v381, %v381
        %v404 = vmul.f32 %v382, %v382
        %v405 = vmul.f32 %v383, %v383
        %v406 = vmul.f32 %v384, %v384
        %v407 = vmul.f32 %v385, %v385
        %v408 = vadd.f32 %v400, %v401
        %v409 = vadd.f32 %v408, %v402
        %v410 = vadd.f32 %v409, %v403
        %v411 = vadd.f32 %v410, %v404
        %v412 = vadd.f32 %v411, %v405
        %v413 = vadd.f32 %v412, %v406
        %v414 = vadd.f32 %v413, %v407
        %v415 = vrot.slane %v414, 4
        %v416 = vadd.f32 %v414, %v415
        %v417 = vrot.slane %v416, 2
        %v418 = vadd.f32 %v416, %v417
        %v419 = vrot.slane %v418, 1
        %v420 = vadd.f32 %v418, %v419
        %v421 = vmul.f32 %v420, 0.015625
        %v422 = vmul.f32 %v399, %v399
        %v423 = vsub.f32 %v421, %v422
        %v424 = vsub.f32 %v378, %v399
        %v425 = vsub.f32 %v379, %v399
        %v426 = vsub.f32 %v380, %v399
        %v427 = vsub.f32 %v381, %v399
        %v428 = vsub.f32 %v382, %v399
        %v429 = vsub.f32 %v383, %v399
        %v430 = vsub.f32 %v384, %v399
        %v431 = vsub.f32 %v385, %v399
        %v432 = vmax.f32 %v423, 0.0
        %v433 = vadd.f32 %v432, 1e-05
        %v434 = vrsqrt.pop %v433
        %v435 = vmul.f32 %v434, %v433
        %v436 = vmul.f32 %v435, %v434
        %v437 = vmul.f32 0.5, %v436
        %v438 = vsub.f32 1.5, %v437
        %v439 = vmul.f32 %v434, %v438
        %vm440 = vweird.f32 %v433
        %vm441 = vweird.f32 %v434
        %vm442 = vmor %vm440, %vm441
        %v443 = vsel %vm442, %v434, %v439
        %v444 = vmul.f32 %v424, %v443
        %v445 = vmul.f32 %v425, %v443
        %v446 = vmul.f32 %v426, %v443
        %v447 = vmul.f32 %v427, %v443
        %v448 = vmul.f32 %v428, %v443
        %v449 = vmul.f32 %v429, %v443
        %v450 = vmul.f32 %v430, %v443
        %v451 = vmul.f32 %v431, %v443
        %v452 = vmax.f32 %v444, 0.0
        %v453 = vmax.f32 %v445, 0.0
        %v454 = vmax.f32 %v446, 0.0
        %v455 = vmax.f32 %v447, 0.0
        %v456 = vmax.f32 %v448, 0.0
        %v457 = vmax.f32 %v449, 0.0
        %v458 = vmax.f32 %v450, 0.0
        %v459 = vmax.f32 %v451, 0.0
        %v460 = vpack.c.bf16 %v452, %v452
        %v461 = vpack.c.bf16 %v453, %v453
        %v462 = vpack.c.bf16 %v454, %v454
        %v463 = vpack.c.bf16 %v455, %v455
        %v464 = vpack.c.bf16 %v456, %v456
        %v465 = vpack.c.bf16 %v457, %v457
        %v466 = vpack.c.bf16 %v458, %v458
        %v467 = vpack.c.bf16 %v459, %v459
        %468 = vst [vmem:[%s215] sm:$0xf] %v460
        %469 = vst [vmem:[%s215 + $0x4] sm:$0xf] %v461
        %470 = vst [vmem:[%s215 + $0x8] sm:$0xf] %v462
        %471 = vst [vmem:[%s215 + $0xc] sm:$0xf] %v463
        %472 = vst [vmem:[%s215 + $0x10] sm:$0xf] %v464
        %473 = vst [vmem:[%s215 + $0x14] sm:$0xf] %v465
        %474 = vst [vmem:[%s215 + $0x18] sm:$0xf] %v466
        %475 = vst [vmem:[%s215 + $0x1c] sm:$0xf] %v467
      $region40: #{inception_generator_forward.18} parent=31 // pred_fallthru
        _
      %p476 = scmp.lt.s32.totalorder %s18, 1
      %s477 = scalar_select %p476, %s18, 1
      %s478 = smul.addr %s477, 8
      %s479 = smul.addr %s478, 4
      %s480 = scalar_lea.vmem %s3, %s479
      // Predicated region
      $region41: #{inception_generator_forward.18} parent=31 // pred_check
        %p481 = pneg %p119
      $region42: #{inception_generator_forward.18} parent=31 // pred_check_branch
        %483 = sbr.rel (%p481) target = $region44
      $region43: #{inception_generator_forward.18} parent=31 // pred_region
        _
      $region44: #{inception_generator_forward.18} parent=31 // pred_fallthru
        _
    $region32: #{inception_generator_forward.18} parent=5 // pred_fallthru
      _
    %p484 = scmp.le.s32.totalorder 2, %s9
    // Predicated region
    $region45: #{inception_generator_forward.18} parent=5 // pred_check
      %p485 = pneg %p484
    $region46: #{inception_generator_forward.18} parent=5 // pred_check_branch
      %487 = sbr.rel (%p485) target = $region48
    $region47: #{inception_generator_forward.18} parent=5 // pred_region
      %s488 = ssub.s32 %s9, 2
      // Predicated region
      $region49: #{inception_generator_forward.18} parent=47 // pred_check
        %p489 = pneg %p125
      $region50: #{inception_generator_forward.18} parent=47 // pred_check_branch
        %491 = sbr.rel (%p489) target = $region52
      $region51: #{inception_generator_forward.18} parent=47 // pred_region
        %p492 = scmp.lt.s32.totalorder %s20, 1
        %s493 = scalar_select %p492, %s20, 1
        %s494 = smul.addr %s493, 8
        %s495 = smul.addr %s494, 4
        %s496 = scalar_lea.vmem %s3, %s495
      $region52: #{inception_generator_forward.18} parent=47 // pred_fallthru
        _
    $region48: #{inception_generator_forward.18} parent=5 // pred_fallthru
      _
  $region6: #{inception_generator_forward.18} parent=0 // loop_footer
    %s13 = sadd.s32 1, %s9
  $region7: #{inception_generator_forward.18} parent=0 // loop_footer_branch
    %8 = sbr.rel target = $region3
  $region8: #{inception_generator_forward.18} parent=0 // loop_exit
    _

// kernel: inception_generator_forward.19
$region0: #{inception_generator_forward.19}
  #allocation0 [shape = 'u32[]', space=smem, size = 0x4, offset = 0x4, fixed_abs, tag = 'smem constant byte address 0x4 - core index']
  #allocation1 [shape = 'u32[72,128]{1,0:T(1,128)}', space=vmem, size = 0x9000, scoped, tag = 'internal scratch']
  #allocation2 [shape = 'f32[16,128]{1,0:T(8,128)}', space=vmem, size = 0x2000, scoped, tag = 'scratch operand']
  %s0 = inlined_call_operand.vmem [shape: bf16[2,16,144], index: 0, kind: input, shape index: {}]
  %s1 = inlined_call_operand.vmem [shape: bf16[144,128], index: 1, kind: input, shape index: {}]
  %s2 = inlined_call_operand.vmem [shape: f32[1,128], index: 2, kind: input, shape index: {}]
  %s3 = inlined_call_operand.vmem [shape: bf16[2,16,128], index: 3, kind: output, shape index: {}]
  %s4 = sld [smem:[#allocation0]]
  $region53: #{inception_generator_forward.19} parent=0
    _
  %s6 = ssub.s32 1, %s4
  %s7 = scalar_select 0, %s6, %s4
  loop: start=0, step=1, limit=4
  $region2: #{inception_generator_forward.19} parent=0 // loop_pre_header
    _
  $region3: #{inception_generator_forward.19} parent=0 // loop_header
    %s9 = sphi 0, %s13
    %p10 = scmp.ge.s32.totalorder %s9, 4
    %s16 = sphi 0, %s28
    %s17 = sphi 0, %s24
    %s18 = sphi 0, %s16
    %s19 = sphi 0, %s17
    %s20 = sphi 0, %s18
    %s21 = sphi 0, %s19
    %s33 = sphi 0, %s35
    %s36 = sphi 0, %s33
    %s37 = sphi 0, %s36
    %s53 = sphi 0, %s37
    %s59 = sphi 0, %s61
    %s62 = sphi 0, %s59
    %s63 = sphi 0, %s62
    %s79 = sphi 0, %s63
    %s83 = sphi 0, %s83
    %s85 = sphi 0, %s83
    %s86 = sphi 0, %s85
    %s100 = sphi 0, %s86
    %s106 = sphi 0, %s108
    %s109 = sphi 0, %s106
    %s110 = sphi 0, %s109
    %s126 = sphi 0, %s110
  $region4: #{inception_generator_forward.19} parent=0 // loop_header_branch
    %12 = sbr.rel (%p10) target = $region8
  $region5: #{inception_generator_forward.19} parent=0 // loop_body
    %s14 = ssub.s32 %s9, 1
    %s15 = ssub.s32 %s9, 2
    %s22 = sadd.s32 1, %s17
    %p23 = scmp.ge.s32.totalorder %s22, 1
    %s24 = scalar_select %p23, 0, %s22
    %s25 = sadd.s32 1, %s16
    %s26 = scalar_select %p23, %s25, %s16
    %p27 = scmp.ge.s32.totalorder %s26, 2
    %s28 = scalar_select %p27, 0, %s26
    %s29 = ssub.s32 %s16, %s28
    %s30 = ssub.s32 %s17, %s24
    %s31 = sor.u32 %s29, %s30
    %p32 = scmp.eq.s32.totalorder %s31, 0
    %s34 = sadd.s32 %s33, 1
    %s35 = scalar_select %p32, %s33, %s34
    %p38 = pneg %p32
    %p39 = scmp.eq.s32.totalorder %s9, 1
    %p40 = por %p38, %p39
    %p41 = scmp.ne.s32.totalorder %s33, %s36
    %p42 = scmp.eq.s32.totalorder %s9, 0
    %p43 = por %p41, %p42
    %p44 = scmp.ne.s32.totalorder %s33, %s36
    %p45 = scmp.eq.s32.totalorder %s14, 1
    %p46 = por %p44, %p45
    %p47 = scmp.ne.s32.totalorder %s36, %s37
    %p48 = scmp.eq.s32.totalorder %s14, 0
    %p49 = por %p47, %p48
    %p50 = scmp.ne.s32.totalorder %s36, %s37
    %p51 = scmp.eq.s32.totalorder %s15, 1
    %p52 = por %p50, %p51
    %p54 = scmp.ne.s32.totalorder %s37, %s53
    %p55 = scmp.eq.s32.totalorder %s15, 0
    %p56 = por %p54, %p55
    %s57 = ssub.s32 %s17, %s24
    %p58 = scmp.eq.s32.totalorder %s57, 0
    %s60 = sadd.s32 %s59, 1
    %s61 = scalar_select %p58, %s59, %s60
    %p64 = pneg %p58
    %p65 = scmp.eq.s32.totalorder %s9, 1
    %p66 = por %p64, %p65
    %p67 = scmp.ne.s32.totalorder %s59, %s62
    %p68 = scmp.eq.s32.totalorder %s9, 0
    %p69 = por %p67, %p68
    %p70 = scmp.ne.s32.totalorder %s59, %s62
    %p71 = scmp.eq.s32.totalorder %s14, 1
    %p72 = por %p70, %p71
    %p73 = scmp.ne.s32.totalorder %s62, %s63
    %p74 = scmp.eq.s32.totalorder %s14, 0
    %p75 = por %p73, %p74
    %p76 = scmp.ne.s32.totalorder %s62, %s63
    %p77 = scmp.eq.s32.totalorder %s15, 1
    %p78 = por %p76, %p77
    %p80 = scmp.ne.s32.totalorder %s63, %s79
    %p81 = scmp.eq.s32.totalorder %s15, 0
    %p82 = por %p80, %p81
    %s84 = sadd.s32 %s83, 1
    %p87 = scmp.eq.s32.totalorder %s9, 1
    %p88 = scmp.ne.s32.totalorder %s83, %s85
    %p89 = scmp.eq.s32.totalorder %s9, 0
    %p90 = por %p88, %p89
    %p91 = scmp.ne.s32.totalorder %s83, %s85
    %p92 = scmp.eq.s32.totalorder %s14, 1
    %p93 = por %p91, %p92
    %p94 = scmp.ne.s32.totalorder %s85, %s86
    %p95 = scmp.eq.s32.totalorder %s14, 0
    %p96 = por %p94, %p95
    %p97 = scmp.ne.s32.totalorder %s85, %s86
    %p98 = scmp.eq.s32.totalorder %s15, 1
    %p99 = por %p97, %p98
    %p101 = scmp.ne.s32.totalorder %s86, %s100
    %p102 = scmp.eq.s32.totalorder %s15, 0
    %p103 = por %p101, %p102
    %s104 = ssub.s32 %s16, %s28
    %p105 = scmp.eq.s32.totalorder %s104, 0
    %s107 = sadd.s32 %s106, 1
    %s108 = scalar_select %p105, %s106, %s107
    %p111 = pneg %p105
    %p112 = scmp.eq.s32.totalorder %s9, 1
    %p113 = por %p111, %p112
    %p114 = scmp.ne.s32.totalorder %s106, %s109
    %p115 = scmp.eq.s32.totalorder %s9, 0
    %p116 = por %p114, %p115
    %p117 = scmp.ne.s32.totalorder %s106, %s109
    %p118 = scmp.eq.s32.totalorder %s14, 1
    %p119 = por %p117, %p118
    %p120 = scmp.ne.s32.totalorder %s109, %s110
    %p121 = scmp.eq.s32.totalorder %s14, 0
    %p122 = por %p120, %p121
    %p123 = scmp.ne.s32.totalorder %s109, %s110
    %p124 = scmp.eq.s32.totalorder %s15, 1
    %p125 = por %p123, %p124
    %p127 = scmp.ne.s32.totalorder %s110, %s126
    %p128 = scmp.eq.s32.totalorder %s15, 0
    %p129 = por %p127, %p128
    %p130 = scmp.le.s32.totalorder 1, %s9
    %p131 = scmp.lt.s32.totalorder %s9, 3
    %p132 = pnand %p130, %p131
    %p133 = pneg %p132
    // Predicated region
    $region9: #{inception_generator_forward.19} parent=5 // pred_check
      _
    $region10: #{inception_generator_forward.19} parent=5 // pred_check_branch
      %135 = sbr.rel (%p132) target = $region12
    $region11: #{inception_generator_forward.19} parent=5 // pred_region
      %s136 = ssub.s32 %s9, 1
      // Predicated region
      $region13: #{inception_generator_forward.19} parent=11 // pred_check
        %p137 = pneg %p75
      $region14: #{inception_generator_forward.19} parent=11 // pred_check_branch
        %139 = sbr.rel (%p137) target = $region16
      $region15: #{inception_generator_forward.19} parent=11 // pred_region
        %s140 = smul.u32 18, %s19
        %p141 = scmp.lt.s32.totalorder %s140, 17
        %s142 = scalar_select %p141, %s140, 17
        %s143 = smul.addr %s142, 4
        %s144 = scalar_lea.vmem %s1, %s143
        %s145 = smul.u32 18, %s19
      $region16: #{inception_generator_forward.19} parent=11 // pred_fallthru
        _
      // Predicated region
      $region17: #{inception_generator_forward.19} parent=11 // pred_check
        %p146 = pneg %p96
      $region18: #{inception_generator_forward.19} parent=11 // pred_check_branch
        %148 = sbr.rel (%p146) target = $region20
      $region19: #{inception_generator_forward.19} parent=11 // pred_region
        _
      $region20: #{inception_generator_forward.19} parent=11 // pred_fallthru
        _
    $region12: #{inception_generator_forward.19} parent=5 // pred_fallthru
      _
    %p149 = scmp.lt.s32.totalorder %s9, 2
    // Predicated region
    $region21: #{inception_generator_forward.19} parent=5 // pred_check
      %p150 = pneg %p149
    $region22: #{inception_generator_forward.19} parent=5 // pred_check_branch
      %152 = sbr.rel (%p150) target = $region24
    $region23: #{inception_generator_forward.19} parent=5 // pred_region
      // Predicated region
      $region25: #{inception_generator_forward.19} parent=23 // pred_check
        %p153 = pneg %p43
      $region26: #{inception_generator_forward.19} parent=23 // pred_check_branch
        %155 = sbr.rel (%p153) target = $region28
      $region27: #{inception_generator_forward.19} parent=23 // pred_region
        %s156 = smul.u32 2, %s17
        %p157 = scmp.lt.s32.totalorder %s16, 1
        %s158 = scalar_select %p157, %s16, 1
        %p159 = scmp.lt.s32.totalorder %s156, 1
        %s160 = scalar_select %p159, %s156, 1
        %s161 = smul.addr %s158, 4
        %s162 = sadd.s32 %s160, %s161
        %s163 = smul.addr %s162, 4
        %s164 = scalar_lea.vmem %s0, %s163
        %s165 = smul.u32 2, %s17
      $region28: #{inception_generator_forward.19} parent=23 // pred_fallthru
        _
    $region24: #{inception_generator_forward.19} parent=5 // pred_fallthru
      _
    %p166 = scmp.le.s32.totalorder 1, %s9
    %p167 = scmp.lt.s32.totalorder %s9, 3
    %p168 = pnand %p166, %p167
    %p169 = pneg %p168
    // Predicated region
    $region29: #{inception_generator_forward.19} parent=5 // pred_check
      _
    $region30: #{inception_generator_forward.19} parent=5 // pred_check_branch
      %171 = sbr.rel (%p168) target = $region32
    $region31: #{inception_generator_forward.19} parent=5 // pred_region
      %s172 = ssub.s32 %s9, 1
      %s173 = smul.u32 2, %s19
      %p174 = scmp.lt.s32.totalorder %s18, 1
      %s175 = scalar_select %p174, %s18, 1
      %p176 = scmp.lt.s32.totalorder %s173, 1
      %s177 = scalar_select %p176, %s173, 1
      %s178 = smul.addr %s175, 4
      %s179 = sadd.s32 %s177, %s178
      %s180 = smul.addr %s179, 4
      %s181 = scalar_lea.vmem %s0, %s180
      %p182 = pneg %p49
      %p183 = pneg %p46
      %s184 = smul.u32 18, %s19
      %p185 = scmp.lt.s32.totalorder %s184, 17
      %s186 = scalar_select %p185, %s184, 17
      %s187 = smul.addr %s186, 4
      %s188 = scalar_lea.vmem %s1, %s187
      %p189 = pneg %p75
      %p190 = pneg %p72
      %p191 = pneg %p96
      %p192 = pneg %p93
      %p193 = pneg %p122
      %p194 = pneg %p119
      %p195 = scmp.lt.s32.totalorder %s18, 1
      %s196 = scalar_select %p195, %s18, 1
      %s197 = smul.addr %s196, 2
      %s198 = smul.addr %s197, 4
      %s199 = scalar_lea.vmem %s3, %s198
      %s200 = smul.u32 2, %s19
      %p201 = scmp.lt.s32.totalorder %s18, 1
      %s202 = scalar_select %p201, %s18, 1
      %p203 = scmp.lt.s32.totalorder %s200, 1
      %s204 = scalar_select %p203, %s200, 1
      %s205 = smul.addr %s202, 4
      %s206 = sadd.s32 %s204, %s205
      %s207 = smul.addr %s206, 4
      %s208 = scalar_lea.vmem %s0, %s207
      %s209 = smul.u32 2, %s19
      %s210 = smul.u32 18, %s19
      %p211 = scmp.lt.s32.totalorder %s210, 17
      %s212 = scalar_select %p211, %s210, 17
      %s213 = smul.addr %s212, 4
      %s214 = scalar_lea.vmem %s1, %s213
      %s215 = smul.u32 18, %s19
      %p216 = scmp.lt.s32.totalorder %s18, 1
      %s217 = scalar_select %p216, %s18, 1
      %s218 = smul.addr %s217, 2
      %s219 = smul.addr %s218, 4
      %s220 = scalar_lea.vmem %s3, %s219
      %p222 = scmp.eq.s32.totalorder %s19, 0
      // Predicated region
      $region33: #{inception_generator_forward.19} parent=31 // pred_check
        %p223 = pneg %p222
      $region34: #{inception_generator_forward.19} parent=31 // pred_check_branch
        %225 = sbr.rel (%p223) target = $region36
      $region35: #{inception_generator_forward.19} parent=31 // pred_region
        %226 = vst [vmem:[#allocation2] sm:$0xff] 0.0
        %227 = vst [vmem:[#allocation2 + $0x8] sm:$0xff] 0.0
      $region36: #{inception_generator_forward.19} parent=31 // pred_fallthru
        _
      %v228 = vld [vmem:[#allocation2] sm:$0xff]
      %v229 = vld [vmem:[#allocation2 + $0x8] sm:$0xff]
      %v230 = vld [vmem:[%s208] sm:$0xff]
      %v231 = vld [vmem:[%s208 + $0x8] sm:$0xff]
      %v232 = vld [vmem:[%s214] sm:$0xf]
      %v233 = vld [vmem:[%s214 + $0x4] sm:$0xf]
      %v234 = vld [vmem:[%s214 + $0x8] sm:$0xf]
      %v235 = vld [vmem:[%s214 + $0xc] sm:$0xf]
      %v236 = vld [vmem:[%s214 + $0x10] sm:$0xf]
      %v237 = vld [vmem:[%s214 + $0x14] sm:$0xf]
      %v238 = vld [vmem:[%s214 + $0x18] sm:$0xf]
      %v239 = vld [vmem:[%s214 + $0x1c] sm:$0xf]
      %v240 = vld [vmem:[%s214 + $0x20] sm:$0xf]
      %v241 = vld [vmem:[%s214 + $0x24] sm:$0xf]
      %v242 = vld [vmem:[%s214 + $0x28] sm:$0xf]
      %v243 = vld [vmem:[%s214 + $0x2c] sm:$0xf]
      %v244 = vld [vmem:[%s214 + $0x30] sm:$0xf]
      %v245 = vld [vmem:[%s214 + $0x34] sm:$0xf]
      %v246 = vld [vmem:[%s214 + $0x38] sm:$0xf]
      %v247 = vld [vmem:[%s214 + $0x3c] sm:$0xf]
      %v248 = vld [vmem:[%s214 + $0x40] sm:$0xf]
      %v249 = vld [vmem:[%s214 + $0x44] sm:$0xf]
      %v252 = vunpack.c.l.b16 %v230
      %v253 = vunpack.c.h.b16 %v230
      %v254 = vunpack.c.l.b16 %v231
      %v255 = vunpack.c.h.b16 %v231
      %v256 = vpack.c.b16 %v254, %v252
      %v257 = vpack.c.b16 %v255, %v253
      %v277 = vunpack.c.l.b16 %v232
      %v278 = vunpack.c.l.b16 %v233
      %v279 = vunpack.c.l.b16 %v234
      %v280 = vunpack.c.l.b16 %v235
      %v281 = vunpack.c.l.b16 %v236
      %v282 = vunpack.c.l.b16 %v237
      %v283 = vunpack.c.l.b16 %v238
      %v284 = vunpack.c.l.b16 %v239
      %v285 = vunpack.c.l.b16 %v240
      %v286 = vunpack.c.l.b16 %v241
      %v287 = vunpack.c.l.b16 %v242
      %v288 = vunpack.c.l.b16 %v243
      %v289 = vunpack.c.l.b16 %v244
      %v290 = vunpack.c.l.b16 %v245
      %v291 = vunpack.c.l.b16 %v246
      %v292 = vunpack.c.l.b16 %v247
      %v293 = vunpack.c.l.b16 %v248
      %v294 = vunpack.c.l.b16 %v249
      %v295 = vpack.c.b16 %v278, %v277
      %v296 = vpack.c.b16 %v280, %v279
      %v297 = vpack.c.b16 %v282, %v281
      %v298 = vpack.c.b16 %v284, %v283
      %v299 = vpack.c.b16 %v286, %v285
      %v300 = vpack.c.b16 %v288, %v287
      %v301 = vpack.c.b16 %v290, %v289
      %v302 = vpack.c.b16 %v292, %v291
      %v303 = vpack.c.b16 %v294, %v293
      %vm313 = vcmask 130048
      %v315 = vsel %vm313, %v257, 0
      %317 = vmatpush.bf16.msra.mxu0 %v302
      %318 = vmatpush.bf16.msra.mxu0 %v301
      %319 = vmatpush.bf16.msra.mxu0 %v300
      %320 = vmatpush.bf16.msra.mxu0 %v299
      %321 = vmatpush.bf16.msra.mxu0 %v298
      %322 = vmatpush.bf16.msra.mxu0 %v297
      %323 = vmatpush.bf16.msra.mxu0 %v296
      %324 = vmatpush.bf16.msra.mxu0 %v295
      %325 = vmatmul.bf16.gmra.mxu0 %v256
      %v326 = vpop.f32.mrf.mxu0
      %v327 = vadd.f32 0.0, %v326
      %v328 = vpop.f32.mrf.mxu0
      %v329 = vadd.f32 0.0, %v328
      %330 = vdwg.mxu0
      %331 = vmatpush.bf16.msra.mxu0 0
      %332 = vmatpush.bf16.msra.mxu0 0
      %333 = vmatpush.bf16.msra.mxu0 0
      %334 = vmatpush.bf16.msra.mxu0 0
      %335 = vmatpush.bf16.msra.mxu0 0
      %336 = vmatpush.bf16.msra.mxu0 0
      %337 = vmatpush.bf16.msra.mxu0 0
      %338 = vmatpush.bf16.msra.mxu0 %v303
      %339 = vmatmul.bf16.gmra.mxu0 %v315
      %v340 = vpop.f32.mrf.mxu0
      %v341 = vadd.f32 %v327, %v340
      %v342 = vpop.f32.mrf.mxu0
      %v343 = vadd.f32 %v329, %v342
      %344 = vdwg.mxu0
      %v345 = vadd.f32 %v228, %v341
      %v346 = vadd.f32 %v229, %v343
      %347 = vst [vmem:[#allocation2] sm:$0xff] %v345
      %348 = vst [vmem:[#allocation2 + $0x8] sm:$0xff] %v346
      // Predicated region
      $region37: #{inception_generator_forward.19} parent=31 // pred_check
        %p349 = pneg %p222
      $region38: #{inception_generator_forward.19} parent=31 // pred_check_branch
        %351 = sbr.rel (%p349) target = $region40
      $region39: #{inception_generator_forward.19} parent=31 // pred_region
        %v352 = vld [vmem:[#allocation2] sm:$0xff]
        %v353 = vld [vmem:[#allocation2 + $0x8] sm:$0xff]
        %v354 = vld [vmem:[%s2] sm:$0x1]
        %v356 = vperm.slane %v354, 0
        %v358 = vadd.f32 %v352, %v356
        %v359 = vadd.f32 %v353, %v356
        %v360 = vadd.f32 %v358, %v359
        %v361 = vrot.slane %v360, 4
        %v362 = vadd.f32 %v360, %v361
        %v363 = vrot.slane %v362, 2
        %v364 = vadd.f32 %v362, %v363
        %v365 = vrot.slane %v364, 1
        %v366 = vadd.f32 %v364, %v365
        %v367 = vmul.f32 %v366, 0.0625
        %v368 = vmul.f32 %v358, %v358
        %v369 = vmul.f32 %v359, %v359
        %v370 = vadd.f32 %v368, %v369
        %v371 = vrot.slane %v370, 4
        %v372 = vadd.f32 %v370, %v371
        %v373 = vrot.slane %v372, 2
        %v374 = vadd.f32 %v372, %v373
        %v375 = vrot.slane %v374, 1
        %v376 = vadd.f32 %v374, %v375
        %v377 = vmul.f32 %v376, 0.0625
        %v378 = vmul.f32 %v367, %v367
        %v379 = vsub.f32 %v377, %v378
        %v380 = vsub.f32 %v358, %v367
        %v381 = vsub.f32 %v359, %v367
        %v382 = vmax.f32 %v379, 0.0
        %v383 = vadd.f32 %v382, 1e-05
        %v384 = vrsqrt.pop %v383
        %v385 = vmul.f32 %v384, %v383
        %v386 = vmul.f32 %v385, %v384
        %v387 = vmul.f32 0.5, %v386
        %v388 = vsub.f32 1.5, %v387
        %v389 = vmul.f32 %v384, %v388
        %vm390 = vweird.f32 %v383
        %vm391 = vweird.f32 %v384
        %vm392 = vmor %vm390, %vm391
        %v393 = vsel %vm392, %v384, %v389
        %v394 = vmul.f32 %v380, %v393
        %v395 = vmul.f32 %v381, %v393
        %v396 = vmax.f32 %v394, 0.0
        %v397 = vmax.f32 %v395, 0.0
        %v398 = vpack.c.bf16 %v396, %v396
        %v399 = vpack.c.bf16 %v397, %v397
        %400 = vst [vmem:[%s220] sm:$0xf] %v398
        %401 = vst [vmem:[%s220 + $0x4] sm:$0xf] %v399
      $region40: #{inception_generator_forward.19} parent=31 // pred_fallthru
        _
      %p402 = scmp.lt.s32.totalorder %s18, 1
      %s403 = scalar_select %p402, %s18, 1
      %s404 = smul.addr %s403, 2
      %s405 = smul.addr %s404, 4
      %s406 = scalar_lea.vmem %s3, %s405
      // Predicated region
      $region41: #{inception_generator_forward.19} parent=31 // pred_check
        %p407 = pneg %p119
      $region42: #{inception_generator_forward.19} parent=31 // pred_check_branch
        %409 = sbr.rel (%p407) target = $region44
      $region43: #{inception_generator_forward.19} parent=31 // pred_region
        _
      $region44: #{inception_generator_forward.19} parent=31 // pred_fallthru
        _
    $region32: #{inception_generator_forward.19} parent=5 // pred_fallthru
      _
    %p410 = scmp.le.s32.totalorder 2, %s9
    // Predicated region
    $region45: #{inception_generator_forward.19} parent=5 // pred_check
      %p411 = pneg %p410
    $region46: #{inception_generator_forward.19} parent=5 // pred_check_branch
      %413 = sbr.rel (%p411) target = $region48
    $region47: #{inception_generator_forward.19} parent=5 // pred_region
      %s414 = ssub.s32 %s9, 2
      // Predicated region
      $region49: #{inception_generator_forward.19} parent=47 // pred_check
        %p415 = pneg %p125
      $region50: #{inception_generator_forward.19} parent=47 // pred_check_branch
        %417 = sbr.rel (%p415) target = $region52
      $region51: #{inception_generator_forward.19} parent=47 // pred_region
        %p418 = scmp.lt.s32.totalorder %s20, 1
        %s419 = scalar_select %p418, %s20, 1
        %s420 = smul.addr %s419, 2
        %s421 = smul.addr %s420, 4
        %s422 = scalar_lea.vmem %s3, %s421
      $region52: #{inception_generator_forward.19} parent=47 // pred_fallthru
        _
    $region48: #{inception_generator_forward.19} parent=5 // pred_fallthru
      _
  $region6: #{inception_generator_forward.19} parent=0 // loop_footer
    %s13 = sadd.s32 1, %s9
  $region7: #{inception_generator_forward.19} parent=0 // loop_footer_branch
    %8 = sbr.rel target = $region3
  $region8: #{inception_generator_forward.19} parent=0 // loop_exit
    _

// kernel: inception_generator_forward.20
$region0: #{inception_generator_forward.20}
  #allocation0 [shape = 'u32[]', space=smem, size = 0x4, offset = 0x4, fixed_abs, tag = 'smem constant byte address 0x4 - core index']
  #allocation1 [shape = 'u32[72,128]{1,0:T(1,128)}', space=vmem, size = 0x9000, scoped, tag = 'internal scratch']
  #allocation2 [shape = 'f32[16,128]{1,0:T(8,128)}', space=vmem, size = 0x2000, scoped, tag = 'scratch operand']
  %s0 = inlined_call_operand.vmem [shape: bf16[2,16,1120], index: 0, kind: input, shape index: {}]
  %s1 = inlined_call_operand.vmem [shape: bf16[1120,128], index: 1, kind: input, shape index: {}]
  %s2 = inlined_call_operand.vmem [shape: f32[1,128], index: 2, kind: input, shape index: {}]
  %s3 = inlined_call_operand.vmem [shape: bf16[2,16,128], index: 3, kind: output, shape index: {}]
  %s4 = sld [smem:[#allocation0]]
  $region53: #{inception_generator_forward.20} parent=0
    _
  %s6 = ssub.s32 1, %s4
  %s7 = scalar_select 0, %s6, %s4
  loop: start=0, step=1, limit=4
  $region2: #{inception_generator_forward.20} parent=0 // loop_pre_header
    _
  $region3: #{inception_generator_forward.20} parent=0 // loop_header
    %s9 = sphi 0, %s13
    %p10 = scmp.ge.s32.totalorder %s9, 4
    %s16 = sphi 0, %s28
    %s17 = sphi 0, %s24
    %s18 = sphi 0, %s16
    %s19 = sphi 0, %s17
    %s20 = sphi 0, %s18
    %s21 = sphi 0, %s19
    %s33 = sphi 0, %s35
    %s36 = sphi 0, %s33
    %s37 = sphi 0, %s36
    %s53 = sphi 0, %s37
    %s59 = sphi 0, %s61
    %s62 = sphi 0, %s59
    %s63 = sphi 0, %s62
    %s79 = sphi 0, %s63
    %s83 = sphi 0, %s83
    %s85 = sphi 0, %s83
    %s86 = sphi 0, %s85
    %s100 = sphi 0, %s86
    %s106 = sphi 0, %s108
    %s109 = sphi 0, %s106
    %s110 = sphi 0, %s109
    %s126 = sphi 0, %s110
  $region4: #{inception_generator_forward.20} parent=0 // loop_header_branch
    %12 = sbr.rel (%p10) target = $region8
  $region5: #{inception_generator_forward.20} parent=0 // loop_body
    %s14 = ssub.s32 %s9, 1
    %s15 = ssub.s32 %s9, 2
    %s22 = sadd.s32 1, %s17
    %p23 = scmp.ge.s32.totalorder %s22, 1
    %s24 = scalar_select %p23, 0, %s22
    %s25 = sadd.s32 1, %s16
    %s26 = scalar_select %p23, %s25, %s16
    %p27 = scmp.ge.s32.totalorder %s26, 2
    %s28 = scalar_select %p27, 0, %s26
    %s29 = ssub.s32 %s16, %s28
    %s30 = ssub.s32 %s17, %s24
    %s31 = sor.u32 %s29, %s30
    %p32 = scmp.eq.s32.totalorder %s31, 0
    %s34 = sadd.s32 %s33, 1
    %s35 = scalar_select %p32, %s33, %s34
    %p38 = pneg %p32
    %p39 = scmp.eq.s32.totalorder %s9, 1
    %p40 = por %p38, %p39
    %p41 = scmp.ne.s32.totalorder %s33, %s36
    %p42 = scmp.eq.s32.totalorder %s9, 0
    %p43 = por %p41, %p42
    %p44 = scmp.ne.s32.totalorder %s33, %s36
    %p45 = scmp.eq.s32.totalorder %s14, 1
    %p46 = por %p44, %p45
    %p47 = scmp.ne.s32.totalorder %s36, %s37
    %p48 = scmp.eq.s32.totalorder %s14, 0
    %p49 = por %p47, %p48
    %p50 = scmp.ne.s32.totalorder %s36, %s37
    %p51 = scmp.eq.s32.totalorder %s15, 1
    %p52 = por %p50, %p51
    %p54 = scmp.ne.s32.totalorder %s37, %s53
    %p55 = scmp.eq.s32.totalorder %s15, 0
    %p56 = por %p54, %p55
    %s57 = ssub.s32 %s17, %s24
    %p58 = scmp.eq.s32.totalorder %s57, 0
    %s60 = sadd.s32 %s59, 1
    %s61 = scalar_select %p58, %s59, %s60
    %p64 = pneg %p58
    %p65 = scmp.eq.s32.totalorder %s9, 1
    %p66 = por %p64, %p65
    %p67 = scmp.ne.s32.totalorder %s59, %s62
    %p68 = scmp.eq.s32.totalorder %s9, 0
    %p69 = por %p67, %p68
    %p70 = scmp.ne.s32.totalorder %s59, %s62
    %p71 = scmp.eq.s32.totalorder %s14, 1
    %p72 = por %p70, %p71
    %p73 = scmp.ne.s32.totalorder %s62, %s63
    %p74 = scmp.eq.s32.totalorder %s14, 0
    %p75 = por %p73, %p74
    %p76 = scmp.ne.s32.totalorder %s62, %s63
    %p77 = scmp.eq.s32.totalorder %s15, 1
    %p78 = por %p76, %p77
    %p80 = scmp.ne.s32.totalorder %s63, %s79
    %p81 = scmp.eq.s32.totalorder %s15, 0
    %p82 = por %p80, %p81
    %s84 = sadd.s32 %s83, 1
    %p87 = scmp.eq.s32.totalorder %s9, 1
    %p88 = scmp.ne.s32.totalorder %s83, %s85
    %p89 = scmp.eq.s32.totalorder %s9, 0
    %p90 = por %p88, %p89
    %p91 = scmp.ne.s32.totalorder %s83, %s85
    %p92 = scmp.eq.s32.totalorder %s14, 1
    %p93 = por %p91, %p92
    %p94 = scmp.ne.s32.totalorder %s85, %s86
    %p95 = scmp.eq.s32.totalorder %s14, 0
    %p96 = por %p94, %p95
    %p97 = scmp.ne.s32.totalorder %s85, %s86
    %p98 = scmp.eq.s32.totalorder %s15, 1
    %p99 = por %p97, %p98
    %p101 = scmp.ne.s32.totalorder %s86, %s100
    %p102 = scmp.eq.s32.totalorder %s15, 0
    %p103 = por %p101, %p102
    %s104 = ssub.s32 %s16, %s28
    %p105 = scmp.eq.s32.totalorder %s104, 0
    %s107 = sadd.s32 %s106, 1
    %s108 = scalar_select %p105, %s106, %s107
    %p111 = pneg %p105
    %p112 = scmp.eq.s32.totalorder %s9, 1
    %p113 = por %p111, %p112
    %p114 = scmp.ne.s32.totalorder %s106, %s109
    %p115 = scmp.eq.s32.totalorder %s9, 0
    %p116 = por %p114, %p115
    %p117 = scmp.ne.s32.totalorder %s106, %s109
    %p118 = scmp.eq.s32.totalorder %s14, 1
    %p119 = por %p117, %p118
    %p120 = scmp.ne.s32.totalorder %s109, %s110
    %p121 = scmp.eq.s32.totalorder %s14, 0
    %p122 = por %p120, %p121
    %p123 = scmp.ne.s32.totalorder %s109, %s110
    %p124 = scmp.eq.s32.totalorder %s15, 1
    %p125 = por %p123, %p124
    %p127 = scmp.ne.s32.totalorder %s110, %s126
    %p128 = scmp.eq.s32.totalorder %s15, 0
    %p129 = por %p127, %p128
    %p130 = scmp.le.s32.totalorder 1, %s9
    %p131 = scmp.lt.s32.totalorder %s9, 3
    %p132 = pnand %p130, %p131
    %p133 = pneg %p132
    // Predicated region
    $region9: #{inception_generator_forward.20} parent=5 // pred_check
      _
    $region10: #{inception_generator_forward.20} parent=5 // pred_check_branch
      %135 = sbr.rel (%p132) target = $region12
    $region11: #{inception_generator_forward.20} parent=5 // pred_region
      %s136 = ssub.s32 %s9, 1
      // Predicated region
      $region13: #{inception_generator_forward.20} parent=11 // pred_check
        %p137 = pneg %p75
      $region14: #{inception_generator_forward.20} parent=11 // pred_check_branch
        %139 = sbr.rel (%p137) target = $region16
      $region15: #{inception_generator_forward.20} parent=11 // pred_region
        %s140 = smul.u32 140, %s19
        %p141 = scmp.lt.s32.totalorder %s140, 139
        %s142 = scalar_select %p141, %s140, 139
        %s143 = smul.addr %s142, 4
        %s144 = scalar_lea.vmem %s1, %s143
        %s145 = smul.u32 140, %s19
      $region16: #{inception_generator_forward.20} parent=11 // pred_fallthru
        _
      // Predicated region
      $region17: #{inception_generator_forward.20} parent=11 // pred_check
        %p146 = pneg %p96
      $region18: #{inception_generator_forward.20} parent=11 // pred_check_branch
        %148 = sbr.rel (%p146) target = $region20
      $region19: #{inception_generator_forward.20} parent=11 // pred_region
        _
      $region20: #{inception_generator_forward.20} parent=11 // pred_fallthru
        _
    $region12: #{inception_generator_forward.20} parent=5 // pred_fallthru
      _
    %p149 = scmp.lt.s32.totalorder %s9, 2
    // Predicated region
    $region21: #{inception_generator_forward.20} parent=5 // pred_check
      %p150 = pneg %p149
    $region22: #{inception_generator_forward.20} parent=5 // pred_check_branch
      %152 = sbr.rel (%p150) target = $region24
    $region23: #{inception_generator_forward.20} parent=5 // pred_region
      // Predicated region
      $region25: #{inception_generator_forward.20} parent=23 // pred_check
        %p153 = pneg %p43
      $region26: #{inception_generator_forward.20} parent=23 // pred_check_branch
        %155 = sbr.rel (%p153) target = $region28
      $region27: #{inception_generator_forward.20} parent=23 // pred_region
        %s156 = smul.u32 9, %s17
        %p157 = scmp.lt.s32.totalorder %s16, 1
        %s158 = scalar_select %p157, %s16, 1
        %p159 = scmp.lt.s32.totalorder %s156, 8
        %s160 = scalar_select %p159, %s156, 8
        %s161 = smul.addr %s158, 18
        %s162 = sadd.s32 %s160, %s161
        %s163 = smul.addr %s162, 4
        %s164 = scalar_lea.vmem %s0, %s163
        %s165 = smul.u32 9, %s17
      $region28: #{inception_generator_forward.20} parent=23 // pred_fallthru
        _
    $region24: #{inception_generator_forward.20} parent=5 // pred_fallthru
      _
    %p166 = scmp.le.s32.totalorder 1, %s9
    %p167 = scmp.lt.s32.totalorder %s9, 3
    %p168 = pnand %p166, %p167
    %p169 = pneg %p168
    // Predicated region
    $region29: #{inception_generator_forward.20} parent=5 // pred_check
      _
    $region30: #{inception_generator_forward.20} parent=5 // pred_check_branch
      %171 = sbr.rel (%p168) target = $region32
    $region31: #{inception_generator_forward.20} parent=5 // pred_region
      %s172 = ssub.s32 %s9, 1
      %s173 = smul.u32 9, %s19
      %p174 = scmp.lt.s32.totalorder %s18, 1
      %s175 = scalar_select %p174, %s18, 1
      %p176 = scmp.lt.s32.totalorder %s173, 8
      %s177 = scalar_select %p176, %s173, 8
      %s178 = smul.addr %s175, 18
      %s179 = sadd.s32 %s177, %s178
      %s180 = smul.addr %s179, 4
      %s181 = scalar_lea.vmem %s0, %s180
      %p182 = pneg %p49
      %p183 = pneg %p46
      %s184 = smul.u32 140, %s19
      %p185 = scmp.lt.s32.totalorder %s184, 139
      %s186 = scalar_select %p185, %s184, 139
      %s187 = smul.addr %s186, 4
      %s188 = scalar_lea.vmem %s1, %s187
      %p189 = pneg %p75
      %p190 = pneg %p72
      %p191 = pneg %p96
      %p192 = pneg %p93
      %p193 = pneg %p122
      %p194 = pneg %p119
      %p195 = scmp.lt.s32.totalorder %s18, 1
      %s196 = scalar_select %p195, %s18, 1
      %s197 = smul.addr %s196, 2
      %s198 = smul.addr %s197, 4
      %s199 = scalar_lea.vmem %s3, %s198
      %s200 = smul.u32 9, %s19
      %p201 = scmp.lt.s32.totalorder %s18, 1
      %s202 = scalar_select %p201, %s18, 1
      %p203 = scmp.lt.s32.totalorder %s200, 8
      %s204 = scalar_select %p203, %s200, 8
      %s205 = smul.addr %s202, 18
      %s206 = sadd.s32 %s204, %s205
      %s207 = smul.addr %s206, 4
      %s208 = scalar_lea.vmem %s0, %s207
      %s209 = smul.u32 9, %s19
      %s210 = smul.u32 140, %s19
      %p211 = scmp.lt.s32.totalorder %s210, 139
      %s212 = scalar_select %p211, %s210, 139
      %s213 = smul.addr %s212, 4
      %s214 = scalar_lea.vmem %s1, %s213
      %s215 = smul.u32 140, %s19
      %p216 = scmp.lt.s32.totalorder %s18, 1
      %s217 = scalar_select %p216, %s18, 1
      %s218 = smul.addr %s217, 2
      %s219 = smul.addr %s218, 4
      %s220 = scalar_lea.vmem %s3, %s219
      %p222 = scmp.eq.s32.totalorder %s19, 0
      // Predicated region
      $region33: #{inception_generator_forward.20} parent=31 // pred_check
        %p223 = pneg %p222
      $region34: #{inception_generator_forward.20} parent=31 // pred_check_branch
        %225 = sbr.rel (%p223) target = $region36
      $region35: #{inception_generator_forward.20} parent=31 // pred_region
        %226 = vst [vmem:[#allocation2] sm:$0xff] 0.0
        %227 = vst [vmem:[#allocation2 + $0x8] sm:$0xff] 0.0
      $region36: #{inception_generator_forward.20} parent=31 // pred_fallthru
        _
      %v228 = vld [vmem:[#allocation2] sm:$0xff]
      %v229 = vld [vmem:[#allocation2 + $0x8] sm:$0xff]
      %v230 = vld [vmem:[%s208] sm:$0xff]
      %v231 = vld [vmem:[%s208 + $0x8] sm:$0xff]
      %v232 = vld [vmem:[%s208 + $0x10] sm:$0xff]
      %v233 = vld [vmem:[%s208 + $0x18] sm:$0xff]
      %v234 = vld [vmem:[%s208 + $0x20] sm:$0xf]
      %v235 = vld [vmem:[%s208 + $0x24] sm:$0xff]
      %v236 = vld [vmem:[%s208 + $0x2c] sm:$0xff]
      %v237 = vld [vmem:[%s208 + $0x34] sm:$0xff]
      %v238 = vld [vmem:[%s208 + $0x3c] sm:$0xff]
      %v239 = vld [vmem:[%s208 + $0x44] sm:$0xf]
      %v240 = vld [vmem:[%s214] sm:$0xf]
      %v241 = vld [vmem:[%s214 + $0x4] sm:$0xf]
      %v242 = vld [vmem:[%s214 + $0x8] sm:$0xf]
      %v243 = vld [vmem:[%s214 + $0xc] sm:$0xf]
      %v244 = vld [vmem:[%s214 + $0x10] sm:$0xf]
      %v245 = vld [vmem:[%s214 + $0x14] sm:$0xf]
      %v246 = vld [vmem:[%s214 + $0x18] sm:$0xf]
      %v247 = vld [vmem:[%s214 + $0x1c] sm:$0xf]
      %v248 = vld [vmem:[%s214 + $0x20] sm:$0xf]
      %v249 = vld [vmem:[%s214 + $0x24] sm:$0xf]
      %v250 = vld [vmem:[%s214 + $0x28] sm:$0xf]
      %v251 = vld [vmem:[%s214 + $0x2c] sm:$0xf]
      %v252 = vld [vmem:[%s214 + $0x30] sm:$0xf]
      %v253 = vld [vmem:[%s214 + $0x34] sm:$0xf]
      %v254 = vld [vmem:[%s214 + $0x38] sm:$0xf]
      %v255 = vld [vmem:[%s214 + $0x3c] sm:$0xf]
      %v256 = vld [vmem:[%s214 + $0x40] sm:$0xf]
      %v257 = vld [vmem:[%s214 + $0x44] sm:$0xf]
      %v258 = vld [vmem:[%s214 + $0x48] sm:$0xf]
      %v259 = vld [vmem:[%s214 + $0x4c] sm:$0xf]
      %v260 = vld [vmem:[%s214 + $0x50] sm:$0xf]
      %v261 = vld [vmem:[%s214 + $0x54] sm:$0xf]
      %v262 = vld [vmem:[%s214 + $0x58] sm:$0xf]
      %v263 = vld [vmem:[%s214 + $0x5c] sm:$0xf]
      %v264 = vld [vmem:[%s214 + $0x60] sm:$0xf]
      %v265 = vld [vmem:[%s214 + $0x64] sm:$0xf]
      %v266 = vld [vmem:[%s214 + $0x68] sm:$0xf]
      %v267 = vld [vmem:[%s214 + $0x6c] sm:$0xf]
      %v268 = vld [vmem:[%s214 + $0x70] sm:$0xf]
      %v269 = vld [vmem:[%s214 + $0x74] sm:$0xf]
      %v270 = vld [vmem:[%s214 + $0x78] sm:$0xf]
      %v271 = vld [vmem:[%s214 + $0x7c] sm:$0xf]
      %v272 = vld [vmem:[%s214 + $0x80] sm:$0xf]
      %v273 = vld [vmem:[%s214 + $0x84] sm:$0xf]
      %v274 = vld [vmem:[%s214 + $0x88] sm:$0xf]
      %v275 = vld [vmem:[%s214 + $0x8c] sm:$0xf]
      %v276 = vld [vmem:[%s214 + $0x90] sm:$0xf]
      %v277 = vld [vmem:[%s214 + $0x94] sm:$0xf]
      %v278 = vld [vmem:[%s214 + $0x98] sm:$0xf]
      %v279 = vld [vmem:[%s214 + $0x9c] sm:$0xf]
      %v280 = vld [vmem:[%s214 + $0xa0] sm:$0xf]
      %v281 = vld [vmem:[%s214 + $0xa4] sm:$0xf]
      %v282 = vld [vmem:[%s214 + $0xa8] sm:$0xf]
      %v283 = vld [vmem:[%s214 + $0xac] sm:$0xf]
      %v284 = vld [vmem:[%s214 + $0xb0] sm:$0xf]
      %v285 = vld [vmem:[%s214 + $0xb4] sm:$0xf]
      %v286 = vld [vmem:[%s214 + $0xb8] sm:$0xf]
      %v287 = vld [vmem:[%s214 + $0xbc] sm:$0xf]
      %v288 = vld [vmem:[%s214 + $0xc0] sm:$0xf]
      %v289 = vld [vmem:[%s214 + $0xc4] sm:$0xf]
      %v290 = vld [vmem:[%s214 + $0xc8] sm:$0xf]
      %v291 = vld [vmem:[%s214 + $0xcc] sm:$0xf]
      %v292 = vld [vmem:[%s214 + $0xd0] sm:$0xf]
      %v293 = vld [vmem:[%s214 + $0xd4] sm:$0xf]
      %v294 = vld [vmem:[%s214 + $0xd8] sm:$0xf]
      %v295 = vld [vmem:[%s214 + $0xdc] sm:$0xf]
      %v296 = vld [vmem:[%s214 + $0xe0] sm:$0xf]
      %v297 = vld [vmem:[%s214 + $0xe4] sm:$0xf]
      %v298 = vld [vmem:[%s214 + $0xe8] sm:$0xf]
      %v299 = vld [vmem:[%s214 + $0xec] sm:$0xf]
      %v300 = vld [vmem:[%s214 + $0xf0] sm:$0xf]
      %v301 = vld [vmem:[%s214 + $0xf4] sm:$0xf]
      %v302 = vld [vmem:[%s214 + $0xf8] sm:$0xf]
      %v303 = vld [vmem:[%s214 + $0xfc] sm:$0xf]
      %v304 = vld [vmem:[%s214 + $0x100] sm:$0xf]
      %v305 = vld [vmem:[%s214 + $0x104] sm:$0xf]
      %v306 = vld [vmem:[%s214 + $0x108] sm:$0xf]
      %v307 = vld [vmem:[%s214 + $0x10c] sm:$0xf]
      %v308 = vld [vmem:[%s214 + $0x110] sm:$0xf]
      %v309 = vld [vmem:[%s214 + $0x114] sm:$0xf]
      %v310 = vld [vmem:[%s214 + $0x118] sm:$0xf]
      %v311 = vld [vmem:[%s214 + $0x11c] sm:$0xf]
      %v312 = vld [vmem:[%s214 + $0x120] sm:$0xf]
      %v313 = vld [vmem:[%s214 + $0x124] sm:$0xf]
      %v314 = vld [vmem:[%s214 + $0x128] sm:$0xf]
      %v315 = vld [vmem:[%s214 + $0x12c] sm:$0xf]
      %v316 = vld [vmem:[%s214 + $0x130] sm:$0xf]
      %v317 = vld [vmem:[%s214 + $0x134] sm:$0xf]
      %v318 = vld [vmem:[%s214 + $0x138] sm:$0xf]
      %v319 = vld [vmem:[%s214 + $0x13c] sm:$0xf]
      %v320 = vld [vmem:[%s214 + $0x140] sm:$0xf]
      %v321 = vld [vmem:[%s214 + $0x144] sm:$0xf]
      %v322 = vld [vmem:[%s214 + $0x148] sm:$0xf]
      %v323 = vld [vmem:[%s214 + $0x14c] sm:$0xf]
      %v324 = vld [vmem:[%s214 + $0x150] sm:$0xf]
      %v325 = vld [vmem:[%s214 + $0x154] sm:$0xf]
      %v326 = vld [vmem:[%s214 + $0x158] sm:$0xf]
      %v327 = vld [vmem:[%s214 + $0x15c] sm:$0xf]
      %v328 = vld [vmem:[%s214 + $0x160] sm:$0xf]
      %v329 = vld [vmem:[%s214 + $0x164] sm:$0xf]
      %v330 = vld [vmem:[%s214 + $0x168] sm:$0xf]
      %v331 = vld [vmem:[%s214 + $0x16c] sm:$0xf]
      %v332 = vld [vmem:[%s214 + $0x170] sm:$0xf]
      %v333 = vld [vmem:[%s214 + $0x174] sm:$0xf]
      %v334 = vld [vmem:[%s214 + $0x178] sm:$0xf]
      %v335 = vld [vmem:[%s214 + $0x17c] sm:$0xf]
      %v336 = vld [vmem:[%s214 + $0x180] sm:$0xf]
      %v337 = vld [vmem:[%s214 + $0x184] sm:$0xf]
      %v338 = vld [vmem:[%s214 + $0x188] sm:$0xf]
      %v339 = vld [vmem:[%s214 + $0x18c] sm:$0xf]
      %v340 = vld [vmem:[%s214 + $0x190] sm:$0xf]
      %v341 = vld [vmem:[%s214 + $0x194] sm:$0xf]
      %v342 = vld [vmem:[%s214 + $0x198] sm:$0xf]
      %v343 = vld [vmem:[%s214 + $0x19c] sm:$0xf]
      %v344 = vld [vmem:[%s214 + $0x1a0] sm:$0xf]
      %v345 = vld [vmem:[%s214 + $0x1a4] sm:$0xf]
      %v346 = vld [vmem:[%s214 + $0x1a8] sm:$0xf]
      %v347 = vld [vmem:[%s214 + $0x1ac] sm:$0xf]
      %v348 = vld [vmem:[%s214 + $0x1b0] sm:$0xf]
      %v349 = vld [vmem:[%s214 + $0x1b4] sm:$0xf]
      %v350 = vld [vmem:[%s214 + $0x1b8] sm:$0xf]
      %v351 = vld [vmem:[%s214 + $0x1bc] sm:$0xf]
      %v352 = vld [vmem:[%s214 + $0x1c0] sm:$0xf]
      %v353 = vld [vmem:[%s214 + $0x1c4] sm:$0xf]
      %v354 = vld [vmem:[%s214 + $0x1c8] sm:$0xf]
      %v355 = vld [vmem:[%s214 + $0x1cc] sm:$0xf]
      %v356 = vld [vmem:[%s214 + $0x1d0] sm:$0xf]
      %v357 = vld [vmem:[%s214 + $0x1d4] sm:$0xf]
      %v358 = vld [vmem:[%s214 + $0x1d8] sm:$0xf]
      %v359 = vld [vmem:[%s214 + $0x1dc] sm:$0xf]
      %v360 = vld [vmem:[%s214 + $0x1e0] sm:$0xf]
      %v361 = vld [vmem:[%s214 + $0x1e4] sm:$0xf]
      %v362 = vld [vmem:[%s214 + $0x1e8] sm:$0xf]
      %v363 = vld [vmem:[%s214 + $0x1ec] sm:$0xf]
      %v364 = vld [vmem:[%s214 + $0x1f0] sm:$0xf]
      %v365 = vld [vmem:[%s214 + $0x1f4] sm:$0xf]
      %v366 = vld [vmem:[%s214 + $0x1f8] sm:$0xf]
      %v367 = vld [vmem:[%s214 + $0x1fc] sm:$0xf]
      %v368 = vld [vmem:[%s214 + $0x200] sm:$0xf]
      %v369 = vld [vmem:[%s214 + $0x204] sm:$0xf]
      %v370 = vld [vmem:[%s214 + $0x208] sm:$0xf]
      %v371 = vld [vmem:[%s214 + $0x20c] sm:$0xf]
      %v372 = vld [vmem:[%s214 + $0x210] sm:$0xf]
      %v373 = vld [vmem:[%s214 + $0x214] sm:$0xf]
      %v374 = vld [vmem:[%s214 + $0x218] sm:$0xf]
      %v375 = vld [vmem:[%s214 + $0x21c] sm:$0xf]
      %v376 = vld [vmem:[%s214 + $0x220] sm:$0xf]
      %v377 = vld [vmem:[%s214 + $0x224] sm:$0xf]
      %v378 = vld [vmem:[%s214 + $0x228] sm:$0xf]
      %v379 = vld [vmem:[%s214 + $0x22c] sm:$0xf]
      %v390 = vunpack.c.l.b16 %v230
      %v391 = vunpack.c.h.b16 %v230
      %v392 = vunpack.c.l.b16 %v231
      %v393 = vunpack.c.h.b16 %v231
      %v394 = vunpack.c.l.b16 %v232
      %v395 = vunpack.c.h.b16 %v232
      %v396 = vunpack.c.l.b16 %v233
      %v397 = vunpack.c.h.b16 %v233
      %v398 = vunpack.c.l.b16 %v234
      %v399 = vunpack.c.l.b16 %v235
      %v400 = vunpack.c.h.b16 %v235
      %v401 = vunpack.c.l.b16 %v236
      %v402 = vunpack.c.h.b16 %v236
      %v403 = vunpack.c.l.b16 %v237
      %v404 = vunpack.c.h.b16 %v237
      %v405 = vunpack.c.l.b16 %v238
      %v406 = vunpack.c.h.b16 %v238
      %v407 = vunpack.c.l.b16 %v239
      %v408 = vpack.c.b16 %v399, %v390
      %v409 = vpack.c.b16 %v400, %v391
      %v410 = vpack.c.b16 %v401, %v392
      %v411 = vpack.c.b16 %v402, %v393
      %v412 = vpack.c.b16 %v403, %v394
      %v413 = vpack.c.b16 %v404, %v395
      %v414 = vpack.c.b16 %v405, %v396
      %v415 = vpack.c.b16 %v406, %v397
      %v416 = vpack.c.b16 %v407, %v398
      %v565 = vunpack.c.l.b16 %v240
      %v566 = vunpack.c.l.b16 %v241
      %v567 = vunpack.c.l.b16 %v242
      %v568 = vunpack.c.l.b16 %v243
      %v569 = vunpack.c.l.b16 %v244
      %v570 = vunpack.c.l.b16 %v245
      %v571 = vunpack.c.l.b16 %v246
      %v572 = vunpack.c.l.b16 %v247
      %v573 = vunpack.c.l.b16 %v248
      %v574 = vunpack.c.l.b16 %v249
      %v575 = vunpack.c.l.b16 %v250
      %v576 = vunpack.c.l.b16 %v251
      %v577 = vunpack.c.l.b16 %v252
      %v578 = vunpack.c.l.b16 %v253
      %v579 = vunpack.c.l.b16 %v254
      %v580 = vunpack.c.l.b16 %v255
      %v581 = vunpack.c.l.b16 %v256
      %v582 = vunpack.c.l.b16 %v257
      %v583 = vunpack.c.l.b16 %v258
      %v584 = vunpack.c.l.b16 %v259
      %v585 = vunpack.c.l.b16 %v260
      %v586 = vunpack.c.l.b16 %v261
      %v587 = vunpack.c.l.b16 %v262
      %v588 = vunpack.c.l.b16 %v263
      %v589 = vunpack.c.l.b16 %v264
      %v590 = vunpack.c.l.b16 %v265
      %v591 = vunpack.c.l.b16 %v266
      %v592 = vunpack.c.l.b16 %v267
      %v593 = vunpack.c.l.b16 %v268
      %v594 = vunpack.c.l.b16 %v269
      %v595 = vunpack.c.l.b16 %v270
      %v596 = vunpack.c.l.b16 %v271
      %v597 = vunpack.c.l.b16 %v272
      %v598 = vunpack.c.l.b16 %v273
      %v599 = vunpack.c.l.b16 %v274
      %v600 = vunpack.c.l.b16 %v275
      %v601 = vunpack.c.l.b16 %v276
      %v602 = vunpack.c.l.b16 %v277
      %v603 = vunpack.c.l.b16 %v278
      %v604 = vunpack.c.l.b16 %v279
      %v605 = vunpack.c.l.b16 %v280
      %v606 = vunpack.c.l.b16 %v281
      %v607 = vunpack.c.l.b16 %v282
      %v608 = vunpack.c.l.b16 %v283
      %v609 = vunpack.c.l.b16 %v284
      %v610 = vunpack.c.l.b16 %v285
      %v611 = vunpack.c.l.b16 %v286
      %v612 = vunpack.c.l.b16 %v287
      %v613 = vunpack.c.l.b16 %v288
      %v614 = vunpack.c.l.b16 %v289
      %v615 = vunpack.c.l.b16 %v290
      %v616 = vunpack.c.l.b16 %v291
      %v617 = vunpack.c.l.b16 %v292
      %v618 = vunpack.c.l.b16 %v293
      %v619 = vunpack.c.l.b16 %v294
      %v620 = vunpack.c.l.b16 %v295
      %v621 = vunpack.c.l.b16 %v296
      %v622 = vunpack.c.l.b16 %v297
      %v623 = vunpack.c.l.b16 %v298
      %v624 = vunpack.c.l.b16 %v299
      %v625 = vunpack.c.l.b16 %v300
      %v626 = vunpack.c.l.b16 %v301
      %v627 = vunpack.c.l.b16 %v302
      %v628 = vunpack.c.l.b16 %v303
      %v629 = vunpack.c.l.b16 %v304
      %v630 = vunpack.c.l.b16 %v305
      %v631 = vunpack.c.l.b16 %v306
      %v632 = vunpack.c.l.b16 %v307
      %v633 = vunpack.c.l.b16 %v308
      %v634 = vunpack.c.l.b16 %v309
      %v635 = vunpack.c.l.b16 %v310
      %v636 = vunpack.c.l.b16 %v311
      %v637 = vunpack.c.l.b16 %v312
      %v638 = vunpack.c.l.b16 %v313
      %v639 = vunpack.c.l.b16 %v314
      %v640 = vunpack.c.l.b16 %v315
      %v641 = vunpack.c.l.b16 %v316
      %v642 = vunpack.c.l.b16 %v317
      %v643 = vunpack.c.l.b16 %v318
      %v644 = vunpack.c.l.b16 %v319
      %v645 = vunpack.c.l.b16 %v320
      %v646 = vunpack.c.l.b16 %v321
      %v647 = vunpack.c.l.b16 %v322
      %v648 = vunpack.c.l.b16 %v323
      %v649 = vunpack.c.l.b16 %v324
      %v650 = vunpack.c.l.b16 %v325
      %v651 = vunpack.c.l.b16 %v326
      %v652 = vunpack.c.l.b16 %v327
      %v653 = vunpack.c.l.b16 %v328
      %v654 = vunpack.c.l.b16 %v329
      %v655 = vunpack.c.l.b16 %v330
      %v656 = vunpack.c.l.b16 %v331
      %v657 = vunpack.c.l.b16 %v332
      %v658 = vunpack.c.l.b16 %v333
      %v659 = vunpack.c.l.b16 %v334
      %v660 = vunpack.c.l.b16 %v335
      %v661 = vunpack.c.l.b16 %v336
      %v662 = vunpack.c.l.b16 %v337
      %v663 = vunpack.c.l.b16 %v338
      %v664 = vunpack.c.l.b16 %v339
      %v665 = vunpack.c.l.b16 %v340
      %v666 = vunpack.c.l.b16 %v341
      %v667 = vunpack.c.l.b16 %v342
      %v668 = vunpack.c.l.b16 %v343
      %v669 = vunpack.c.l.b16 %v344
      %v670 = vunpack.c.l.b16 %v345
      %v671 = vunpack.c.l.b16 %v346
      %v672 = vunpack.c.l.b16 %v347
      %v673 = vunpack.c.l.b16 %v348
      %v674 = vunpack.c.l.b16 %v349
      %v675 = vunpack.c.l.b16 %v350
      %v676 = vunpack.c.l.b16 %v351
      %v677 = vunpack.c.l.b16 %v352
      %v678 = vunpack.c.l.b16 %v353
      %v679 = vunpack.c.l.b16 %v354
      %v680 = vunpack.c.l.b16 %v355
      %v681 = vunpack.c.l.b16 %v356
      %v682 = vunpack.c.l.b16 %v357
      %v683 = vunpack.c.l.b16 %v358
      %v684 = vunpack.c.l.b16 %v359
      %v685 = vunpack.c.l.b16 %v360
      %v686 = vunpack.c.l.b16 %v361
      %v687 = vunpack.c.l.b16 %v362
      %v688 = vunpack.c.l.b16 %v363
      %v689 = vunpack.c.l.b16 %v364
      %v690 = vunpack.c.l.b16 %v365
      %v691 = vunpack.c.l.b16 %v366
      %v692 = vunpack.c.l.b16 %v367
      %v693 = vunpack.c.l.b16 %v368
      %v694 = vunpack.c.l.b16 %v369
      %v695 = vunpack.c.l.b16 %v370
      %v696 = vunpack.c.l.b16 %v371
      %v697 = vunpack.c.l.b16 %v372
      %v698 = vunpack.c.l.b16 %v373
      %v699 = vunpack.c.l.b16 %v374
      %v700 = vunpack.c.l.b16 %v375
      %v701 = vunpack.c.l.b16 %v376
      %v702 = vunpack.c.l.b16 %v377
      %v703 = vunpack.c.l.b16 %v378
      %v704 = vunpack.c.l.b16 %v379
      %v705 = vpack.c.b16 %v566, %v565
      %v706 = vpack.c.b16 %v568, %v567
      %v707 = vpack.c.b16 %v570, %v569
      %v708 = vpack.c.b16 %v572, %v571
      %v709 = vpack.c.b16 %v574, %v573
      %v710 = vpack.c.b16 %v576, %v575
      %v711 = vpack.c.b16 %v578, %v577
      %v712 = vpack.c.b16 %v580, %v579
      %v713 = vpack.c.b16 %v582, %v581
      %v714 = vpack.c.b16 %v584, %v583
      %v715 = vpack.c.b16 %v586, %v585
      %v716 = vpack.c.b16 %v588, %v587
      %v717 = vpack.c.b16 %v590, %v589
      %v718 = vpack.c.b16 %v592, %v591
      %v719 = vpack.c.b16 %v594, %v593
      %v720 = vpack.c.b16 %v596, %v595
      %v721 = vpack.c.b16 %v598, %v597
      %v722 = vpack.c.b16 %v600, %v599
      %v723 = vpack.c.b16 %v602, %v601
      %v724 = vpack.c.b16 %v604, %v603
      %v725 = vpack.c.b16 %v606, %v605
      %v726 = vpack.c.b16 %v608, %v607
      %v727 = vpack.c.b16 %v610, %v609
      %v728 = vpack.c.b16 %v612, %v611
      %v729 = vpack.c.b16 %v614, %v613
      %v730 = vpack.c.b16 %v616, %v615
      %v731 = vpack.c.b16 %v618, %v617
      %v732 = vpack.c.b16 %v620, %v619
      %v733 = vpack.c.b16 %v622, %v621
      %v734 = vpack.c.b16 %v624, %v623
      %v735 = vpack.c.b16 %v626, %v625
      %v736 = vpack.c.b16 %v628, %v627
      %v737 = vpack.c.b16 %v630, %v629
      %v738 = vpack.c.b16 %v632, %v631
      %v739 = vpack.c.b16 %v634, %v633
      %v740 = vpack.c.b16 %v636, %v635
      %v741 = vpack.c.b16 %v638, %v637
      %v742 = vpack.c.b16 %v640, %v639
      %v743 = vpack.c.b16 %v642, %v641
      %v744 = vpack.c.b16 %v644, %v643
      %v745 = vpack.c.b16 %v646, %v645
      %v746 = vpack.c.b16 %v648, %v647
      %v747 = vpack.c.b16 %v650, %v649
      %v748 = vpack.c.b16 %v652, %v651
      %v749 = vpack.c.b16 %v654, %v653
      %v750 = vpack.c.b16 %v656, %v655
      %v751 = vpack.c.b16 %v658, %v657
      %v752 = vpack.c.b16 %v660, %v659
      %v753 = vpack.c.b16 %v662, %v661
      %v754 = vpack.c.b16 %v664, %v663
      %v755 = vpack.c.b16 %v666, %v665
      %v756 = vpack.c.b16 %v668, %v667
      %v757 = vpack.c.b16 %v670, %v669
      %v758 = vpack.c.b16 %v672, %v671
      %v759 = vpack.c.b16 %v674, %v673
      %v760 = vpack.c.b16 %v676, %v675
      %v761 = vpack.c.b16 %v678, %v677
      %v762 = vpack.c.b16 %v680, %v679
      %v763 = vpack.c.b16 %v682, %v681
      %v764 = vpack.c.b16 %v684, %v683
      %v765 = vpack.c.b16 %v686, %v685
      %v766 = vpack.c.b16 %v688, %v687
      %v767 = vpack.c.b16 %v690, %v689
      %v768 = vpack.c.b16 %v692, %v691
      %v769 = vpack.c.b16 %v694, %v693
      %v770 = vpack.c.b16 %v696, %v695
      %v771 = vpack.c.b16 %v698, %v697
      %v772 = vpack.c.b16 %v700, %v699
      %v773 = vpack.c.b16 %v702, %v701
      %v774 = vpack.c.b16 %v704, %v703
      %vm845 = vcmask 785408
      %v847 = vsel %vm845, %v416, 0
      %849 = vmatpush.bf16.msra.mxu0 %v712
      %850 = vmatpush.bf16.msra.mxu0 %v711
      %851 = vmatpush.bf16.msra.mxu0 %v710
      %852 = vmatpush.bf16.msra.mxu0 %v709
      %853 = vmatpush.bf16.msra.mxu0 %v708
      %854 = vmatpush.bf16.msra.mxu0 %v707
      %855 = vmatpush.bf16.msra.mxu0 %v706
      %856 = vmatpush.bf16.msra.mxu0 %v705
      %857 = vmatmul.bf16.gmra.mxu0 %v408
      %v858 = vpop.f32.mrf.mxu0
      %v859 = vadd.f32 0.0, %v858
      %v860 = vpop.f32.mrf.mxu0
      %v861 = vadd.f32 0.0, %v860
      %862 = vdwg.mxu0
      %863 = vmatpush.bf16.msra.mxu0 %v720
      %864 = vmatpush.bf16.msra.mxu0 %v719
      %865 = vmatpush.bf16.msra.mxu0 %v718
      %866 = vmatpush.bf16.msra.mxu0 %v717
      %867 = vmatpush.bf16.msra.mxu0 %v716
      %868 = vmatpush.bf16.msra.mxu0 %v715
      %869 = vmatpush.bf16.msra.mxu0 %v714
      %870 = vmatpush.bf16.msra.mxu0 %v713
      %871 = vmatmul.bf16.gmra.mxu0 %v409
      %v872 = vpop.f32.mrf.mxu0
      %v873 = vadd.f32 %v859, %v872
      %v874 = vpop.f32.mrf.mxu0
      %v875 = vadd.f32 %v861, %v874
      %876 = vdwg.mxu0
      %877 = vmatpush.bf16.msra.mxu0 %v728
      %878 = vmatpush.bf16.msra.mxu0 %v727
      %879 = vmatpush.bf16.msra.mxu0 %v726
      %880 = vmatpush.bf16.msra.mxu0 %v725
      %881 = vmatpush.bf16.msra.mxu0 %v724
      %882 = vmatpush.bf16.msra.mxu0 %v723
      %883 = vmatpush.bf16.msra.mxu0 %v722
      %884 = vmatpush.bf16.msra.mxu0 %v721
      %885 = vmatmul.bf16.gmra.mxu0 %v410
      %v886 = vpop.f32.mrf.mxu0
      %v887 = vadd.f32 %v873, %v886
      %v888 = vpop.f32.mrf.mxu0
      %v889 = vadd.f32 %v875, %v888
      %890 = vdwg.mxu0
      %891 = vmatpush.bf16.msra.mxu0 %v736
      %892 = vmatpush.bf16.msra.mxu0 %v735
      %893 = vmatpush.bf16.msra.mxu0 %v734
      %894 = vmatpush.bf16.msra.mxu0 %v733
      %895 = vmatpush.bf16.msra.mxu0 %v732
      %896 = vmatpush.bf16.msra.mxu0 %v731
      %897 = vmatpush.bf16.msra.mxu0 %v730
      %898 = vmatpush.bf16.msra.mxu0 %v729
      %899 = vmatmul.bf16.gmra.mxu0 %v411
      %v900 = vpop.f32.mrf.mxu0
      %v901 = vadd.f32 %v887, %v900
      %v902 = vpop.f32.mrf.mxu0
      %v903 = vadd.f32 %v889, %v902
      %904 = vdwg.mxu0
      %905 = vmatpush.bf16.msra.mxu0 %v744
      %906 = vmatpush.bf16.msra.mxu0 %v743
      %907 = vmatpush.bf16.msra.mxu0 %v742
      %908 = vmatpush.bf16.msra.mxu0 %v741
      %909 = vmatpush.bf16.msra.mxu0 %v740
      %910 = vmatpush.bf16.msra.mxu0 %v739
      %911 = vmatpush.bf16.msra.mxu0 %v738
      %912 = vmatpush.bf16.msra.mxu0 %v737
      %913 = vmatmul.bf16.gmra.mxu0 %v412
      %v914 = vpop.f32.mrf.mxu0
      %v915 = vadd.f32 %v901, %v914
      %v916 = vpop.f32.mrf.mxu0
      %v917 = vadd.f32 %v903, %v916
      %918 = vdwg.mxu0
      %919 = vmatpush.bf16.msra.mxu0 %v752
      %920 = vmatpush.bf16.msra.mxu0 %v751
      %921 = vmatpush.bf16.msra.mxu0 %v750
      %922 = vmatpush.bf16.msra.mxu0 %v749
      %923 = vmatpush.bf16.msra.mxu0 %v748
      %924 = vmatpush.bf16.msra.mxu0 %v747
      %925 = vmatpush.bf16.msra.mxu0 %v746
      %926 = vmatpush.bf16.msra.mxu0 %v745
      %927 = vmatmul.bf16.gmra.mxu0 %v413
      %v928 = vpop.f32.mrf.mxu0
      %v929 = vadd.f32 %v915, %v928
      %v930 = vpop.f32.mrf.mxu0
      %v931 = vadd.f32 %v917, %v930
      %932 = vdwg.mxu0
      %933 = vmatpush.bf16.msra.mxu0 %v760
      %934 = vmatpush.bf16.msra.mxu0 %v759
      %935 = vmatpush.bf16.msra.mxu0 %v758
      %936 = vmatpush.bf16.msra.mxu0 %v757
      %937 = vmatpush.bf16.msra.mxu0 %v756
      %938 = vmatpush.bf16.msra.mxu0 %v755
      %939 = vmatpush.bf16.msra.mxu0 %v754
      %940 = vmatpush.bf16.msra.mxu0 %v753
      %941 = vmatmul.bf16.gmra.mxu0 %v414
      %v942 = vpop.f32.mrf.mxu0
      %v943 = vadd.f32 %v929, %v942
      %v944 = vpop.f32.mrf.mxu0
      %v945 = vadd.f32 %v931, %v944
      %946 = vdwg.mxu0
      %947 = vmatpush.bf16.msra.mxu0 %v768
      %948 = vmatpush.bf16.msra.mxu0 %v767
      %949 = vmatpush.bf16.msra.mxu0 %v766
      %950 = vmatpush.bf16.msra.mxu0 %v765
      %951 = vmatpush.bf16.msra.mxu0 %v764
      %952 = vmatpush.bf16.msra.mxu0 %v763
      %953 = vmatpush.bf16.msra.mxu0 %v762
      %954 = vmatpush.bf16.msra.mxu0 %v761
      %955 = vmatmul.bf16.gmra.mxu0 %v415
      %v956 = vpop.f32.mrf.mxu0
      %v957 = vadd.f32 %v943, %v956
      %v958 = vpop.f32.mrf.mxu0
      %v959 = vadd.f32 %v945, %v958
      %960 = vdwg.mxu0
      %961 = vmatpush.bf16.msra.mxu0 0
      %962 = vmatpush.bf16.msra.mxu0 0
      %963 = vmatpush.bf16.msra.mxu0 %v774
      %964 = vmatpush.bf16.msra.mxu0 %v773
      %965 = vmatpush.bf16.msra.mxu0 %v772
      %966 = vmatpush.bf16.msra.mxu0 %v771
      %967 = vmatpush.bf16.msra.mxu0 %v770
      %968 = vmatpush.bf16.msra.mxu0 %v769
      %969 = vmatmul.bf16.gmra.mxu0 %v847
      %v970 = vpop.f32.mrf.mxu0
      %v971 = vadd.f32 %v957, %v970
      %v972 = vpop.f32.mrf.mxu0
      %v973 = vadd.f32 %v959, %v972
      %974 = vdwg.mxu0
      %v975 = vadd.f32 %v228, %v971
      %v976 = vadd.f32 %v229, %v973
      %977 = vst [vmem:[#allocation2] sm:$0xff] %v975
      %978 = vst [vmem:[#allocation2 + $0x8] sm:$0xff] %v976
      // Predicated region
      $region37: #{inception_generator_forward.20} parent=31 // pred_check
        %p979 = pneg %p222
      $region38: #{inception_generator_forward.20} parent=31 // pred_check_branch
        %981 = sbr.rel (%p979) target = $region40
      $region39: #{inception_generator_forward.20} parent=31 // pred_region
        %v982 = vld [vmem:[#allocation2] sm:$0xff]
        %v983 = vld [vmem:[#allocation2 + $0x8] sm:$0xff]
        %v984 = vld [vmem:[%s2] sm:$0x1]
        %v986 = vperm.slane %v984, 0
        %v988 = vadd.f32 %v982, %v986
        %v989 = vadd.f32 %v983, %v986
        %v990 = vadd.f32 %v988, %v989
        %v991 = vrot.slane %v990, 4
        %v992 = vadd.f32 %v990, %v991
        %v993 = vrot.slane %v992, 2
        %v994 = vadd.f32 %v992, %v993
        %v995 = vrot.slane %v994, 1
        %v996 = vadd.f32 %v994, %v995
        %v997 = vmul.f32 %v996, 0.0625
        %v998 = vmul.f32 %v988, %v988
        %v999 = vmul.f32 %v989, %v989
        %v1000 = vadd.f32 %v998, %v999
        %v1001 = vrot.slane %v1000, 4
        %v1002 = vadd.f32 %v1000, %v1001
        %v1003 = vrot.slane %v1002, 2
        %v1004 = vadd.f32 %v1002, %v1003
        %v1005 = vrot.slane %v1004, 1
        %v1006 = vadd.f32 %v1004, %v1005
        %v1007 = vmul.f32 %v1006, 0.0625
        %v1008 = vmul.f32 %v997, %v997
        %v1009 = vsub.f32 %v1007, %v1008
        %v1010 = vsub.f32 %v988, %v997
        %v1011 = vsub.f32 %v989, %v997
        %v1012 = vmax.f32 %v1009, 0.0
        %v1013 = vadd.f32 %v1012, 1e-05
        %v1014 = vrsqrt.pop %v1013
        %v1015 = vmul.f32 %v1014, %v1013
        %v1016 = vmul.f32 %v1015, %v1014
        %v1017 = vmul.f32 0.5, %v1016
        %v1018 = vsub.f32 1.5, %v1017
        %v1019 = vmul.f32 %v1014, %v1018
        %vm1020 = vweird.f32 %v1013
        %vm1021 = vweird.f32 %v1014
        %vm1022 = vmor %vm1020, %vm1021
        %v1023 = vsel %vm1022, %v1014, %v1019
        %v1024 = vmul.f32 %v1010, %v1023
        %v1025 = vmul.f32 %v1011, %v1023
        %v1026 = vmax.f32 %v1024, 0.0
        %v1027 = vmax.f32 %v1025, 0.0
        %v1028 = vpack.c.bf16 %v1026, %v1026
        %v1029 = vpack.c.bf16 %v1027, %v1027
        %1030 = vst [vmem:[%s220] sm:$0xf] %v1028
        %1031 = vst [vmem:[%s220 + $0x4] sm:$0xf] %v1029
      $region40: #{inception_generator_forward.20} parent=31 // pred_fallthru
        _
      %p1032 = scmp.lt.s32.totalorder %s18, 1
      %s1033 = scalar_select %p1032, %s18, 1
      %s1034 = smul.addr %s1033, 2
      %s1035 = smul.addr %s1034, 4
      %s1036 = scalar_lea.vmem %s3, %s1035
      // Predicated region
      $region41: #{inception_generator_forward.20} parent=31 // pred_check
        %p1037 = pneg %p119
      $region42: #{inception_generator_forward.20} parent=31 // pred_check_branch
        %1039 = sbr.rel (%p1037) target = $region44
      $region43: #{inception_generator_forward.20} parent=31 // pred_region
        _
      $region44: #{inception_generator_forward.20} parent=31 // pred_fallthru
        _
    $region32: #{inception_generator_forward.20} parent=5 // pred_fallthru
      _
    %p1040 = scmp.le.s32.totalorder 2, %s9
    // Predicated region
    $region45: #{inception_generator_forward.20} parent=5 // pred_check
      %p1041 = pneg %p1040
    $region46: #{inception_generator_forward.20} parent=5 // pred_check_branch
      %1043 = sbr.rel (%p1041) target = $region48
    $region47: #{inception_generator_forward.20} parent=5 // pred_region
      %s1044 = ssub.s32 %s9, 2
      // Predicated region
      $region49: #{inception_generator_forward.20} parent=47 // pred_check
        %p1045 = pneg %p125
      $region50: #{inception_generator_forward.20} parent=47 // pred_check_branch
        %1047 = sbr.rel (%p1045) target = $region52
      $region51: #{inception_generator_forward.20} parent=47 // pred_region
        %p1048 = scmp.lt.s32.totalorder %s20, 1
        %s1049 = scalar_select %p1048, %s20, 1
        %s1050 = smul.addr %s1049, 2
        %s1051 = smul.addr %s1050, 4
        %s1052 = scalar_lea.vmem %s3, %s1051
      $region52: #{inception_generator_forward.20} parent=47 // pred_fallthru
        _
    $region48: #{inception_generator_forward.20} parent=5 // pred_fallthru
      _
  $region6: #{inception_generator_forward.20} parent=0 // loop_footer
    %s13 = sadd.s32 1, %s9
  $region7: #{inception_generator_forward.20} parent=0 // loop_footer_branch
    %8 = sbr.rel target = $region3
  $region8: #{inception_generator_forward.20} parent=0 // loop_exit
    _

// kernel: inception_generator_forward.21
$region0: #{inception_generator_forward.21}
  #allocation0 [shape = 'u32[]', space=smem, size = 0x4, offset = 0x4, fixed_abs, tag = 'smem constant byte address 0x4 - core index']
  #allocation1 [shape = 'u32[72,128]{1,0:T(1,128)}', space=vmem, size = 0x9000, scoped, tag = 'internal scratch']
  #allocation2 [shape = 'f32[16,128]{1,0:T(8,128)}', space=vmem, size = 0x2000, scoped, tag = 'scratch operand']
  %s0 = inlined_call_operand.vmem [shape: bf16[2,16,544], index: 0, kind: input, shape index: {}]
  %s1 = inlined_call_operand.vmem [shape: bf16[544,128], index: 1, kind: input, shape index: {}]
  %s2 = inlined_call_operand.vmem [shape: f32[1,128], index: 2, kind: input, shape index: {}]
  %s3 = inlined_call_operand.vmem [shape: bf16[2,16,128], index: 3, kind: output, shape index: {}]
  %s4 = sld [smem:[#allocation0]]
  $region53: #{inception_generator_forward.21} parent=0
    _
  %s6 = ssub.s32 1, %s4
  %s7 = scalar_select 0, %s6, %s4
  loop: start=0, step=1, limit=4
  $region2: #{inception_generator_forward.21} parent=0 // loop_pre_header
    _
  $region3: #{inception_generator_forward.21} parent=0 // loop_header
    %s9 = sphi 0, %s13
    %p10 = scmp.ge.s32.totalorder %s9, 4
    %s16 = sphi 0, %s28
    %s17 = sphi 0, %s24
    %s18 = sphi 0, %s16
    %s19 = sphi 0, %s17
    %s20 = sphi 0, %s18
    %s21 = sphi 0, %s19
    %s33 = sphi 0, %s35
    %s36 = sphi 0, %s33
    %s37 = sphi 0, %s36
    %s53 = sphi 0, %s37
    %s59 = sphi 0, %s61
    %s62 = sphi 0, %s59
    %s63 = sphi 0, %s62
    %s79 = sphi 0, %s63
    %s83 = sphi 0, %s83
    %s85 = sphi 0, %s83
    %s86 = sphi 0, %s85
    %s100 = sphi 0, %s86
    %s106 = sphi 0, %s108
    %s109 = sphi 0, %s106
    %s110 = sphi 0, %s109
    %s126 = sphi 0, %s110
  $region4: #{inception_generator_forward.21} parent=0 // loop_header_branch
    %12 = sbr.rel (%p10) target = $region8
  $region5: #{inception_generator_forward.21} parent=0 // loop_body
    %s14 = ssub.s32 %s9, 1
    %s15 = ssub.s32 %s9, 2
    %s22 = sadd.s32 1, %s17
    %p23 = scmp.ge.s32.totalorder %s22, 1
    %s24 = scalar_select %p23, 0, %s22
    %s25 = sadd.s32 1, %s16
    %s26 = scalar_select %p23, %s25, %s16
    %p27 = scmp.ge.s32.totalorder %s26, 2
    %s28 = scalar_select %p27, 0, %s26
    %s29 = ssub.s32 %s16, %s28
    %s30 = ssub.s32 %s17, %s24
    %s31 = sor.u32 %s29, %s30
    %p32 = scmp.eq.s32.totalorder %s31, 0
    %s34 = sadd.s32 %s33, 1
    %s35 = scalar_select %p32, %s33, %s34
    %p38 = pneg %p32
    %p39 = scmp.eq.s32.totalorder %s9, 1
    %p40 = por %p38, %p39
    %p41 = scmp.ne.s32.totalorder %s33, %s36
    %p42 = scmp.eq.s32.totalorder %s9, 0
    %p43 = por %p41, %p42
    %p44 = scmp.ne.s32.totalorder %s33, %s36
    %p45 = scmp.eq.s32.totalorder %s14, 1
    %p46 = por %p44, %p45
    %p47 = scmp.ne.s32.totalorder %s36, %s37
    %p48 = scmp.eq.s32.totalorder %s14, 0
    %p49 = por %p47, %p48
    %p50 = scmp.ne.s32.totalorder %s36, %s37
    %p51 = scmp.eq.s32.totalorder %s15, 1
    %p52 = por %p50, %p51
    %p54 = scmp.ne.s32.totalorder %s37, %s53
    %p55 = scmp.eq.s32.totalorder %s15, 0
    %p56 = por %p54, %p55
    %s57 = ssub.s32 %s17, %s24
    %p58 = scmp.eq.s32.totalorder %s57, 0
    %s60 = sadd.s32 %s59, 1
    %s61 = scalar_select %p58, %s59, %s60
    %p64 = pneg %p58
    %p65 = scmp.eq.s32.totalorder %s9, 1
    %p66 = por %p64, %p65
    %p67 = scmp.ne.s32.totalorder %s59, %s62
    %p68 = scmp.eq.s32.totalorder %s9, 0
    %p69 = por %p67, %p68
    %p70 = scmp.ne.s32.totalorder %s59, %s62
    %p71 = scmp.eq.s32.totalorder %s14, 1
    %p72 = por %p70, %p71
    %p73 = scmp.ne.s32.totalorder %s62, %s63
    %p74 = scmp.eq.s32.totalorder %s14, 0
    %p75 = por %p73, %p74
    %p76 = scmp.ne.s32.totalorder %s62, %s63
    %p77 = scmp.eq.s32.totalorder %s15, 1
    %p78 = por %p76, %p77
    %p80 = scmp.ne.s32.totalorder %s63, %s79
    %p81 = scmp.eq.s32.totalorder %s15, 0
    %p82 = por %p80, %p81
    %s84 = sadd.s32 %s83, 1
    %p87 = scmp.eq.s32.totalorder %s9, 1
    %p88 = scmp.ne.s32.totalorder %s83, %s85
    %p89 = scmp.eq.s32.totalorder %s9, 0
    %p90 = por %p88, %p89
    %p91 = scmp.ne.s32.totalorder %s83, %s85
    %p92 = scmp.eq.s32.totalorder %s14, 1
    %p93 = por %p91, %p92
    %p94 = scmp.ne.s32.totalorder %s85, %s86
    %p95 = scmp.eq.s32.totalorder %s14, 0
    %p96 = por %p94, %p95
    %p97 = scmp.ne.s32.totalorder %s85, %s86
    %p98 = scmp.eq.s32.totalorder %s15, 1
    %p99 = por %p97, %p98
    %p101 = scmp.ne.s32.totalorder %s86, %s100
    %p102 = scmp.eq.s32.totalorder %s15, 0
    %p103 = por %p101, %p102
    %s104 = ssub.s32 %s16, %s28
    %p105 = scmp.eq.s32.totalorder %s104, 0
    %s107 = sadd.s32 %s106, 1
    %s108 = scalar_select %p105, %s106, %s107
    %p111 = pneg %p105
    %p112 = scmp.eq.s32.totalorder %s9, 1
    %p113 = por %p111, %p112
    %p114 = scmp.ne.s32.totalorder %s106, %s109
    %p115 = scmp.eq.s32.totalorder %s9, 0
    %p116 = por %p114, %p115
    %p117 = scmp.ne.s32.totalorder %s106, %s109
    %p118 = scmp.eq.s32.totalorder %s14, 1
    %p119 = por %p117, %p118
    %p120 = scmp.ne.s32.totalorder %s109, %s110
    %p121 = scmp.eq.s32.totalorder %s14, 0
    %p122 = por %p120, %p121
    %p123 = scmp.ne.s32.totalorder %s109, %s110
    %p124 = scmp.eq.s32.totalorder %s15, 1
    %p125 = por %p123, %p124
    %p127 = scmp.ne.s32.totalorder %s110, %s126
    %p128 = scmp.eq.s32.totalorder %s15, 0
    %p129 = por %p127, %p128
    %p130 = scmp.le.s32.totalorder 1, %s9
    %p131 = scmp.lt.s32.totalorder %s9, 3
    %p132 = pnand %p130, %p131
    %p133 = pneg %p132
    // Predicated region
    $region9: #{inception_generator_forward.21} parent=5 // pred_check
      _
    $region10: #{inception_generator_forward.21} parent=5 // pred_check_branch
      %135 = sbr.rel (%p132) target = $region12
    $region11: #{inception_generator_forward.21} parent=5 // pred_region
      %s136 = ssub.s32 %s9, 1
      // Predicated region
      $region13: #{inception_generator_forward.21} parent=11 // pred_check
        %p137 = pneg %p75
      $region14: #{inception_generator_forward.21} parent=11 // pred_check_branch
        %139 = sbr.rel (%p137) target = $region16
      $region15: #{inception_generator_forward.21} parent=11 // pred_region
        %s140 = smul.u32 68, %s19
        %p141 = scmp.lt.s32.totalorder %s140, 67
        %s142 = scalar_select %p141, %s140, 67
        %s143 = smul.addr %s142, 4
        %s144 = scalar_lea.vmem %s1, %s143
        %s145 = smul.u32 68, %s19
      $region16: #{inception_generator_forward.21} parent=11 // pred_fallthru
        _
      // Predicated region
      $region17: #{inception_generator_forward.21} parent=11 // pred_check
        %p146 = pneg %p96
      $region18: #{inception_generator_forward.21} parent=11 // pred_check_branch
        %148 = sbr.rel (%p146) target = $region20
      $region19: #{inception_generator_forward.21} parent=11 // pred_region
        _
      $region20: #{inception_generator_forward.21} parent=11 // pred_fallthru
        _
    $region12: #{inception_generator_forward.21} parent=5 // pred_fallthru
      _
    %p149 = scmp.lt.s32.totalorder %s9, 2
    // Predicated region
    $region21: #{inception_generator_forward.21} parent=5 // pred_check
      %p150 = pneg %p149
    $region22: #{inception_generator_forward.21} parent=5 // pred_check_branch
      %152 = sbr.rel (%p150) target = $region24
    $region23: #{inception_generator_forward.21} parent=5 // pred_region
      // Predicated region
      $region25: #{inception_generator_forward.21} parent=23 // pred_check
        %p153 = pneg %p43
      $region26: #{inception_generator_forward.21} parent=23 // pred_check_branch
        %155 = sbr.rel (%p153) target = $region28
      $region27: #{inception_generator_forward.21} parent=23 // pred_region
        %s156 = smul.u32 5, %s17
        %p157 = scmp.lt.s32.totalorder %s16, 1
        %s158 = scalar_select %p157, %s16, 1
        %p159 = scmp.lt.s32.totalorder %s156, 4
        %s160 = scalar_select %p159, %s156, 4
        %s161 = smul.addr %s158, 10
        %s162 = sadd.s32 %s160, %s161
        %s163 = smul.addr %s162, 4
        %s164 = scalar_lea.vmem %s0, %s163
        %s165 = smul.u32 5, %s17
      $region28: #{inception_generator_forward.21} parent=23 // pred_fallthru
        _
    $region24: #{inception_generator_forward.21} parent=5 // pred_fallthru
      _
    %p166 = scmp.le.s32.totalorder 1, %s9
    %p167 = scmp.lt.s32.totalorder %s9, 3
    %p168 = pnand %p166, %p167
    %p169 = pneg %p168
    // Predicated region
    $region29: #{inception_generator_forward.21} parent=5 // pred_check
      _
    $region30: #{inception_generator_forward.21} parent=5 // pred_check_branch
      %171 = sbr.rel (%p168) target = $region32
    $region31: #{inception_generator_forward.21} parent=5 // pred_region
      %s172 = ssub.s32 %s9, 1
      %s173 = smul.u32 5, %s19
      %p174 = scmp.lt.s32.totalorder %s18, 1
      %s175 = scalar_select %p174, %s18, 1
      %p176 = scmp.lt.s32.totalorder %s173, 4
      %s177 = scalar_select %p176, %s173, 4
      %s178 = smul.addr %s175, 10
      %s179 = sadd.s32 %s177, %s178
      %s180 = smul.addr %s179, 4
      %s181 = scalar_lea.vmem %s0, %s180
      %p182 = pneg %p49
      %p183 = pneg %p46
      %s184 = smul.u32 68, %s19
      %p185 = scmp.lt.s32.totalorder %s184, 67
      %s186 = scalar_select %p185, %s184, 67
      %s187 = smul.addr %s186, 4
      %s188 = scalar_lea.vmem %s1, %s187
      %p189 = pneg %p75
      %p190 = pneg %p72
      %p191 = pneg %p96
      %p192 = pneg %p93
      %p193 = pneg %p122
      %p194 = pneg %p119
      %p195 = scmp.lt.s32.totalorder %s18, 1
      %s196 = scalar_select %p195, %s18, 1
      %s197 = smul.addr %s196, 2
      %s198 = smul.addr %s197, 4
      %s199 = scalar_lea.vmem %s3, %s198
      %s200 = smul.u32 5, %s19
      %p201 = scmp.lt.s32.totalorder %s18, 1
      %s202 = scalar_select %p201, %s18, 1
      %p203 = scmp.lt.s32.totalorder %s200, 4
      %s204 = scalar_select %p203, %s200, 4
      %s205 = smul.addr %s202, 10
      %s206 = sadd.s32 %s204, %s205
      %s207 = smul.addr %s206, 4
      %s208 = scalar_lea.vmem %s0, %s207
      %s209 = smul.u32 5, %s19
      %s210 = smul.u32 68, %s19
      %p211 = scmp.lt.s32.totalorder %s210, 67
      %s212 = scalar_select %p211, %s210, 67
      %s213 = smul.addr %s212, 4
      %s214 = scalar_lea.vmem %s1, %s213
      %s215 = smul.u32 68, %s19
      %p216 = scmp.lt.s32.totalorder %s18, 1
      %s217 = scalar_select %p216, %s18, 1
      %s218 = smul.addr %s217, 2
      %s219 = smul.addr %s218, 4
      %s220 = scalar_lea.vmem %s3, %s219
      %p222 = scmp.eq.s32.totalorder %s19, 0
      // Predicated region
      $region33: #{inception_generator_forward.21} parent=31 // pred_check
        %p223 = pneg %p222
      $region34: #{inception_generator_forward.21} parent=31 // pred_check_branch
        %225 = sbr.rel (%p223) target = $region36
      $region35: #{inception_generator_forward.21} parent=31 // pred_region
        %226 = vst [vmem:[#allocation2] sm:$0xff] 0.0
        %227 = vst [vmem:[#allocation2 + $0x8] sm:$0xff] 0.0
      $region36: #{inception_generator_forward.21} parent=31 // pred_fallthru
        _
      %v228 = vld [vmem:[#allocation2] sm:$0xff]
      %v229 = vld [vmem:[#allocation2 + $0x8] sm:$0xff]
      %v230 = vld [vmem:[%s208] sm:$0xff]
      %v231 = vld [vmem:[%s208 + $0x8] sm:$0xff]
      %v232 = vld [vmem:[%s208 + $0x10] sm:$0xf]
      %v233 = vld [vmem:[%s208 + $0x14] sm:$0xff]
      %v234 = vld [vmem:[%s208 + $0x1c] sm:$0xff]
      %v235 = vld [vmem:[%s208 + $0x24] sm:$0xf]
      %v236 = vld [vmem:[%s214] sm:$0xf]
      %v237 = vld [vmem:[%s214 + $0x4] sm:$0xf]
      %v238 = vld [vmem:[%s214 + $0x8] sm:$0xf]
      %v239 = vld [vmem:[%s214 + $0xc] sm:$0xf]
      %v240 = vld [vmem:[%s214 + $0x10] sm:$0xf]
      %v241 = vld [vmem:[%s214 + $0x14] sm:$0xf]
      %v242 = vld [vmem:[%s214 + $0x18] sm:$0xf]
      %v243 = vld [vmem:[%s214 + $0x1c] sm:$0xf]
      %v244 = vld [vmem:[%s214 + $0x20] sm:$0xf]
      %v245 = vld [vmem:[%s214 + $0x24] sm:$0xf]
      %v246 = vld [vmem:[%s214 + $0x28] sm:$0xf]
      %v247 = vld [vmem:[%s214 + $0x2c] sm:$0xf]
      %v248 = vld [vmem:[%s214 + $0x30] sm:$0xf]
      %v249 = vld [vmem:[%s214 + $0x34] sm:$0xf]
      %v250 = vld [vmem:[%s214 + $0x38] sm:$0xf]
      %v251 = vld [vmem:[%s214 + $0x3c] sm:$0xf]
      %v252 = vld [vmem:[%s214 + $0x40] sm:$0xf]
      %v253 = vld [vmem:[%s214 + $0x44] sm:$0xf]
      %v254 = vld [vmem:[%s214 + $0x48] sm:$0xf]
      %v255 = vld [vmem:[%s214 + $0x4c] sm:$0xf]
      %v256 = vld [vmem:[%s214 + $0x50] sm:$0xf]
      %v257 = vld [vmem:[%s214 + $0x54] sm:$0xf]
      %v258 = vld [vmem:[%s214 + $0x58] sm:$0xf]
      %v259 = vld [vmem:[%s214 + $0x5c] sm:$0xf]
      %v260 = vld [vmem:[%s214 + $0x60] sm:$0xf]
      %v261 = vld [vmem:[%s214 + $0x64] sm:$0xf]
      %v262 = vld [vmem:[%s214 + $0x68] sm:$0xf]
      %v263 = vld [vmem:[%s214 + $0x6c] sm:$0xf]
      %v264 = vld [vmem:[%s214 + $0x70] sm:$0xf]
      %v265 = vld [vmem:[%s214 + $0x74] sm:$0xf]
      %v266 = vld [vmem:[%s214 + $0x78] sm:$0xf]
      %v267 = vld [vmem:[%s214 + $0x7c] sm:$0xf]
      %v268 = vld [vmem:[%s214 + $0x80] sm:$0xf]
      %v269 = vld [vmem:[%s214 + $0x84] sm:$0xf]
      %v270 = vld [vmem:[%s214 + $0x88] sm:$0xf]
      %v271 = vld [vmem:[%s214 + $0x8c] sm:$0xf]
      %v272 = vld [vmem:[%s214 + $0x90] sm:$0xf]
      %v273 = vld [vmem:[%s214 + $0x94] sm:$0xf]
      %v274 = vld [vmem:[%s214 + $0x98] sm:$0xf]
      %v275 = vld [vmem:[%s214 + $0x9c] sm:$0xf]
      %v276 = vld [vmem:[%s214 + $0xa0] sm:$0xf]
      %v277 = vld [vmem:[%s214 + $0xa4] sm:$0xf]
      %v278 = vld [vmem:[%s214 + $0xa8] sm:$0xf]
      %v279 = vld [vmem:[%s214 + $0xac] sm:$0xf]
      %v280 = vld [vmem:[%s214 + $0xb0] sm:$0xf]
      %v281 = vld [vmem:[%s214 + $0xb4] sm:$0xf]
      %v282 = vld [vmem:[%s214 + $0xb8] sm:$0xf]
      %v283 = vld [vmem:[%s214 + $0xbc] sm:$0xf]
      %v284 = vld [vmem:[%s214 + $0xc0] sm:$0xf]
      %v285 = vld [vmem:[%s214 + $0xc4] sm:$0xf]
      %v286 = vld [vmem:[%s214 + $0xc8] sm:$0xf]
      %v287 = vld [vmem:[%s214 + $0xcc] sm:$0xf]
      %v288 = vld [vmem:[%s214 + $0xd0] sm:$0xf]
      %v289 = vld [vmem:[%s214 + $0xd4] sm:$0xf]
      %v290 = vld [vmem:[%s214 + $0xd8] sm:$0xf]
      %v291 = vld [vmem:[%s214 + $0xdc] sm:$0xf]
      %v292 = vld [vmem:[%s214 + $0xe0] sm:$0xf]
      %v293 = vld [vmem:[%s214 + $0xe4] sm:$0xf]
      %v294 = vld [vmem:[%s214 + $0xe8] sm:$0xf]
      %v295 = vld [vmem:[%s214 + $0xec] sm:$0xf]
      %v296 = vld [vmem:[%s214 + $0xf0] sm:$0xf]
      %v297 = vld [vmem:[%s214 + $0xf4] sm:$0xf]
      %v298 = vld [vmem:[%s214 + $0xf8] sm:$0xf]
      %v299 = vld [vmem:[%s214 + $0xfc] sm:$0xf]
      %v300 = vld [vmem:[%s214 + $0x100] sm:$0xf]
      %v301 = vld [vmem:[%s214 + $0x104] sm:$0xf]
      %v302 = vld [vmem:[%s214 + $0x108] sm:$0xf]
      %v303 = vld [vmem:[%s214 + $0x10c] sm:$0xf]
      %v310 = vunpack.c.l.b16 %v230
      %v311 = vunpack.c.h.b16 %v230
      %v312 = vunpack.c.l.b16 %v231
      %v313 = vunpack.c.h.b16 %v231
      %v314 = vunpack.c.l.b16 %v232
      %v315 = vunpack.c.l.b16 %v233
      %v316 = vunpack.c.h.b16 %v233
      %v317 = vunpack.c.l.b16 %v234
      %v318 = vunpack.c.h.b16 %v234
      %v319 = vunpack.c.l.b16 %v235
      %v320 = vpack.c.b16 %v315, %v310
      %v321 = vpack.c.b16 %v316, %v311
      %v322 = vpack.c.b16 %v317, %v312
      %v323 = vpack.c.b16 %v318, %v313
      %v324 = vpack.c.b16 %v319, %v314
      %v397 = vunpack.c.l.b16 %v236
      %v398 = vunpack.c.l.b16 %v237
      %v399 = vunpack.c.l.b16 %v238
      %v400 = vunpack.c.l.b16 %v239
      %v401 = vunpack.c.l.b16 %v240
      %v402 = vunpack.c.l.b16 %v241
      %v403 = vunpack.c.l.b16 %v242
      %v404 = vunpack.c.l.b16 %v243
      %v405 = vunpack.c.l.b16 %v244
      %v406 = vunpack.c.l.b16 %v245
      %v407 = vunpack.c.l.b16 %v246
      %v408 = vunpack.c.l.b16 %v247
      %v409 = vunpack.c.l.b16 %v248
      %v410 = vunpack.c.l.b16 %v249
      %v411 = vunpack.c.l.b16 %v250
      %v412 = vunpack.c.l.b16 %v251
      %v413 = vunpack.c.l.b16 %v252
      %v414 = vunpack.c.l.b16 %v253
      %v415 = vunpack.c.l.b16 %v254
      %v416 = vunpack.c.l.b16 %v255
      %v417 = vunpack.c.l.b16 %v256
      %v418 = vunpack.c.l.b16 %v257
      %v419 = vunpack.c.l.b16 %v258
      %v420 = vunpack.c.l.b16 %v259
      %v421 = vunpack.c.l.b16 %v260
      %v422 = vunpack.c.l.b16 %v261
      %v423 = vunpack.c.l.b16 %v262
      %v424 = vunpack.c.l.b16 %v263
      %v425 = vunpack.c.l.b16 %v264
      %v426 = vunpack.c.l.b16 %v265
      %v427 = vunpack.c.l.b16 %v266
      %v428 = vunpack.c.l.b16 %v267
      %v429 = vunpack.c.l.b16 %v268
      %v430 = vunpack.c.l.b16 %v269
      %v431 = vunpack.c.l.b16 %v270
      %v432 = vunpack.c.l.b16 %v271
      %v433 = vunpack.c.l.b16 %v272
      %v434 = vunpack.c.l.b16 %v273
      %v435 = vunpack.c.l.b16 %v274
      %v436 = vunpack.c.l.b16 %v275
      %v437 = vunpack.c.l.b16 %v276
      %v438 = vunpack.c.l.b16 %v277
      %v439 = vunpack.c.l.b16 %v278
      %v440 = vunpack.c.l.b16 %v279
      %v441 = vunpack.c.l.b16 %v280
      %v442 = vunpack.c.l.b16 %v281
      %v443 = vunpack.c.l.b16 %v282
      %v444 = vunpack.c.l.b16 %v283
      %v445 = vunpack.c.l.b16 %v284
      %v446 = vunpack.c.l.b16 %v285
      %v447 = vunpack.c.l.b16 %v286
      %v448 = vunpack.c.l.b16 %v287
      %v449 = vunpack.c.l.b16 %v288
      %v450 = vunpack.c.l.b16 %v289
      %v451 = vunpack.c.l.b16 %v290
      %v452 = vunpack.c.l.b16 %v291
      %v453 = vunpack.c.l.b16 %v292
      %v454 = vunpack.c.l.b16 %v293
      %v455 = vunpack.c.l.b16 %v294
      %v456 = vunpack.c.l.b16 %v295
      %v457 = vunpack.c.l.b16 %v296
      %v458 = vunpack.c.l.b16 %v297
      %v459 = vunpack.c.l.b16 %v298
      %v460 = vunpack.c.l.b16 %v299
      %v461 = vunpack.c.l.b16 %v300
      %v462 = vunpack.c.l.b16 %v301
      %v463 = vunpack.c.l.b16 %v302
      %v464 = vunpack.c.l.b16 %v303
      %v465 = vpack.c.b16 %v398, %v397
      %v466 = vpack.c.b16 %v400, %v399
      %v467 = vpack.c.b16 %v402, %v401
      %v468 = vpack.c.b16 %v404, %v403
      %v469 = vpack.c.b16 %v406, %v405
      %v470 = vpack.c.b16 %v408, %v407
      %v471 = vpack.c.b16 %v410, %v409
      %v472 = vpack.c.b16 %v412, %v411
      %v473 = vpack.c.b16 %v414, %v413
      %v474 = vpack.c.b16 %v416, %v415
      %v475 = vpack.c.b16 %v418, %v417
      %v476 = vpack.c.b16 %v420, %v419
      %v477 = vpack.c.b16 %v422, %v421
      %v478 = vpack.c.b16 %v424, %v423
      %v479 = vpack.c.b16 %v426, %v425
      %v480 = vpack.c.b16 %v428, %v427
      %v481 = vpack.c.b16 %v430, %v429
      %v482 = vpack.c.b16 %v432, %v431
      %v483 = vpack.c.b16 %v434, %v433
      %v484 = vpack.c.b16 %v436, %v435
      %v485 = vpack.c.b16 %v438, %v437
      %v486 = vpack.c.b16 %v440, %v439
      %v487 = vpack.c.b16 %v442, %v441
      %v488 = vpack.c.b16 %v444, %v443
      %v489 = vpack.c.b16 %v446, %v445
      %v490 = vpack.c.b16 %v448, %v447
      %v491 = vpack.c.b16 %v450, %v449
      %v492 = vpack.c.b16 %v452, %v451
      %v493 = vpack.c.b16 %v454, %v453
      %v494 = vpack.c.b16 %v456, %v455
      %v495 = vpack.c.b16 %v458, %v457
      %v496 = vpack.c.b16 %v460, %v459
      %v497 = vpack.c.b16 %v462, %v461
      %v498 = vpack.c.b16 %v464, %v463
      %vm533 = vcmask 261120
      %v535 = vsel %vm533, %v324, 0
      %537 = vmatpush.bf16.msra.mxu0 %v472
      %538 = vmatpush.bf16.msra.mxu0 %v471
      %539 = vmatpush.bf16.msra.mxu0 %v470
      %540 = vmatpush.bf16.msra.mxu0 %v469
      %541 = vmatpush.bf16.msra.mxu0 %v468
      %542 = vmatpush.bf16.msra.mxu0 %v467
      %543 = vmatpush.bf16.msra.mxu0 %v466
      %544 = vmatpush.bf16.msra.mxu0 %v465
      %545 = vmatmul.bf16.gmra.mxu0 %v320
      %v546 = vpop.f32.mrf.mxu0
      %v547 = vadd.f32 0.0, %v546
      %v548 = vpop.f32.mrf.mxu0
      %v549 = vadd.f32 0.0, %v548
      %550 = vdwg.mxu0
      %551 = vmatpush.bf16.msra.mxu0 %v480
      %552 = vmatpush.bf16.msra.mxu0 %v479
      %553 = vmatpush.bf16.msra.mxu0 %v478
      %554 = vmatpush.bf16.msra.mxu0 %v477
      %555 = vmatpush.bf16.msra.mxu0 %v476
      %556 = vmatpush.bf16.msra.mxu0 %v475
      %557 = vmatpush.bf16.msra.mxu0 %v474
      %558 = vmatpush.bf16.msra.mxu0 %v473
      %559 = vmatmul.bf16.gmra.mxu0 %v321
      %v560 = vpop.f32.mrf.mxu0
      %v561 = vadd.f32 %v547, %v560
      %v562 = vpop.f32.mrf.mxu0
      %v563 = vadd.f32 %v549, %v562
      %564 = vdwg.mxu0
      %565 = vmatpush.bf16.msra.mxu0 %v488
      %566 = vmatpush.bf16.msra.mxu0 %v487
      %567 = vmatpush.bf16.msra.mxu0 %v486
      %568 = vmatpush.bf16.msra.mxu0 %v485
      %569 = vmatpush.bf16.msra.mxu0 %v484
      %570 = vmatpush.bf16.msra.mxu0 %v483
      %571 = vmatpush.bf16.msra.mxu0 %v482
      %572 = vmatpush.bf16.msra.mxu0 %v481
      %573 = vmatmul.bf16.gmra.mxu0 %v322
      %v574 = vpop.f32.mrf.mxu0
      %v575 = vadd.f32 %v561, %v574
      %v576 = vpop.f32.mrf.mxu0
      %v577 = vadd.f32 %v563, %v576
      %578 = vdwg.mxu0
      %579 = vmatpush.bf16.msra.mxu0 %v496
      %580 = vmatpush.bf16.msra.mxu0 %v495
      %581 = vmatpush.bf16.msra.mxu0 %v494
      %582 = vmatpush.bf16.msra.mxu0 %v493
      %583 = vmatpush.bf16.msra.mxu0 %v492
      %584 = vmatpush.bf16.msra.mxu0 %v491
      %585 = vmatpush.bf16.msra.mxu0 %v490
      %586 = vmatpush.bf16.msra.mxu0 %v489
      %587 = vmatmul.bf16.gmra.mxu0 %v323
      %v588 = vpop.f32.mrf.mxu0
      %v589 = vadd.f32 %v575, %v588
      %v590 = vpop.f32.mrf.mxu0
      %v591 = vadd.f32 %v577, %v590
      %592 = vdwg.mxu0
      %593 = vmatpush.bf16.msra.mxu0 0
      %594 = vmatpush.bf16.msra.mxu0 0
      %595 = vmatpush.bf16.msra.mxu0 0
      %596 = vmatpush.bf16.msra.mxu0 0
      %597 = vmatpush.bf16.msra.mxu0 0
      %598 = vmatpush.bf16.msra.mxu0 0
      %599 = vmatpush.bf16.msra.mxu0 %v498
      %600 = vmatpush.bf16.msra.mxu0 %v497
      %601 = vmatmul.bf16.gmra.mxu0 %v535
      %v602 = vpop.f32.mrf.mxu0
      %v603 = vadd.f32 %v589, %v602
      %v604 = vpop.f32.mrf.mxu0
      %v605 = vadd.f32 %v591, %v604
      %606 = vdwg.mxu0
      %v607 = vadd.f32 %v228, %v603
      %v608 = vadd.f32 %v229, %v605
      %609 = vst [vmem:[#allocation2] sm:$0xff] %v607
      %610 = vst [vmem:[#allocation2 + $0x8] sm:$0xff] %v608
      // Predicated region
      $region37: #{inception_generator_forward.21} parent=31 // pred_check
        %p611 = pneg %p222
      $region38: #{inception_generator_forward.21} parent=31 // pred_check_branch
        %613 = sbr.rel (%p611) target = $region40
      $region39: #{inception_generator_forward.21} parent=31 // pred_region
        %v614 = vld [vmem:[#allocation2] sm:$0xff]
        %v615 = vld [vmem:[#allocation2 + $0x8] sm:$0xff]
        %v616 = vld [vmem:[%s2] sm:$0x1]
        %v618 = vperm.slane %v616, 0
        %v620 = vadd.f32 %v614, %v618
        %v621 = vadd.f32 %v615, %v618
        %v622 = vadd.f32 %v620, %v621
        %v623 = vrot.slane %v622, 4
        %v624 = vadd.f32 %v622, %v623
        %v625 = vrot.slane %v624, 2
        %v626 = vadd.f32 %v624, %v625
        %v627 = vrot.slane %v626, 1
        %v628 = vadd.f32 %v626, %v627
        %v629 = vmul.f32 %v628, 0.0625
        %v630 = vmul.f32 %v620, %v620
        %v631 = vmul.f32 %v621, %v621
        %v632 = vadd.f32 %v630, %v631
        %v633 = vrot.slane %v632, 4
        %v634 = vadd.f32 %v632, %v633
        %v635 = vrot.slane %v634, 2
        %v636 = vadd.f32 %v634, %v635
        %v637 = vrot.slane %v636, 1
        %v638 = vadd.f32 %v636, %v637
        %v639 = vmul.f32 %v638, 0.0625
        %v640 = vmul.f32 %v629, %v629
        %v641 = vsub.f32 %v639, %v640
        %v642 = vsub.f32 %v620, %v629
        %v643 = vsub.f32 %v621, %v629
        %v644 = vmax.f32 %v641, 0.0
        %v645 = vadd.f32 %v644, 1e-05
        %v646 = vrsqrt.pop %v645
        %v647 = vmul.f32 %v646, %v645
        %v648 = vmul.f32 %v647, %v646
        %v649 = vmul.f32 0.5, %v648
        %v650 = vsub.f32 1.5, %v649
        %v651 = vmul.f32 %v646, %v650
        %vm652 = vweird.f32 %v645
        %vm653 = vweird.f32 %v646
        %vm654 = vmor %vm652, %vm653
        %v655 = vsel %vm654, %v646, %v651
        %v656 = vmul.f32 %v642, %v655
        %v657 = vmul.f32 %v643, %v655
        %v658 = vmax.f32 %v656, 0.0
        %v659 = vmax.f32 %v657, 0.0
        %v660 = vpack.c.bf16 %v658, %v658
        %v661 = vpack.c.bf16 %v659, %v659
        %662 = vst [vmem:[%s220] sm:$0xf] %v660
        %663 = vst [vmem:[%s220 + $0x4] sm:$0xf] %v661
      $region40: #{inception_generator_forward.21} parent=31 // pred_fallthru
        _
      %p664 = scmp.lt.s32.totalorder %s18, 1
      %s665 = scalar_select %p664, %s18, 1
      %s666 = smul.addr %s665, 2
      %s667 = smul.addr %s666, 4
      %s668 = scalar_lea.vmem %s3, %s667
      // Predicated region
      $region41: #{inception_generator_forward.21} parent=31 // pred_check
        %p669 = pneg %p119
      $region42: #{inception_generator_forward.21} parent=31 // pred_check_branch
        %671 = sbr.rel (%p669) target = $region44
      $region43: #{inception_generator_forward.21} parent=31 // pred_region
        _
      $region44: #{inception_generator_forward.21} parent=31 // pred_fallthru
        _
    $region32: #{inception_generator_forward.21} parent=5 // pred_fallthru
      _
    %p672 = scmp.le.s32.totalorder 2, %s9
    // Predicated region
    $region45: #{inception_generator_forward.21} parent=5 // pred_check
      %p673 = pneg %p672
    $region46: #{inception_generator_forward.21} parent=5 // pred_check_branch
      %675 = sbr.rel (%p673) target = $region48
    $region47: #{inception_generator_forward.21} parent=5 // pred_region
      %s676 = ssub.s32 %s9, 2
      // Predicated region
      $region49: #{inception_generator_forward.21} parent=47 // pred_check
        %p677 = pneg %p125
      $region50: #{inception_generator_forward.21} parent=47 // pred_check_branch
        %679 = sbr.rel (%p677) target = $region52
      $region51: #{inception_generator_forward.21} parent=47 // pred_region
        %p680 = scmp.lt.s32.totalorder %s20, 1
        %s681 = scalar_select %p680, %s20, 1
        %s682 = smul.addr %s681, 2
        %s683 = smul.addr %s682, 4
        %s684 = scalar_lea.vmem %s3, %s683
      $region52: #{inception_generator_forward.21} parent=47 // pred_fallthru
        _
    $region48: #{inception_generator_forward.21} parent=5 // pred_fallthru
      _
  $region6: #{inception_generator_forward.21} parent=0 // loop_footer
    %s13 = sadd.s32 1, %s9
  $region7: #{inception_generator_forward.21} parent=0 // loop_footer_branch
    %8 = sbr.rel target = $region3
  $region8: #{inception_generator_forward.21} parent=0 // loop_exit
    _

// kernel: inception_generator_forward.22
$region0: #{inception_generator_forward.22}
  #allocation0 [shape = 'u32[]', space=smem, size = 0x4, offset = 0x4, fixed_abs, tag = 'smem constant byte address 0x4 - core index']
  #allocation1 [shape = 'u32[72,128]{1,0:T(1,128)}', space=vmem, size = 0x9000, scoped, tag = 'internal scratch']
  #allocation2 [shape = 'f32[16,128]{1,0:T(8,128)}', space=vmem, size = 0x2000, scoped, tag = 'scratch operand']
  %s0 = inlined_call_operand.vmem [shape: bf16[2,16,576], index: 0, kind: input, shape index: {}]
  %s1 = inlined_call_operand.vmem [shape: bf16[576,128], index: 1, kind: input, shape index: {}]
  %s2 = inlined_call_operand.vmem [shape: f32[1,128], index: 2, kind: input, shape index: {}]
  %s3 = inlined_call_operand.vmem [shape: bf16[2,16,128], index: 3, kind: input, shape index: {}]
  %s4 = inlined_call_operand.vmem [shape: bf16[2,16,128], index: 4, kind: output, shape index: {}]
  %s5 = sld [smem:[#allocation0]]
  $region57: #{inception_generator_forward.22} parent=0
    _
  %s7 = ssub.s32 1, %s5
  %s8 = scalar_select 0, %s7, %s5
  loop: start=0, step=1, limit=4
  $region2: #{inception_generator_forward.22} parent=0 // loop_pre_header
    _
  $region3: #{inception_generator_forward.22} parent=0 // loop_header
    %s10 = sphi 0, %s14
    %p11 = scmp.ge.s32.totalorder %s10, 4
    %s17 = sphi 0, %s29
    %s18 = sphi 0, %s25
    %s19 = sphi 0, %s17
    %s20 = sphi 0, %s18
    %s21 = sphi 0, %s19
    %s22 = sphi 0, %s20
    %s34 = sphi 0, %s36
    %s37 = sphi 0, %s34
    %s38 = sphi 0, %s37
    %s54 = sphi 0, %s38
    %s60 = sphi 0, %s62
    %s63 = sphi 0, %s60
    %s64 = sphi 0, %s63
    %s80 = sphi 0, %s64
    %s84 = sphi 0, %s84
    %s86 = sphi 0, %s84
    %s87 = sphi 0, %s86
    %s101 = sphi 0, %s87
    %s107 = sphi 0, %s109
    %s110 = sphi 0, %s107
    %s111 = sphi 0, %s110
    %s127 = sphi 0, %s111
    %s133 = sphi 0, %s135
    %s136 = sphi 0, %s133
    %s137 = sphi 0, %s136
    %s153 = sphi 0, %s137
  $region4: #{inception_generator_forward.22} parent=0 // loop_header_branch
    %13 = sbr.rel (%p11) target = $region8
  $region5: #{inception_generator_forward.22} parent=0 // loop_body
    %s15 = ssub.s32 %s10, 1
    %s16 = ssub.s32 %s10, 2
    %s23 = sadd.s32 1, %s18
    %p24 = scmp.ge.s32.totalorder %s23, 1
    %s25 = scalar_select %p24, 0, %s23
    %s26 = sadd.s32 1, %s17
    %s27 = scalar_select %p24, %s26, %s17
    %p28 = scmp.ge.s32.totalorder %s27, 2
    %s29 = scalar_select %p28, 0, %s27
    %s30 = ssub.s32 %s17, %s29
    %s31 = ssub.s32 %s18, %s25
    %s32 = sor.u32 %s30, %s31
    %p33 = scmp.eq.s32.totalorder %s32, 0
    %s35 = sadd.s32 %s34, 1
    %s36 = scalar_select %p33, %s34, %s35
    %p39 = pneg %p33
    %p40 = scmp.eq.s32.totalorder %s10, 1
    %p41 = por %p39, %p40
    %p42 = scmp.ne.s32.totalorder %s34, %s37
    %p43 = scmp.eq.s32.totalorder %s10, 0
    %p44 = por %p42, %p43
    %p45 = scmp.ne.s32.totalorder %s34, %s37
    %p46 = scmp.eq.s32.totalorder %s15, 1
    %p47 = por %p45, %p46
    %p48 = scmp.ne.s32.totalorder %s37, %s38
    %p49 = scmp.eq.s32.totalorder %s15, 0
    %p50 = por %p48, %p49
    %p51 = scmp.ne.s32.totalorder %s37, %s38
    %p52 = scmp.eq.s32.totalorder %s16, 1
    %p53 = por %p51, %p52
    %p55 = scmp.ne.s32.totalorder %s38, %s54
    %p56 = scmp.eq.s32.totalorder %s16, 0
    %p57 = por %p55, %p56
    %s58 = ssub.s32 %s18, %s25
    %p59 = scmp.eq.s32.totalorder %s58, 0
    %s61 = sadd.s32 %s60, 1
    %s62 = scalar_select %p59, %s60, %s61
    %p65 = pneg %p59
    %p66 = scmp.eq.s32.totalorder %s10, 1
    %p67 = por %p65, %p66
    %p68 = scmp.ne.s32.totalorder %s60, %s63
    %p69 = scmp.eq.s32.totalorder %s10, 0
    %p70 = por %p68, %p69
    %p71 = scmp.ne.s32.totalorder %s60, %s63
    %p72 = scmp.eq.s32.totalorder %s15, 1
    %p73 = por %p71, %p72
    %p74 = scmp.ne.s32.totalorder %s63, %s64
    %p75 = scmp.eq.s32.totalorder %s15, 0
    %p76 = por %p74, %p75
    %p77 = scmp.ne.s32.totalorder %s63, %s64
    %p78 = scmp.eq.s32.totalorder %s16, 1
    %p79 = por %p77, %p78
    %p81 = scmp.ne.s32.totalorder %s64, %s80
    %p82 = scmp.eq.s32.totalorder %s16, 0
    %p83 = por %p81, %p82
    %s85 = sadd.s32 %s84, 1
    %p88 = scmp.eq.s32.totalorder %s10, 1
    %p89 = scmp.ne.s32.totalorder %s84, %s86
    %p90 = scmp.eq.s32.totalorder %s10, 0
    %p91 = por %p89, %p90
    %p92 = scmp.ne.s32.totalorder %s84, %s86
    %p93 = scmp.eq.s32.totalorder %s15, 1
    %p94 = por %p92, %p93
    %p95 = scmp.ne.s32.totalorder %s86, %s87
    %p96 = scmp.eq.s32.totalorder %s15, 0
    %p97 = por %p95, %p96
    %p98 = scmp.ne.s32.totalorder %s86, %s87
    %p99 = scmp.eq.s32.totalorder %s16, 1
    %p100 = por %p98, %p99
    %p102 = scmp.ne.s32.totalorder %s87, %s101
    %p103 = scmp.eq.s32.totalorder %s16, 0
    %p104 = por %p102, %p103
    %s105 = ssub.s32 %s17, %s29
    %p106 = scmp.eq.s32.totalorder %s105, 0
    %s108 = sadd.s32 %s107, 1
    %s109 = scalar_select %p106, %s107, %s108
    %p112 = pneg %p106
    %p113 = scmp.eq.s32.totalorder %s10, 1
    %p114 = por %p112, %p113
    %p115 = scmp.ne.s32.totalorder %s107, %s110
    %p116 = scmp.eq.s32.totalorder %s10, 0
    %p117 = por %p115, %p116
    %p118 = scmp.ne.s32.totalorder %s107, %s110
    %p119 = scmp.eq.s32.totalorder %s15, 1
    %p120 = por %p118, %p119
    %p121 = scmp.ne.s32.totalorder %s110, %s111
    %p122 = scmp.eq.s32.totalorder %s15, 0
    %p123 = por %p121, %p122
    %p124 = scmp.ne.s32.totalorder %s110, %s111
    %p125 = scmp.eq.s32.totalorder %s16, 1
    %p126 = por %p124, %p125
    %p128 = scmp.ne.s32.totalorder %s111, %s127
    %p129 = scmp.eq.s32.totalorder %s16, 0
    %p130 = por %p128, %p129
    %s131 = ssub.s32 %s17, %s29
    %p132 = scmp.eq.s32.totalorder %s131, 0
    %s134 = sadd.s32 %s133, 1
    %s135 = scalar_select %p132, %s133, %s134
    %p138 = pneg %p132
    %p139 = scmp.eq.s32.totalorder %s10, 1
    %p140 = por %p138, %p139
    %p141 = scmp.ne.s32.totalorder %s133, %s136
    %p142 = scmp.eq.s32.totalorder %s10, 0
    %p143 = por %p141, %p142
    %p144 = scmp.ne.s32.totalorder %s133, %s136
    %p145 = scmp.eq.s32.totalorder %s15, 1
    %p146 = por %p144, %p145
    %p147 = scmp.ne.s32.totalorder %s136, %s137
    %p148 = scmp.eq.s32.totalorder %s15, 0
    %p149 = por %p147, %p148
    %p150 = scmp.ne.s32.totalorder %s136, %s137
    %p151 = scmp.eq.s32.totalorder %s16, 1
    %p152 = por %p150, %p151
    %p154 = scmp.ne.s32.totalorder %s137, %s153
    %p155 = scmp.eq.s32.totalorder %s16, 0
    %p156 = por %p154, %p155
    %p157 = scmp.le.s32.totalorder 1, %s10
    %p158 = scmp.lt.s32.totalorder %s10, 3
    %p159 = pnand %p157, %p158
    %p160 = pneg %p159
    // Predicated region
    $region9: #{inception_generator_forward.22} parent=5 // pred_check
      _
    $region10: #{inception_generator_forward.22} parent=5 // pred_check_branch
      %162 = sbr.rel (%p159) target = $region12
    $region11: #{inception_generator_forward.22} parent=5 // pred_region
      %s163 = ssub.s32 %s10, 1
      // Predicated region
      $region13: #{inception_generator_forward.22} parent=11 // pred_check
        %p164 = pneg %p76
      $region14: #{inception_generator_forward.22} parent=11 // pred_check_branch
        %166 = sbr.rel (%p164) target = $region16
      $region15: #{inception_generator_forward.22} parent=11 // pred_region
        %s167 = smul.u32 72, %s20
        %p168 = scmp.lt.s32.totalorder %s167, 71
        %s169 = scalar_select %p168, %s167, 71
        %s170 = smul.addr %s169, 4
        %s171 = scalar_lea.vmem %s1, %s170
        %s172 = smul.u32 72, %s20
      $region16: #{inception_generator_forward.22} parent=11 // pred_fallthru
        _
      // Predicated region
      $region17: #{inception_generator_forward.22} parent=11 // pred_check
        %p173 = pneg %p97
      $region18: #{inception_generator_forward.22} parent=11 // pred_check_branch
        %175 = sbr.rel (%p173) target = $region20
      $region19: #{inception_generator_forward.22} parent=11 // pred_region
        _
      $region20: #{inception_generator_forward.22} parent=11 // pred_fallthru
        _
    $region12: #{inception_generator_forward.22} parent=5 // pred_fallthru
      _
    %p176 = scmp.lt.s32.totalorder %s10, 2
    // Predicated region
    $region21: #{inception_generator_forward.22} parent=5 // pred_check
      %p177 = pneg %p176
    $region22: #{inception_generator_forward.22} parent=5 // pred_check_branch
      %179 = sbr.rel (%p177) target = $region24
    $region23: #{inception_generator_forward.22} parent=5 // pred_region
      // Predicated region
      $region25: #{inception_generator_forward.22} parent=23 // pred_check
        %p180 = pneg %p44
      $region26: #{inception_generator_forward.22} parent=23 // pred_check_branch
        %182 = sbr.rel (%p180) target = $region28
      $region27: #{inception_generator_forward.22} parent=23 // pred_region
        %s183 = smul.u32 5, %s18
        %p184 = scmp.lt.s32.totalorder %s17, 1
        %s185 = scalar_select %p184, %s17, 1
        %p186 = scmp.lt.s32.totalorder %s183, 4
        %s187 = scalar_select %p186, %s183, 4
        %s188 = smul.addr %s185, 10
        %s189 = sadd.s32 %s187, %s188
        %s190 = smul.addr %s189, 4
        %s191 = scalar_lea.vmem %s0, %s190
        %s192 = smul.u32 5, %s18
      $region28: #{inception_generator_forward.22} parent=23 // pred_fallthru
        _
      // Predicated region
      $region29: #{inception_generator_forward.22} parent=23 // pred_check
        %p193 = pneg %p117
      $region30: #{inception_generator_forward.22} parent=23 // pred_check_branch
        %195 = sbr.rel (%p193) target = $region32
      $region31: #{inception_generator_forward.22} parent=23 // pred_region
        %p196 = scmp.lt.s32.totalorder %s17, 1
        %s197 = scalar_select %p196, %s17, 1
        %s198 = smul.addr %s197, 2
        %s199 = smul.addr %s198, 4
        %s200 = scalar_lea.vmem %s3, %s199
      $region32: #{inception_generator_forward.22} parent=23 // pred_fallthru
        _
    $region24: #{inception_generator_forward.22} parent=5 // pred_fallthru
      _
    %p201 = scmp.le.s32.totalorder 1, %s10
    %p202 = scmp.lt.s32.totalorder %s10, 3
    %p203 = pnand %p201, %p202
    %p204 = pneg %p203
    // Predicated region
    $region33: #{inception_generator_forward.22} parent=5 // pred_check
      _
    $region34: #{inception_generator_forward.22} parent=5 // pred_check_branch
      %206 = sbr.rel (%p203) target = $region36
    $region35: #{inception_generator_forward.22} parent=5 // pred_region
      %s207 = ssub.s32 %s10, 1
      %s208 = smul.u32 5, %s20
      %p209 = scmp.lt.s32.totalorder %s19, 1
      %s210 = scalar_select %p209, %s19, 1
      %p211 = scmp.lt.s32.totalorder %s208, 4
      %s212 = scalar_select %p211, %s208, 4
      %s213 = smul.addr %s210, 10
      %s214 = sadd.s32 %s212, %s213
      %s215 = smul.addr %s214, 4
      %s216 = scalar_lea.vmem %s0, %s215
      %p217 = pneg %p50
      %p218 = pneg %p47
      %s219 = smul.u32 72, %s20
      %p220 = scmp.lt.s32.totalorder %s219, 71
      %s221 = scalar_select %p220, %s219, 71
      %s222 = smul.addr %s221, 4
      %s223 = scalar_lea.vmem %s1, %s222
      %p224 = pneg %p76
      %p225 = pneg %p73
      %p226 = pneg %p97
      %p227 = pneg %p94
      %p228 = scmp.lt.s32.totalorder %s19, 1
      %s229 = scalar_select %p228, %s19, 1
      %s230 = smul.addr %s229, 2
      %s231 = smul.addr %s230, 4
      %s232 = scalar_lea.vmem %s3, %s231
      %p233 = pneg %p123
      %p234 = pneg %p120
      %p235 = pneg %p149
      %p236 = pneg %p146
      %p237 = scmp.lt.s32.totalorder %s19, 1
      %s238 = scalar_select %p237, %s19, 1
      %s239 = smul.addr %s238, 2
      %s240 = smul.addr %s239, 4
      %s241 = scalar_lea.vmem %s4, %s240
      %s242 = smul.u32 5, %s20
      %p243 = scmp.lt.s32.totalorder %s19, 1
      %s244 = scalar_select %p243, %s19, 1
      %p245 = scmp.lt.s32.totalorder %s242, 4
      %s246 = scalar_select %p245, %s242, 4
      %s247 = smul.addr %s244, 10
      %s248 = sadd.s32 %s246, %s247
      %s249 = smul.addr %s248, 4
      %s250 = scalar_lea.vmem %s0, %s249
      %s251 = smul.u32 5, %s20
      %s252 = smul.u32 72, %s20
      %p253 = scmp.lt.s32.totalorder %s252, 71
      %s254 = scalar_select %p253, %s252, 71
      %s255 = smul.addr %s254, 4
      %s256 = scalar_lea.vmem %s1, %s255
      %s257 = smul.u32 72, %s20
      %p258 = scmp.lt.s32.totalorder %s19, 1
      %s259 = scalar_select %p258, %s19, 1
      %s260 = smul.addr %s259, 2
      %s261 = smul.addr %s260, 4
      %s262 = scalar_lea.vmem %s3, %s261
      %p263 = scmp.lt.s32.totalorder %s19, 1
      %s264 = scalar_select %p263, %s19, 1
      %s265 = smul.addr %s264, 2
      %s266 = smul.addr %s265, 4
      %s267 = scalar_lea.vmem %s4, %s266
      %p269 = scmp.eq.s32.totalorder %s20, 0
      // Predicated region
      $region37: #{inception_generator_forward.22} parent=35 // pred_check
        %p270 = pneg %p269
      $region38: #{inception_generator_forward.22} parent=35 // pred_check_branch
        %272 = sbr.rel (%p270) target = $region40
      $region39: #{inception_generator_forward.22} parent=35 // pred_region
        %273 = vst [vmem:[#allocation2] sm:$0xff] 0.0
        %274 = vst [vmem:[#allocation2 + $0x8] sm:$0xff] 0.0
      $region40: #{inception_generator_forward.22} parent=35 // pred_fallthru
        _
      %v275 = vld [vmem:[#allocation2] sm:$0xff]
      %v276 = vld [vmem:[#allocation2 + $0x8] sm:$0xff]
      %v277 = vld [vmem:[%s250] sm:$0xff]
      %v278 = vld [vmem:[%s250 + $0x8] sm:$0xff]
      %v279 = vld [vmem:[%s250 + $0x10] sm:$0xf]
      %v280 = vld [vmem:[%s250 + $0x14] sm:$0xff]
      %v281 = vld [vmem:[%s250 + $0x1c] sm:$0xff]
      %v282 = vld [vmem:[%s250 + $0x24] sm:$0xf]
      %v283 = vld [vmem:[%s256] sm:$0xf]
      %v284 = vld [vmem:[%s256 + $0x4] sm:$0xf]
      %v285 = vld [vmem:[%s256 + $0x8] sm:$0xf]
      %v286 = vld [vmem:[%s256 + $0xc] sm:$0xf]
      %v287 = vld [vmem:[%s256 + $0x10] sm:$0xf]
      %v288 = vld [vmem:[%s256 + $0x14] sm:$0xf]
      %v289 = vld [vmem:[%s256 + $0x18] sm:$0xf]
      %v290 = vld [vmem:[%s256 + $0x1c] sm:$0xf]
      %v291 = vld [vmem:[%s256 + $0x20] sm:$0xf]
      %v292 = vld [vmem:[%s256 + $0x24] sm:$0xf]
      %v293 = vld [vmem:[%s256 + $0x28] sm:$0xf]
      %v294 = vld [vmem:[%s256 + $0x2c] sm:$0xf]
      %v295 = vld [vmem:[%s256 + $0x30] sm:$0xf]
      %v296 = vld [vmem:[%s256 + $0x34] sm:$0xf]
      %v297 = vld [vmem:[%s256 + $0x38] sm:$0xf]
      %v298 = vld [vmem:[%s256 + $0x3c] sm:$0xf]
      %v299 = vld [vmem:[%s256 + $0x40] sm:$0xf]
      %v300 = vld [vmem:[%s256 + $0x44] sm:$0xf]
      %v301 = vld [vmem:[%s256 + $0x48] sm:$0xf]
      %v302 = vld [vmem:[%s256 + $0x4c] sm:$0xf]
      %v303 = vld [vmem:[%s256 + $0x50] sm:$0xf]
      %v304 = vld [vmem:[%s256 + $0x54] sm:$0xf]
      %v305 = vld [vmem:[%s256 + $0x58] sm:$0xf]
      %v306 = vld [vmem:[%s256 + $0x5c] sm:$0xf]
      %v307 = vld [vmem:[%s256 + $0x60] sm:$0xf]
      %v308 = vld [vmem:[%s256 + $0x64] sm:$0xf]
      %v309 = vld [vmem:[%s256 + $0x68] sm:$0xf]
      %v310 = vld [vmem:[%s256 + $0x6c] sm:$0xf]
      %v311 = vld [vmem:[%s256 + $0x70] sm:$0xf]
      %v312 = vld [vmem:[%s256 + $0x74] sm:$0xf]
      %v313 = vld [vmem:[%s256 + $0x78] sm:$0xf]
      %v314 = vld [vmem:[%s256 + $0x7c] sm:$0xf]
      %v315 = vld [vmem:[%s256 + $0x80] sm:$0xf]
      %v316 = vld [vmem:[%s256 + $0x84] sm:$0xf]
      %v317 = vld [vmem:[%s256 + $0x88] sm:$0xf]
      %v318 = vld [vmem:[%s256 + $0x8c] sm:$0xf]
      %v319 = vld [vmem:[%s256 + $0x90] sm:$0xf]
      %v320 = vld [vmem:[%s256 + $0x94] sm:$0xf]
      %v321 = vld [vmem:[%s256 + $0x98] sm:$0xf]
      %v322 = vld [vmem:[%s256 + $0x9c] sm:$0xf]
      %v323 = vld [vmem:[%s256 + $0xa0] sm:$0xf]
      %v324 = vld [vmem:[%s256 + $0xa4] sm:$0xf]
      %v325 = vld [vmem:[%s256 + $0xa8] sm:$0xf]
      %v326 = vld [vmem:[%s256 + $0xac] sm:$0xf]
      %v327 = vld [vmem:[%s256 + $0xb0] sm:$0xf]
      %v328 = vld [vmem:[%s256 + $0xb4] sm:$0xf]
      %v329 = vld [vmem:[%s256 + $0xb8] sm:$0xf]
      %v330 = vld [vmem:[%s256 + $0xbc] sm:$0xf]
      %v331 = vld [vmem:[%s256 + $0xc0] sm:$0xf]
      %v332 = vld [vmem:[%s256 + $0xc4] sm:$0xf]
      %v333 = vld [vmem:[%s256 + $0xc8] sm:$0xf]
      %v334 = vld [vmem:[%s256 + $0xcc] sm:$0xf]
      %v335 = vld [vmem:[%s256 + $0xd0] sm:$0xf]
      %v336 = vld [vmem:[%s256 + $0xd4] sm:$0xf]
      %v337 = vld [vmem:[%s256 + $0xd8] sm:$0xf]
      %v338 = vld [vmem:[%s256 + $0xdc] sm:$0xf]
      %v339 = vld [vmem:[%s256 + $0xe0] sm:$0xf]
      %v340 = vld [vmem:[%s256 + $0xe4] sm:$0xf]
      %v341 = vld [vmem:[%s256 + $0xe8] sm:$0xf]
      %v342 = vld [vmem:[%s256 + $0xec] sm:$0xf]
      %v343 = vld [vmem:[%s256 + $0xf0] sm:$0xf]
      %v344 = vld [vmem:[%s256 + $0xf4] sm:$0xf]
      %v345 = vld [vmem:[%s256 + $0xf8] sm:$0xf]
      %v346 = vld [vmem:[%s256 + $0xfc] sm:$0xf]
      %v347 = vld [vmem:[%s256 + $0x100] sm:$0xf]
      %v348 = vld [vmem:[%s256 + $0x104] sm:$0xf]
      %v349 = vld [vmem:[%s256 + $0x108] sm:$0xf]
      %v350 = vld [vmem:[%s256 + $0x10c] sm:$0xf]
      %v351 = vld [vmem:[%s256 + $0x110] sm:$0xf]
      %v352 = vld [vmem:[%s256 + $0x114] sm:$0xf]
      %v353 = vld [vmem:[%s256 + $0x118] sm:$0xf]
      %v354 = vld [vmem:[%s256 + $0x11c] sm:$0xf]
      %v361 = vunpack.c.l.b16 %v277
      %v362 = vunpack.c.h.b16 %v277
      %v363 = vunpack.c.l.b16 %v278
      %v364 = vunpack.c.h.b16 %v278
      %v365 = vunpack.c.l.b16 %v279
      %v366 = vunpack.c.l.b16 %v280
      %v367 = vunpack.c.h.b16 %v280
      %v368 = vunpack.c.l.b16 %v281
      %v369 = vunpack.c.h.b16 %v281
      %v370 = vunpack.c.l.b16 %v282
      %v371 = vpack.c.b16 %v366, %v361
      %v372 = vpack.c.b16 %v367, %v362
      %v373 = vpack.c.b16 %v368, %v363
      %v374 = vpack.c.b16 %v369, %v364
      %v375 = vpack.c.b16 %v370, %v365
      %v452 = vunpack.c.l.b16 %v283
      %v453 = vunpack.c.l.b16 %v284
      %v454 = vunpack.c.l.b16 %v285
      %v455 = vunpack.c.l.b16 %v286
      %v456 = vunpack.c.l.b16 %v287
      %v457 = vunpack.c.l.b16 %v288
      %v458 = vunpack.c.l.b16 %v289
      %v459 = vunpack.c.l.b16 %v290
      %v460 = vunpack.c.l.b16 %v291
      %v461 = vunpack.c.l.b16 %v292
      %v462 = vunpack.c.l.b16 %v293
      %v463 = vunpack.c.l.b16 %v294
      %v464 = vunpack.c.l.b16 %v295
      %v465 = vunpack.c.l.b16 %v296
      %v466 = vunpack.c.l.b16 %v297
      %v467 = vunpack.c.l.b16 %v298
      %v468 = vunpack.c.l.b16 %v299
      %v469 = vunpack.c.l.b16 %v300
      %v470 = vunpack.c.l.b16 %v301
      %v471 = vunpack.c.l.b16 %v302
      %v472 = vunpack.c.l.b16 %v303
      %v473 = vunpack.c.l.b16 %v304
      %v474 = vunpack.c.l.b16 %v305
      %v475 = vunpack.c.l.b16 %v306
      %v476 = vunpack.c.l.b16 %v307
      %v477 = vunpack.c.l.b16 %v308
      %v478 = vunpack.c.l.b16 %v309
      %v479 = vunpack.c.l.b16 %v310
      %v480 = vunpack.c.l.b16 %v311
      %v481 = vunpack.c.l.b16 %v312
      %v482 = vunpack.c.l.b16 %v313
      %v483 = vunpack.c.l.b16 %v314
      %v484 = vunpack.c.l.b16 %v315
      %v485 = vunpack.c.l.b16 %v316
      %v486 = vunpack.c.l.b16 %v317
      %v487 = vunpack.c.l.b16 %v318
      %v488 = vunpack.c.l.b16 %v319
      %v489 = vunpack.c.l.b16 %v320
      %v490 = vunpack.c.l.b16 %v321
      %v491 = vunpack.c.l.b16 %v322
      %v492 = vunpack.c.l.b16 %v323
      %v493 = vunpack.c.l.b16 %v324
      %v494 = vunpack.c.l.b16 %v325
      %v495 = vunpack.c.l.b16 %v326
      %v496 = vunpack.c.l.b16 %v327
      %v497 = vunpack.c.l.b16 %v328
      %v498 = vunpack.c.l.b16 %v329
      %v499 = vunpack.c.l.b16 %v330
      %v500 = vunpack.c.l.b16 %v331
      %v501 = vunpack.c.l.b16 %v332
      %v502 = vunpack.c.l.b16 %v333
      %v503 = vunpack.c.l.b16 %v334
      %v504 = vunpack.c.l.b16 %v335
      %v505 = vunpack.c.l.b16 %v336
      %v506 = vunpack.c.l.b16 %v337
      %v507 = vunpack.c.l.b16 %v338
      %v508 = vunpack.c.l.b16 %v339
      %v509 = vunpack.c.l.b16 %v340
      %v510 = vunpack.c.l.b16 %v341
      %v511 = vunpack.c.l.b16 %v342
      %v512 = vunpack.c.l.b16 %v343
      %v513 = vunpack.c.l.b16 %v344
      %v514 = vunpack.c.l.b16 %v345
      %v515 = vunpack.c.l.b16 %v346
      %v516 = vunpack.c.l.b16 %v347
      %v517 = vunpack.c.l.b16 %v348
      %v518 = vunpack.c.l.b16 %v349
      %v519 = vunpack.c.l.b16 %v350
      %v520 = vunpack.c.l.b16 %v351
      %v521 = vunpack.c.l.b16 %v352
      %v522 = vunpack.c.l.b16 %v353
      %v523 = vunpack.c.l.b16 %v354
      %v524 = vpack.c.b16 %v453, %v452
      %v525 = vpack.c.b16 %v455, %v454
      %v526 = vpack.c.b16 %v457, %v456
      %v527 = vpack.c.b16 %v459, %v458
      %v528 = vpack.c.b16 %v461, %v460
      %v529 = vpack.c.b16 %v463, %v462
      %v530 = vpack.c.b16 %v465, %v464
      %v531 = vpack.c.b16 %v467, %v466
      %v532 = vpack.c.b16 %v469, %v468
      %v533 = vpack.c.b16 %v471, %v470
      %v534 = vpack.c.b16 %v473, %v472
      %v535 = vpack.c.b16 %v475, %v474
      %v536 = vpack.c.b16 %v477, %v476
      %v537 = vpack.c.b16 %v479, %v478
      %v538 = vpack.c.b16 %v481, %v480
      %v539 = vpack.c.b16 %v483, %v482
      %v540 = vpack.c.b16 %v485, %v484
      %v541 = vpack.c.b16 %v487, %v486
      %v542 = vpack.c.b16 %v489, %v488
      %v543 = vpack.c.b16 %v491, %v490
      %v544 = vpack.c.b16 %v493, %v492
      %v545 = vpack.c.b16 %v495, %v494
      %v546 = vpack.c.b16 %v497, %v496
      %v547 = vpack.c.b16 %v499, %v498
      %v548 = vpack.c.b16 %v501, %v500
      %v549 = vpack.c.b16 %v503, %v502
      %v550 = vpack.c.b16 %v505, %v504
      %v551 = vpack.c.b16 %v507, %v506
      %v552 = vpack.c.b16 %v509, %v508
      %v553 = vpack.c.b16 %v511, %v510
      %v554 = vpack.c.b16 %v513, %v512
      %v555 = vpack.c.b16 %v515, %v514
      %v556 = vpack.c.b16 %v517, %v516
      %v557 = vpack.c.b16 %v519, %v518
      %v558 = vpack.c.b16 %v521, %v520
      %v559 = vpack.c.b16 %v523, %v522
      %vm596 = vcmask 523264
      %v598 = vsel %vm596, %v375, 0
      %600 = vmatpush.bf16.msra.mxu0 %v531
      %601 = vmatpush.bf16.msra.mxu0 %v530
      %602 = vmatpush.bf16.msra.mxu0 %v529
      %603 = vmatpush.bf16.msra.mxu0 %v528
      %604 = vmatpush.bf16.msra.mxu0 %v527
      %605 = vmatpush.bf16.msra.mxu0 %v526
      %606 = vmatpush.bf16.msra.mxu0 %v525
      %607 = vmatpush.bf16.msra.mxu0 %v524
      %608 = vmatmul.bf16.gmra.mxu0 %v371
      %v609 = vpop.f32.mrf.mxu0
      %v610 = vadd.f32 0.0, %v609
      %v611 = vpop.f32.mrf.mxu0
      %v612 = vadd.f32 0.0, %v611
      %613 = vdwg.mxu0
      %614 = vmatpush.bf16.msra.mxu0 %v539
      %615 = vmatpush.bf16.msra.mxu0 %v538
      %616 = vmatpush.bf16.msra.mxu0 %v537
      %617 = vmatpush.bf16.msra.mxu0 %v536
      %618 = vmatpush.bf16.msra.mxu0 %v535
      %619 = vmatpush.bf16.msra.mxu0 %v534
      %620 = vmatpush.bf16.msra.mxu0 %v533
      %621 = vmatpush.bf16.msra.mxu0 %v532
      %622 = vmatmul.bf16.gmra.mxu0 %v372
      %v623 = vpop.f32.mrf.mxu0
      %v624 = vadd.f32 %v610, %v623
      %v625 = vpop.f32.mrf.mxu0
      %v626 = vadd.f32 %v612, %v625
      %627 = vdwg.mxu0
      %628 = vmatpush.bf16.msra.mxu0 %v547
      %629 = vmatpush.bf16.msra.mxu0 %v546
      %630 = vmatpush.bf16.msra.mxu0 %v545
      %631 = vmatpush.bf16.msra.mxu0 %v544
      %632 = vmatpush.bf16.msra.mxu0 %v543
      %633 = vmatpush.bf16.msra.mxu0 %v542
      %634 = vmatpush.bf16.msra.mxu0 %v541
      %635 = vmatpush.bf16.msra.mxu0 %v540
      %636 = vmatmul.bf16.gmra.mxu0 %v373
      %v637 = vpop.f32.mrf.mxu0
      %v638 = vadd.f32 %v624, %v637
      %v639 = vpop.f32.mrf.mxu0
      %v640 = vadd.f32 %v626, %v639
      %641 = vdwg.mxu0
      %642 = vmatpush.bf16.msra.mxu0 %v555
      %643 = vmatpush.bf16.msra.mxu0 %v554
      %644 = vmatpush.bf16.msra.mxu0 %v553
      %645 = vmatpush.bf16.msra.mxu0 %v552
      %646 = vmatpush.bf16.msra.mxu0 %v551
      %647 = vmatpush.bf16.msra.mxu0 %v550
      %648 = vmatpush.bf16.msra.mxu0 %v549
      %649 = vmatpush.bf16.msra.mxu0 %v548
      %650 = vmatmul.bf16.gmra.mxu0 %v374
      %v651 = vpop.f32.mrf.mxu0
      %v652 = vadd.f32 %v638, %v651
      %v653 = vpop.f32.mrf.mxu0
      %v654 = vadd.f32 %v640, %v653
      %655 = vdwg.mxu0
      %656 = vmatpush.bf16.msra.mxu0 0
      %657 = vmatpush.bf16.msra.mxu0 0
      %658 = vmatpush.bf16.msra.mxu0 0
      %659 = vmatpush.bf16.msra.mxu0 0
      %660 = vmatpush.bf16.msra.mxu0 %v559
      %661 = vmatpush.bf16.msra.mxu0 %v558
      %662 = vmatpush.bf16.msra.mxu0 %v557
      %663 = vmatpush.bf16.msra.mxu0 %v556
      %664 = vmatmul.bf16.gmra.mxu0 %v598
      %v665 = vpop.f32.mrf.mxu0
      %v666 = vadd.f32 %v652, %v665
      %v667 = vpop.f32.mrf.mxu0
      %v668 = vadd.f32 %v654, %v667
      %669 = vdwg.mxu0
      %v670 = vadd.f32 %v275, %v666
      %v671 = vadd.f32 %v276, %v668
      %672 = vst [vmem:[#allocation2] sm:$0xff] %v670
      %673 = vst [vmem:[#allocation2 + $0x8] sm:$0xff] %v671
      // Predicated region
      $region41: #{inception_generator_forward.22} parent=35 // pred_check
        %p674 = pneg %p269
      $region42: #{inception_generator_forward.22} parent=35 // pred_check_branch
        %676 = sbr.rel (%p674) target = $region44
      $region43: #{inception_generator_forward.22} parent=35 // pred_region
        %v677 = vld [vmem:[#allocation2] sm:$0xff]
        %v678 = vld [vmem:[#allocation2 + $0x8] sm:$0xff]
        %v679 = vld [vmem:[%s2] sm:$0x1]
        %v681 = vperm.slane %v679, 0
        %v683 = vadd.f32 %v677, %v681
        %v684 = vadd.f32 %v678, %v681
        %v685 = vadd.f32 %v683, %v684
        %v686 = vrot.slane %v685, 4
        %v687 = vadd.f32 %v685, %v686
        %v688 = vrot.slane %v687, 2
        %v689 = vadd.f32 %v687, %v688
        %v690 = vrot.slane %v689, 1
        %v691 = vadd.f32 %v689, %v690
        %v692 = vmul.f32 %v691, 0.0625
        %v693 = vmul.f32 %v683, %v683
        %v694 = vmul.f32 %v684, %v684
        %v695 = vadd.f32 %v693, %v694
        %v696 = vrot.slane %v695, 4
        %v697 = vadd.f32 %v695, %v696
        %v698 = vrot.slane %v697, 2
        %v699 = vadd.f32 %v697, %v698
        %v700 = vrot.slane %v699, 1
        %v701 = vadd.f32 %v699, %v700
        %v702 = vmul.f32 %v701, 0.0625
        %v703 = vmul.f32 %v692, %v692
        %v704 = vsub.f32 %v702, %v703
        %v705 = vld [vmem:[%s262] sm:$0xf]
        %v706 = vld [vmem:[%s262 + $0x4] sm:$0xf]
        %v707 = vunpack.c.l.bf16 %v705
        %v708 = vunpack.c.l.bf16 %v706
        %v709 = vsub.f32 %v683, %v692
        %v710 = vsub.f32 %v684, %v692
        %v711 = vmax.f32 %v704, 0.0
        %v712 = vadd.f32 %v711, 1e-05
        %v713 = vrsqrt.pop %v712
        %v714 = vmul.f32 %v713, %v712
        %v715 = vmul.f32 %v714, %v713
        %v716 = vmul.f32 0.5, %v715
        %v717 = vsub.f32 1.5, %v716
        %v718 = vmul.f32 %v713, %v717
        %vm719 = vweird.f32 %v712
        %vm720 = vweird.f32 %v713
        %vm721 = vmor %vm719, %vm720
        %v722 = vsel %vm721, %v713, %v718
        %v723 = vmul.f32 %v709, %v722
        %v724 = vmul.f32 %v710, %v722
        %v725 = vadd.f32 %v707, %v723
        %v726 = vadd.f32 %v708, %v724
        %v727 = vpack.c.bf16 %v725, %v725
        %v728 = vpack.c.bf16 %v726, %v726
        %729 = vst [vmem:[%s267] sm:$0xf] %v727
        %730 = vst [vmem:[%s267 + $0x4] sm:$0xf] %v728
      $region44: #{inception_generator_forward.22} parent=35 // pred_fallthru
        _
      %p731 = scmp.lt.s32.totalorder %s19, 1
      %s732 = scalar_select %p731, %s19, 1
      %s733 = smul.addr %s732, 2
      %s734 = smul.addr %s733, 4
      %s735 = scalar_lea.vmem %s4, %s734
      // Predicated region
      $region45: #{inception_generator_forward.22} parent=35 // pred_check
        %p736 = pneg %p146
      $region46: #{inception_generator_forward.22} parent=35 // pred_check_branch
        %738 = sbr.rel (%p736) target = $region48
      $region47: #{inception_generator_forward.22} parent=35 // pred_region
        _
      $region48: #{inception_generator_forward.22} parent=35 // pred_fallthru
        _
    $region36: #{inception_generator_forward.22} parent=5 // pred_fallthru
      _
    %p739 = scmp.le.s32.totalorder 2, %s10
    // Predicated region
    $region49: #{inception_generator_forward.22} parent=5 // pred_check
      %p740 = pneg %p739
    $region50: #{inception_generator_forward.22} parent=5 // pred_check_branch
      %742 = sbr.rel (%p740) target = $region52
    $region51: #{inception_generator_forward.22} parent=5 // pred_region
      %s743 = ssub.s32 %s10, 2
      // Predicated region
      $region53: #{inception_generator_forward.22} parent=51 // pred_check
        %p744 = pneg %p152
      $region54: #{inception_generator_forward.22} parent=51 // pred_check_branch
        %746 = sbr.rel (%p744) target = $region56
      $region55: #{inception_generator_forward.22} parent=51 // pred_region
        %p747 = scmp.lt.s32.totalorder %s21, 1
        %s748 = scalar_select %p747, %s21, 1
        %s749 = smul.addr %s748, 2
        %s750 = smul.addr %s749, 4
        %s751 = scalar_lea.vmem %s4, %s750
      $region56: #{inception_generator_forward.22} parent=51 // pred_fallthru
        _
    $region52: #{inception_generator_forward.22} parent=5 // pred_fallthru
      _
  $region6: #{inception_generator_forward.22} parent=0 // loop_footer
    %s14 = sadd.s32 1, %s10
  $region7: #{inception_generator_forward.22} parent=0 // loop_footer_branch
    %9 = sbr.rel target = $region3
  $region8: #{inception_generator_forward.22} parent=0 // loop_exit
    _

// kernel: inception_generator_forward.29
$region0: #{inception_generator_forward.29}
  #allocation0 [shape = 'u32[]', space=smem, size = 0x4, offset = 0x4, fixed_abs, tag = 'smem constant byte address 0x4 - core index']
  #allocation1 [shape = 'u32[72,128]{1,0:T(1,128)}', space=vmem, size = 0x9000, scoped, tag = 'internal scratch']
  #allocation2 [shape = 'f32[32,128]{1,0:T(8,128)}', space=vmem, size = 0x4000, scoped, tag = 'scratch operand']
  %s0 = inlined_call_operand.vmem [shape: bf16[32,128], index: 0, kind: input, shape index: {}]
  %s1 = inlined_call_operand.vmem [shape: bf16[128,128], index: 1, kind: input, shape index: {}]
  %s2 = inlined_call_operand.vmem [shape: f32[1,128], index: 2, kind: input, shape index: {}]
  %s3 = inlined_call_operand.vmem [shape: bf16[32,128], index: 3, kind: output, shape index: {}]
  %s4 = sld [smem:[#allocation0]]
  $region30: #{inception_generator_forward.29} parent=0
    _
  %s6 = ssub.s32 1, %s4
  %s7 = scalar_select 0, %s6, %s4
  // Predicated region
  $region2: #{inception_generator_forward.29} parent=0 // pred_check
    _
  $region3: #{inception_generator_forward.29} parent=0 // pred_check_branch
    %9 = sbr.rel (0) target = $region5
  $region4: #{inception_generator_forward.29} parent=0 // pred_region
    _
  $region5: #{inception_generator_forward.29} parent=0 // pred_fallthru
    _
  // Predicated region
  $region6: #{inception_generator_forward.29} parent=0 // pred_check
    _
  $region7: #{inception_generator_forward.29} parent=0 // pred_check_branch
    %11 = sbr.rel (0) target = $region9
  $region8: #{inception_generator_forward.29} parent=0 // pred_region
    _
  $region9: #{inception_generator_forward.29} parent=0 // pred_fallthru
    _
  // Predicated region
  $region10: #{inception_generator_forward.29} parent=0 // pred_check
    _
  $region11: #{inception_generator_forward.29} parent=0 // pred_check_branch
    %13 = sbr.rel (0) target = $region13
  $region12: #{inception_generator_forward.29} parent=0 // pred_region
    _
  $region13: #{inception_generator_forward.29} parent=0 // pred_fallthru
    _
  %p14 = scmp.eq.s32.totalorder 0, 0
  // Predicated region
  $region14: #{inception_generator_forward.29} parent=0 // pred_check
    %p15 = pneg %p14
  $region15: #{inception_generator_forward.29} parent=0 // pred_check_branch
    %17 = sbr.rel (%p15) target = $region17
  $region16: #{inception_generator_forward.29} parent=0 // pred_region
    %18 = vst [vmem:[#allocation2] sm:$0xff] 0.0
    %19 = vst [vmem:[#allocation2 + $0x8] sm:$0xff] 0.0
    %20 = vst [vmem:[#allocation2 + $0x10] sm:$0xff] 0.0
    %21 = vst [vmem:[#allocation2 + $0x18] sm:$0xff] 0.0
  $region17: #{inception_generator_forward.29} parent=0 // pred_fallthru
    _
  %v22 = vld [vmem:[#allocation2] sm:$0xff]
  %v23 = vld [vmem:[#allocation2 + $0x8] sm:$0xff]
  %v24 = vld [vmem:[#allocation2 + $0x10] sm:$0xff]
  %v25 = vld [vmem:[#allocation2 + $0x18] sm:$0xff]
  %v26 = vld [vmem:[%s0] sm:$0xf]
  %v27 = vld [vmem:[%s0 + $0x4] sm:$0xf]
  %v28 = vld [vmem:[%s0 + $0x8] sm:$0xf]
  %v29 = vld [vmem:[%s0 + $0xc] sm:$0xf]
  %v30 = vld [vmem:[%s1] sm:$0xf]
  %v31 = vld [vmem:[%s1 + $0x4] sm:$0xf]
  %v32 = vld [vmem:[%s1 + $0x8] sm:$0xf]
  %v33 = vld [vmem:[%s1 + $0xc] sm:$0xf]
  %v34 = vld [vmem:[%s1 + $0x10] sm:$0xf]
  %v35 = vld [vmem:[%s1 + $0x14] sm:$0xf]
  %v36 = vld [vmem:[%s1 + $0x18] sm:$0xf]
  %v37 = vld [vmem:[%s1 + $0x1c] sm:$0xf]
  %v38 = vld [vmem:[%s1 + $0x20] sm:$0xf]
  %v39 = vld [vmem:[%s1 + $0x24] sm:$0xf]
  %v40 = vld [vmem:[%s1 + $0x28] sm:$0xf]
  %v41 = vld [vmem:[%s1 + $0x2c] sm:$0xf]
  %v42 = vld [vmem:[%s1 + $0x30] sm:$0xf]
  %v43 = vld [vmem:[%s1 + $0x34] sm:$0xf]
  %v44 = vld [vmem:[%s1 + $0x38] sm:$0xf]
  %v45 = vld [vmem:[%s1 + $0x3c] sm:$0xf]
  %v50 = vunpack.c.l.b16 %v26
  %v51 = vunpack.c.l.b16 %v27
  %v52 = vunpack.c.l.b16 %v28
  %v53 = vunpack.c.l.b16 %v29
  %v54 = vpack.c.b16 %v51, %v50
  %v55 = vpack.c.b16 %v53, %v52
  %v74 = vunpack.c.l.b16 %v30
  %v75 = vunpack.c.l.b16 %v31
  %v76 = vunpack.c.l.b16 %v32
  %v77 = vunpack.c.l.b16 %v33
  %v78 = vunpack.c.l.b16 %v34
  %v79 = vunpack.c.l.b16 %v35
  %v80 = vunpack.c.l.b16 %v36
  %v81 = vunpack.c.l.b16 %v37
  %v82 = vunpack.c.l.b16 %v38
  %v83 = vunpack.c.l.b16 %v39
  %v84 = vunpack.c.l.b16 %v40
  %v85 = vunpack.c.l.b16 %v41
  %v86 = vunpack.c.l.b16 %v42
  %v87 = vunpack.c.l.b16 %v43
  %v88 = vunpack.c.l.b16 %v44
  %v89 = vunpack.c.l.b16 %v45
  %v90 = vpack.c.b16 %v75, %v74
  %v91 = vpack.c.b16 %v77, %v76
  %v92 = vpack.c.b16 %v79, %v78
  %v93 = vpack.c.b16 %v81, %v80
  %v94 = vpack.c.b16 %v83, %v82
  %v95 = vpack.c.b16 %v85, %v84
  %v96 = vpack.c.b16 %v87, %v86
  %v97 = vpack.c.b16 %v89, %v88
  %106 = vmatpush.bf16.msra.mxu0 %v97
  %107 = vmatpush.bf16.msra.mxu0 %v96
  %108 = vmatpush.bf16.msra.mxu0 %v95
  %109 = vmatpush.bf16.msra.mxu0 %v94
  %110 = vmatpush.bf16.msra.mxu0 %v93
  %111 = vmatpush.bf16.msra.mxu0 %v92
  %112 = vmatpush.bf16.msra.mxu0 %v91
  %113 = vmatpush.bf16.msra.mxu0 %v90
  %114 = vmatmul.bf16.gmra.mxu0 %v54
  %v115 = vpop.f32.mrf.mxu0
  %v116 = vadd.f32 0.0, %v115
  %v117 = vpop.f32.mrf.mxu0
  %v118 = vadd.f32 0.0, %v117
  %119 = vmatmul.bf16.gmra.mxu0 %v55
  %v120 = vpop.f32.mrf.mxu0
  %v121 = vadd.f32 0.0, %v120
  %v122 = vpop.f32.mrf.mxu0
  %v123 = vadd.f32 0.0, %v122
  %124 = vdwg.mxu0
  %v125 = vadd.f32 %v22, %v116
  %v126 = vadd.f32 %v23, %v118
  %v127 = vadd.f32 %v24, %v121
  %v128 = vadd.f32 %v25, %v123
  %129 = vst [vmem:[#allocation2] sm:$0xff] %v125
  %130 = vst [vmem:[#allocation2 + $0x8] sm:$0xff] %v126
  %131 = vst [vmem:[#allocation2 + $0x10] sm:$0xff] %v127
  %132 = vst [vmem:[#allocation2 + $0x18] sm:$0xff] %v128
  // Predicated region
  $region18: #{inception_generator_forward.29} parent=0 // pred_check
    %p133 = pneg %p14
  $region19: #{inception_generator_forward.29} parent=0 // pred_check_branch
    %135 = sbr.rel (%p133) target = $region21
  $region20: #{inception_generator_forward.29} parent=0 // pred_region
    %v136 = vld [vmem:[#allocation2] sm:$0xff]
    %v137 = vld [vmem:[#allocation2 + $0x8] sm:$0xff]
    %v138 = vld [vmem:[#allocation2 + $0x10] sm:$0xff]
    %v139 = vld [vmem:[#allocation2 + $0x18] sm:$0xff]
    %v140 = vld [vmem:[%s2] sm:$0x1]
    %v142 = vperm.slane %v140, 0
    %v144 = vadd.f32 %v136, %v142
    %v145 = vadd.f32 %v137, %v142
    %v146 = vadd.f32 %v138, %v142
    %v147 = vadd.f32 %v139, %v142
    %v148 = vpack.c.bf16 %v144, %v144
    %v149 = vpack.c.bf16 %v145, %v145
    %v150 = vpack.c.bf16 %v146, %v146
    %v151 = vpack.c.bf16 %v147, %v147
    %152 = vst [vmem:[%s3] sm:$0xf] %v148
    %153 = vst [vmem:[%s3 + $0x4] sm:$0xf] %v149
    %154 = vst [vmem:[%s3 + $0x8] sm:$0xf] %v150
    %155 = vst [vmem:[%s3 + $0xc] sm:$0xf] %v151
  $region21: #{inception_generator_forward.29} parent=0 // pred_fallthru
    _
  // Predicated region
  $region22: #{inception_generator_forward.29} parent=0 // pred_check
    _
  $region23: #{inception_generator_forward.29} parent=0 // pred_check_branch
    %157 = sbr.rel (0) target = $region25
  $region24: #{inception_generator_forward.29} parent=0 // pred_region
    _
  $region25: #{inception_generator_forward.29} parent=0 // pred_fallthru
    _
  // Predicated region
  $region26: #{inception_generator_forward.29} parent=0 // pred_check
    _
  $region27: #{inception_generator_forward.29} parent=0 // pred_check_branch
    %159 = sbr.rel (0) target = $region29
  $region28: #{inception_generator_forward.29} parent=0 // pred_region
    _
  $region29: #{inception_generator_forward.29} parent=0 // pred_fallthru
    _

// kernel: inception_generator_forward.30
$region0: #{inception_generator_forward.30}
  #allocation0 [shape = 'u32[]', space=smem, size = 0x4, offset = 0x4, fixed_abs, tag = 'smem constant byte address 0x4 - core index']
  #allocation1 [shape = 'u32[72,128]{1,0:T(1,128)}', space=vmem, size = 0x9000, scoped, tag = 'internal scratch']
  %s0 = inlined_call_operand.vmem [shape: bf16[2,64,16], index: 0, kind: input, shape index: {}]
  %s1 = inlined_call_operand.vmem [shape: bf16[2,64,16], index: 1, kind: output, shape index: {}]
  %s2 = sld [smem:[#allocation0]]
  $region37: #{inception_generator_forward.30} parent=0
    _
  %s4 = ssub.s32 1, %s2
  %s5 = scalar_select 0, %s4, %s2
  loop: start=0, step=1, limit=4
  $region2: #{inception_generator_forward.30} parent=0 // loop_pre_header
    _
  $region3: #{inception_generator_forward.30} parent=0 // loop_header
    %s7 = sphi 0, %s11
    %p8 = scmp.ge.s32.totalorder %s7, 4
    %s17 = sphi 0, %s19
    %s20 = sphi 0, %s17
    %s21 = sphi 0, %s20
    %s37 = sphi 0, %s21
    %s43 = sphi 0, %s45
    %s46 = sphi 0, %s43
    %s47 = sphi 0, %s46
    %s63 = sphi 0, %s47
  $region4: #{inception_generator_forward.30} parent=0 // loop_header_branch
    %10 = sbr.rel (%p8) target = $region8
  $region5: #{inception_generator_forward.30} parent=0 // loop_body
    %s12 = ssub.s32 %s7, 1
    %s13 = ssub.s32 %s7, 2
    %s14 = sadd.s32 %s7, 1
    %s15 = ssub.s32 %s7, %s14
    %p16 = scmp.eq.s32.totalorder %s15, 0
    %s18 = sadd.s32 %s17, 1
    %s19 = scalar_select %p16, %s17, %s18
    %p22 = pneg %p16
    %p23 = scmp.eq.s32.totalorder %s7, 1
    %p24 = por %p22, %p23
    %p25 = scmp.ne.s32.totalorder %s17, %s20
    %p26 = scmp.eq.s32.totalorder %s7, 0
    %p27 = por %p25, %p26
    %p28 = scmp.ne.s32.totalorder %s17, %s20
    %p29 = scmp.eq.s32.totalorder %s12, 1
    %p30 = por %p28, %p29
    %p31 = scmp.ne.s32.totalorder %s20, %s21
    %p32 = scmp.eq.s32.totalorder %s12, 0
    %p33 = por %p31, %p32
    %p34 = scmp.ne.s32.totalorder %s20, %s21
    %p35 = scmp.eq.s32.totalorder %s13, 1
    %p36 = por %p34, %p35
    %p38 = scmp.ne.s32.totalorder %s21, %s37
    %p39 = scmp.eq.s32.totalorder %s13, 0
    %p40 = por %p38, %p39
    %s41 = ssub.s32 %s7, %s14
    %p42 = scmp.eq.s32.totalorder %s41, 0
    %s44 = sadd.s32 %s43, 1
    %s45 = scalar_select %p42, %s43, %s44
    %p48 = pneg %p42
    %p49 = scmp.eq.s32.totalorder %s7, 1
    %p50 = por %p48, %p49
    %p51 = scmp.ne.s32.totalorder %s43, %s46
    %p52 = scmp.eq.s32.totalorder %s7, 0
    %p53 = por %p51, %p52
    %p54 = scmp.ne.s32.totalorder %s43, %s46
    %p55 = scmp.eq.s32.totalorder %s12, 1
    %p56 = por %p54, %p55
    %p57 = scmp.ne.s32.totalorder %s46, %s47
    %p58 = scmp.eq.s32.totalorder %s12, 0
    %p59 = por %p57, %p58
    %p60 = scmp.ne.s32.totalorder %s46, %s47
    %p61 = scmp.eq.s32.totalorder %s13, 1
    %p62 = por %p60, %p61
    %p64 = scmp.ne.s32.totalorder %s47, %s63
    %p65 = scmp.eq.s32.totalorder %s13, 0
    %p66 = por %p64, %p65
    %p67 = scmp.le.s32.totalorder 1, %s7
    %p68 = scmp.lt.s32.totalorder %s7, 3
    %p69 = pnand %p67, %p68
    %p70 = pneg %p69
    // Predicated region
    $region9: #{inception_generator_forward.30} parent=5 // pred_check
      _
    $region10: #{inception_generator_forward.30} parent=5 // pred_check_branch
      %72 = sbr.rel (%p69) target = $region12
    $region11: #{inception_generator_forward.30} parent=5 // pred_region
      %s73 = ssub.s32 %s7, 1
    $region12: #{inception_generator_forward.30} parent=5 // pred_fallthru
      _
    %p74 = scmp.lt.s32.totalorder %s7, 2
    // Predicated region
    $region13: #{inception_generator_forward.30} parent=5 // pred_check
      %p75 = pneg %p74
    $region14: #{inception_generator_forward.30} parent=5 // pred_check_branch
      %77 = sbr.rel (%p75) target = $region16
    $region15: #{inception_generator_forward.30} parent=5 // pred_region
      // Predicated region
      $region17: #{inception_generator_forward.30} parent=15 // pred_check
        %p78 = pneg %p27
      $region18: #{inception_generator_forward.30} parent=15 // pred_check_branch
        %80 = sbr.rel (%p78) target = $region20
      $region19: #{inception_generator_forward.30} parent=15 // pred_region
        %p81 = scmp.lt.s32.totalorder %s7, 1
        %s82 = scalar_select %p81, %s7, 1
        %s83 = smul.addr %s82, 8
        %s84 = smul.addr %s83, 4
        %s85 = scalar_lea.vmem %s0, %s84
      $region20: #{inception_generator_forward.30} parent=15 // pred_fallthru
        _
    $region16: #{inception_generator_forward.30} parent=5 // pred_fallthru
      _
    %p86 = scmp.le.s32.totalorder 1, %s7
    %p87 = scmp.lt.s32.totalorder %s7, 3
    %p88 = pnand %p86, %p87
    %p89 = pneg %p88
    // Predicated region
    $region21: #{inception_generator_forward.30} parent=5 // pred_check
      _
    $region22: #{inception_generator_forward.30} parent=5 // pred_check_branch
      %91 = sbr.rel (%p88) target = $region24
    $region23: #{inception_generator_forward.30} parent=5 // pred_region
      %s92 = ssub.s32 %s7, 1
      %p93 = scmp.lt.s32.totalorder %s12, 1
      %s94 = scalar_select %p93, %s12, 1
      %s95 = smul.addr %s94, 8
      %s96 = smul.addr %s95, 4
      %s97 = scalar_lea.vmem %s0, %s96
      %p98 = pneg %p33
      %p99 = pneg %p30
      %p100 = pneg %p59
      %p101 = pneg %p56
      %p102 = scmp.lt.s32.totalorder %s12, 1
      %s103 = scalar_select %p102, %s12, 1
      %s104 = smul.addr %s103, 8
      %s105 = smul.addr %s104, 4
      %s106 = scalar_lea.vmem %s1, %s105
      %p107 = scmp.lt.s32.totalorder %s12, 1
      %s108 = scalar_select %p107, %s12, 1
      %s109 = smul.addr %s108, 8
      %s110 = smul.addr %s109, 4
      %s111 = scalar_lea.vmem %s0, %s110
      %p112 = scmp.lt.s32.totalorder %s12, 1
      %s113 = scalar_select %p112, %s12, 1
      %s114 = smul.addr %s113, 8
      %s115 = smul.addr %s114, 4
      %s116 = scalar_lea.vmem %s1, %s115
      %v117 = vld [vmem:[%s111] sm:$0xf]
      %v118 = vld [vmem:[%s111 + $0x4] sm:$0xf]
      %v119 = vld [vmem:[%s111 + $0x8] sm:$0xf]
      %v120 = vld [vmem:[%s111 + $0xc] sm:$0xf]
      %v121 = vld [vmem:[%s111 + $0x10] sm:$0xf]
      %v122 = vld [vmem:[%s111 + $0x14] sm:$0xf]
      %v123 = vld [vmem:[%s111 + $0x18] sm:$0xf]
      %v124 = vld [vmem:[%s111 + $0x1c] sm:$0xf]
      %v125 = vunpack.c.l.bf16 %v117
      %v126 = vunpack.c.l.bf16 %v118
      %v127 = vunpack.c.l.bf16 %v119
      %v128 = vunpack.c.l.bf16 %v120
      %v129 = vunpack.c.l.bf16 %v121
      %v130 = vunpack.c.l.bf16 %v122
      %v131 = vunpack.c.l.bf16 %v123
      %v132 = vunpack.c.l.bf16 %v124
      %vm133 = vcmask 130048
      %v134 = vsel %vm133, %v125, 0.0
      %v135 = vsel %vm133, %v126, 0.0
      %v136 = vadd.f32 %v134, %v135
      %v137 = vsel %vm133, %v127, 0.0
      %v138 = vadd.f32 %v136, %v137
      %v139 = vsel %vm133, %v128, 0.0
      %v140 = vadd.f32 %v138, %v139
      %v141 = vsel %vm133, %v129, 0.0
      %v142 = vadd.f32 %v140, %v141
      %v143 = vsel %vm133, %v130, 0.0
      %v144 = vadd.f32 %v142, %v143
      %v145 = vsel %vm133, %v131, 0.0
      %v146 = vadd.f32 %v144, %v145
      %v147 = vsel %vm133, %v132, 0.0
      %v148 = vadd.f32 %v146, %v147
      %v149 = vrot.slane %v148, 4
      %v150 = vadd.f32 %v148, %v149
      %v151 = vrot.slane %v150, 2
      %v152 = vadd.f32 %v150, %v151
      %v153 = vrot.slane %v152, 1
      %v154 = vadd.f32 %v152, %v153
      %v155 = vmul.f32 %v154, 0.015625
      %v156 = vmul.f32 %v125, %v125
      %v157 = vmul.f32 %v126, %v126
      %v158 = vmul.f32 %v127, %v127
      %v159 = vmul.f32 %v128, %v128
      %v160 = vmul.f32 %v129, %v129
      %v161 = vmul.f32 %v130, %v130
      %v162 = vmul.f32 %v131, %v131
      %v163 = vmul.f32 %v132, %v132
      %v164 = vsel %vm133, %v156, 0.0
      %v165 = vsel %vm133, %v157, 0.0
      %v166 = vadd.f32 %v164, %v165
      %v167 = vsel %vm133, %v158, 0.0
      %v168 = vadd.f32 %v166, %v167
      %v169 = vsel %vm133, %v159, 0.0
      %v170 = vadd.f32 %v168, %v169
      %v171 = vsel %vm133, %v160, 0.0
      %v172 = vadd.f32 %v170, %v171
      %v173 = vsel %vm133, %v161, 0.0
      %v174 = vadd.f32 %v172, %v173
      %v175 = vsel %vm133, %v162, 0.0
      %v176 = vadd.f32 %v174, %v175
      %v177 = vsel %vm133, %v163, 0.0
      %v178 = vadd.f32 %v176, %v177
      %v179 = vrot.slane %v178, 4
      %v180 = vadd.f32 %v178, %v179
      %v181 = vrot.slane %v180, 2
      %v182 = vadd.f32 %v180, %v181
      %v183 = vrot.slane %v182, 1
      %v184 = vadd.f32 %v182, %v183
      %v185 = vmul.f32 %v184, 0.015625
      %v186 = vmul.f32 %v155, %v155
      %v187 = vsub.f32 %v185, %v186
      %v188 = vsub.f32 %v125, %v155
      %v189 = vsub.f32 %v126, %v155
      %v190 = vsub.f32 %v127, %v155
      %v191 = vsub.f32 %v128, %v155
      %v192 = vsub.f32 %v129, %v155
      %v193 = vsub.f32 %v130, %v155
      %v194 = vsub.f32 %v131, %v155
      %v195 = vsub.f32 %v132, %v155
      %v196 = vmax.f32 %v187, 0.0
      %v197 = vadd.f32 %v196, 1e-05
      %v198 = vrsqrt.pop %v197
      %v199 = vmul.f32 %v198, %v197
      %v200 = vmul.f32 %v199, %v198
      %v201 = vmul.f32 0.5, %v200
      %v202 = vsub.f32 1.5, %v201
      %v203 = vmul.f32 %v198, %v202
      %vm204 = vweird.f32 %v197
      %vm205 = vweird.f32 %v198
      %vm206 = vmor %vm204, %vm205
      %v207 = vsel %vm206, %v198, %v203
      %v208 = vmul.f32 %v188, %v207
      %v209 = vmul.f32 %v189, %v207
      %v210 = vmul.f32 %v190, %v207
      %v211 = vmul.f32 %v191, %v207
      %v212 = vmul.f32 %v192, %v207
      %v213 = vmul.f32 %v193, %v207
      %v214 = vmul.f32 %v194, %v207
      %v215 = vmul.f32 %v195, %v207
      %v216 = vmax.f32 %v208, 0.0
      %v217 = vmax.f32 %v209, 0.0
      %v218 = vmax.f32 %v210, 0.0
      %v219 = vmax.f32 %v211, 0.0
      %v220 = vmax.f32 %v212, 0.0
      %v221 = vmax.f32 %v213, 0.0
      %v222 = vmax.f32 %v214, 0.0
      %v223 = vmax.f32 %v215, 0.0
      %v224 = vpack.c.bf16 %v216, %v216
      %v225 = vpack.c.bf16 %v217, %v217
      %v226 = vpack.c.bf16 %v218, %v218
      %v227 = vpack.c.bf16 %v219, %v219
      %v228 = vpack.c.bf16 %v220, %v220
      %v229 = vpack.c.bf16 %v221, %v221
      %v230 = vpack.c.bf16 %v222, %v222
      %v231 = vpack.c.bf16 %v223, %v223
      %vm232 = vcmask 125952
      %233 = vst.msk [vmem:[%s116] sm:$0xf] %vm232, %v224
      %234 = vst.msk [vmem:[%s116 + $0x4] sm:$0xf] %vm232, %v225
      %235 = vst.msk [vmem:[%s116 + $0x8] sm:$0xf] %vm232, %v226
      %236 = vst.msk [vmem:[%s116 + $0xc] sm:$0xf] %vm232, %v227
      %237 = vst.msk [vmem:[%s116 + $0x10] sm:$0xf] %vm232, %v228
      %238 = vst.msk [vmem:[%s116 + $0x14] sm:$0xf] %vm232, %v229
      %239 = vst.msk [vmem:[%s116 + $0x18] sm:$0xf] %vm232, %v230
      %240 = vst.msk [vmem:[%s116 + $0x1c] sm:$0xf] %vm232, %v231
      %p241 = scmp.lt.s32.totalorder %s12, 1
      %s242 = scalar_select %p241, %s12, 1
      %s243 = smul.addr %s242, 8
      %s244 = smul.addr %s243, 4
      %s245 = scalar_lea.vmem %s1, %s244
      // Predicated region
      $region25: #{inception_generator_forward.30} parent=23 // pred_check
        %p246 = pneg %p56
      $region26: #{inception_generator_forward.30} parent=23 // pred_check_branch
        %248 = sbr.rel (%p246) target = $region28
      $region27: #{inception_generator_forward.30} parent=23 // pred_region
        _
      $region28: #{inception_generator_forward.30} parent=23 // pred_fallthru
        _
    $region24: #{inception_generator_forward.30} parent=5 // pred_fallthru
      _
    %p249 = scmp.le.s32.totalorder 2, %s7
    // Predicated region
    $region29: #{inception_generator_forward.30} parent=5 // pred_check
      %p250 = pneg %p249
    $region30: #{inception_generator_forward.30} parent=5 // pred_check_branch
      %252 = sbr.rel (%p250) target = $region32
    $region31: #{inception_generator_forward.30} parent=5 // pred_region
      %s253 = ssub.s32 %s7, 2
      // Predicated region
      $region33: #{inception_generator_forward.30} parent=31 // pred_check
        %p254 = pneg %p62
      $region34: #{inception_generator_forward.30} parent=31 // pred_check_branch
        %256 = sbr.rel (%p254) target = $region36
      $region35: #{inception_generator_forward.30} parent=31 // pred_region
        %p257 = scmp.lt.s32.totalorder %s13, 1
        %s258 = scalar_select %p257, %s13, 1
        %s259 = smul.addr %s258, 8
        %s260 = smul.addr %s259, 4
        %s261 = scalar_lea.vmem %s1, %s260
      $region36: #{inception_generator_forward.30} parent=31 // pred_fallthru
        _
    $region32: #{inception_generator_forward.30} parent=5 // pred_fallthru
      _
  $region6: #{inception_generator_forward.30} parent=0 // loop_footer
    %s11 = sadd.s32 1, %s7
  $region7: #{inception_generator_forward.30} parent=0 // loop_footer_branch
    %6 = sbr.rel target = $region3
  $region8: #{inception_generator_forward.30} parent=0 // loop_exit
    _

// kernel: inception_generator_forward.31
$region0: #{inception_generator_forward.31}
  #allocation0 [shape = 'u32[]', space=smem, size = 0x4, offset = 0x4, fixed_abs, tag = 'smem constant byte address 0x4 - core index']
  #allocation1 [shape = 'u32[72,128]{1,0:T(1,128)}', space=vmem, size = 0x9000, scoped, tag = 'internal scratch']
  #allocation2 [shape = 'f32[128,128]{1,0:T(8,128)}', space=vmem, size = 0x10000, scoped, tag = 'scratch operand']
  %s0 = inlined_call_operand.vmem [shape: bf16[128,64], index: 0, kind: input, shape index: {}]
  %s1 = inlined_call_operand.vmem [shape: bf16[64,128], index: 1, kind: input, shape index: {}]
  %s2 = inlined_call_operand.vmem [shape: f32[1,128], index: 2, kind: input, shape index: {}]
  %s3 = inlined_call_operand.vmem [shape: bf16[128,128], index: 3, kind: output, shape index: {}]
  %s4 = sld [smem:[#allocation0]]
  $region30: #{inception_generator_forward.31} parent=0
    _
  %s6 = ssub.s32 1, %s4
  %s7 = scalar_select 0, %s6, %s4
  // Predicated region
  $region2: #{inception_generator_forward.31} parent=0 // pred_check
    _
  $region3: #{inception_generator_forward.31} parent=0 // pred_check_branch
    %9 = sbr.rel (0) target = $region5
  $region4: #{inception_generator_forward.31} parent=0 // pred_region
    _
  $region5: #{inception_generator_forward.31} parent=0 // pred_fallthru
    _
  // Predicated region
  $region6: #{inception_generator_forward.31} parent=0 // pred_check
    _
  $region7: #{inception_generator_forward.31} parent=0 // pred_check_branch
    %11 = sbr.rel (0) target = $region9
  $region8: #{inception_generator_forward.31} parent=0 // pred_region
    _
  $region9: #{inception_generator_forward.31} parent=0 // pred_fallthru
    _
  // Predicated region
  $region10: #{inception_generator_forward.31} parent=0 // pred_check
    _
  $region11: #{inception_generator_forward.31} parent=0 // pred_check_branch
    %13 = sbr.rel (0) target = $region13
  $region12: #{inception_generator_forward.31} parent=0 // pred_region
    _
  $region13: #{inception_generator_forward.31} parent=0 // pred_fallthru
    _
  %p15 = scmp.eq.s32.totalorder 0, 0
  // Predicated region
  $region14: #{inception_generator_forward.31} parent=0 // pred_check
    %p16 = pneg %p15
  $region15: #{inception_generator_forward.31} parent=0 // pred_check_branch
    %18 = sbr.rel (%p16) target = $region17
  $region16: #{inception_generator_forward.31} parent=0 // pred_region
    %19 = vst [vmem:[#allocation2] sm:$0xff] 0.0
    %20 = vst [vmem:[#allocation2 + $0x8] sm:$0xff] 0.0
    %21 = vst [vmem:[#allocation2 + $0x10] sm:$0xff] 0.0
    %22 = vst [vmem:[#allocation2 + $0x18] sm:$0xff] 0.0
    %23 = vst [vmem:[#allocation2 + $0x20] sm:$0xff] 0.0
    %24 = vst [vmem:[#allocation2 + $0x28] sm:$0xff] 0.0
    %25 = vst [vmem:[#allocation2 + $0x30] sm:$0xff] 0.0
    %26 = vst [vmem:[#allocation2 + $0x38] sm:$0xff] 0.0
    %27 = vst [vmem:[#allocation2 + $0x40] sm:$0xff] 0.0
    %28 = vst [vmem:[#allocation2 + $0x48] sm:$0xff] 0.0
    %29 = vst [vmem:[#allocation2 + $0x50] sm:$0xff] 0.0
    %30 = vst [vmem:[#allocation2 + $0x58] sm:$0xff] 0.0
    %31 = vst [vmem:[#allocation2 + $0x60] sm:$0xff] 0.0
    %32 = vst [vmem:[#allocation2 + $0x68] sm:$0xff] 0.0
    %33 = vst [vmem:[#allocation2 + $0x70] sm:$0xff] 0.0
    %34 = vst [vmem:[#allocation2 + $0x78] sm:$0xff] 0.0
  $region17: #{inception_generator_forward.31} parent=0 // pred_fallthru
    _
  %v35 = vld [vmem:[#allocation2] sm:$0xff]
  %v36 = vld [vmem:[#allocation2 + $0x8] sm:$0xff]
  %v37 = vld [vmem:[#allocation2 + $0x10] sm:$0xff]
  %v38 = vld [vmem:[#allocation2 + $0x18] sm:$0xff]
  %v39 = vld [vmem:[#allocation2 + $0x20] sm:$0xff]
  %v40 = vld [vmem:[#allocation2 + $0x28] sm:$0xff]
  %v41 = vld [vmem:[#allocation2 + $0x30] sm:$0xff]
  %v42 = vld [vmem:[#allocation2 + $0x38] sm:$0xff]
  %v43 = vld [vmem:[#allocation2 + $0x40] sm:$0xff]
  %v44 = vld [vmem:[#allocation2 + $0x48] sm:$0xff]
  %v45 = vld [vmem:[#allocation2 + $0x50] sm:$0xff]
  %v46 = vld [vmem:[#allocation2 + $0x58] sm:$0xff]
  %v47 = vld [vmem:[#allocation2 + $0x60] sm:$0xff]
  %v48 = vld [vmem:[#allocation2 + $0x68] sm:$0xff]
  %v49 = vld [vmem:[#allocation2 + $0x70] sm:$0xff]
  %v50 = vld [vmem:[#allocation2 + $0x78] sm:$0xff]
  %v51 = vld [vmem:[%s0] sm:$0xf]
  %v52 = vld [vmem:[%s0 + $0x4] sm:$0xf]
  %v53 = vld [vmem:[%s0 + $0x8] sm:$0xf]
  %v54 = vld [vmem:[%s0 + $0xc] sm:$0xf]
  %v55 = vld [vmem:[%s0 + $0x10] sm:$0xf]
  %v56 = vld [vmem:[%s0 + $0x14] sm:$0xf]
  %v57 = vld [vmem:[%s0 + $0x18] sm:$0xf]
  %v58 = vld [vmem:[%s0 + $0x1c] sm:$0xf]
  %v59 = vld [vmem:[%s0 + $0x20] sm:$0xf]
  %v60 = vld [vmem:[%s0 + $0x24] sm:$0xf]
  %v61 = vld [vmem:[%s0 + $0x28] sm:$0xf]
  %v62 = vld [vmem:[%s0 + $0x2c] sm:$0xf]
  %v63 = vld [vmem:[%s0 + $0x30] sm:$0xf]
  %v64 = vld [vmem:[%s0 + $0x34] sm:$0xf]
  %v65 = vld [vmem:[%s0 + $0x38] sm:$0xf]
  %v66 = vld [vmem:[%s0 + $0x3c] sm:$0xf]
  %v67 = vld [vmem:[%s1] sm:$0xf]
  %v68 = vld [vmem:[%s1 + $0x4] sm:$0xf]
  %v69 = vld [vmem:[%s1 + $0x8] sm:$0xf]
  %v70 = vld [vmem:[%s1 + $0xc] sm:$0xf]
  %v71 = vld [vmem:[%s1 + $0x10] sm:$0xf]
  %v72 = vld [vmem:[%s1 + $0x14] sm:$0xf]
  %v73 = vld [vmem:[%s1 + $0x18] sm:$0xf]
  %v74 = vld [vmem:[%s1 + $0x1c] sm:$0xf]
  %v91 = vunpack.c.l.b16 %v51
  %v92 = vunpack.c.l.b16 %v52
  %v93 = vunpack.c.l.b16 %v53
  %v94 = vunpack.c.l.b16 %v54
  %v95 = vunpack.c.l.b16 %v55
  %v96 = vunpack.c.l.b16 %v56
  %v97 = vunpack.c.l.b16 %v57
  %v98 = vunpack.c.l.b16 %v58
  %v99 = vunpack.c.l.b16 %v59
  %v100 = vunpack.c.l.b16 %v60
  %v101 = vunpack.c.l.b16 %v61
  %v102 = vunpack.c.l.b16 %v62
  %v103 = vunpack.c.l.b16 %v63
  %v104 = vunpack.c.l.b16 %v64
  %v105 = vunpack.c.l.b16 %v65
  %v106 = vunpack.c.l.b16 %v66
  %v107 = vpack.c.b16 %v92, %v91
  %v108 = vpack.c.b16 %v94, %v93
  %v109 = vpack.c.b16 %v96, %v95
  %v110 = vpack.c.b16 %v98, %v97
  %v111 = vpack.c.b16 %v100, %v99
  %v112 = vpack.c.b16 %v102, %v101
  %v113 = vpack.c.b16 %v104, %v103
  %v114 = vpack.c.b16 %v106, %v105
  %v123 = vunpack.c.l.b16 %v67
  %v124 = vunpack.c.l.b16 %v68
  %v125 = vunpack.c.l.b16 %v69
  %v126 = vunpack.c.l.b16 %v70
  %v127 = vunpack.c.l.b16 %v71
  %v128 = vunpack.c.l.b16 %v72
  %v129 = vunpack.c.l.b16 %v73
  %v130 = vunpack.c.l.b16 %v74
  %v131 = vpack.c.b16 %v124, %v123
  %v132 = vpack.c.b16 %v126, %v125
  %v133 = vpack.c.b16 %v128, %v127
  %v134 = vpack.c.b16 %v130, %v129
  %vm139 = vcmask 523264
  %v141 = vsel %vm139, %v107, 0
  %v144 = vsel %vm139, %v108, 0
  %v147 = vsel %vm139, %v109, 0
  %v150 = vsel %vm139, %v110, 0
  %v153 = vsel %vm139, %v111, 0
  %v156 = vsel %vm139, %v112, 0
  %v159 = vsel %vm139, %v113, 0
  %v162 = vsel %vm139, %v114, 0
  %164 = vmatpush.bf16.msra.mxu0 0
  %165 = vmatpush.bf16.msra.mxu0 0
  %166 = vmatpush.bf16.msra.mxu0 0
  %167 = vmatpush.bf16.msra.mxu0 0
  %168 = vmatpush.bf16.msra.mxu0 %v134
  %169 = vmatpush.bf16.msra.mxu0 %v133
  %170 = vmatpush.bf16.msra.mxu0 %v132
  %171 = vmatpush.bf16.msra.mxu0 %v131
  %172 = vmatmul.bf16.gmra.mxu0 %v141
  %v173 = vpop.f32.mrf.mxu0
  %v174 = vadd.f32 0.0, %v173
  %v175 = vpop.f32.mrf.mxu0
  %v176 = vadd.f32 0.0, %v175
  %177 = vmatmul.bf16.gmra.mxu0 %v144
  %v178 = vpop.f32.mrf.mxu0
  %v179 = vadd.f32 0.0, %v178
  %v180 = vpop.f32.mrf.mxu0
  %v181 = vadd.f32 0.0, %v180
  %182 = vmatmul.bf16.gmra.mxu0 %v147
  %v183 = vpop.f32.mrf.mxu0
  %v184 = vadd.f32 0.0, %v183
  %v185 = vpop.f32.mrf.mxu0
  %v186 = vadd.f32 0.0, %v185
  %187 = vmatmul.bf16.gmra.mxu0 %v150
  %v188 = vpop.f32.mrf.mxu0
  %v189 = vadd.f32 0.0, %v188
  %v190 = vpop.f32.mrf.mxu0
  %v191 = vadd.f32 0.0, %v190
  %192 = vmatmul.bf16.gmra.mxu0 %v153
  %v193 = vpop.f32.mrf.mxu0
  %v194 = vadd.f32 0.0, %v193
  %v195 = vpop.f32.mrf.mxu0
  %v196 = vadd.f32 0.0, %v195
  %197 = vmatmul.bf16.gmra.mxu0 %v156
  %v198 = vpop.f32.mrf.mxu0
  %v199 = vadd.f32 0.0, %v198
  %v200 = vpop.f32.mrf.mxu0
  %v201 = vadd.f32 0.0, %v200
  %202 = vmatmul.bf16.gmra.mxu0 %v159
  %v203 = vpop.f32.mrf.mxu0
  %v204 = vadd.f32 0.0, %v203
  %v205 = vpop.f32.mrf.mxu0
  %v206 = vadd.f32 0.0, %v205
  %207 = vmatmul.bf16.gmra.mxu0 %v162
  %v208 = vpop.f32.mrf.mxu0
  %v209 = vadd.f32 0.0, %v208
  %v210 = vpop.f32.mrf.mxu0
  %v211 = vadd.f32 0.0, %v210
  %212 = vdwg.mxu0
  %v213 = vadd.f32 %v35, %v174
  %v214 = vadd.f32 %v36, %v176
  %v215 = vadd.f32 %v37, %v179
  %v216 = vadd.f32 %v38, %v181
  %v217 = vadd.f32 %v39, %v184
  %v218 = vadd.f32 %v40, %v186
  %v219 = vadd.f32 %v41, %v189
  %v220 = vadd.f32 %v42, %v191
  %v221 = vadd.f32 %v43, %v194
  %v222 = vadd.f32 %v44, %v196
  %v223 = vadd.f32 %v45, %v199
  %v224 = vadd.f32 %v46, %v201
  %v225 = vadd.f32 %v47, %v204
  %v226 = vadd.f32 %v48, %v206
  %v227 = vadd.f32 %v49, %v209
  %v228 = vadd.f32 %v50, %v211
  %229 = vst [vmem:[#allocation2] sm:$0xff] %v213
  %230 = vst [vmem:[#allocation2 + $0x8] sm:$0xff] %v214
  %231 = vst [vmem:[#allocation2 + $0x10] sm:$0xff] %v215
  %232 = vst [vmem:[#allocation2 + $0x18] sm:$0xff] %v216
  %233 = vst [vmem:[#allocation2 + $0x20] sm:$0xff] %v217
  %234 = vst [vmem:[#allocation2 + $0x28] sm:$0xff] %v218
  %235 = vst [vmem:[#allocation2 + $0x30] sm:$0xff] %v219
  %236 = vst [vmem:[#allocation2 + $0x38] sm:$0xff] %v220
  %237 = vst [vmem:[#allocation2 + $0x40] sm:$0xff] %v221
  %238 = vst [vmem:[#allocation2 + $0x48] sm:$0xff] %v222
  %239 = vst [vmem:[#allocation2 + $0x50] sm:$0xff] %v223
  %240 = vst [vmem:[#allocation2 + $0x58] sm:$0xff] %v224
  %241 = vst [vmem:[#allocation2 + $0x60] sm:$0xff] %v225
  %242 = vst [vmem:[#allocation2 + $0x68] sm:$0xff] %v226
  %243 = vst [vmem:[#allocation2 + $0x70] sm:$0xff] %v227
  %244 = vst [vmem:[#allocation2 + $0x78] sm:$0xff] %v228
  // Predicated region
  $region18: #{inception_generator_forward.31} parent=0 // pred_check
    %p245 = pneg %p15
  $region19: #{inception_generator_forward.31} parent=0 // pred_check_branch
    %247 = sbr.rel (%p245) target = $region21
  $region20: #{inception_generator_forward.31} parent=0 // pred_region
    %v248 = vld [vmem:[#allocation2] sm:$0xff]
    %v249 = vld [vmem:[#allocation2 + $0x8] sm:$0xff]
    %v250 = vld [vmem:[#allocation2 + $0x10] sm:$0xff]
    %v251 = vld [vmem:[#allocation2 + $0x18] sm:$0xff]
    %v252 = vld [vmem:[#allocation2 + $0x20] sm:$0xff]
    %v253 = vld [vmem:[#allocation2 + $0x28] sm:$0xff]
    %v254 = vld [vmem:[#allocation2 + $0x30] sm:$0xff]
    %v255 = vld [vmem:[#allocation2 + $0x38] sm:$0xff]
    %v256 = vld [vmem:[#allocation2 + $0x40] sm:$0xff]
    %v257 = vld [vmem:[#allocation2 + $0x48] sm:$0xff]
    %v258 = vld [vmem:[#allocation2 + $0x50] sm:$0xff]
    %v259 = vld [vmem:[#allocation2 + $0x58] sm:$0xff]
    %v260 = vld [vmem:[#allocation2 + $0x60] sm:$0xff]
    %v261 = vld [vmem:[#allocation2 + $0x68] sm:$0xff]
    %v262 = vld [vmem:[#allocation2 + $0x70] sm:$0xff]
    %v263 = vld [vmem:[#allocation2 + $0x78] sm:$0xff]
    %v264 = vld [vmem:[%s2] sm:$0x1]
    %v266 = vperm.slane %v264, 0
    %v268 = vadd.f32 %v248, %v266
    %v269 = vadd.f32 %v249, %v266
    %v270 = vadd.f32 %v250, %v266
    %v271 = vadd.f32 %v251, %v266
    %v272 = vadd.f32 %v252, %v266
    %v273 = vadd.f32 %v253, %v266
    %v274 = vadd.f32 %v254, %v266
    %v275 = vadd.f32 %v255, %v266
    %v276 = vadd.f32 %v256, %v266
    %v277 = vadd.f32 %v257, %v266
    %v278 = vadd.f32 %v258, %v266
    %v279 = vadd.f32 %v259, %v266
    %v280 = vadd.f32 %v260, %v266
    %v281 = vadd.f32 %v261, %v266
    %v282 = vadd.f32 %v262, %v266
    %v283 = vadd.f32 %v263, %v266
    %v284 = vpack.c.bf16 %v268, %v268
    %v285 = vpack.c.bf16 %v269, %v269
    %v286 = vpack.c.bf16 %v270, %v270
    %v287 = vpack.c.bf16 %v271, %v271
    %v288 = vpack.c.bf16 %v272, %v272
    %v289 = vpack.c.bf16 %v273, %v273
    %v290 = vpack.c.bf16 %v274, %v274
    %v291 = vpack.c.bf16 %v275, %v275
    %v292 = vpack.c.bf16 %v276, %v276
    %v293 = vpack.c.bf16 %v277, %v277
    %v294 = vpack.c.bf16 %v278, %v278
    %v295 = vpack.c.bf16 %v279, %v279
    %v296 = vpack.c.bf16 %v280, %v280
    %v297 = vpack.c.bf16 %v281, %v281
    %v298 = vpack.c.bf16 %v282, %v282
    %v299 = vpack.c.bf16 %v283, %v283
    %300 = vst [vmem:[%s3] sm:$0xf] %v284
    %301 = vst [vmem:[%s3 + $0x4] sm:$0xf] %v285
    %302 = vst [vmem:[%s3 + $0x8] sm:$0xf] %v286
    %303 = vst [vmem:[%s3 + $0xc] sm:$0xf] %v287
    %304 = vst [vmem:[%s3 + $0x10] sm:$0xf] %v288
    %305 = vst [vmem:[%s3 + $0x14] sm:$0xf] %v289
    %306 = vst [vmem:[%s3 + $0x18] sm:$0xf] %v290
    %307 = vst [vmem:[%s3 + $0x1c] sm:$0xf] %v291
    %308 = vst [vmem:[%s3 + $0x20] sm:$0xf] %v292
    %309 = vst [vmem:[%s3 + $0x24] sm:$0xf] %v293
    %310 = vst [vmem:[%s3 + $0x28] sm:$0xf] %v294
    %311 = vst [vmem:[%s3 + $0x2c] sm:$0xf] %v295
    %312 = vst [vmem:[%s3 + $0x30] sm:$0xf] %v296
    %313 = vst [vmem:[%s3 + $0x34] sm:$0xf] %v297
    %314 = vst [vmem:[%s3 + $0x38] sm:$0xf] %v298
    %315 = vst [vmem:[%s3 + $0x3c] sm:$0xf] %v299
  $region21: #{inception_generator_forward.31} parent=0 // pred_fallthru
    _
  // Predicated region
  $region22: #{inception_generator_forward.31} parent=0 // pred_check
    _
  $region23: #{inception_generator_forward.31} parent=0 // pred_check_branch
    %317 = sbr.rel (0) target = $region25
  $region24: #{inception_generator_forward.31} parent=0 // pred_region
    _
  $region25: #{inception_generator_forward.31} parent=0 // pred_fallthru
    _
  // Predicated region
  $region26: #{inception_generator_forward.31} parent=0 // pred_check
    _
  $region27: #{inception_generator_forward.31} parent=0 // pred_check_branch
    %319 = sbr.rel (0) target = $region29
  $region28: #{inception_generator_forward.31} parent=0 // pred_region
    _
  $region29: #{inception_generator_forward.31} parent=0 // pred_fallthru
    _

// kernel: inception_generator_forward.32
$region0: #{inception_generator_forward.32}
  #allocation0 [shape = 'u32[]', space=smem, size = 0x4, offset = 0x4, fixed_abs, tag = 'smem constant byte address 0x4 - core index']
  #allocation1 [shape = 'u32[72,128]{1,0:T(1,128)}', space=vmem, size = 0x9000, scoped, tag = 'internal scratch']
  %s0 = inlined_call_operand.vmem [shape: bf16[2,256,8], index: 0, kind: input, shape index: {}]
  %s1 = inlined_call_operand.vmem [shape: bf16[2,256,8], index: 1, kind: output, shape index: {}]
  %s2 = sld [smem:[#allocation0]]
  $region37: #{inception_generator_forward.32} parent=0
    _
  %s4 = ssub.s32 1, %s2
  %s5 = scalar_select 0, %s4, %s2
  loop: start=0, step=1, limit=4
  $region2: #{inception_generator_forward.32} parent=0 // loop_pre_header
    _
  $region3: #{inception_generator_forward.32} parent=0 // loop_header
    %s7 = sphi 0, %s11
    %p8 = scmp.ge.s32.totalorder %s7, 4
    %s17 = sphi 0, %s19
    %s20 = sphi 0, %s17
    %s21 = sphi 0, %s20
    %s37 = sphi 0, %s21
    %s43 = sphi 0, %s45
    %s46 = sphi 0, %s43
    %s47 = sphi 0, %s46
    %s63 = sphi 0, %s47
  $region4: #{inception_generator_forward.32} parent=0 // loop_header_branch
    %10 = sbr.rel (%p8) target = $region8
  $region5: #{inception_generator_forward.32} parent=0 // loop_body
    %s12 = ssub.s32 %s7, 1
    %s13 = ssub.s32 %s7, 2
    %s14 = sadd.s32 %s7, 1
    %s15 = ssub.s32 %s7, %s14
    %p16 = scmp.eq.s32.totalorder %s15, 0
    %s18 = sadd.s32 %s17, 1
    %s19 = scalar_select %p16, %s17, %s18
    %p22 = pneg %p16
    %p23 = scmp.eq.s32.totalorder %s7, 1
    %p24 = por %p22, %p23
    %p25 = scmp.ne.s32.totalorder %s17, %s20
    %p26 = scmp.eq.s32.totalorder %s7, 0
    %p27 = por %p25, %p26
    %p28 = scmp.ne.s32.totalorder %s17, %s20
    %p29 = scmp.eq.s32.totalorder %s12, 1
    %p30 = por %p28, %p29
    %p31 = scmp.ne.s32.totalorder %s20, %s21
    %p32 = scmp.eq.s32.totalorder %s12, 0
    %p33 = por %p31, %p32
    %p34 = scmp.ne.s32.totalorder %s20, %s21
    %p35 = scmp.eq.s32.totalorder %s13, 1
    %p36 = por %p34, %p35
    %p38 = scmp.ne.s32.totalorder %s21, %s37
    %p39 = scmp.eq.s32.totalorder %s13, 0
    %p40 = por %p38, %p39
    %s41 = ssub.s32 %s7, %s14
    %p42 = scmp.eq.s32.totalorder %s41, 0
    %s44 = sadd.s32 %s43, 1
    %s45 = scalar_select %p42, %s43, %s44
    %p48 = pneg %p42
    %p49 = scmp.eq.s32.totalorder %s7, 1
    %p50 = por %p48, %p49
    %p51 = scmp.ne.s32.totalorder %s43, %s46
    %p52 = scmp.eq.s32.totalorder %s7, 0
    %p53 = por %p51, %p52
    %p54 = scmp.ne.s32.totalorder %s43, %s46
    %p55 = scmp.eq.s32.totalorder %s12, 1
    %p56 = por %p54, %p55
    %p57 = scmp.ne.s32.totalorder %s46, %s47
    %p58 = scmp.eq.s32.totalorder %s12, 0
    %p59 = por %p57, %p58
    %p60 = scmp.ne.s32.totalorder %s46, %s47
    %p61 = scmp.eq.s32.totalorder %s13, 1
    %p62 = por %p60, %p61
    %p64 = scmp.ne.s32.totalorder %s47, %s63
    %p65 = scmp.eq.s32.totalorder %s13, 0
    %p66 = por %p64, %p65
    %p67 = scmp.le.s32.totalorder 1, %s7
    %p68 = scmp.lt.s32.totalorder %s7, 3
    %p69 = pnand %p67, %p68
    %p70 = pneg %p69
    // Predicated region
    $region9: #{inception_generator_forward.32} parent=5 // pred_check
      _
    $region10: #{inception_generator_forward.32} parent=5 // pred_check_branch
      %72 = sbr.rel (%p69) target = $region12
    $region11: #{inception_generator_forward.32} parent=5 // pred_region
      %s73 = ssub.s32 %s7, 1
    $region12: #{inception_generator_forward.32} parent=5 // pred_fallthru
      _
    %p74 = scmp.lt.s32.totalorder %s7, 2
    // Predicated region
    $region13: #{inception_generator_forward.32} parent=5 // pred_check
      %p75 = pneg %p74
    $region14: #{inception_generator_forward.32} parent=5 // pred_check_branch
      %77 = sbr.rel (%p75) target = $region16
    $region15: #{inception_generator_forward.32} parent=5 // pred_region
      // Predicated region
      $region17: #{inception_generator_forward.32} parent=15 // pred_check
        %p78 = pneg %p27
      $region18: #{inception_generator_forward.32} parent=15 // pred_check_branch
        %80 = sbr.rel (%p78) target = $region20
      $region19: #{inception_generator_forward.32} parent=15 // pred_region
        %p81 = scmp.lt.s32.totalorder %s7, 1
        %s82 = scalar_select %p81, %s7, 1
        %s83 = smul.addr %s82, 32
        %s84 = smul.addr %s83, 4
        %s85 = scalar_lea.vmem %s0, %s84
      $region20: #{inception_generator_forward.32} parent=15 // pred_fallthru
        _
    $region16: #{inception_generator_forward.32} parent=5 // pred_fallthru
      _
    %p86 = scmp.le.s32.totalorder 1, %s7
    %p87 = scmp.lt.s32.totalorder %s7, 3
    %p88 = pnand %p86, %p87
    %p89 = pneg %p88
    // Predicated region
    $region21: #{inception_generator_forward.32} parent=5 // pred_check
      _
    $region22: #{inception_generator_forward.32} parent=5 // pred_check_branch
      %91 = sbr.rel (%p88) target = $region24
    $region23: #{inception_generator_forward.32} parent=5 // pred_region
      %s92 = ssub.s32 %s7, 1
      %p93 = scmp.lt.s32.totalorder %s12, 1
      %s94 = scalar_select %p93, %s12, 1
      %s95 = smul.addr %s94, 32
      %s96 = smul.addr %s95, 4
      %s97 = scalar_lea.vmem %s0, %s96
      %p98 = pneg %p33
      %p99 = pneg %p30
      %p100 = pneg %p59
      %p101 = pneg %p56
      %p102 = scmp.lt.s32.totalorder %s12, 1
      %s103 = scalar_select %p102, %s12, 1
      %s104 = smul.addr %s103, 32
      %s105 = smul.addr %s104, 4
      %s106 = scalar_lea.vmem %s1, %s105
      %p107 = scmp.lt.s32.totalorder %s12, 1
      %s108 = scalar_select %p107, %s12, 1
      %s109 = smul.addr %s108, 32
      %s110 = smul.addr %s109, 4
      %s111 = scalar_lea.vmem %s0, %s110
      %p112 = scmp.lt.s32.totalorder %s12, 1
      %s113 = scalar_select %p112, %s12, 1
      %s114 = smul.addr %s113, 32
      %s115 = smul.addr %s114, 4
      %s116 = scalar_lea.vmem %s1, %s115
      %v117 = vld [vmem:[%s111] sm:$0xf]
      %v118 = vld [vmem:[%s111 + $0x4] sm:$0xf]
      %v119 = vld [vmem:[%s111 + $0x8] sm:$0xf]
      %v120 = vld [vmem:[%s111 + $0xc] sm:$0xf]
      %v121 = vld [vmem:[%s111 + $0x10] sm:$0xf]
      %v122 = vld [vmem:[%s111 + $0x14] sm:$0xf]
      %v123 = vld [vmem:[%s111 + $0x18] sm:$0xf]
      %v124 = vld [vmem:[%s111 + $0x1c] sm:$0xf]
      %v125 = vld [vmem:[%s111 + $0x20] sm:$0xf]
      %v126 = vld [vmem:[%s111 + $0x24] sm:$0xf]
      %v127 = vld [vmem:[%s111 + $0x28] sm:$0xf]
      %v128 = vld [vmem:[%s111 + $0x2c] sm:$0xf]
      %v129 = vld [vmem:[%s111 + $0x30] sm:$0xf]
      %v130 = vld [vmem:[%s111 + $0x34] sm:$0xf]
      %v131 = vld [vmem:[%s111 + $0x38] sm:$0xf]
      %v132 = vld [vmem:[%s111 + $0x3c] sm:$0xf]
      %v133 = vld [vmem:[%s111 + $0x40] sm:$0xf]
      %v134 = vld [vmem:[%s111 + $0x44] sm:$0xf]
      %v135 = vld [vmem:[%s111 + $0x48] sm:$0xf]
      %v136 = vld [vmem:[%s111 + $0x4c] sm:$0xf]
      %v137 = vld [vmem:[%s111 + $0x50] sm:$0xf]
      %v138 = vld [vmem:[%s111 + $0x54] sm:$0xf]
      %v139 = vld [vmem:[%s111 + $0x58] sm:$0xf]
      %v140 = vld [vmem:[%s111 + $0x5c] sm:$0xf]
      %v141 = vld [vmem:[%s111 + $0x60] sm:$0xf]
      %v142 = vld [vmem:[%s111 + $0x64] sm:$0xf]
      %v143 = vld [vmem:[%s111 + $0x68] sm:$0xf]
      %v144 = vld [vmem:[%s111 + $0x6c] sm:$0xf]
      %v145 = vld [vmem:[%s111 + $0x70] sm:$0xf]
      %v146 = vld [vmem:[%s111 + $0x74] sm:$0xf]
      %v147 = vld [vmem:[%s111 + $0x78] sm:$0xf]
      %v148 = vld [vmem:[%s111 + $0x7c] sm:$0xf]
      %v149 = vunpack.c.l.bf16 %v117
      %v150 = vunpack.c.l.bf16 %v118
      %v151 = vunpack.c.l.bf16 %v119
      %v152 = vunpack.c.l.bf16 %v120
      %v153 = vunpack.c.l.bf16 %v121
      %v154 = vunpack.c.l.bf16 %v122
      %v155 = vunpack.c.l.bf16 %v123
      %v156 = vunpack.c.l.bf16 %v124
      %v157 = vunpack.c.l.bf16 %v125
      %v158 = vunpack.c.l.bf16 %v126
      %v159 = vunpack.c.l.bf16 %v127
      %v160 = vunpack.c.l.bf16 %v128
      %v161 = vunpack.c.l.bf16 %v129
      %v162 = vunpack.c.l.bf16 %v130
      %v163 = vunpack.c.l.bf16 %v131
      %v164 = vunpack.c.l.bf16 %v132
      %v165 = vunpack.c.l.bf16 %v133
      %v166 = vunpack.c.l.bf16 %v134
      %v167 = vunpack.c.l.bf16 %v135
      %v168 = vunpack.c.l.bf16 %v136
      %v169 = vunpack.c.l.bf16 %v137
      %v170 = vunpack.c.l.bf16 %v138
      %v171 = vunpack.c.l.bf16 %v139
      %v172 = vunpack.c.l.bf16 %v140
      %v173 = vunpack.c.l.bf16 %v141
      %v174 = vunpack.c.l.bf16 %v142
      %v175 = vunpack.c.l.bf16 %v143
      %v176 = vunpack.c.l.bf16 %v144
      %v177 = vunpack.c.l.bf16 %v145
      %v178 = vunpack.c.l.bf16 %v146
      %v179 = vunpack.c.l.bf16 %v147
      %v180 = vunpack.c.l.bf16 %v148
      %vm181 = vcmask 64512
      %v182 = vsel %vm181, %v149, 0.0
      %v183 = vsel %vm181, %v150, 0.0
      %v184 = vadd.f32 %v182, %v183
      %v185 = vsel %vm181, %v151, 0.0
      %v186 = vadd.f32 %v184, %v185
      %v187 = vsel %vm181, %v152, 0.0
      %v188 = vadd.f32 %v186, %v187
      %v189 = vsel %vm181, %v153, 0.0
      %v190 = vadd.f32 %v188, %v189
      %v191 = vsel %vm181, %v154, 0.0
      %v192 = vadd.f32 %v190, %v191
      %v193 = vsel %vm181, %v155, 0.0
      %v194 = vadd.f32 %v192, %v193
      %v195 = vsel %vm181, %v156, 0.0
      %v196 = vadd.f32 %v194, %v195
      %v197 = vsel %vm181, %v157, 0.0
      %v198 = vadd.f32 %v196, %v197
      %v199 = vsel %vm181, %v158, 0.0
      %v200 = vadd.f32 %v198, %v199
      %v201 = vsel %vm181, %v159, 0.0
      %v202 = vadd.f32 %v200, %v201
      %v203 = vsel %vm181, %v160, 0.0
      %v204 = vadd.f32 %v202, %v203
      %v205 = vsel %vm181, %v161, 0.0
      %v206 = vadd.f32 %v204, %v205
      %v207 = vsel %vm181, %v162, 0.0
      %v208 = vadd.f32 %v206, %v207
      %v209 = vsel %vm181, %v163, 0.0
      %v210 = vadd.f32 %v208, %v209
      %v211 = vsel %vm181, %v164, 0.0
      %v212 = vadd.f32 %v210, %v211
      %v213 = vsel %vm181, %v165, 0.0
      %v214 = vadd.f32 %v212, %v213
      %v215 = vsel %vm181, %v166, 0.0
      %v216 = vadd.f32 %v214, %v215
      %v217 = vsel %vm181, %v167, 0.0
      %v218 = vadd.f32 %v216, %v217
      %v219 = vsel %vm181, %v168, 0.0
      %v220 = vadd.f32 %v218, %v219
      %v221 = vsel %vm181, %v169, 0.0
      %v222 = vadd.f32 %v220, %v221
      %v223 = vsel %vm181, %v170, 0.0
      %v224 = vadd.f32 %v222, %v223
      %v225 = vsel %vm181, %v171, 0.0
      %v226 = vadd.f32 %v224, %v225
      %v227 = vsel %vm181, %v172, 0.0
      %v228 = vadd.f32 %v226, %v227
      %v229 = vsel %vm181, %v173, 0.0
      %v230 = vadd.f32 %v228, %v229
      %v231 = vsel %vm181, %v174, 0.0
      %v232 = vadd.f32 %v230, %v231
      %v233 = vsel %vm181, %v175, 0.0
      %v234 = vadd.f32 %v232, %v233
      %v235 = vsel %vm181, %v176, 0.0
      %v236 = vadd.f32 %v234, %v235
      %v237 = vsel %vm181, %v177, 0.0
      %v238 = vadd.f32 %v236, %v237
      %v239 = vsel %vm181, %v178, 0.0
      %v240 = vadd.f32 %v238, %v239
      %v241 = vsel %vm181, %v179, 0.0
      %v242 = vadd.f32 %v240, %v241
      %v243 = vsel %vm181, %v180, 0.0
      %v244 = vadd.f32 %v242, %v243
      %v245 = vrot.slane %v244, 4
      %v246 = vadd.f32 %v244, %v245
      %v247 = vrot.slane %v246, 2
      %v248 = vadd.f32 %v246, %v247
      %v249 = vrot.slane %v248, 1
      %v250 = vadd.f32 %v248, %v249
      %v251 = vmul.f32 %v250, 0.00390625
      %v252 = vmul.f32 %v149, %v149
      %v253 = vmul.f32 %v150, %v150
      %v254 = vmul.f32 %v151, %v151
      %v255 = vmul.f32 %v152, %v152
      %v256 = vmul.f32 %v153, %v153
      %v257 = vmul.f32 %v154, %v154
      %v258 = vmul.f32 %v155, %v155
      %v259 = vmul.f32 %v156, %v156
      %v260 = vmul.f32 %v157, %v157
      %v261 = vmul.f32 %v158, %v158
      %v262 = vmul.f32 %v159, %v159
      %v263 = vmul.f32 %v160, %v160
      %v264 = vmul.f32 %v161, %v161
      %v265 = vmul.f32 %v162, %v162
      %v266 = vmul.f32 %v163, %v163
      %v267 = vmul.f32 %v164, %v164
      %v268 = vmul.f32 %v165, %v165
      %v269 = vmul.f32 %v166, %v166
      %v270 = vmul.f32 %v167, %v167
      %v271 = vmul.f32 %v168, %v168
      %v272 = vmul.f32 %v169, %v169
      %v273 = vmul.f32 %v170, %v170
      %v274 = vmul.f32 %v171, %v171
      %v275 = vmul.f32 %v172, %v172
      %v276 = vmul.f32 %v173, %v173
      %v277 = vmul.f32 %v174, %v174
      %v278 = vmul.f32 %v175, %v175
      %v279 = vmul.f32 %v176, %v176
      %v280 = vmul.f32 %v177, %v177
      %v281 = vmul.f32 %v178, %v178
      %v282 = vmul.f32 %v179, %v179
      %v283 = vmul.f32 %v180, %v180
      %v284 = vsel %vm181, %v252, 0.0
      %v285 = vsel %vm181, %v253, 0.0
      %v286 = vadd.f32 %v284, %v285
      %v287 = vsel %vm181, %v254, 0.0
      %v288 = vadd.f32 %v286, %v287
      %v289 = vsel %vm181, %v255, 0.0
      %v290 = vadd.f32 %v288, %v289
      %v291 = vsel %vm181, %v256, 0.0
      %v292 = vadd.f32 %v290, %v291
      %v293 = vsel %vm181, %v257, 0.0
      %v294 = vadd.f32 %v292, %v293
      %v295 = vsel %vm181, %v258, 0.0
      %v296 = vadd.f32 %v294, %v295
      %v297 = vsel %vm181, %v259, 0.0
      %v298 = vadd.f32 %v296, %v297
      %v299 = vsel %vm181, %v260, 0.0
      %v300 = vadd.f32 %v298, %v299
      %v301 = vsel %vm181, %v261, 0.0
      %v302 = vadd.f32 %v300, %v301
      %v303 = vsel %vm181, %v262, 0.0
      %v304 = vadd.f32 %v302, %v303
      %v305 = vsel %vm181, %v263, 0.0
      %v306 = vadd.f32 %v304, %v305
      %v307 = vsel %vm181, %v264, 0.0
      %v308 = vadd.f32 %v306, %v307
      %v309 = vsel %vm181, %v265, 0.0
      %v310 = vadd.f32 %v308, %v309
      %v311 = vsel %vm181, %v266, 0.0
      %v312 = vadd.f32 %v310, %v311
      %v313 = vsel %vm181, %v267, 0.0
      %v314 = vadd.f32 %v312, %v313
      %v315 = vsel %vm181, %v268, 0.0
      %v316 = vadd.f32 %v314, %v315
      %v317 = vsel %vm181, %v269, 0.0
      %v318 = vadd.f32 %v316, %v317
      %v319 = vsel %vm181, %v270, 0.0
      %v320 = vadd.f32 %v318, %v319
      %v321 = vsel %vm181, %v271, 0.0
      %v322 = vadd.f32 %v320, %v321
      %v323 = vsel %vm181, %v272, 0.0
      %v324 = vadd.f32 %v322, %v323
      %v325 = vsel %vm181, %v273, 0.0
      %v326 = vadd.f32 %v324, %v325
      %v327 = vsel %vm181, %v274, 0.0
      %v328 = vadd.f32 %v326, %v327
      %v329 = vsel %vm181, %v275, 0.0
      %v330 = vadd.f32 %v328, %v329
      %v331 = vsel %vm181, %v276, 0.0
      %v332 = vadd.f32 %v330, %v331
      %v333 = vsel %vm181, %v277, 0.0
      %v334 = vadd.f32 %v332, %v333
      %v335 = vsel %vm181, %v278, 0.0
      %v336 = vadd.f32 %v334, %v335
      %v337 = vsel %vm181, %v279, 0.0
      %v338 = vadd.f32 %v336, %v337
      %v339 = vsel %vm181, %v280, 0.0
      %v340 = vadd.f32 %v338, %v339
      %v341 = vsel %vm181, %v281, 0.0
      %v342 = vadd.f32 %v340, %v341
      %v343 = vsel %vm181, %v282, 0.0
      %v344 = vadd.f32 %v342, %v343
      %v345 = vsel %vm181, %v283, 0.0
      %v346 = vadd.f32 %v344, %v345
      %v347 = vrot.slane %v346, 4
      %v348 = vadd.f32 %v346, %v347
      %v349 = vrot.slane %v348, 2
      %v350 = vadd.f32 %v348, %v349
      %v351 = vrot.slane %v350, 1
      %v352 = vadd.f32 %v350, %v351
      %v353 = vmul.f32 %v352, 0.00390625
      %v354 = vmul.f32 %v251, %v251
      %v355 = vsub.f32 %v353, %v354
      %v356 = vsub.f32 %v149, %v251
      %v357 = vsub.f32 %v150, %v251
      %v358 = vsub.f32 %v151, %v251
      %v359 = vsub.f32 %v152, %v251
      %v360 = vsub.f32 %v153, %v251
      %v361 = vsub.f32 %v154, %v251
      %v362 = vsub.f32 %v155, %v251
      %v363 = vsub.f32 %v156, %v251
      %v364 = vsub.f32 %v157, %v251
      %v365 = vsub.f32 %v158, %v251
      %v366 = vsub.f32 %v159, %v251
      %v367 = vsub.f32 %v160, %v251
      %v368 = vsub.f32 %v161, %v251
      %v369 = vsub.f32 %v162, %v251
      %v370 = vsub.f32 %v163, %v251
      %v371 = vsub.f32 %v164, %v251
      %v372 = vsub.f32 %v165, %v251
      %v373 = vsub.f32 %v166, %v251
      %v374 = vsub.f32 %v167, %v251
      %v375 = vsub.f32 %v168, %v251
      %v376 = vsub.f32 %v169, %v251
      %v377 = vsub.f32 %v170, %v251
      %v378 = vsub.f32 %v171, %v251
      %v379 = vsub.f32 %v172, %v251
      %v380 = vsub.f32 %v173, %v251
      %v381 = vsub.f32 %v174, %v251
      %v382 = vsub.f32 %v175, %v251
      %v383 = vsub.f32 %v176, %v251
      %v384 = vsub.f32 %v177, %v251
      %v385 = vsub.f32 %v178, %v251
      %v386 = vsub.f32 %v179, %v251
      %v387 = vsub.f32 %v180, %v251
      %v388 = vmax.f32 %v355, 0.0
      %v389 = vadd.f32 %v388, 1e-05
      %v390 = vrsqrt.pop %v389
      %v391 = vmul.f32 %v390, %v389
      %v392 = vmul.f32 %v391, %v390
      %v393 = vmul.f32 0.5, %v392
      %v394 = vsub.f32 1.5, %v393
      %v395 = vmul.f32 %v390, %v394
      %vm396 = vweird.f32 %v389
      %vm397 = vweird.f32 %v390
      %vm398 = vmor %vm396, %vm397
      %v399 = vsel %vm398, %v390, %v395
      %v400 = vmul.f32 %v356, %v399
      %v401 = vmul.f32 %v357, %v399
      %v402 = vmul.f32 %v358, %v399
      %v403 = vmul.f32 %v359, %v399
      %v404 = vmul.f32 %v360, %v399
      %v405 = vmul.f32 %v361, %v399
      %v406 = vmul.f32 %v362, %v399
      %v407 = vmul.f32 %v363, %v399
      %v408 = vmul.f32 %v364, %v399
      %v409 = vmul.f32 %v365, %v399
      %v410 = vmul.f32 %v366, %v399
      %v411 = vmul.f32 %v367, %v399
      %v412 = vmul.f32 %v368, %v399
      %v413 = vmul.f32 %v369, %v399
      %v414 = vmul.f32 %v370, %v399
      %v415 = vmul.f32 %v371, %v399
      %v416 = vmul.f32 %v372, %v399
      %v417 = vmul.f32 %v373, %v399
      %v418 = vmul.f32 %v374, %v399
      %v419 = vmul.f32 %v375, %v399
      %v420 = vmul.f32 %v376, %v399
      %v421 = vmul.f32 %v377, %v399
      %v422 = vmul.f32 %v378, %v399
      %v423 = vmul.f32 %v379, %v399
      %v424 = vmul.f32 %v380, %v399
      %v425 = vmul.f32 %v381, %v399
      %v426 = vmul.f32 %v382, %v399
      %v427 = vmul.f32 %v383, %v399
      %v428 = vmul.f32 %v384, %v399
      %v429 = vmul.f32 %v385, %v399
      %v430 = vmul.f32 %v386, %v399
      %v431 = vmul.f32 %v387, %v399
      %v432 = vmax.f32 %v400, 0.0
      %v433 = vmax.f32 %v401, 0.0
      %v434 = vmax.f32 %v402, 0.0
      %v435 = vmax.f32 %v403, 0.0
      %v436 = vmax.f32 %v404, 0.0
      %v437 = vmax.f32 %v405, 0.0
      %v438 = vmax.f32 %v406, 0.0
      %v439 = vmax.f32 %v407, 0.0
      %v440 = vmax.f32 %v408, 0.0
      %v441 = vmax.f32 %v409, 0.0
      %v442 = vmax.f32 %v410, 0.0
      %v443 = vmax.f32 %v411, 0.0
      %v444 = vmax.f32 %v412, 0.0
      %v445 = vmax.f32 %v413, 0.0
      %v446 = vmax.f32 %v414, 0.0
      %v447 = vmax.f32 %v415, 0.0
      %v448 = vmax.f32 %v416, 0.0
      %v449 = vmax.f32 %v417, 0.0
      %v450 = vmax.f32 %v418, 0.0
      %v451 = vmax.f32 %v419, 0.0
      %v452 = vmax.f32 %v420, 0.0
      %v453 = vmax.f32 %v421, 0.0
      %v454 = vmax.f32 %v422, 0.0
      %v455 = vmax.f32 %v423, 0.0
      %v456 = vmax.f32 %v424, 0.0
      %v457 = vmax.f32 %v425, 0.0
      %v458 = vmax.f32 %v426, 0.0
      %v459 = vmax.f32 %v427, 0.0
      %v460 = vmax.f32 %v428, 0.0
      %v461 = vmax.f32 %v429, 0.0
      %v462 = vmax.f32 %v430, 0.0
      %v463 = vmax.f32 %v431, 0.0
      %v464 = vpack.c.bf16 %v432, %v432
      %v465 = vpack.c.bf16 %v433, %v433
      %v466 = vpack.c.bf16 %v434, %v434
      %v467 = vpack.c.bf16 %v435, %v435
      %v468 = vpack.c.bf16 %v436, %v436
      %v469 = vpack.c.bf16 %v437, %v437
      %v470 = vpack.c.bf16 %v438, %v438
      %v471 = vpack.c.bf16 %v439, %v439
      %v472 = vpack.c.bf16 %v440, %v440
      %v473 = vpack.c.bf16 %v441, %v441
      %v474 = vpack.c.bf16 %v442, %v442
      %v475 = vpack.c.bf16 %v443, %v443
      %v476 = vpack.c.bf16 %v444, %v444
      %v477 = vpack.c.bf16 %v445, %v445
      %v478 = vpack.c.bf16 %v446, %v446
      %v479 = vpack.c.bf16 %v447, %v447
      %v480 = vpack.c.bf16 %v448, %v448
      %v481 = vpack.c.bf16 %v449, %v449
      %v482 = vpack.c.bf16 %v450, %v450
      %v483 = vpack.c.bf16 %v451, %v451
      %v484 = vpack.c.bf16 %v452, %v452
      %v485 = vpack.c.bf16 %v453, %v453
      %v486 = vpack.c.bf16 %v454, %v454
      %v487 = vpack.c.bf16 %v455, %v455
      %v488 = vpack.c.bf16 %v456, %v456
      %v489 = vpack.c.bf16 %v457, %v457
      %v490 = vpack.c.bf16 %v458, %v458
      %v491 = vpack.c.bf16 %v459, %v459
      %v492 = vpack.c.bf16 %v460, %v460
      %v493 = vpack.c.bf16 %v461, %v461
      %v494 = vpack.c.bf16 %v462, %v462
      %v495 = vpack.c.bf16 %v463, %v463
      %vm496 = vcmask 60416
      %497 = vst.msk [vmem:[%s116] sm:$0xf] %vm496, %v464
      %498 = vst.msk [vmem:[%s116 + $0x4] sm:$0xf] %vm496, %v465
      %499 = vst.msk [vmem:[%s116 + $0x8] sm:$0xf] %vm496, %v466
      %500 = vst.msk [vmem:[%s116 + $0xc] sm:$0xf] %vm496, %v467
      %501 = vst.msk [vmem:[%s116 + $0x10] sm:$0xf] %vm496, %v468
      %502 = vst.msk [vmem:[%s116 + $0x14] sm:$0xf] %vm496, %v469
      %503 = vst.msk [vmem:[%s116 + $0x18] sm:$0xf] %vm496, %v470
      %504 = vst.msk [vmem:[%s116 + $0x1c] sm:$0xf] %vm496, %v471
      %505 = vst.msk [vmem:[%s116 + $0x20] sm:$0xf] %vm496, %v472
      %506 = vst.msk [vmem:[%s116 + $0x24] sm:$0xf] %vm496, %v473
      %507 = vst.msk [vmem:[%s116 + $0x28] sm:$0xf] %vm496, %v474
      %508 = vst.msk [vmem:[%s116 + $0x2c] sm:$0xf] %vm496, %v475
      %509 = vst.msk [vmem:[%s116 + $0x30] sm:$0xf] %vm496, %v476
      %510 = vst.msk [vmem:[%s116 + $0x34] sm:$0xf] %vm496, %v477
      %511 = vst.msk [vmem:[%s116 + $0x38] sm:$0xf] %vm496, %v478
      %512 = vst.msk [vmem:[%s116 + $0x3c] sm:$0xf] %vm496, %v479
      %513 = vst.msk [vmem:[%s116 + $0x40] sm:$0xf] %vm496, %v480
      %514 = vst.msk [vmem:[%s116 + $0x44] sm:$0xf] %vm496, %v481
      %515 = vst.msk [vmem:[%s116 + $0x48] sm:$0xf] %vm496, %v482
      %516 = vst.msk [vmem:[%s116 + $0x4c] sm:$0xf] %vm496, %v483
      %517 = vst.msk [vmem:[%s116 + $0x50] sm:$0xf] %vm496, %v484
      %518 = vst.msk [vmem:[%s116 + $0x54] sm:$0xf] %vm496, %v485
      %519 = vst.msk [vmem:[%s116 + $0x58] sm:$0xf] %vm496, %v486
      %520 = vst.msk [vmem:[%s116 + $0x5c] sm:$0xf] %vm496, %v487
      %521 = vst.msk [vmem:[%s116 + $0x60] sm:$0xf] %vm496, %v488
      %522 = vst.msk [vmem:[%s116 + $0x64] sm:$0xf] %vm496, %v489
      %523 = vst.msk [vmem:[%s116 + $0x68] sm:$0xf] %vm496, %v490
      %524 = vst.msk [vmem:[%s116 + $0x6c] sm:$0xf] %vm496, %v491
      %525 = vst.msk [vmem:[%s116 + $0x70] sm:$0xf] %vm496, %v492
      %526 = vst.msk [vmem:[%s116 + $0x74] sm:$0xf] %vm496, %v493
      %527 = vst.msk [vmem:[%s116 + $0x78] sm:$0xf] %vm496, %v494
      %528 = vst.msk [vmem:[%s116 + $0x7c] sm:$0xf] %vm496, %v495
      %p529 = scmp.lt.s32.totalorder %s12, 1
      %s530 = scalar_select %p529, %s12, 1
      %s531 = smul.addr %s530, 32
      %s532 = smul.addr %s531, 4
      %s533 = scalar_lea.vmem %s1, %s532
      // Predicated region
      $region25: #{inception_generator_forward.32} parent=23 // pred_check
        %p534 = pneg %p56
      $region26: #{inception_generator_forward.32} parent=23 // pred_check_branch
        %536 = sbr.rel (%p534) target = $region28
      $region27: #{inception_generator_forward.32} parent=23 // pred_region
        _
      $region28: #{inception_generator_forward.32} parent=23 // pred_fallthru
        _
    $region24: #{inception_generator_forward.32} parent=5 // pred_fallthru
      _
    %p537 = scmp.le.s32.totalorder 2, %s7
    // Predicated region
    $region29: #{inception_generator_forward.32} parent=5 // pred_check
      %p538 = pneg %p537
    $region30: #{inception_generator_forward.32} parent=5 // pred_check_branch
      %540 = sbr.rel (%p538) target = $region32
    $region31: #{inception_generator_forward.32} parent=5 // pred_region
      %s541 = ssub.s32 %s7, 2
      // Predicated region
      $region33: #{inception_generator_forward.32} parent=31 // pred_check
        %p542 = pneg %p62
      $region34: #{inception_generator_forward.32} parent=31 // pred_check_branch
        %544 = sbr.rel (%p542) target = $region36
      $region35: #{inception_generator_forward.32} parent=31 // pred_region
        %p545 = scmp.lt.s32.totalorder %s13, 1
        %s546 = scalar_select %p545, %s13, 1
        %s547 = smul.addr %s546, 32
        %s548 = smul.addr %s547, 4
        %s549 = scalar_lea.vmem %s1, %s548
      $region36: #{inception_generator_forward.32} parent=31 // pred_fallthru
        _
    $region32: #{inception_generator_forward.32} parent=5 // pred_fallthru
      _
  $region6: #{inception_generator_forward.32} parent=0 // loop_footer
    %s11 = sadd.s32 1, %s7
  $region7: #{inception_generator_forward.32} parent=0 // loop_footer_branch
    %6 = sbr.rel target = $region3
  $region8: #{inception_generator_forward.32} parent=0 // loop_exit
    _

// kernel: inception_generator_forward.33
$region0: #{inception_generator_forward.33}
  #allocation0 [shape = 'u32[]', space=smem, size = 0x4, offset = 0x4, fixed_abs, tag = 'smem constant byte address 0x4 - core index']
  #allocation1 [shape = 'u32[72,128]{1,0:T(1,128)}', space=vmem, size = 0x9000, scoped, tag = 'internal scratch']
  #allocation2 [shape = 'f32[256,128]{1,0:T(8,128)}', space=vmem, size = 0x20000, scoped, tag = 'scratch operand']
  %s0 = inlined_call_operand.vmem [shape: bf16[512,392], index: 0, kind: input, shape index: {}]
  %s1 = inlined_call_operand.vmem [shape: bf16[392,128], index: 1, kind: input, shape index: {}]
  %s2 = inlined_call_operand.vmem [shape: f32[1,128], index: 2, kind: input, shape index: {}]
  %s3 = inlined_call_operand.vmem [shape: f32[512,128], index: 3, kind: output, shape index: {}]
  %s4 = sld [smem:[#allocation0]]
  $region53: #{inception_generator_forward.33} parent=0
    _
  %s6 = ssub.s32 1, %s4
  %s7 = scalar_select 0, %s6, %s4
  loop: start=0, step=1, limit=4
  $region2: #{inception_generator_forward.33} parent=0 // loop_pre_header
    _
  $region3: #{inception_generator_forward.33} parent=0 // loop_header
    %s9 = sphi 0, %s13
    %p10 = scmp.ge.s32.totalorder %s9, 4
    %s16 = sphi 0, %s28
    %s17 = sphi 0, %s24
    %s18 = sphi 0, %s16
    %s19 = sphi 0, %s17
    %s20 = sphi 0, %s18
    %s21 = sphi 0, %s19
    %s33 = sphi 0, %s35
    %s36 = sphi 0, %s33
    %s37 = sphi 0, %s36
    %s53 = sphi 0, %s37
    %s59 = sphi 0, %s61
    %s62 = sphi 0, %s59
    %s63 = sphi 0, %s62
    %s79 = sphi 0, %s63
    %s83 = sphi 0, %s83
    %s85 = sphi 0, %s83
    %s86 = sphi 0, %s85
    %s100 = sphi 0, %s86
    %s106 = sphi 0, %s108
    %s109 = sphi 0, %s106
    %s110 = sphi 0, %s109
    %s126 = sphi 0, %s110
  $region4: #{inception_generator_forward.33} parent=0 // loop_header_branch
    %12 = sbr.rel (%p10) target = $region8
  $region5: #{inception_generator_forward.33} parent=0 // loop_body
    %s14 = ssub.s32 %s9, 1
    %s15 = ssub.s32 %s9, 2
    %s22 = sadd.s32 1, %s17
    %p23 = scmp.ge.s32.totalorder %s22, 1
    %s24 = scalar_select %p23, 0, %s22
    %s25 = sadd.s32 1, %s16
    %s26 = scalar_select %p23, %s25, %s16
    %p27 = scmp.ge.s32.totalorder %s26, 2
    %s28 = scalar_select %p27, 0, %s26
    %s29 = ssub.s32 %s16, %s28
    %s30 = ssub.s32 %s17, %s24
    %s31 = sor.u32 %s29, %s30
    %p32 = scmp.eq.s32.totalorder %s31, 0
    %s34 = sadd.s32 %s33, 1
    %s35 = scalar_select %p32, %s33, %s34
    %p38 = pneg %p32
    %p39 = scmp.eq.s32.totalorder %s9, 1
    %p40 = por %p38, %p39
    %p41 = scmp.ne.s32.totalorder %s33, %s36
    %p42 = scmp.eq.s32.totalorder %s9, 0
    %p43 = por %p41, %p42
    %p44 = scmp.ne.s32.totalorder %s33, %s36
    %p45 = scmp.eq.s32.totalorder %s14, 1
    %p46 = por %p44, %p45
    %p47 = scmp.ne.s32.totalorder %s36, %s37
    %p48 = scmp.eq.s32.totalorder %s14, 0
    %p49 = por %p47, %p48
    %p50 = scmp.ne.s32.totalorder %s36, %s37
    %p51 = scmp.eq.s32.totalorder %s15, 1
    %p52 = por %p50, %p51
    %p54 = scmp.ne.s32.totalorder %s37, %s53
    %p55 = scmp.eq.s32.totalorder %s15, 0
    %p56 = por %p54, %p55
    %s57 = ssub.s32 %s17, %s24
    %p58 = scmp.eq.s32.totalorder %s57, 0
    %s60 = sadd.s32 %s59, 1
    %s61 = scalar_select %p58, %s59, %s60
    %p64 = pneg %p58
    %p65 = scmp.eq.s32.totalorder %s9, 1
    %p66 = por %p64, %p65
    %p67 = scmp.ne.s32.totalorder %s59, %s62
    %p68 = scmp.eq.s32.totalorder %s9, 0
    %p69 = por %p67, %p68
    %p70 = scmp.ne.s32.totalorder %s59, %s62
    %p71 = scmp.eq.s32.totalorder %s14, 1
    %p72 = por %p70, %p71
    %p73 = scmp.ne.s32.totalorder %s62, %s63
    %p74 = scmp.eq.s32.totalorder %s14, 0
    %p75 = por %p73, %p74
    %p76 = scmp.ne.s32.totalorder %s62, %s63
    %p77 = scmp.eq.s32.totalorder %s15, 1
    %p78 = por %p76, %p77
    %p80 = scmp.ne.s32.totalorder %s63, %s79
    %p81 = scmp.eq.s32.totalorder %s15, 0
    %p82 = por %p80, %p81
    %s84 = sadd.s32 %s83, 1
    %p87 = scmp.eq.s32.totalorder %s9, 1
    %p88 = scmp.ne.s32.totalorder %s83, %s85
    %p89 = scmp.eq.s32.totalorder %s9, 0
    %p90 = por %p88, %p89
    %p91 = scmp.ne.s32.totalorder %s83, %s85
    %p92 = scmp.eq.s32.totalorder %s14, 1
    %p93 = por %p91, %p92
    %p94 = scmp.ne.s32.totalorder %s85, %s86
    %p95 = scmp.eq.s32.totalorder %s14, 0
    %p96 = por %p94, %p95
    %p97 = scmp.ne.s32.totalorder %s85, %s86
    %p98 = scmp.eq.s32.totalorder %s15, 1
    %p99 = por %p97, %p98
    %p101 = scmp.ne.s32.totalorder %s86, %s100
    %p102 = scmp.eq.s32.totalorder %s15, 0
    %p103 = por %p101, %p102
    %s104 = ssub.s32 %s16, %s28
    %p105 = scmp.eq.s32.totalorder %s104, 0
    %s107 = sadd.s32 %s106, 1
    %s108 = scalar_select %p105, %s106, %s107
    %p111 = pneg %p105
    %p112 = scmp.eq.s32.totalorder %s9, 1
    %p113 = por %p111, %p112
    %p114 = scmp.ne.s32.totalorder %s106, %s109
    %p115 = scmp.eq.s32.totalorder %s9, 0
    %p116 = por %p114, %p115
    %p117 = scmp.ne.s32.totalorder %s106, %s109
    %p118 = scmp.eq.s32.totalorder %s14, 1
    %p119 = por %p117, %p118
    %p120 = scmp.ne.s32.totalorder %s109, %s110
    %p121 = scmp.eq.s32.totalorder %s14, 0
    %p122 = por %p120, %p121
    %p123 = scmp.ne.s32.totalorder %s109, %s110
    %p124 = scmp.eq.s32.totalorder %s15, 1
    %p125 = por %p123, %p124
    %p127 = scmp.ne.s32.totalorder %s110, %s126
    %p128 = scmp.eq.s32.totalorder %s15, 0
    %p129 = por %p127, %p128
    %p130 = scmp.le.s32.totalorder 1, %s9
    %p131 = scmp.lt.s32.totalorder %s9, 3
    %p132 = pnand %p130, %p131
    %p133 = pneg %p132
    // Predicated region
    $region9: #{inception_generator_forward.33} parent=5 // pred_check
      _
    $region10: #{inception_generator_forward.33} parent=5 // pred_check_branch
      %135 = sbr.rel (%p132) target = $region12
    $region11: #{inception_generator_forward.33} parent=5 // pred_region
      %s136 = ssub.s32 %s9, 1
      // Predicated region
      $region13: #{inception_generator_forward.33} parent=11 // pred_check
        %p137 = pneg %p75
      $region14: #{inception_generator_forward.33} parent=11 // pred_check_branch
        %139 = sbr.rel (%p137) target = $region16
      $region15: #{inception_generator_forward.33} parent=11 // pred_region
        %s140 = smul.u32 49, %s19
        %p141 = scmp.lt.s32.totalorder %s140, 48
        %s142 = scalar_select %p141, %s140, 48
        %s143 = smul.addr %s142, 4
        %s144 = scalar_lea.vmem %s1, %s143
        %s145 = smul.u32 49, %s19
      $region16: #{inception_generator_forward.33} parent=11 // pred_fallthru
        _
      // Predicated region
      $region17: #{inception_generator_forward.33} parent=11 // pred_check
        %p146 = pneg %p96
      $region18: #{inception_generator_forward.33} parent=11 // pred_check_branch
        %148 = sbr.rel (%p146) target = $region20
      $region19: #{inception_generator_forward.33} parent=11 // pred_region
        _
      $region20: #{inception_generator_forward.33} parent=11 // pred_fallthru
        _
    $region12: #{inception_generator_forward.33} parent=5 // pred_fallthru
      _
    %p149 = scmp.lt.s32.totalorder %s9, 2
    // Predicated region
    $region21: #{inception_generator_forward.33} parent=5 // pred_check
      %p150 = pneg %p149
    $region22: #{inception_generator_forward.33} parent=5 // pred_check_branch
      %152 = sbr.rel (%p150) target = $region24
    $region23: #{inception_generator_forward.33} parent=5 // pred_region
      // Predicated region
      $region25: #{inception_generator_forward.33} parent=23 // pred_check
        %p153 = pneg %p43
      $region26: #{inception_generator_forward.33} parent=23 // pred_check_branch
        %155 = sbr.rel (%p153) target = $region28
      $region27: #{inception_generator_forward.33} parent=23 // pred_region
        %s156 = smul.u32 32, %s16
        %s157 = smul.u32 4, %s17
        %p158 = scmp.lt.s32.totalorder %s156, 63
        %s159 = scalar_select %p158, %s156, 63
        %p160 = scmp.lt.s32.totalorder %s157, 3
        %s161 = scalar_select %p160, %s157, 3
        %s162 = smul.addr %s159, 4
        %s163 = sadd.s32 %s161, %s162
        %s164 = smul.addr %s163, 4
        %s165 = scalar_lea.vmem %s0, %s164
        %s166 = smul.u32 32, %s16
        %s167 = smul.u32 4, %s17
      $region28: #{inception_generator_forward.33} parent=23 // pred_fallthru
        _
    $region24: #{inception_generator_forward.33} parent=5 // pred_fallthru
      _
    %p168 = scmp.le.s32.totalorder 1, %s9
    %p169 = scmp.lt.s32.totalorder %s9, 3
    %p170 = pnand %p168, %p169
    %p171 = pneg %p170
    // Predicated region
    $region29: #{inception_generator_forward.33} parent=5 // pred_check
      _
    $region30: #{inception_generator_forward.33} parent=5 // pred_check_branch
      %173 = sbr.rel (%p170) target = $region32
    $region31: #{inception_generator_forward.33} parent=5 // pred_region
      %s174 = ssub.s32 %s9, 1
      %s175 = smul.u32 32, %s18
      %s176 = smul.u32 4, %s19
      %p177 = scmp.lt.s32.totalorder %s175, 63
      %s178 = scalar_select %p177, %s175, 63
      %p179 = scmp.lt.s32.totalorder %s176, 3
      %s180 = scalar_select %p179, %s176, 3
      %s181 = smul.addr %s178, 4
      %s182 = sadd.s32 %s180, %s181
      %s183 = smul.addr %s182, 4
      %s184 = scalar_lea.vmem %s0, %s183
      %p185 = pneg %p49
      %p186 = pneg %p46
      %s187 = smul.u32 49, %s19
      %p188 = scmp.lt.s32.totalorder %s187, 48
      %s189 = scalar_select %p188, %s187, 48
      %s190 = smul.addr %s189, 4
      %s191 = scalar_lea.vmem %s1, %s190
      %p192 = pneg %p75
      %p193 = pneg %p72
      %p194 = pneg %p96
      %p195 = pneg %p93
      %p196 = pneg %p122
      %p197 = pneg %p119
      %s198 = smul.u32 32, %s18
      %p199 = scmp.lt.s32.totalorder %s198, 63
      %s200 = scalar_select %p199, %s198, 63
      %s201 = smul.addr %s200, 8
      %s202 = scalar_lea.vmem %s3, %s201
      %s203 = smul.u32 32, %s18
      %s204 = smul.u32 4, %s19
      %p205 = scmp.lt.s32.totalorder %s203, 63
      %s206 = scalar_select %p205, %s203, 63
      %p207 = scmp.lt.s32.totalorder %s204, 3
      %s208 = scalar_select %p207, %s204, 3
      %s209 = smul.addr %s206, 4
      %s210 = sadd.s32 %s208, %s209
      %s211 = smul.addr %s210, 4
      %s212 = scalar_lea.vmem %s0, %s211
      %s213 = smul.u32 32, %s18
      %s214 = smul.u32 4, %s19
      %s215 = smul.u32 49, %s19
      %p216 = scmp.lt.s32.totalorder %s215, 48
      %s217 = scalar_select %p216, %s215, 48
      %s218 = smul.addr %s217, 4
      %s219 = scalar_lea.vmem %s1, %s218
      %s220 = smul.u32 49, %s19
      %s221 = smul.u32 32, %s18
      %p222 = scmp.lt.s32.totalorder %s221, 63
      %s223 = scalar_select %p222, %s221, 63
      %s224 = smul.addr %s223, 8
      %s225 = scalar_lea.vmem %s3, %s224
      %s226 = smul.u32 32, %s18
      %p228 = scmp.eq.s32.totalorder %s19, 0
      // Predicated region
      $region33: #{inception_generator_forward.33} parent=31 // pred_check
        %p229 = pneg %p228
      $region34: #{inception_generator_forward.33} parent=31 // pred_check_branch
        %231 = sbr.rel (%p229) target = $region36
      $region35: #{inception_generator_forward.33} parent=31 // pred_region
        %232 = vst [vmem:[#allocation2] sm:$0xff] 0.0
        %233 = vst [vmem:[#allocation2 + $0x8] sm:$0xff] 0.0
        %234 = vst [vmem:[#allocation2 + $0x10] sm:$0xff] 0.0
        %235 = vst [vmem:[#allocation2 + $0x18] sm:$0xff] 0.0
        %236 = vst [vmem:[#allocation2 + $0x20] sm:$0xff] 0.0
        %237 = vst [vmem:[#allocation2 + $0x28] sm:$0xff] 0.0
        %238 = vst [vmem:[#allocation2 + $0x30] sm:$0xff] 0.0
        %239 = vst [vmem:[#allocation2 + $0x38] sm:$0xff] 0.0
        %240 = vst [vmem:[#allocation2 + $0x40] sm:$0xff] 0.0
        %241 = vst [vmem:[#allocation2 + $0x48] sm:$0xff] 0.0
        %242 = vst [vmem:[#allocation2 + $0x50] sm:$0xff] 0.0
        %243 = vst [vmem:[#allocation2 + $0x58] sm:$0xff] 0.0
        %244 = vst [vmem:[#allocation2 + $0x60] sm:$0xff] 0.0
        %245 = vst [vmem:[#allocation2 + $0x68] sm:$0xff] 0.0
        %246 = vst [vmem:[#allocation2 + $0x70] sm:$0xff] 0.0
        %247 = vst [vmem:[#allocation2 + $0x78] sm:$0xff] 0.0
        %248 = vst [vmem:[#allocation2 + $0x80] sm:$0xff] 0.0
        %249 = vst [vmem:[#allocation2 + $0x88] sm:$0xff] 0.0
        %250 = vst [vmem:[#allocation2 + $0x90] sm:$0xff] 0.0
        %251 = vst [vmem:[#allocation2 + $0x98] sm:$0xff] 0.0
        %252 = vst [vmem:[#allocation2 + $0xa0] sm:$0xff] 0.0
        %253 = vst [vmem:[#allocation2 + $0xa8] sm:$0xff] 0.0
        %254 = vst [vmem:[#allocation2 + $0xb0] sm:$0xff] 0.0
        %255 = vst [vmem:[#allocation2 + $0xb8] sm:$0xff] 0.0
        %256 = vst [vmem:[#allocation2 + $0xc0] sm:$0xff] 0.0
        %257 = vst [vmem:[#allocation2 + $0xc8] sm:$0xff] 0.0
        %258 = vst [vmem:[#allocation2 + $0xd0] sm:$0xff] 0.0
        %259 = vst [vmem:[#allocation2 + $0xd8] sm:$0xff] 0.0
        %260 = vst [vmem:[#allocation2 + $0xe0] sm:$0xff] 0.0
        %261 = vst [vmem:[#allocation2 + $0xe8] sm:$0xff] 0.0
        %262 = vst [vmem:[#allocation2 + $0xf0] sm:$0xff] 0.0
        %263 = vst [vmem:[#allocation2 + $0xf8] sm:$0xff] 0.0
      $region36: #{inception_generator_forward.33} parent=31 // pred_fallthru
        _
      %v264 = vld [vmem:[#allocation2] sm:$0xff]
      %v265 = vld [vmem:[#allocation2 + $0x8] sm:$0xff]
      %v266 = vld [vmem:[#allocation2 + $0x10] sm:$0xff]
      %v267 = vld [vmem:[#allocation2 + $0x18] sm:$0xff]
      %v268 = vld [vmem:[#allocation2 + $0x20] sm:$0xff]
      %v269 = vld [vmem:[#allocation2 + $0x28] sm:$0xff]
      %v270 = vld [vmem:[#allocation2 + $0x30] sm:$0xff]
      %v271 = vld [vmem:[#allocation2 + $0x38] sm:$0xff]
      %v272 = vld [vmem:[#allocation2 + $0x40] sm:$0xff]
      %v273 = vld [vmem:[#allocation2 + $0x48] sm:$0xff]
      %v274 = vld [vmem:[#allocation2 + $0x50] sm:$0xff]
      %v275 = vld [vmem:[#allocation2 + $0x58] sm:$0xff]
      %v276 = vld [vmem:[#allocation2 + $0x60] sm:$0xff]
      %v277 = vld [vmem:[#allocation2 + $0x68] sm:$0xff]
      %v278 = vld [vmem:[#allocation2 + $0x70] sm:$0xff]
      %v279 = vld [vmem:[#allocation2 + $0x78] sm:$0xff]
      %v280 = vld [vmem:[#allocation2 + $0x80] sm:$0xff]
      %v281 = vld [vmem:[#allocation2 + $0x88] sm:$0xff]
      %v282 = vld [vmem:[#allocation2 + $0x90] sm:$0xff]
      %v283 = vld [vmem:[#allocation2 + $0x98] sm:$0xff]
      %v284 = vld [vmem:[#allocation2 + $0xa0] sm:$0xff]
      %v285 = vld [vmem:[#allocation2 + $0xa8] sm:$0xff]
      %v286 = vld [vmem:[#allocation2 + $0xb0] sm:$0xff]
      %v287 = vld [vmem:[#allocation2 + $0xb8] sm:$0xff]
      %v288 = vld [vmem:[#allocation2 + $0xc0] sm:$0xff]
      %v289 = vld [vmem:[#allocation2 + $0xc8] sm:$0xff]
      %v290 = vld [vmem:[#allocation2 + $0xd0] sm:$0xff]
      %v291 = vld [vmem:[#allocation2 + $0xd8] sm:$0xff]
      %v292 = vld [vmem:[#allocation2 + $0xe0] sm:$0xff]
      %v293 = vld [vmem:[#allocation2 + $0xe8] sm:$0xff]
      %v294 = vld [vmem:[#allocation2 + $0xf0] sm:$0xff]
      %v295 = vld [vmem:[#allocation2 + $0xf8] sm:$0xff]
      %v296 = vld [vmem:[%s212] sm:$0xff]
      %v297 = vld [vmem:[%s212 + $0x8] sm:$0xff]
      %v298 = vld [vmem:[%s212 + $0x10] sm:$0xff]
      %v299 = vld [vmem:[%s212 + $0x18] sm:$0xff]
      %v300 = vld [vmem:[%s212 + $0x20] sm:$0xff]
      %v301 = vld [vmem:[%s212 + $0x28] sm:$0xff]
      %v302 = vld [vmem:[%s212 + $0x30] sm:$0xff]
      %v303 = vld [vmem:[%s212 + $0x38] sm:$0xff]
      %v304 = vld [vmem:[%s212 + $0x40] sm:$0xff]
      %v305 = vld [vmem:[%s212 + $0x48] sm:$0xff]
      %v306 = vld [vmem:[%s212 + $0x50] sm:$0xff]
      %v307 = vld [vmem:[%s212 + $0x58] sm:$0xff]
      %v308 = vld [vmem:[%s212 + $0x60] sm:$0xff]
      %v309 = vld [vmem:[%s212 + $0x68] sm:$0xff]
      %v310 = vld [vmem:[%s212 + $0x70] sm:$0xff]
      %v311 = vld [vmem:[%s212 + $0x78] sm:$0xff]
      %v312 = vld [vmem:[%s212 + $0x80] sm:$0xff]
      %v313 = vld [vmem:[%s212 + $0x88] sm:$0xff]
      %v314 = vld [vmem:[%s212 + $0x90] sm:$0xff]
      %v315 = vld [vmem:[%s212 + $0x98] sm:$0xff]
      %v316 = vld [vmem:[%s212 + $0xa0] sm:$0xff]
      %v317 = vld [vmem:[%s212 + $0xa8] sm:$0xff]
      %v318 = vld [vmem:[%s212 + $0xb0] sm:$0xff]
      %v319 = vld [vmem:[%s212 + $0xb8] sm:$0xff]
      %v320 = vld [vmem:[%s212 + $0xc0] sm:$0xff]
      %v321 = vld [vmem:[%s212 + $0xc8] sm:$0xff]
      %v322 = vld [vmem:[%s212 + $0xd0] sm:$0xff]
      %v323 = vld [vmem:[%s212 + $0xd8] sm:$0xff]
      %v324 = vld [vmem:[%s212 + $0xe0] sm:$0xff]
      %v325 = vld [vmem:[%s212 + $0xe8] sm:$0xff]
      %v326 = vld [vmem:[%s212 + $0xf0] sm:$0xff]
      %v327 = vld [vmem:[%s212 + $0xf8] sm:$0xff]
      %v328 = vld [vmem:[%s212 + $0x100] sm:$0xff]
      %v329 = vld [vmem:[%s212 + $0x108] sm:$0xff]
      %v330 = vld [vmem:[%s212 + $0x110] sm:$0xff]
      %v331 = vld [vmem:[%s212 + $0x118] sm:$0xff]
      %v332 = vld [vmem:[%s212 + $0x120] sm:$0xff]
      %v333 = vld [vmem:[%s212 + $0x128] sm:$0xff]
      %v334 = vld [vmem:[%s212 + $0x130] sm:$0xff]
      %v335 = vld [vmem:[%s212 + $0x138] sm:$0xff]
      %v336 = vld [vmem:[%s212 + $0x140] sm:$0xff]
      %v337 = vld [vmem:[%s212 + $0x148] sm:$0xff]
      %v338 = vld [vmem:[%s212 + $0x150] sm:$0xff]
      %v339 = vld [vmem:[%s212 + $0x158] sm:$0xff]
      %v340 = vld [vmem:[%s212 + $0x160] sm:$0xff]
      %v341 = vld [vmem:[%s212 + $0x168] sm:$0xff]
      %v342 = vld [vmem:[%s212 + $0x170] sm:$0xff]
      %v343 = vld [vmem:[%s212 + $0x178] sm:$0xff]
      %v344 = vld [vmem:[%s212 + $0x180] sm:$0xff]
      %v345 = vld [vmem:[%s212 + $0x188] sm:$0xff]
      %v346 = vld [vmem:[%s212 + $0x190] sm:$0xff]
      %v347 = vld [vmem:[%s212 + $0x198] sm:$0xff]
      %v348 = vld [vmem:[%s212 + $0x1a0] sm:$0xff]
      %v349 = vld [vmem:[%s212 + $0x1a8] sm:$0xff]
      %v350 = vld [vmem:[%s212 + $0x1b0] sm:$0xff]
      %v351 = vld [vmem:[%s212 + $0x1b8] sm:$0xff]
      %v352 = vld [vmem:[%s212 + $0x1c0] sm:$0xff]
      %v353 = vld [vmem:[%s212 + $0x1c8] sm:$0xff]
      %v354 = vld [vmem:[%s212 + $0x1d0] sm:$0xff]
      %v355 = vld [vmem:[%s212 + $0x1d8] sm:$0xff]
      %v356 = vld [vmem:[%s212 + $0x1e0] sm:$0xff]
      %v357 = vld [vmem:[%s212 + $0x1e8] sm:$0xff]
      %v358 = vld [vmem:[%s212 + $0x1f0] sm:$0xff]
      %v359 = vld [vmem:[%s212 + $0x1f8] sm:$0xff]
      %v360 = vld [vmem:[%s219] sm:$0xf]
      %v361 = vld [vmem:[%s219 + $0x4] sm:$0xf]
      %v362 = vld [vmem:[%s219 + $0x8] sm:$0xf]
      %v363 = vld [vmem:[%s219 + $0xc] sm:$0xf]
      %v364 = vld [vmem:[%s219 + $0x10] sm:$0xf]
      %v365 = vld [vmem:[%s219 + $0x14] sm:$0xf]
      %v366 = vld [vmem:[%s219 + $0x18] sm:$0xf]
      %v367 = vld [vmem:[%s219 + $0x1c] sm:$0xf]
      %v368 = vld [vmem:[%s219 + $0x20] sm:$0xf]
      %v369 = vld [vmem:[%s219 + $0x24] sm:$0xf]
      %v370 = vld [vmem:[%s219 + $0x28] sm:$0xf]
      %v371 = vld [vmem:[%s219 + $0x2c] sm:$0xf]
      %v372 = vld [vmem:[%s219 + $0x30] sm:$0xf]
      %v373 = vld [vmem:[%s219 + $0x34] sm:$0xf]
      %v374 = vld [vmem:[%s219 + $0x38] sm:$0xf]
      %v375 = vld [vmem:[%s219 + $0x3c] sm:$0xf]
      %v376 = vld [vmem:[%s219 + $0x40] sm:$0xf]
      %v377 = vld [vmem:[%s219 + $0x44] sm:$0xf]
      %v378 = vld [vmem:[%s219 + $0x48] sm:$0xf]
      %v379 = vld [vmem:[%s219 + $0x4c] sm:$0xf]
      %v380 = vld [vmem:[%s219 + $0x50] sm:$0xf]
      %v381 = vld [vmem:[%s219 + $0x54] sm:$0xf]
      %v382 = vld [vmem:[%s219 + $0x58] sm:$0xf]
      %v383 = vld [vmem:[%s219 + $0x5c] sm:$0xf]
      %v384 = vld [vmem:[%s219 + $0x60] sm:$0xf]
      %v385 = vld [vmem:[%s219 + $0x64] sm:$0xf]
      %v386 = vld [vmem:[%s219 + $0x68] sm:$0xf]
      %v387 = vld [vmem:[%s219 + $0x6c] sm:$0xf]
      %v388 = vld [vmem:[%s219 + $0x70] sm:$0xf]
      %v389 = vld [vmem:[%s219 + $0x74] sm:$0xf]
      %v390 = vld [vmem:[%s219 + $0x78] sm:$0xf]
      %v391 = vld [vmem:[%s219 + $0x7c] sm:$0xf]
      %v392 = vld [vmem:[%s219 + $0x80] sm:$0xf]
      %v393 = vld [vmem:[%s219 + $0x84] sm:$0xf]
      %v394 = vld [vmem:[%s219 + $0x88] sm:$0xf]
      %v395 = vld [vmem:[%s219 + $0x8c] sm:$0xf]
      %v396 = vld [vmem:[%s219 + $0x90] sm:$0xf]
      %v397 = vld [vmem:[%s219 + $0x94] sm:$0xf]
      %v398 = vld [vmem:[%s219 + $0x98] sm:$0xf]
      %v399 = vld [vmem:[%s219 + $0x9c] sm:$0xf]
      %v400 = vld [vmem:[%s219 + $0xa0] sm:$0xf]
      %v401 = vld [vmem:[%s219 + $0xa4] sm:$0xf]
      %v402 = vld [vmem:[%s219 + $0xa8] sm:$0xf]
      %v403 = vld [vmem:[%s219 + $0xac] sm:$0xf]
      %v404 = vld [vmem:[%s219 + $0xb0] sm:$0xf]
      %v405 = vld [vmem:[%s219 + $0xb4] sm:$0xf]
      %v406 = vld [vmem:[%s219 + $0xb8] sm:$0xf]
      %v407 = vld [vmem:[%s219 + $0xbc] sm:$0xf]
      %v408 = vld [vmem:[%s219 + $0xc0] sm:$0xf]
      %v473 = vunpack.c.l.b16 %v296
      %v474 = vunpack.c.h.b16 %v296
      %v475 = vunpack.c.l.b16 %v297
      %v476 = vunpack.c.h.b16 %v297
      %v477 = vunpack.c.l.b16 %v298
      %v478 = vunpack.c.h.b16 %v298
      %v479 = vunpack.c.l.b16 %v299
      %v480 = vunpack.c.h.b16 %v299
      %v481 = vunpack.c.l.b16 %v300
      %v482 = vunpack.c.h.b16 %v300
      %v483 = vunpack.c.l.b16 %v301
      %v484 = vunpack.c.h.b16 %v301
      %v485 = vunpack.c.l.b16 %v302
      %v486 = vunpack.c.h.b16 %v302
      %v487 = vunpack.c.l.b16 %v303
      %v488 = vunpack.c.h.b16 %v303
      %v489 = vunpack.c.l.b16 %v304
      %v490 = vunpack.c.h.b16 %v304
      %v491 = vunpack.c.l.b16 %v305
      %v492 = vunpack.c.h.b16 %v305
      %v493 = vunpack.c.l.b16 %v306
      %v494 = vunpack.c.h.b16 %v306
      %v495 = vunpack.c.l.b16 %v307
      %v496 = vunpack.c.h.b16 %v307
      %v497 = vunpack.c.l.b16 %v308
      %v498 = vunpack.c.h.b16 %v308
      %v499 = vunpack.c.l.b16 %v309
      %v500 = vunpack.c.h.b16 %v309
      %v501 = vunpack.c.l.b16 %v310
      %v502 = vunpack.c.h.b16 %v310
      %v503 = vunpack.c.l.b16 %v311
      %v504 = vunpack.c.h.b16 %v311
      %v505 = vunpack.c.l.b16 %v312
      %v506 = vunpack.c.h.b16 %v312
      %v507 = vunpack.c.l.b16 %v313
      %v508 = vunpack.c.h.b16 %v313
      %v509 = vunpack.c.l.b16 %v314
      %v510 = vunpack.c.h.b16 %v314
      %v511 = vunpack.c.l.b16 %v315
      %v512 = vunpack.c.h.b16 %v315
      %v513 = vunpack.c.l.b16 %v316
      %v514 = vunpack.c.h.b16 %v316
      %v515 = vunpack.c.l.b16 %v317
      %v516 = vunpack.c.h.b16 %v317
      %v517 = vunpack.c.l.b16 %v318
      %v518 = vunpack.c.h.b16 %v318
      %v519 = vunpack.c.l.b16 %v319
      %v520 = vunpack.c.h.b16 %v319
      %v521 = vunpack.c.l.b16 %v320
      %v522 = vunpack.c.h.b16 %v320
      %v523 = vunpack.c.l.b16 %v321
      %v524 = vunpack.c.h.b16 %v321
      %v525 = vunpack.c.l.b16 %v322
      %v526 = vunpack.c.h.b16 %v322
      %v527 = vunpack.c.l.b16 %v323
      %v528 = vunpack.c.h.b16 %v323
      %v529 = vunpack.c.l.b16 %v324
      %v530 = vunpack.c.h.b16 %v324
      %v531 = vunpack.c.l.b16 %v325
      %v532 = vunpack.c.h.b16 %v325
      %v533 = vunpack.c.l.b16 %v326
      %v534 = vunpack.c.h.b16 %v326
      %v535 = vunpack.c.l.b16 %v327
      %v536 = vunpack.c.h.b16 %v327
      %v537 = vunpack.c.l.b16 %v328
      %v538 = vunpack.c.h.b16 %v328
      %v539 = vunpack.c.l.b16 %v329
      %v540 = vunpack.c.h.b16 %v329
      %v541 = vunpack.c.l.b16 %v330
      %v542 = vunpack.c.h.b16 %v330
      %v543 = vunpack.c.l.b16 %v331
      %v544 = vunpack.c.h.b16 %v331
      %v545 = vunpack.c.l.b16 %v332
      %v546 = vunpack.c.h.b16 %v332
      %v547 = vunpack.c.l.b16 %v333
      %v548 = vunpack.c.h.b16 %v333
      %v549 = vunpack.c.l.b16 %v334
      %v550 = vunpack.c.h.b16 %v334
      %v551 = vunpack.c.l.b16 %v335
      %v552 = vunpack.c.h.b16 %v335
      %v553 = vunpack.c.l.b16 %v336
      %v554 = vunpack.c.h.b16 %v336
      %v555 = vunpack.c.l.b16 %v337
      %v556 = vunpack.c.h.b16 %v337
      %v557 = vunpack.c.l.b16 %v338
      %v558 = vunpack.c.h.b16 %v338
      %v559 = vunpack.c.l.b16 %v339
      %v560 = vunpack.c.h.b16 %v339
      %v561 = vunpack.c.l.b16 %v340
      %v562 = vunpack.c.h.b16 %v340
      %v563 = vunpack.c.l.b16 %v341
      %v564 = vunpack.c.h.b16 %v341
      %v565 = vunpack.c.l.b16 %v342
      %v566 = vunpack.c.h.b16 %v342
      %v567 = vunpack.c.l.b16 %v343
      %v568 = vunpack.c.h.b16 %v343
      %v569 = vunpack.c.l.b16 %v344
      %v570 = vunpack.c.h.b16 %v344
      %v571 = vunpack.c.l.b16 %v345
      %v572 = vunpack.c.h.b16 %v345
      %v573 = vunpack.c.l.b16 %v346
      %v574 = vunpack.c.h.b16 %v346
      %v575 = vunpack.c.l.b16 %v347
      %v576 = vunpack.c.h.b16 %v347
      %v577 = vunpack.c.l.b16 %v348
      %v578 = vunpack.c.h.b16 %v348
      %v579 = vunpack.c.l.b16 %v349
      %v580 = vunpack.c.h.b16 %v349
      %v581 = vunpack.c.l.b16 %v350
      %v582 = vunpack.c.h.b16 %v350
      %v583 = vunpack.c.l.b16 %v351
      %v584 = vunpack.c.h.b16 %v351
      %v585 = vunpack.c.l.b16 %v352
      %v586 = vunpack.c.h.b16 %v352
      %v587 = vunpack.c.l.b16 %v353
      %v588 = vunpack.c.h.b16 %v353
      %v589 = vunpack.c.l.b16 %v354
      %v590 = vunpack.c.h.b16 %v354
      %v591 = vunpack.c.l.b16 %v355
      %v592 = vunpack.c.h.b16 %v355
      %v593 = vunpack.c.l.b16 %v356
      %v594 = vunpack.c.h.b16 %v356
      %v595 = vunpack.c.l.b16 %v357
      %v596 = vunpack.c.h.b16 %v357
      %v597 = vunpack.c.l.b16 %v358
      %v598 = vunpack.c.h.b16 %v358
      %v599 = vunpack.c.l.b16 %v359
      %v600 = vunpack.c.h.b16 %v359
      %v601 = vpack.c.b16 %v477, %v473
      %v602 = vpack.c.b16 %v478, %v474
      %v603 = vpack.c.b16 %v479, %v475
      %v604 = vpack.c.b16 %v480, %v476
      %v605 = vpack.c.b16 %v485, %v481
      %v606 = vpack.c.b16 %v486, %v482
      %v607 = vpack.c.b16 %v487, %v483
      %v608 = vpack.c.b16 %v488, %v484
      %v609 = vpack.c.b16 %v493, %v489
      %v610 = vpack.c.b16 %v494, %v490
      %v611 = vpack.c.b16 %v495, %v491
      %v612 = vpack.c.b16 %v496, %v492
      %v613 = vpack.c.b16 %v501, %v497
      %v614 = vpack.c.b16 %v502, %v498
      %v615 = vpack.c.b16 %v503, %v499
      %v616 = vpack.c.b16 %v504, %v500
      %v617 = vpack.c.b16 %v509, %v505
      %v618 = vpack.c.b16 %v510, %v506
      %v619 = vpack.c.b16 %v511, %v507
      %v620 = vpack.c.b16 %v512, %v508
      %v621 = vpack.c.b16 %v517, %v513
      %v622 = vpack.c.b16 %v518, %v514
      %v623 = vpack.c.b16 %v519, %v515
      %v624 = vpack.c.b16 %v520, %v516
      %v625 = vpack.c.b16 %v525, %v521
      %v626 = vpack.c.b16 %v526, %v522
      %v627 = vpack.c.b16 %v527, %v523
      %v628 = vpack.c.b16 %v528, %v524
      %v629 = vpack.c.b16 %v533, %v529
      %v630 = vpack.c.b16 %v534, %v530
      %v631 = vpack.c.b16 %v535, %v531
      %v632 = vpack.c.b16 %v536, %v532
      %v633 = vpack.c.b16 %v541, %v537
      %v634 = vpack.c.b16 %v542, %v538
      %v635 = vpack.c.b16 %v543, %v539
      %v636 = vpack.c.b16 %v544, %v540
      %v637 = vpack.c.b16 %v549, %v545
      %v638 = vpack.c.b16 %v550, %v546
      %v639 = vpack.c.b16 %v551, %v547
      %v640 = vpack.c.b16 %v552, %v548
      %v641 = vpack.c.b16 %v557, %v553
      %v642 = vpack.c.b16 %v558, %v554
      %v643 = vpack.c.b16 %v559, %v555
      %v644 = vpack.c.b16 %v560, %v556
      %v645 = vpack.c.b16 %v565, %v561
      %v646 = vpack.c.b16 %v566, %v562
      %v647 = vpack.c.b16 %v567, %v563
      %v648 = vpack.c.b16 %v568, %v564
      %v649 = vpack.c.b16 %v573, %v569
      %v650 = vpack.c.b16 %v574, %v570
      %v651 = vpack.c.b16 %v575, %v571
      %v652 = vpack.c.b16 %v576, %v572
      %v653 = vpack.c.b16 %v581, %v577
      %v654 = vpack.c.b16 %v582, %v578
      %v655 = vpack.c.b16 %v583, %v579
      %v656 = vpack.c.b16 %v584, %v580
      %v657 = vpack.c.b16 %v589, %v585
      %v658 = vpack.c.b16 %v590, %v586
      %v659 = vpack.c.b16 %v591, %v587
      %v660 = vpack.c.b16 %v592, %v588
      %v661 = vpack.c.b16 %v597, %v593
      %v662 = vpack.c.b16 %v598, %v594
      %v663 = vpack.c.b16 %v599, %v595
      %v664 = vpack.c.b16 %v600, %v596
      %v762 = vunpack.c.l.b16 %v360
      %v763 = vunpack.c.l.b16 %v361
      %v764 = vunpack.c.l.b16 %v362
      %v765 = vunpack.c.l.b16 %v363
      %v766 = vunpack.c.l.b16 %v364
      %v767 = vunpack.c.l.b16 %v365
      %v768 = vunpack.c.l.b16 %v366
      %v769 = vunpack.c.l.b16 %v367
      %v770 = vunpack.c.l.b16 %v368
      %v771 = vunpack.c.l.b16 %v369
      %v772 = vunpack.c.l.b16 %v370
      %v773 = vunpack.c.l.b16 %v371
      %v774 = vunpack.c.l.b16 %v372
      %v775 = vunpack.c.l.b16 %v373
      %v776 = vunpack.c.l.b16 %v374
      %v777 = vunpack.c.l.b16 %v375
      %v778 = vunpack.c.l.b16 %v376
      %v779 = vunpack.c.l.b16 %v377
      %v780 = vunpack.c.l.b16 %v378
      %v781 = vunpack.c.l.b16 %v379
      %v782 = vunpack.c.l.b16 %v380
      %v783 = vunpack.c.l.b16 %v381
      %v784 = vunpack.c.l.b16 %v382
      %v785 = vunpack.c.l.b16 %v383
      %v786 = vunpack.c.l.b16 %v384
      %v787 = vunpack.c.l.b16 %v385
      %v788 = vunpack.c.l.b16 %v386
      %v789 = vunpack.c.l.b16 %v387
      %v790 = vunpack.c.l.b16 %v388
      %v791 = vunpack.c.l.b16 %v389
      %v792 = vunpack.c.l.b16 %v390
      %v793 = vunpack.c.l.b16 %v391
      %v794 = vunpack.c.l.b16 %v392
      %v795 = vunpack.c.l.b16 %v393
      %v796 = vunpack.c.l.b16 %v394
      %v797 = vunpack.c.l.b16 %v395
      %v798 = vunpack.c.l.b16 %v396
      %v799 = vunpack.c.l.b16 %v397
      %v800 = vunpack.c.l.b16 %v398
      %v801 = vunpack.c.l.b16 %v399
      %v802 = vunpack.c.l.b16 %v400
      %v803 = vunpack.c.l.b16 %v401
      %v804 = vunpack.c.l.b16 %v402
      %v805 = vunpack.c.l.b16 %v403
      %v806 = vunpack.c.l.b16 %v404
      %v807 = vunpack.c.l.b16 %v405
      %v808 = vunpack.c.l.b16 %v406
      %v809 = vunpack.c.l.b16 %v407
      %v810 = vunpack.c.l.b16 %v408
      %v811 = vpack.c.b16 %v763, %v762
      %v812 = vpack.c.b16 %v765, %v764
      %v813 = vpack.c.b16 %v767, %v766
      %v814 = vpack.c.b16 %v769, %v768
      %v815 = vpack.c.b16 %v771, %v770
      %v816 = vpack.c.b16 %v773, %v772
      %v817 = vpack.c.b16 %v775, %v774
      %v818 = vpack.c.b16 %v777, %v776
      %v819 = vpack.c.b16 %v779, %v778
      %v820 = vpack.c.b16 %v781, %v780
      %v821 = vpack.c.b16 %v783, %v782
      %v822 = vpack.c.b16 %v785, %v784
      %v823 = vpack.c.b16 %v787, %v786
      %v824 = vpack.c.b16 %v789, %v788
      %v825 = vpack.c.b16 %v791, %v790
      %v826 = vpack.c.b16 %v793, %v792
      %v827 = vpack.c.b16 %v795, %v794
      %v828 = vpack.c.b16 %v797, %v796
      %v829 = vpack.c.b16 %v799, %v798
      %v830 = vpack.c.b16 %v801, %v800
      %v831 = vpack.c.b16 %v803, %v802
      %v832 = vpack.c.b16 %v805, %v804
      %v833 = vpack.c.b16 %v807, %v806
      %v834 = vpack.c.b16 %v809, %v808
      %v835 = vpack.c.b16 %v810, %v810
      %vm860 = vcmask 64512
      %v862 = vsel %vm860, %v604, 0
      %v865 = vsel %vm860, %v608, 0
      %v868 = vsel %vm860, %v612, 0
      %v871 = vsel %vm860, %v616, 0
      %v874 = vsel %vm860, %v620, 0
      %v877 = vsel %vm860, %v624, 0
      %v880 = vsel %vm860, %v628, 0
      %v883 = vsel %vm860, %v632, 0
      %v886 = vsel %vm860, %v636, 0
      %v889 = vsel %vm860, %v640, 0
      %v892 = vsel %vm860, %v644, 0
      %v895 = vsel %vm860, %v648, 0
      %v898 = vsel %vm860, %v652, 0
      %v901 = vsel %vm860, %v656, 0
      %v904 = vsel %vm860, %v660, 0
      %v907 = vsel %vm860, %v664, 0
      %vm909 = vcmask 1043456
      %v911 = vsel %vm909, %v835, 0
      %913 = vmatpush.bf16.msra.mxu0 %v818
      %914 = vmatpush.bf16.msra.mxu0 %v817
      %915 = vmatpush.bf16.msra.mxu0 %v816
      %916 = vmatpush.bf16.msra.mxu0 %v815
      %917 = vmatpush.bf16.msra.mxu0 %v814
      %918 = vmatpush.bf16.msra.mxu0 %v813
      %919 = vmatpush.bf16.msra.mxu0 %v812
      %920 = vmatpush.bf16.msra.mxu0 %v811
      %921 = vmatmul.bf16.gmra.mxu0 %v601
      %v922 = vpop.f32.mrf.mxu0
      %v923 = vadd.f32 0.0, %v922
      %v924 = vpop.f32.mrf.mxu0
      %v925 = vadd.f32 0.0, %v924
      %926 = vmatmul.bf16.gmra.mxu0 %v605
      %v927 = vpop.f32.mrf.mxu0
      %v928 = vadd.f32 0.0, %v927
      %v929 = vpop.f32.mrf.mxu0
      %v930 = vadd.f32 0.0, %v929
      %931 = vmatmul.bf16.gmra.mxu0 %v609
      %v932 = vpop.f32.mrf.mxu0
      %v933 = vadd.f32 0.0, %v932
      %v934 = vpop.f32.mrf.mxu0
      %v935 = vadd.f32 0.0, %v934
      %936 = vmatmul.bf16.gmra.mxu0 %v613
      %v937 = vpop.f32.mrf.mxu0
      %v938 = vadd.f32 0.0, %v937
      %v939 = vpop.f32.mrf.mxu0
      %v940 = vadd.f32 0.0, %v939
      %941 = vmatmul.bf16.gmra.mxu0 %v617
      %v942 = vpop.f32.mrf.mxu0
      %v943 = vadd.f32 0.0, %v942
      %v944 = vpop.f32.mrf.mxu0
      %v945 = vadd.f32 0.0, %v944
      %946 = vmatmul.bf16.gmra.mxu0 %v621
      %v947 = vpop.f32.mrf.mxu0
      %v948 = vadd.f32 0.0, %v947
      %v949 = vpop.f32.mrf.mxu0
      %v950 = vadd.f32 0.0, %v949
      %951 = vmatmul.bf16.gmra.mxu0 %v625
      %v952 = vpop.f32.mrf.mxu0
      %v953 = vadd.f32 0.0, %v952
      %v954 = vpop.f32.mrf.mxu0
      %v955 = vadd.f32 0.0, %v954
      %956 = vmatmul.bf16.gmra.mxu0 %v629
      %v957 = vpop.f32.mrf.mxu0
      %v958 = vadd.f32 0.0, %v957
      %v959 = vpop.f32.mrf.mxu0
      %v960 = vadd.f32 0.0, %v959
      %961 = vmatmul.bf16.gmra.mxu0 %v633
      %v962 = vpop.f32.mrf.mxu0
      %v963 = vadd.f32 0.0, %v962
      %v964 = vpop.f32.mrf.mxu0
      %v965 = vadd.f32 0.0, %v964
      %966 = vmatmul.bf16.gmra.mxu0 %v637
      %v967 = vpop.f32.mrf.mxu0
      %v968 = vadd.f32 0.0, %v967
      %v969 = vpop.f32.mrf.mxu0
      %v970 = vadd.f32 0.0, %v969
      %971 = vmatmul.bf16.gmra.mxu0 %v641
      %v972 = vpop.f32.mrf.mxu0
      %v973 = vadd.f32 0.0, %v972
      %v974 = vpop.f32.mrf.mxu0
      %v975 = vadd.f32 0.0, %v974
      %976 = vmatmul.bf16.gmra.mxu0 %v645
      %v977 = vpop.f32.mrf.mxu0
      %v978 = vadd.f32 0.0, %v977
      %v979 = vpop.f32.mrf.mxu0
      %v980 = vadd.f32 0.0, %v979
      %981 = vmatmul.bf16.gmra.mxu0 %v649
      %v982 = vpop.f32.mrf.mxu0
      %v983 = vadd.f32 0.0, %v982
      %v984 = vpop.f32.mrf.mxu0
      %v985 = vadd.f32 0.0, %v984
      %986 = vmatmul.bf16.gmra.mxu0 %v653
      %v987 = vpop.f32.mrf.mxu0
      %v988 = vadd.f32 0.0, %v987
      %v989 = vpop.f32.mrf.mxu0
      %v990 = vadd.f32 0.0, %v989
      %991 = vmatmul.bf16.gmra.mxu0 %v657
      %v992 = vpop.f32.mrf.mxu0
      %v993 = vadd.f32 0.0, %v992
      %v994 = vpop.f32.mrf.mxu0
      %v995 = vadd.f32 0.0, %v994
      %996 = vmatmul.bf16.gmra.mxu0 %v661
      %v997 = vpop.f32.mrf.mxu0
      %v998 = vadd.f32 0.0, %v997
      %v999 = vpop.f32.mrf.mxu0
      %v1000 = vadd.f32 0.0, %v999
      %1001 = vdwg.mxu0
      %1002 = vmatpush.bf16.msra.mxu0 %v826
      %1003 = vmatpush.bf16.msra.mxu0 %v825
      %1004 = vmatpush.bf16.msra.mxu0 %v824
      %1005 = vmatpush.bf16.msra.mxu0 %v823
      %1006 = vmatpush.bf16.msra.mxu0 %v822
      %1007 = vmatpush.bf16.msra.mxu0 %v821
      %1008 = vmatpush.bf16.msra.mxu0 %v820
      %1009 = vmatpush.bf16.msra.mxu0 %v819
      %1010 = vmatmul.bf16.gmra.mxu0 %v602
      %v1011 = vpop.f32.mrf.mxu0
      %v1012 = vadd.f32 %v923, %v1011
      %v1013 = vpop.f32.mrf.mxu0
      %v1014 = vadd.f32 %v925, %v1013
      %1015 = vmatmul.bf16.gmra.mxu0 %v606
      %v1016 = vpop.f32.mrf.mxu0
      %v1017 = vadd.f32 %v928, %v1016
      %v1018 = vpop.f32.mrf.mxu0
      %v1019 = vadd.f32 %v930, %v1018
      %1020 = vmatmul.bf16.gmra.mxu0 %v610
      %v1021 = vpop.f32.mrf.mxu0
      %v1022 = vadd.f32 %v933, %v1021
      %v1023 = vpop.f32.mrf.mxu0
      %v1024 = vadd.f32 %v935, %v1023
      %1025 = vmatmul.bf16.gmra.mxu0 %v614
      %v1026 = vpop.f32.mrf.mxu0
      %v1027 = vadd.f32 %v938, %v1026
      %v1028 = vpop.f32.mrf.mxu0
      %v1029 = vadd.f32 %v940, %v1028
      %1030 = vmatmul.bf16.gmra.mxu0 %v618
      %v1031 = vpop.f32.mrf.mxu0
      %v1032 = vadd.f32 %v943, %v1031
      %v1033 = vpop.f32.mrf.mxu0
      %v1034 = vadd.f32 %v945, %v1033
      %1035 = vmatmul.bf16.gmra.mxu0 %v622
      %v1036 = vpop.f32.mrf.mxu0
      %v1037 = vadd.f32 %v948, %v1036
      %v1038 = vpop.f32.mrf.mxu0
      %v1039 = vadd.f32 %v950, %v1038
      %1040 = vmatmul.bf16.gmra.mxu0 %v626
      %v1041 = vpop.f32.mrf.mxu0
      %v1042 = vadd.f32 %v953, %v1041
      %v1043 = vpop.f32.mrf.mxu0
      %v1044 = vadd.f32 %v955, %v1043
      %1045 = vmatmul.bf16.gmra.mxu0 %v630
      %v1046 = vpop.f32.mrf.mxu0
      %v1047 = vadd.f32 %v958, %v1046
      %v1048 = vpop.f32.mrf.mxu0
      %v1049 = vadd.f32 %v960, %v1048
      %1050 = vmatmul.bf16.gmra.mxu0 %v634
      %v1051 = vpop.f32.mrf.mxu0
      %v1052 = vadd.f32 %v963, %v1051
      %v1053 = vpop.f32.mrf.mxu0
      %v1054 = vadd.f32 %v965, %v1053
      %1055 = vmatmul.bf16.gmra.mxu0 %v638
      %v1056 = vpop.f32.mrf.mxu0
      %v1057 = vadd.f32 %v968, %v1056
      %v1058 = vpop.f32.mrf.mxu0
      %v1059 = vadd.f32 %v970, %v1058
      %1060 = vmatmul.bf16.gmra.mxu0 %v642
      %v1061 = vpop.f32.mrf.mxu0
      %v1062 = vadd.f32 %v973, %v1061
      %v1063 = vpop.f32.mrf.mxu0
      %v1064 = vadd.f32 %v975, %v1063
      %1065 = vmatmul.bf16.gmra.mxu0 %v646
      %v1066 = vpop.f32.mrf.mxu0
      %v1067 = vadd.f32 %v978, %v1066
      %v1068 = vpop.f32.mrf.mxu0
      %v1069 = vadd.f32 %v980, %v1068
      %1070 = vmatmul.bf16.gmra.mxu0 %v650
      %v1071 = vpop.f32.mrf.mxu0
      %v1072 = vadd.f32 %v983, %v1071
      %v1073 = vpop.f32.mrf.mxu0
      %v1074 = vadd.f32 %v985, %v1073
      %1075 = vmatmul.bf16.gmra.mxu0 %v654
      %v1076 = vpop.f32.mrf.mxu0
      %v1077 = vadd.f32 %v988, %v1076
      %v1078 = vpop.f32.mrf.mxu0
      %v1079 = vadd.f32 %v990, %v1078
      %1080 = vmatmul.bf16.gmra.mxu0 %v658
      %v1081 = vpop.f32.mrf.mxu0
      %v1082 = vadd.f32 %v993, %v1081
      %v1083 = vpop.f32.mrf.mxu0
      %v1084 = vadd.f32 %v995, %v1083
      %1085 = vmatmul.bf16.gmra.mxu0 %v662
      %v1086 = vpop.f32.mrf.mxu0
      %v1087 = vadd.f32 %v998, %v1086
      %v1088 = vpop.f32.mrf.mxu0
      %v1089 = vadd.f32 %v1000, %v1088
      %1090 = vdwg.mxu0
      %1091 = vmatpush.bf16.msra.mxu0 %v834
      %1092 = vmatpush.bf16.msra.mxu0 %v833
      %1093 = vmatpush.bf16.msra.mxu0 %v832
      %1094 = vmatpush.bf16.msra.mxu0 %v831
      %1095 = vmatpush.bf16.msra.mxu0 %v830
      %1096 = vmatpush.bf16.msra.mxu0 %v829
      %1097 = vmatpush.bf16.msra.mxu0 %v828
      %1098 = vmatpush.bf16.msra.mxu0 %v827
      %1099 = vmatmul.bf16.gmra.mxu0 %v603
      %v1100 = vpop.f32.mrf.mxu0
      %v1101 = vadd.f32 %v1012, %v1100
      %v1102 = vpop.f32.mrf.mxu0
      %v1103 = vadd.f32 %v1014, %v1102
      %1104 = vmatmul.bf16.gmra.mxu0 %v607
      %v1105 = vpop.f32.mrf.mxu0
      %v1106 = vadd.f32 %v1017, %v1105
      %v1107 = vpop.f32.mrf.mxu0
      %v1108 = vadd.f32 %v1019, %v1107
      %1109 = vmatmul.bf16.gmra.mxu0 %v611
      %v1110 = vpop.f32.mrf.mxu0
      %v1111 = vadd.f32 %v1022, %v1110
      %v1112 = vpop.f32.mrf.mxu0
      %v1113 = vadd.f32 %v1024, %v1112
      %1114 = vmatmul.bf16.gmra.mxu0 %v615
      %v1115 = vpop.f32.mrf.mxu0
      %v1116 = vadd.f32 %v1027, %v1115
      %v1117 = vpop.f32.mrf.mxu0
      %v1118 = vadd.f32 %v1029, %v1117
      %1119 = vmatmul.bf16.gmra.mxu0 %v619
      %v1120 = vpop.f32.mrf.mxu0
      %v1121 = vadd.f32 %v1032, %v1120
      %v1122 = vpop.f32.mrf.mxu0
      %v1123 = vadd.f32 %v1034, %v1122
      %1124 = vmatmul.bf16.gmra.mxu0 %v623
      %v1125 = vpop.f32.mrf.mxu0
      %v1126 = vadd.f32 %v1037, %v1125
      %v1127 = vpop.f32.mrf.mxu0
      %v1128 = vadd.f32 %v1039, %v1127
      %1129 = vmatmul.bf16.gmra.mxu0 %v627
      %v1130 = vpop.f32.mrf.mxu0
      %v1131 = vadd.f32 %v1042, %v1130
      %v1132 = vpop.f32.mrf.mxu0
      %v1133 = vadd.f32 %v1044, %v1132
      %1134 = vmatmul.bf16.gmra.mxu0 %v631
      %v1135 = vpop.f32.mrf.mxu0
      %v1136 = vadd.f32 %v1047, %v1135
      %v1137 = vpop.f32.mrf.mxu0
      %v1138 = vadd.f32 %v1049, %v1137
      %1139 = vmatmul.bf16.gmra.mxu0 %v635
      %v1140 = vpop.f32.mrf.mxu0
      %v1141 = vadd.f32 %v1052, %v1140
      %v1142 = vpop.f32.mrf.mxu0
      %v1143 = vadd.f32 %v1054, %v1142
      %1144 = vmatmul.bf16.gmra.mxu0 %v639
      %v1145 = vpop.f32.mrf.mxu0
      %v1146 = vadd.f32 %v1057, %v1145
      %v1147 = vpop.f32.mrf.mxu0
      %v1148 = vadd.f32 %v1059, %v1147
      %1149 = vmatmul.bf16.gmra.mxu0 %v643
      %v1150 = vpop.f32.mrf.mxu0
      %v1151 = vadd.f32 %v1062, %v1150
      %v1152 = vpop.f32.mrf.mxu0
      %v1153 = vadd.f32 %v1064, %v1152
      %1154 = vmatmul.bf16.gmra.mxu0 %v647
      %v1155 = vpop.f32.mrf.mxu0
      %v1156 = vadd.f32 %v1067, %v1155
      %v1157 = vpop.f32.mrf.mxu0
      %v1158 = vadd.f32 %v1069, %v1157
      %1159 = vmatmul.bf16.gmra.mxu0 %v651
      %v1160 = vpop.f32.mrf.mxu0
      %v1161 = vadd.f32 %v1072, %v1160
      %v1162 = vpop.f32.mrf.mxu0
      %v1163 = vadd.f32 %v1074, %v1162
      %1164 = vmatmul.bf16.gmra.mxu0 %v655
      %v1165 = vpop.f32.mrf.mxu0
      %v1166 = vadd.f32 %v1077, %v1165
      %v1167 = vpop.f32.mrf.mxu0
      %v1168 = vadd.f32 %v1079, %v1167
      %1169 = vmatmul.bf16.gmra.mxu0 %v659
      %v1170 = vpop.f32.mrf.mxu0
      %v1171 = vadd.f32 %v1082, %v1170
      %v1172 = vpop.f32.mrf.mxu0
      %v1173 = vadd.f32 %v1084, %v1172
      %1174 = vmatmul.bf16.gmra.mxu0 %v663
      %v1175 = vpop.f32.mrf.mxu0
      %v1176 = vadd.f32 %v1087, %v1175
      %v1177 = vpop.f32.mrf.mxu0
      %v1178 = vadd.f32 %v1089, %v1177
      %1179 = vdwg.mxu0
      %1180 = vmatpush.bf16.msra.mxu0 0
      %1181 = vmatpush.bf16.msra.mxu0 0
      %1182 = vmatpush.bf16.msra.mxu0 0
      %1183 = vmatpush.bf16.msra.mxu0 0
      %1184 = vmatpush.bf16.msra.mxu0 0
      %1185 = vmatpush.bf16.msra.mxu0 0
      %1186 = vmatpush.bf16.msra.mxu0 0
      %1187 = vmatpush.bf16.msra.mxu0 %v911
      %1188 = vmatmul.bf16.gmra.mxu0 %v862
      %v1189 = vpop.f32.mrf.mxu0
      %v1190 = vadd.f32 %v1101, %v1189
      %v1191 = vpop.f32.mrf.mxu0
      %v1192 = vadd.f32 %v1103, %v1191
      %1193 = vmatmul.bf16.gmra.mxu0 %v865
      %v1194 = vpop.f32.mrf.mxu0
      %v1195 = vadd.f32 %v1106, %v1194
      %v1196 = vpop.f32.mrf.mxu0
      %v1197 = vadd.f32 %v1108, %v1196
      %1198 = vmatmul.bf16.gmra.mxu0 %v868
      %v1199 = vpop.f32.mrf.mxu0
      %v1200 = vadd.f32 %v1111, %v1199
      %v1201 = vpop.f32.mrf.mxu0
      %v1202 = vadd.f32 %v1113, %v1201
      %1203 = vmatmul.bf16.gmra.mxu0 %v871
      %v1204 = vpop.f32.mrf.mxu0
      %v1205 = vadd.f32 %v1116, %v1204
      %v1206 = vpop.f32.mrf.mxu0
      %v1207 = vadd.f32 %v1118, %v1206
      %1208 = vmatmul.bf16.gmra.mxu0 %v874
      %v1209 = vpop.f32.mrf.mxu0
      %v1210 = vadd.f32 %v1121, %v1209
      %v1211 = vpop.f32.mrf.mxu0
      %v1212 = vadd.f32 %v1123, %v1211
      %1213 = vmatmul.bf16.gmra.mxu0 %v877
      %v1214 = vpop.f32.mrf.mxu0
      %v1215 = vadd.f32 %v1126, %v1214
      %v1216 = vpop.f32.mrf.mxu0
      %v1217 = vadd.f32 %v1128, %v1216
      %1218 = vmatmul.bf16.gmra.mxu0 %v880
      %v1219 = vpop.f32.mrf.mxu0
      %v1220 = vadd.f32 %v1131, %v1219
      %v1221 = vpop.f32.mrf.mxu0
      %v1222 = vadd.f32 %v1133, %v1221
      %1223 = vmatmul.bf16.gmra.mxu0 %v883
      %v1224 = vpop.f32.mrf.mxu0
      %v1225 = vadd.f32 %v1136, %v1224
      %v1226 = vpop.f32.mrf.mxu0
      %v1227 = vadd.f32 %v1138, %v1226
      %1228 = vmatmul.bf16.gmra.mxu0 %v886
      %v1229 = vpop.f32.mrf.mxu0
      %v1230 = vadd.f32 %v1141, %v1229
      %v1231 = vpop.f32.mrf.mxu0
      %v1232 = vadd.f32 %v1143, %v1231
      %1233 = vmatmul.bf16.gmra.mxu0 %v889
      %v1234 = vpop.f32.mrf.mxu0
      %v1235 = vadd.f32 %v1146, %v1234
      %v1236 = vpop.f32.mrf.mxu0
      %v1237 = vadd.f32 %v1148, %v1236
      %1238 = vmatmul.bf16.gmra.mxu0 %v892
      %v1239 = vpop.f32.mrf.mxu0
      %v1240 = vadd.f32 %v1151, %v1239
      %v1241 = vpop.f32.mrf.mxu0
      %v1242 = vadd.f32 %v1153, %v1241
      %1243 = vmatmul.bf16.gmra.mxu0 %v895
      %v1244 = vpop.f32.mrf.mxu0
      %v1245 = vadd.f32 %v1156, %v1244
      %v1246 = vpop.f32.mrf.mxu0
      %v1247 = vadd.f32 %v1158, %v1246
      %1248 = vmatmul.bf16.gmra.mxu0 %v898
      %v1249 = vpop.f32.mrf.mxu0
      %v1250 = vadd.f32 %v1161, %v1249
      %v1251 = vpop.f32.mrf.mxu0
      %v1252 = vadd.f32 %v1163, %v1251
      %1253 = vmatmul.bf16.gmra.mxu0 %v901
      %v1254 = vpop.f32.mrf.mxu0
      %v1255 = vadd.f32 %v1166, %v1254
      %v1256 = vpop.f32.mrf.mxu0
      %v1257 = vadd.f32 %v1168, %v1256
      %1258 = vmatmul.bf16.gmra.mxu0 %v904
      %v1259 = vpop.f32.mrf.mxu0
      %v1260 = vadd.f32 %v1171, %v1259
      %v1261 = vpop.f32.mrf.mxu0
      %v1262 = vadd.f32 %v1173, %v1261
      %1263 = vmatmul.bf16.gmra.mxu0 %v907
      %v1264 = vpop.f32.mrf.mxu0
      %v1265 = vadd.f32 %v1176, %v1264
      %v1266 = vpop.f32.mrf.mxu0
      %v1267 = vadd.f32 %v1178, %v1266
      %1268 = vdwg.mxu0
      %v1269 = vadd.f32 %v264, %v1190
      %v1270 = vadd.f32 %v265, %v1192
      %v1271 = vadd.f32 %v266, %v1195
      %v1272 = vadd.f32 %v267, %v1197
      %v1273 = vadd.f32 %v268, %v1200
      %v1274 = vadd.f32 %v269, %v1202
      %v1275 = vadd.f32 %v270, %v1205
      %v1276 = vadd.f32 %v271, %v1207
      %v1277 = vadd.f32 %v272, %v1210
      %v1278 = vadd.f32 %v273, %v1212
      %v1279 = vadd.f32 %v274, %v1215
      %v1280 = vadd.f32 %v275, %v1217
      %v1281 = vadd.f32 %v276, %v1220
      %v1282 = vadd.f32 %v277, %v1222
      %v1283 = vadd.f32 %v278, %v1225
      %v1284 = vadd.f32 %v279, %v1227
      %v1285 = vadd.f32 %v280, %v1230
      %v1286 = vadd.f32 %v281, %v1232
      %v1287 = vadd.f32 %v282, %v1235
      %v1288 = vadd.f32 %v283, %v1237
      %v1289 = vadd.f32 %v284, %v1240
      %v1290 = vadd.f32 %v285, %v1242
      %v1291 = vadd.f32 %v286, %v1245
      %v1292 = vadd.f32 %v287, %v1247
      %v1293 = vadd.f32 %v288, %v1250
      %v1294 = vadd.f32 %v289, %v1252
      %v1295 = vadd.f32 %v290, %v1255
      %v1296 = vadd.f32 %v291, %v1257
      %v1297 = vadd.f32 %v292, %v1260
      %v1298 = vadd.f32 %v293, %v1262
      %v1299 = vadd.f32 %v294, %v1265
      %v1300 = vadd.f32 %v295, %v1267
      %1301 = vst [vmem:[#allocation2] sm:$0xff] %v1269
      %1302 = vst [vmem:[#allocation2 + $0x8] sm:$0xff] %v1270
      %1303 = vst [vmem:[#allocation2 + $0x10] sm:$0xff] %v1271
      %1304 = vst [vmem:[#allocation2 + $0x18] sm:$0xff] %v1272
      %1305 = vst [vmem:[#allocation2 + $0x20] sm:$0xff] %v1273
      %1306 = vst [vmem:[#allocation2 + $0x28] sm:$0xff] %v1274
      %1307 = vst [vmem:[#allocation2 + $0x30] sm:$0xff] %v1275
      %1308 = vst [vmem:[#allocation2 + $0x38] sm:$0xff] %v1276
      %1309 = vst [vmem:[#allocation2 + $0x40] sm:$0xff] %v1277
      %1310 = vst [vmem:[#allocation2 + $0x48] sm:$0xff] %v1278
      %1311 = vst [vmem:[#allocation2 + $0x50] sm:$0xff] %v1279
      %1312 = vst [vmem:[#allocation2 + $0x58] sm:$0xff] %v1280
      %1313 = vst [vmem:[#allocation2 + $0x60] sm:$0xff] %v1281
      %1314 = vst [vmem:[#allocation2 + $0x68] sm:$0xff] %v1282
      %1315 = vst [vmem:[#allocation2 + $0x70] sm:$0xff] %v1283
      %1316 = vst [vmem:[#allocation2 + $0x78] sm:$0xff] %v1284
      %1317 = vst [vmem:[#allocation2 + $0x80] sm:$0xff] %v1285
      %1318 = vst [vmem:[#allocation2 + $0x88] sm:$0xff] %v1286
      %1319 = vst [vmem:[#allocation2 + $0x90] sm:$0xff] %v1287
      %1320 = vst [vmem:[#allocation2 + $0x98] sm:$0xff] %v1288
      %1321 = vst [vmem:[#allocation2 + $0xa0] sm:$0xff] %v1289
      %1322 = vst [vmem:[#allocation2 + $0xa8] sm:$0xff] %v1290
      %1323 = vst [vmem:[#allocation2 + $0xb0] sm:$0xff] %v1291
      %1324 = vst [vmem:[#allocation2 + $0xb8] sm:$0xff] %v1292
      %1325 = vst [vmem:[#allocation2 + $0xc0] sm:$0xff] %v1293
      %1326 = vst [vmem:[#allocation2 + $0xc8] sm:$0xff] %v1294
      %1327 = vst [vmem:[#allocation2 + $0xd0] sm:$0xff] %v1295
      %1328 = vst [vmem:[#allocation2 + $0xd8] sm:$0xff] %v1296
      %1329 = vst [vmem:[#allocation2 + $0xe0] sm:$0xff] %v1297
      %1330 = vst [vmem:[#allocation2 + $0xe8] sm:$0xff] %v1298
      %1331 = vst [vmem:[#allocation2 + $0xf0] sm:$0xff] %v1299
      %1332 = vst [vmem:[#allocation2 + $0xf8] sm:$0xff] %v1300
      // Predicated region
      $region37: #{inception_generator_forward.33} parent=31 // pred_check
        %p1333 = pneg %p228
      $region38: #{inception_generator_forward.33} parent=31 // pred_check_branch
        %1335 = sbr.rel (%p1333) target = $region40
      $region39: #{inception_generator_forward.33} parent=31 // pred_region
        %v1336 = vld [vmem:[#allocation2] sm:$0xff]
        %v1337 = vld [vmem:[#allocation2 + $0x8] sm:$0xff]
        %v1338 = vld [vmem:[#allocation2 + $0x10] sm:$0xff]
        %v1339 = vld [vmem:[#allocation2 + $0x18] sm:$0xff]
        %v1340 = vld [vmem:[#allocation2 + $0x20] sm:$0xff]
        %v1341 = vld [vmem:[#allocation2 + $0x28] sm:$0xff]
        %v1342 = vld [vmem:[#allocation2 + $0x30] sm:$0xff]
        %v1343 = vld [vmem:[#allocation2 + $0x38] sm:$0xff]
        %v1344 = vld [vmem:[#allocation2 + $0x40] sm:$0xff]
        %v1345 = vld [vmem:[#allocation2 + $0x48] sm:$0xff]
        %v1346 = vld [vmem:[#allocation2 + $0x50] sm:$0xff]
        %v1347 = vld [vmem:[#allocation2 + $0x58] sm:$0xff]
        %v1348 = vld [vmem:[#allocation2 + $0x60] sm:$0xff]
        %v1349 = vld [vmem:[#allocation2 + $0x68] sm:$0xff]
        %v1350 = vld [vmem:[#allocation2 + $0x70] sm:$0xff]
        %v1351 = vld [vmem:[#allocation2 + $0x78] sm:$0xff]
        %v1352 = vld [vmem:[#allocation2 + $0x80] sm:$0xff]
        %v1353 = vld [vmem:[#allocation2 + $0x88] sm:$0xff]
        %v1354 = vld [vmem:[#allocation2 + $0x90] sm:$0xff]
        %v1355 = vld [vmem:[#allocation2 + $0x98] sm:$0xff]
        %v1356 = vld [vmem:[#allocation2 + $0xa0] sm:$0xff]
        %v1357 = vld [vmem:[#allocation2 + $0xa8] sm:$0xff]
        %v1358 = vld [vmem:[#allocation2 + $0xb0] sm:$0xff]
        %v1359 = vld [vmem:[#allocation2 + $0xb8] sm:$0xff]
        %v1360 = vld [vmem:[#allocation2 + $0xc0] sm:$0xff]
        %v1361 = vld [vmem:[#allocation2 + $0xc8] sm:$0xff]
        %v1362 = vld [vmem:[#allocation2 + $0xd0] sm:$0xff]
        %v1363 = vld [vmem:[#allocation2 + $0xd8] sm:$0xff]
        %v1364 = vld [vmem:[#allocation2 + $0xe0] sm:$0xff]
        %v1365 = vld [vmem:[#allocation2 + $0xe8] sm:$0xff]
        %v1366 = vld [vmem:[#allocation2 + $0xf0] sm:$0xff]
        %v1367 = vld [vmem:[#allocation2 + $0xf8] sm:$0xff]
        %v1368 = vld [vmem:[%s2] sm:$0x1]
        %v1370 = vperm.slane %v1368, 0
        %v1372 = vadd.f32 %v1336, %v1370
        %v1373 = vadd.f32 %v1337, %v1370
        %v1374 = vadd.f32 %v1338, %v1370
        %v1375 = vadd.f32 %v1339, %v1370
        %v1376 = vadd.f32 %v1340, %v1370
        %v1377 = vadd.f32 %v1341, %v1370
        %v1378 = vadd.f32 %v1342, %v1370
        %v1379 = vadd.f32 %v1343, %v1370
        %v1380 = vadd.f32 %v1344, %v1370
        %v1381 = vadd.f32 %v1345, %v1370
        %v1382 = vadd.f32 %v1346, %v1370
        %v1383 = vadd.f32 %v1347, %v1370
        %v1384 = vadd.f32 %v1348, %v1370
        %v1385 = vadd.f32 %v1349, %v1370
        %v1386 = vadd.f32 %v1350, %v1370
        %v1387 = vadd.f32 %v1351, %v1370
        %v1388 = vadd.f32 %v1352, %v1370
        %v1389 = vadd.f32 %v1353, %v1370
        %v1390 = vadd.f32 %v1354, %v1370
        %v1391 = vadd.f32 %v1355, %v1370
        %v1392 = vadd.f32 %v1356, %v1370
        %v1393 = vadd.f32 %v1357, %v1370
        %v1394 = vadd.f32 %v1358, %v1370
        %v1395 = vadd.f32 %v1359, %v1370
        %v1396 = vadd.f32 %v1360, %v1370
        %v1397 = vadd.f32 %v1361, %v1370
        %v1398 = vadd.f32 %v1362, %v1370
        %v1399 = vadd.f32 %v1363, %v1370
        %v1400 = vadd.f32 %v1364, %v1370
        %v1401 = vadd.f32 %v1365, %v1370
        %v1402 = vadd.f32 %v1366, %v1370
        %v1403 = vadd.f32 %v1367, %v1370
        %v1404 = vtanh.pop %v1372
        %v1405 = vtanh.pop %v1373
        %v1406 = vtanh.pop %v1374
        %v1407 = vtanh.pop %v1375
        %v1408 = vtanh.pop %v1376
        %v1409 = vtanh.pop %v1377
        %v1410 = vtanh.pop %v1378
        %v1411 = vtanh.pop %v1379
        %v1412 = vtanh.pop %v1380
        %v1413 = vtanh.pop %v1381
        %v1414 = vtanh.pop %v1382
        %v1415 = vtanh.pop %v1383
        %v1416 = vtanh.pop %v1384
        %v1417 = vtanh.pop %v1385
        %v1418 = vtanh.pop %v1386
        %v1419 = vtanh.pop %v1387
        %v1420 = vtanh.pop %v1388
        %v1421 = vtanh.pop %v1389
        %v1422 = vtanh.pop %v1390
        %v1423 = vtanh.pop %v1391
        %v1424 = vtanh.pop %v1392
        %v1425 = vtanh.pop %v1393
        %v1426 = vtanh.pop %v1394
        %v1427 = vtanh.pop %v1395
        %v1428 = vtanh.pop %v1396
        %v1429 = vtanh.pop %v1397
        %v1430 = vtanh.pop %v1398
        %v1431 = vtanh.pop %v1399
        %v1432 = vtanh.pop %v1400
        %v1433 = vtanh.pop %v1401
        %v1434 = vtanh.pop %v1402
        %v1435 = vtanh.pop %v1403
        %1436 = vst [vmem:[%s225] sm:$0xff] %v1404
        %1437 = vst [vmem:[%s225 + $0x8] sm:$0xff] %v1405
        %1438 = vst [vmem:[%s225 + $0x10] sm:$0xff] %v1406
        %1439 = vst [vmem:[%s225 + $0x18] sm:$0xff] %v1407
        %1440 = vst [vmem:[%s225 + $0x20] sm:$0xff] %v1408
        %1441 = vst [vmem:[%s225 + $0x28] sm:$0xff] %v1409
        %1442 = vst [vmem:[%s225 + $0x30] sm:$0xff] %v1410
        %1443 = vst [vmem:[%s225 + $0x38] sm:$0xff] %v1411
        %1444 = vst [vmem:[%s225 + $0x40] sm:$0xff] %v1412
        %1445 = vst [vmem:[%s225 + $0x48] sm:$0xff] %v1413
        %1446 = vst [vmem:[%s225 + $0x50] sm:$0xff] %v1414
        %1447 = vst [vmem:[%s225 + $0x58] sm:$0xff] %v1415
        %1448 = vst [vmem:[%s225 + $0x60] sm:$0xff] %v1416
        %1449 = vst [vmem:[%s225 + $0x68] sm:$0xff] %v1417
        %1450 = vst [vmem:[%s225 + $0x70] sm:$0xff] %v1418
        %1451 = vst [vmem:[%s225 + $0x78] sm:$0xff] %v1419
        %1452 = vst [vmem:[%s225 + $0x80] sm:$0xff] %v1420
        %1453 = vst [vmem:[%s225 + $0x88] sm:$0xff] %v1421
        %1454 = vst [vmem:[%s225 + $0x90] sm:$0xff] %v1422
        %1455 = vst [vmem:[%s225 + $0x98] sm:$0xff] %v1423
        %1456 = vst [vmem:[%s225 + $0xa0] sm:$0xff] %v1424
        %1457 = vst [vmem:[%s225 + $0xa8] sm:$0xff] %v1425
        %1458 = vst [vmem:[%s225 + $0xb0] sm:$0xff] %v1426
        %1459 = vst [vmem:[%s225 + $0xb8] sm:$0xff] %v1427
        %1460 = vst [vmem:[%s225 + $0xc0] sm:$0xff] %v1428
        %1461 = vst [vmem:[%s225 + $0xc8] sm:$0xff] %v1429
        %1462 = vst [vmem:[%s225 + $0xd0] sm:$0xff] %v1430
        %1463 = vst [vmem:[%s225 + $0xd8] sm:$0xff] %v1431
        %1464 = vst [vmem:[%s225 + $0xe0] sm:$0xff] %v1432
        %1465 = vst [vmem:[%s225 + $0xe8] sm:$0xff] %v1433
        %1466 = vst [vmem:[%s225 + $0xf0] sm:$0xff] %v1434
        %1467 = vst [vmem:[%s225 + $0xf8] sm:$0xff] %v1435
      $region40: #{inception_generator_forward.33} parent=31 // pred_fallthru
        _
      %s1468 = smul.u32 32, %s18
      %p1469 = scmp.lt.s32.totalorder %s1468, 63
      %s1470 = scalar_select %p1469, %s1468, 63
      %s1471 = smul.addr %s1470, 8
      %s1472 = scalar_lea.vmem %s3, %s1471
      // Predicated region
      $region41: #{inception_generator_forward.33} parent=31 // pred_check
        %p1473 = pneg %p119
      $region42: #{inception_generator_forward.33} parent=31 // pred_check_branch
        %1475 = sbr.rel (%p1473) target = $region44
      $region43: #{inception_generator_forward.33} parent=31 // pred_region
        %s1476 = smul.u32 32, %s18
      $region44: #{inception_generator_forward.33} parent=31 // pred_fallthru
        _
    $region32: #{inception_generator_forward.33} parent=5 // pred_fallthru
      _
    %p1477 = scmp.le.s32.totalorder 2, %s9
    // Predicated region
    $region45: #{inception_generator_forward.33} parent=5 // pred_check
      %p1478 = pneg %p1477
    $region46: #{inception_generator_forward.33} parent=5 // pred_check_branch
      %1480 = sbr.rel (%p1478) target = $region48
    $region47: #{inception_generator_forward.33} parent=5 // pred_region
      %s1481 = ssub.s32 %s9, 2
      // Predicated region
      $region49: #{inception_generator_forward.33} parent=47 // pred_check
        %p1482 = pneg %p125
      $region50: #{inception_generator_forward.33} parent=47 // pred_check_branch
        %1484 = sbr.rel (%p1482) target = $region52
      $region51: #{inception_generator_forward.33} parent=47 // pred_region
        %s1485 = smul.u32 32, %s20
        %p1486 = scmp.lt.s32.totalorder %s1485, 63
        %s1487 = scalar_select %p1486, %s1485, 63
        %s1488 = smul.addr %s1487, 8
        %s1489 = scalar_lea.vmem %s3, %s1488
      $region52: #{inception_generator_forward.33} parent=47 // pred_fallthru
        _
    $region48: #{inception_generator_forward.33} parent=5 // pred_fallthru
      _
  $region6: #{inception_generator_forward.33} parent=0 // loop_footer
    %s13 = sadd.s32 1, %s9
  $region7: #{inception_generator_forward.33} parent=0 // loop_footer_branch
    %8 = sbr.rel target = $region3
  $region8: #{inception_generator_forward.33} parent=0 // loop_exit
    _

</llo_original>
